<compile_context>
chip_gen: v7x
topology: tpu7x:2x2x1
jax: 0.10.0
libtpu: 0.0.40
codegen_flags: <defaults>
</compile_context>

<pallas_src>
import jax
import jax.numpy as jnp
from jax.experimental import pallas as pl
from jax.experimental.pallas import tpu as pltpu

IN_FEA = 302 + 55          # 357
MAINFEA = 512
LSTM_IN = 59
H1 = 64                    # lstm1 logical hidden
H2 = 128                   # lstm2 logical hidden
HP = 128                   # padded (lane-aligned) hidden used inside the kernel

_VMEM = pl.BlockSpec(memory_space=pltpu.MemorySpace.VMEM)
_ANY = pl.BlockSpec(memory_space=pl.ANY)


# ---------------------------------------------------------------------------
# Fused Pallas kernel
# ---------------------------------------------------------------------------
def _lstm_gates(g, c, H):
    """PyTorch gate order (i, f, g, o); g: [B, 4H]; full-vreg 128-lane slices."""
    i = jax.nn.sigmoid(g[:, 0 * H:1 * H])
    f = jax.nn.sigmoid(g[:, 1 * H:2 * H])
    gg = jnp.tanh(g[:, 2 * H:3 * H])
    o = jax.nn.sigmoid(g[:, 3 * H:4 * H])
    c_new = f * c + i * gg
    h_new = o * jnp.tanh(c_new)
    return h_new, c_new


def _two_layer_lstm(B, xflat_ref, wih0_ref, whh0_ref, b0_ref,
                    wih1_ref, whh1_ref, b1_ref):
    """2-layer LSTM over time-major-flattened x [T*B, I]; returns last h1, [B, Hp].

    Weights are pre-padded so gate blocks sit on 128-lane boundaries; padded lanes
    of h/c stay exactly 0 (zero weight columns/rows, zero biases, zero init state),
    so results match the unpadded recurrence.
    """
    bf16 = jnp.bfloat16
    T = xflat_ref.shape[0] // B
    Hp = whh0_ref.shape[0]

    # Carry-independent layer-0 input projection hoisted into ONE batched matmul
    # over all T*B rows (instead of T small M=B matmuls inside the recurrence).
    g0_all = (jnp.dot(xflat_ref[...].astype(bf16), wih0_ref[...],
                      preferred_element_type=jnp.float32)
              + b0_ref[...])                                   # [T*B, 4Hp]

    b1b = jnp.broadcast_to(b1_ref[...], (B, 4 * Hp))           # hoisted broadcast
    z = jnp.zeros((B, Hp), jnp.float32)
    h0, c0, h1, c1 = z, z, z, z
    for t in range(T):                                         # static T -> fully unrolled
        # layer 0: only the recurrent dot is on the serial critical path.
        g0 = g0_all[t * B:(t + 1) * B] + jnp.dot(
            h0.astype(bf16), whh0_ref[...], preferred_element_type=jnp.float32)
        h0, c0 = _lstm_gates(g0, c0, Hp)
        # layer 1: two separate dots (no per-step [h0|h1] lane-concat); the whh1 dot
        # only depends on the previous step's h1 so it can issue early.
        g1 = (jnp.dot(h0.astype(bf16), wih1_ref[...], preferred_element_type=jnp.float32)
              + jnp.dot(h1.astype(bf16), whh1_ref[...], preferred_element_type=jnp.float32)
              + b1b)
        h1, c1 = _lstm_gates(g1, c1, Hp)
    return h1


def fused_kernel(base_ref, act_ref, his_ref,
                 l1_wih0, l1_whh0, l1_b0, l1_wih1, l1_whh1, l1_b1,
                 l2_wih0, l2_whh0, l2_b0, l2_wih1, l2_whh1, l2_b1,
                 mb0_ref, ba_ref, lng_ref, lnb_ref, bb_ref, bc_ref,
                 wf_ref, bf_ref,
                 w0b_hbm, w0x1_hbm, w0x2_hbm, wa_hbm, wb_hbm, wc_hbm,
                 out_ref,
                 w0b_buf, w0x1_buf, w0x2_buf, wa_buf, wb_buf, wc_buf, dma_sem):
    """Both LSTMs + (implicit concat) + mlp_base, all in one kernel."""
    bf16 = jnp.bfloat16
    B = base_ref.shape[0]

    # --- Kick off the MLP-weight HBM->VMEM DMAs first; they are only consumed after
    #     both LSTM recurrences, so they stream behind the serial compute. ---
    copies = [
        pltpu.make_async_copy(w0b_hbm, w0b_buf, dma_sem.at[0]),
        pltpu.make_async_copy(w0x1_hbm, w0x1_buf, dma_sem.at[1]),
        pltpu.make_async_copy(w0x2_hbm, w0x2_buf, dma_sem.at[2]),
        pltpu.make_async_copy(wa_hbm, wa_buf, dma_sem.at[3]),
        pltpu.make_async_copy(wb_hbm, wb_buf, dma_sem.at[4]),
        pltpu.make_async_copy(wc_hbm, wc_buf, dma_sem.at[5]),
    ]
    for cp in copies:
        cp.start()

    # --- Two independent 2-layer LSTMs (serial recurrences). ---
    # TODO(synk): on v7x (2 TensorCores/chip) these two LSTMs could run on separate
    # cores via pl.core_map(pltpu.create_tensorcore_mesh(...)); on v5e/v6e (1 TC)
    # that is pure serial-loop overhead, so the single-core path is kept.
    x1 = _two_layer_lstm(B, act_ref, l1_wih0, l1_whh0, l1_b0,
                         l1_wih1, l1_whh1, l1_b1)              # [B, 128]
    x2 = _two_layer_lstm(B, his_ref, l2_wih0, l2_whh0, l2_b0,
                         l2_wih1, l2_whh1, l2_b1)              # [B, 128]

    # --- MLP weights must have landed by now. ---
    for cp in copies:
        cp.wait()

    # Linear(in_fea + 64 + 128, 512) + Tanh, with w0 split into three row blocks
    # (the [B, 549] concat is never materialized). bf16 weights, f32 accumulate.
    h = (jnp.dot(base_ref[...].astype(bf16), w0b_buf[...],
                 preferred_element_type=jnp.float32)
         + jnp.dot(x1.astype(bf16), w0x1_buf[...],
                   preferred_element_type=jnp.float32)
         + jnp.dot(x2.astype(bf16), w0x2_buf[...],
                   preferred_element_type=jnp.float32)
         + mb0_ref[...])
    h = jnp.tanh(h)

    # ResBlock(512, 512)
    identity = h
    t1 = jnp.dot(h.astype(bf16), wa_buf[...],
                 preferred_element_type=jnp.float32) + ba_ref[...]
    mu = jnp.mean(t1, axis=-1, keepdims=True)                  # LayerNorm(512)
    var = jnp.mean((t1 - mu) * (t1 - mu), axis=-1, keepdims=True)
    t1 = (t1 - mu) * jax.lax.rsqrt(var + 1e-5) * lng_ref[...] + lnb_ref[...]
    t1 = jnp.tanh(t1)
    out = jnp.dot(t1.astype(bf16), wb_buf[...],
                  preferred_element_type=jnp.float32) + bb_ref[...]
    out = jnp.tanh(out + identity)
    out1 = jnp.dot(out.astype(bf16), wc_buf[...],
                   preferred_element_type=jnp.float32) + bc_ref[...]
    out1 = jnp.tanh(out1 + identity + out)

    # Linear(512, 1): VPU multiply + cross-lane reduce (keeps the N=1 matmul off the MXU).
    y = jnp.sum(out1 * wf_ref[...], axis=-1, keepdims=True) + bf_ref[...]
    out_ref[...] = y


# ---------------------------------------------------------------------------
# Wrapper
# ---------------------------------------------------------------------------
@jax.jit
def agent_cri_net_forward(baseFea, actFea, hisActFea, l1, l2, mlp):
    """baseFea [B,357], actFea [B,T1,59], hisActFea [B,T2,59] -> [B,1]."""
    B, T1, _ = actFea.shape
    T2 = hisActFea.shape[1]
    # One tiny fused transpose+reshape per sequence (~4 KB): time-major flattened
    # [T*B, I] rows make the hoisted layer-0 projection's per-step slices a contiguous
    # static sublane slice in-kernel (an in-kernel [B,T,I]->[B*T,I] reshape would need
    # a sublane relayout whenever T is not a multiple of 8).
    act_flat = jnp.transpose(actFea.astype(jnp.float32), (1, 0, 2)).reshape(T1 * B, LSTM_IN)
    his_flat = jnp.transpose(hisActFea.astype(jnp.float32), (1, 0, 2)).reshape(T2 * B, LSTM_IN)

    args = (baseFea.astype(jnp.float32), act_flat, his_flat,
            l1["wih0"], l1["whh0"], l1["b0"], l1["wih1"], l1["whh1"], l1["b1"],
            l2["wih0"], l2["whh0"], l2["b0"], l2["wih1"], l2["whh1"], l2["b1"],
            mlp["b0"], mlp["ba"], mlp["lng"], mlp["lnb"], mlp["bb"], mlp["bc"],
            mlp["wf"], mlp["bf"],
            mlp["w0b"], mlp["w0x1"], mlp["w0x2"], mlp["wa"], mlp["wb"], mlp["wc"])
    n_vmem, n_hbm = 23, 6

    # Advisory cost estimate so XLA schedules neighbors around this µs-scale call.
    flops = 2 * ((T1 + T2) * B * LSTM_IN * 4 * HP            # layer-0 input projections
                 + (T1 + T2) * B * 3 * HP * 4 * HP           # recurrent + layer-1 dots
                 + B * (IN_FEA * MAINFEA + 2 * HP * MAINFEA
                        + 3 * MAINFEA * MAINFEA + MAINFEA))  # MLP
    transcendentals = (T1 + T2) * B * 10 * HP + B * 5 * MAINFEA
    bytes_accessed = sum(int(a.size) * a.dtype.itemsize for a in args) + B * 4

    return pl.pallas_call(
        fused_kernel,
        out_shape=jax.ShapeDtypeStruct((B, 1), jnp.float32),
        in_specs=[_VMEM] * n_vmem + [_ANY] * n_hbm,
        out_specs=_VMEM,
        scratch_shapes=[
            pltpu.VMEM(mlp["w0b"].shape, jnp.bfloat16),
            pltpu.VMEM(mlp["w0x1"].shape, jnp.bfloat16),
            pltpu.VMEM(mlp["w0x2"].shape, jnp.bfloat16),
            pltpu.VMEM(mlp["wa"].shape, jnp.bfloat16),
            pltpu.VMEM(mlp["wb"].shape, jnp.bfloat16),
            pltpu.VMEM(mlp["wc"].shape, jnp.bfloat16),
            pltpu.SemaphoreType.DMA((6,)),
        ],
        cost_estimate=pl.CostEstimate(flops=flops, transcendentals=transcendentals,
                                      bytes_accessed=bytes_accessed),
    )(*args)


# ---------------------------------------------------------------------------
# Deterministic parameter construction (logical layout) + kernel packing
# ---------------------------------------------------------------------------
def _w(key, shape, fan_in):
    return jax.random.normal(key, shape, jnp.float32) / (fan_in ** 0.5)


def make_lstm_params(key, input_size, hidden_size):
    H = hidden_size
    ks = jax.random.split(key, 6)
    return dict(
        wih0=_w(ks[0], (input_size, 4 * H), input_size),
        whh0=_w(ks[1], (H, 4 * H), H),
        b0=0.1 * _w(ks[2], (1, 4 * H), H),
        wih1=_w(ks[3], (H, 4 * H), H),
        whh1=_w(ks[4], (H, 4 * H), H),
        b1=0.1 * _w(ks[5], (1, 4 * H), H),
    )


def make_mlp_params(key, in_dim, hidden):
    ks = jax.random.split(key, 5)
    zeros = lambda n: jnp.zeros((1, n), jnp.float32)
    return dict(
        w0=_w(ks[0], (in_dim, hidden), in_dim), b0=zeros(hidden),
        wa=_w(ks[1], (hidden, hidden), hidden), ba=zeros(hidden),
        lng=jnp.ones((1, hidden), jnp.float32), lnb=zeros(hidden),
        wb=_w(ks[2], (hidden, hidden), hidden), bb=zeros(hidden),
        wc=_w(ks[3], (hidden, hidden), hidden), bc=zeros(hidden),
        wf=_w(ks[4], (hidden, 1), hidden), bf=jnp.zeros((1, 1), jnp.float32),
    )


def _pad_gate_cols(w, H, Hp):
    """[K, 4H] -> [K, 4Hp] with each gate block starting at a 128-lane boundary."""
    K = w.shape[0]
    out = jnp.zeros((K, 4 * Hp), w.dtype)
    for k in range(4):
        out = out.at[:, k * Hp:k * Hp + H].set(w[:, k * H:(k + 1) * H])
    return out


def _pad_rows(w, Kp):
    return jnp.pad(w, ((0, Kp - w.shape[0]), (0, 0)))


def pack_lstm_params(p, H, Hp=HP):
    """Pad gates/rows to Hp=128; matmul weights stored bf16, biases stay f32."""
    bf16 = jnp.bfloat16
    return dict(
        wih0=_pad_gate_cols(p["wih0"], H, Hp).astype(bf16),                  # [I, 4Hp]
        whh0=_pad_rows(_pad_gate_cols(p["whh0"], H, Hp), Hp).astype(bf16),   # [Hp, 4Hp]
        b0=_pad_gate_cols(p["b0"], H, Hp),                                   # [1, 4Hp]
        wih1=_pad_rows(_pad_gate_cols(p["wih1"], H, Hp), Hp).astype(bf16),   # [Hp, 4Hp]
        whh1=_pad_rows(_pad_gate_cols(p["whh1"], H, Hp), Hp).astype(bf16),   # [Hp, 4Hp]
        b1=_pad_gate_cols(p["b1"], H, Hp),                                   # [1, 4Hp]
    )


def pack_mlp_params(p, in_fea=IN_FEA, h1=H1, h2=H2, hp=HP):
    """Split w0 into base/x1/x2 row blocks (x1/x2 padded to 128 rows), cast to bf16."""
    bf16 = jnp.bfloat16
    w0 = p["w0"]
    return dict(
        w0b=w0[:in_fea].astype(bf16),
        w0x1=_pad_rows(w0[in_fea:in_fea + h1], hp).astype(bf16),
        w0x2=_pad_rows(w0[in_fea + h1:in_fea + h1 + h2], hp).astype(bf16),
        b0=p["b0"],
        wa=p["wa"].astype(bf16), ba=p["ba"], lng=p["lng"], lnb=p["lnb"],
        wb=p["wb"].astype(bf16), bb=p["bb"],
        wc=p["wc"].astype(bf16), bc=p["bc"],
        wf=p["wf"].T,              # [1, hidden], f32 (VPU reduce path)
        bf=p["bf"],
    )


# ---------------------------------------------------------------------------
# Pure-JAX reference (unpadded weights; f32 HIGHEST LSTM, bf16 MLP matmuls)
# ---------------------------------------------------------------------------
def _dot32(a, b):
    return jnp.dot(a, b, precision=jax.lax.Precision.HIGHEST)


def _bdot(a, w):
    return jnp.dot(a.astype(jnp.bfloat16), w.astype(jnp.bfloat16),
                   preferred_element_type=jnp.float32)


def _ref_lstm(x, p):
    B, T, _ = x.shape
    H = p["whh0"].shape[0]

    def cell(xt, h, c, wih, whh, b):
        g = _dot32(xt, wih) + _dot32(h, whh) + b
        i = jax.nn.sigmoid(g[:, 0 * H:1 * H])
        f = jax.nn.sigmoid(g[:, 1 * H:2 * H])
        gg = jnp.tanh(g[:, 2 * H:3 * H])
        o = jax.nn.sigmoid(g[:, 3 * H:4 * H])
        c = f * c + i * gg
        return o * jnp.tanh(c), c

    h0 = c0 = h1 = c1 = jnp.zeros((B, H), jnp.float32)
    for t in range(T):
        h0, c0 = cell(x[:, t, :], h0, c0, p["wih0"], p["whh0"], p["b0"])
        h1, c1 = cell(h0, h1, c1, p["wih1"], p["whh1"], p["b1"])
    return h1


def _ref_forward(baseFea, actFea, hisActFea, l1, l2, mp):
    x1 = _ref_lstm(actFea.astype(jnp.float32), l1)
    x2 = _ref_lstm(hisActFea.astype(jnp.float32), l2)
    x = jnp.concatenate([baseFea.astype(jnp.float32), x1, x2], axis=1)
    h = jnp.tanh(_bdot(x, mp["w0"]) + mp["b0"])
    identity = h
    t1 = _bdot(h, mp["wa"]) + mp["ba"]
    mu = jnp.mean(t1, axis=-1, keepdims=True)
    var = jnp.mean((t1 - mu) ** 2, axis=-1, keepdims=True)
    t1 = jnp.tanh((t1 - mu) / jnp.sqrt(var + 1e-5) * mp["lng"] + mp["lnb"])
    out = jnp.tanh(_bdot(t1, mp["wb"]) + mp["bb"] + identity)
    out1 = _bdot(out, mp["wc"]) + mp["bc"]
    out1 = jnp.tanh(out1 + identity + out)
    return _dot32(out1, mp["wf"]) + mp["bf"]


# ---------------------------------------------------------------------------
if __name__ == "__main__":
    key = jax.random.PRNGKey(0)
    k_base, k_act, k_his, k_l1, k_l2, k_mlp = jax.random.split(key, 6)

    B, T1, T2 = 2, 8, 6
    baseFea = jax.random.normal(k_base, (B, IN_FEA), jnp.float32)
    actFea = jax.random.normal(k_act, (B, T1, LSTM_IN), jnp.float32)
    hisActFea = jax.random.normal(k_his, (B, T2, LSTM_IN), jnp.float32)

    lstm1 = make_lstm_params(k_l1, LSTM_IN, H1)
    lstm2 = make_lstm_params(k_l2, LSTM_IN, H2)
    mlp = make_mlp_params(k_mlp, IN_FEA + H1 + H2, MAINFEA)

    l1_k = pack_lstm_params(lstm1, H1)
    l2_k = pack_lstm_params(lstm2, H2)
    mlp_k = pack_mlp_params(mlp)

    y = agent_cri_net_forward(baseFea, actFea, hisActFea, l1_k, l2_k, mlp_k)
    y = jax.block_until_ready(y)
    assert y.shape == (B, 1) and y.dtype == jnp.float32

    # Gap vs the f32-HIGHEST LSTM reference is dominated by the intended bf16 MXU path.
    y_ref = _ref_forward(baseFea, actFea, hisActFea, lstm1, lstm2, mlp)
    assert jnp.allclose(y, y_ref, atol=3e-2, rtol=3e-2), (y, y_ref)

    print("KERNEL_OK")
</pallas_src>

<mosaic_0001>
module attributes {stable_mosaic.version = 11 : i64} {
  func.func @fused_kernel(%arg0: memref<2x357xf32, #tpu.memory_space<vmem>>, %arg1: memref<16x59xf32, #tpu.memory_space<vmem>>, %arg2: memref<12x59xf32, #tpu.memory_space<vmem>>, %arg3: memref<59x512xbf16, #tpu.memory_space<vmem>>, %arg4: memref<128x512xbf16, #tpu.memory_space<vmem>>, %arg5: memref<1x512xf32, #tpu.memory_space<vmem>>, %arg6: memref<128x512xbf16, #tpu.memory_space<vmem>>, %arg7: memref<128x512xbf16, #tpu.memory_space<vmem>>, %arg8: memref<1x512xf32, #tpu.memory_space<vmem>>, %arg9: memref<59x512xbf16, #tpu.memory_space<vmem>>, %arg10: memref<128x512xbf16, #tpu.memory_space<vmem>>, %arg11: memref<1x512xf32, #tpu.memory_space<vmem>>, %arg12: memref<128x512xbf16, #tpu.memory_space<vmem>>, %arg13: memref<128x512xbf16, #tpu.memory_space<vmem>>, %arg14: memref<1x512xf32, #tpu.memory_space<vmem>>, %arg15: memref<1x512xf32, #tpu.memory_space<vmem>>, %arg16: memref<1x512xf32, #tpu.memory_space<vmem>>, %arg17: memref<1x512xf32, #tpu.memory_space<vmem>>, %arg18: memref<1x512xf32, #tpu.memory_space<vmem>>, %arg19: memref<1x512xf32, #tpu.memory_space<vmem>>, %arg20: memref<1x512xf32, #tpu.memory_space<vmem>>, %arg21: memref<1x512xf32, #tpu.memory_space<vmem>>, %arg22: memref<1x1xf32, #tpu.memory_space<vmem>>, %arg23: memref<357x512xbf16, #tpu.memory_space<any>>, %arg24: memref<128x512xbf16, #tpu.memory_space<any>>, %arg25: memref<128x512xbf16, #tpu.memory_space<any>>, %arg26: memref<512x512xbf16, #tpu.memory_space<any>>, %arg27: memref<512x512xbf16, #tpu.memory_space<any>>, %arg28: memref<512x512xbf16, #tpu.memory_space<any>>, %arg29: memref<2x1xf32, #tpu.memory_space<vmem>>, %arg30: memref<357x512xbf16, #tpu.memory_space<vmem>>, %arg31: memref<128x512xbf16, #tpu.memory_space<vmem>>, %arg32: memref<128x512xbf16, #tpu.memory_space<vmem>>, %arg33: memref<512x512xbf16, #tpu.memory_space<vmem>>, %arg34: memref<512x512xbf16, #tpu.memory_space<vmem>>, %arg35: memref<512x512xbf16, #tpu.memory_space<vmem>>, %arg36: memref<6x!tpu.dma_semaphore, #tpu.memory_space<semaphore_mem>>) attributes {dimension_semantics = [], scalar_prefetch = 0 : i64, scratch_operands = 7 : i64, tpu.core_type = #tpu.core_type<tc>} {
    %c0_i32 = arith.constant 0 : i32
    %0 = tpu.memref_slice %arg36[%c0_i32] : memref<6x!tpu.dma_semaphore, #tpu.memory_space<semaphore_mem>> -> memref<1x!tpu.dma_semaphore, #tpu.memory_space<semaphore_mem>>
    %1 = tpu.memref_squeeze %0 : memref<1x!tpu.dma_semaphore, #tpu.memory_space<semaphore_mem>> -> memref<!tpu.dma_semaphore, #tpu.memory_space<semaphore_mem>>
    tpu.enqueue_dma source(%arg23 : memref<357x512xbf16, #tpu.memory_space<any>>) target(%arg30 : memref<357x512xbf16, #tpu.memory_space<vmem>>) target_semaphore(%1 : memref<!tpu.dma_semaphore, #tpu.memory_space<semaphore_mem>>)
    %c1_i32 = arith.constant 1 : i32
    %2 = tpu.memref_slice %arg36[%c1_i32] : memref<6x!tpu.dma_semaphore, #tpu.memory_space<semaphore_mem>> -> memref<1x!tpu.dma_semaphore, #tpu.memory_space<semaphore_mem>>
    %3 = tpu.memref_squeeze %2 : memref<1x!tpu.dma_semaphore, #tpu.memory_space<semaphore_mem>> -> memref<!tpu.dma_semaphore, #tpu.memory_space<semaphore_mem>>
    tpu.enqueue_dma source(%arg24 : memref<128x512xbf16, #tpu.memory_space<any>>) target(%arg31 : memref<128x512xbf16, #tpu.memory_space<vmem>>) target_semaphore(%3 : memref<!tpu.dma_semaphore, #tpu.memory_space<semaphore_mem>>)
    %c2_i32 = arith.constant 2 : i32
    %4 = tpu.memref_slice %arg36[%c2_i32] : memref<6x!tpu.dma_semaphore, #tpu.memory_space<semaphore_mem>> -> memref<1x!tpu.dma_semaphore, #tpu.memory_space<semaphore_mem>>
    %5 = tpu.memref_squeeze %4 : memref<1x!tpu.dma_semaphore, #tpu.memory_space<semaphore_mem>> -> memref<!tpu.dma_semaphore, #tpu.memory_space<semaphore_mem>>
    tpu.enqueue_dma source(%arg25 : memref<128x512xbf16, #tpu.memory_space<any>>) target(%arg32 : memref<128x512xbf16, #tpu.memory_space<vmem>>) target_semaphore(%5 : memref<!tpu.dma_semaphore, #tpu.memory_space<semaphore_mem>>)
    %c3_i32 = arith.constant 3 : i32
    %6 = tpu.memref_slice %arg36[%c3_i32] : memref<6x!tpu.dma_semaphore, #tpu.memory_space<semaphore_mem>> -> memref<1x!tpu.dma_semaphore, #tpu.memory_space<semaphore_mem>>
    %7 = tpu.memref_squeeze %6 : memref<1x!tpu.dma_semaphore, #tpu.memory_space<semaphore_mem>> -> memref<!tpu.dma_semaphore, #tpu.memory_space<semaphore_mem>>
    tpu.enqueue_dma source(%arg26 : memref<512x512xbf16, #tpu.memory_space<any>>) target(%arg33 : memref<512x512xbf16, #tpu.memory_space<vmem>>) target_semaphore(%7 : memref<!tpu.dma_semaphore, #tpu.memory_space<semaphore_mem>>)
    %c4_i32 = arith.constant 4 : i32
    %8 = tpu.memref_slice %arg36[%c4_i32] : memref<6x!tpu.dma_semaphore, #tpu.memory_space<semaphore_mem>> -> memref<1x!tpu.dma_semaphore, #tpu.memory_space<semaphore_mem>>
    %9 = tpu.memref_squeeze %8 : memref<1x!tpu.dma_semaphore, #tpu.memory_space<semaphore_mem>> -> memref<!tpu.dma_semaphore, #tpu.memory_space<semaphore_mem>>
    tpu.enqueue_dma source(%arg27 : memref<512x512xbf16, #tpu.memory_space<any>>) target(%arg34 : memref<512x512xbf16, #tpu.memory_space<vmem>>) target_semaphore(%9 : memref<!tpu.dma_semaphore, #tpu.memory_space<semaphore_mem>>)
    %c5_i32 = arith.constant 5 : i32
    %10 = tpu.memref_slice %arg36[%c5_i32] : memref<6x!tpu.dma_semaphore, #tpu.memory_space<semaphore_mem>> -> memref<1x!tpu.dma_semaphore, #tpu.memory_space<semaphore_mem>>
    %11 = tpu.memref_squeeze %10 : memref<1x!tpu.dma_semaphore, #tpu.memory_space<semaphore_mem>> -> memref<!tpu.dma_semaphore, #tpu.memory_space<semaphore_mem>>
    tpu.enqueue_dma source(%arg28 : memref<512x512xbf16, #tpu.memory_space<any>>) target(%arg35 : memref<512x512xbf16, #tpu.memory_space<vmem>>) target_semaphore(%11 : memref<!tpu.dma_semaphore, #tpu.memory_space<semaphore_mem>>)
    %c0 = arith.constant 0 : index
    %c0_0 = arith.constant 0 : index
    %12 = vector.load %arg1[%c0, %c0_0] : memref<16x59xf32, #tpu.memory_space<vmem>>, vector<16x59xf32>
    %13 = arith.truncf %12 : vector<16x59xf32> to vector<16x59xbf16>
    %c0_1 = arith.constant 0 : index
    %c0_2 = arith.constant 0 : index
    %14 = vector.load %arg3[%c0_1, %c0_2] : memref<59x512xbf16, #tpu.memory_space<vmem>>, vector<59x512xbf16>
    %cst = arith.constant dense<0.000000e+00> : vector<16x512xf32>
    %15 = tpu.matmul %13, %14, %cst {dimension_numbers = #tpu.dot_dimension_numbers<[1], [0], [0], [1], [0, 0, 1, 1], [], []>} : vector<16x59xbf16>, vector<59x512xbf16>, vector<16x512xf32> -> vector<16x512xf32>
    %c0_3 = arith.constant 0 : index
    %c0_4 = arith.constant 0 : index
    %16 = vector.load %arg5[%c0_3, %c0_4] : memref<1x512xf32, #tpu.memory_space<vmem>>, vector<1x512xf32>
    %17 = vector.broadcast %16 : vector<1x512xf32> to vector<16x512xf32>
    %18 = arith.addf %15, %17 : vector<16x512xf32>
    %c0_5 = arith.constant 0 : index
    %c0_6 = arith.constant 0 : index
    %19 = vector.load %arg8[%c0_5, %c0_6] : memref<1x512xf32, #tpu.memory_space<vmem>>, vector<1x512xf32>
    %20 = vector.shape_cast %19 : vector<1x512xf32> to vector<1x512xf32>
    %21 = vector.broadcast %20 : vector<1x512xf32> to vector<2x512xf32>
    %cst_7 = arith.constant 0.000000e+00 : f32
    %22 = vector.broadcast %cst_7 : f32 to vector<2x128xf32>
    %23 = vector.extract_strided_slice %18 {offsets = [0, 0], sizes = [2, 512], strides = [1, 1]} : vector<16x512xf32> to vector<2x512xf32>
    %24 = arith.truncf %22 : vector<2x128xf32> to vector<2x128xbf16>
    %c0_8 = arith.constant 0 : index
    %c0_9 = arith.constant 0 : index
    %25 = vector.load %arg4[%c0_8, %c0_9] : memref<128x512xbf16, #tpu.memory_space<vmem>>, vector<128x512xbf16>
    %cst_10 = arith.constant dense<0.000000e+00> : vector<2x512xf32>
    %26 = tpu.matmul %24, %25, %cst_10 {dimension_numbers = #tpu.dot_dimension_numbers<[1], [0], [0], [1], [0, 0, 1, 1], [], []>} : vector<2x128xbf16>, vector<128x512xbf16>, vector<2x512xf32> -> vector<2x512xf32>
    %27 = arith.addf %23, %26 : vector<2x512xf32>
    %28 = vector.extract_strided_slice %27 {offsets = [0, 0], sizes = [2, 128], strides = [1, 1]} : vector<2x512xf32> to vector<2x128xf32>
    %29 = arith.negf %28 : vector<2x128xf32>
    %30 = math.exp %29 : vector<2x128xf32>
    %cst_11 = arith.constant 1.000000e+00 : f32
    %31 = vector.broadcast %cst_11 : f32 to vector<2x128xf32>
    %32 = arith.addf %31, %30 : vector<2x128xf32>
    %33 = arith.divf %31, %32 : vector<2x128xf32>
    %34 = vector.extract_strided_slice %27 {offsets = [0, 128], sizes = [2, 128], strides = [1, 1]} : vector<2x512xf32> to vector<2x128xf32>
    %35 = arith.negf %34 : vector<2x128xf32>
    %36 = math.exp %35 : vector<2x128xf32>
    %cst_12 = arith.constant 1.000000e+00 : f32
    %37 = vector.broadcast %cst_12 : f32 to vector<2x128xf32>
    %38 = arith.addf %37, %36 : vector<2x128xf32>
    %39 = arith.divf %37, %38 : vector<2x128xf32>
    %40 = vector.extract_strided_slice %27 {offsets = [0, 256], sizes = [2, 128], strides = [1, 1]} : vector<2x512xf32> to vector<2x128xf32>
    %41 = math.tanh %40 : vector<2x128xf32>
    %42 = vector.extract_strided_slice %27 {offsets = [0, 384], sizes = [2, 128], strides = [1, 1]} : vector<2x512xf32> to vector<2x128xf32>
    %43 = arith.negf %42 : vector<2x128xf32>
    %44 = math.exp %43 : vector<2x128xf32>
    %cst_13 = arith.constant 1.000000e+00 : f32
    %45 = vector.broadcast %cst_13 : f32 to vector<2x128xf32>
    %46 = arith.addf %45, %44 : vector<2x128xf32>
    %47 = arith.divf %45, %46 : vector<2x128xf32>
    %48 = arith.mulf %39, %22 : vector<2x128xf32>
    %49 = arith.mulf %33, %41 : vector<2x128xf32>
    %50 = arith.addf %48, %49 : vector<2x128xf32>
    %51 = math.tanh %50 : vector<2x128xf32>
    %52 = arith.mulf %47, %51 : vector<2x128xf32>
    %53 = arith.truncf %52 : vector<2x128xf32> to vector<2x128xbf16>
    %c0_14 = arith.constant 0 : index
    %c0_15 = arith.constant 0 : index
    %54 = vector.load %arg6[%c0_14, %c0_15] : memref<128x512xbf16, #tpu.memory_space<vmem>>, vector<128x512xbf16>
    %cst_16 = arith.constant dense<0.000000e+00> : vector<2x512xf32>
    %55 = tpu.matmul %53, %54, %cst_16 {dimension_numbers = #tpu.dot_dimension_numbers<[1], [0], [0], [1], [0, 0, 1, 1], [], []>} : vector<2x128xbf16>, vector<128x512xbf16>, vector<2x512xf32> -> vector<2x512xf32>
    %56 = arith.truncf %22 : vector<2x128xf32> to vector<2x128xbf16>
    %c0_17 = arith.constant 0 : index
    %c0_18 = arith.constant 0 : index
    %57 = vector.load %arg7[%c0_17, %c0_18] : memref<128x512xbf16, #tpu.memory_space<vmem>>, vector<128x512xbf16>
    %cst_19 = arith.constant dense<0.000000e+00> : vector<2x512xf32>
    %58 = tpu.matmul %56, %57, %cst_19 {dimension_numbers = #tpu.dot_dimension_numbers<[1], [0], [0], [1], [0, 0, 1, 1], [], []>} : vector<2x128xbf16>, vector<128x512xbf16>, vector<2x512xf32> -> vector<2x512xf32>
    %59 = arith.addf %55, %58 : vector<2x512xf32>
    %60 = arith.addf %59, %21 : vector<2x512xf32>
    %61 = vector.extract_strided_slice %60 {offsets = [0, 0], sizes = [2, 128], strides = [1, 1]} : vector<2x512xf32> to vector<2x128xf32>
    %62 = arith.negf %61 : vector<2x128xf32>
    %63 = math.exp %62 : vector<2x128xf32>
    %cst_20 = arith.constant 1.000000e+00 : f32
    %64 = vector.broadcast %cst_20 : f32 to vector<2x128xf32>
    %65 = arith.addf %64, %63 : vector<2x128xf32>
    %66 = arith.divf %64, %65 : vector<2x128xf32>
    %67 = vector.extract_strided_slice %60 {offsets = [0, 128], sizes = [2, 128], strides = [1, 1]} : vector<2x512xf32> to vector<2x128xf32>
    %68 = arith.negf %67 : vector<2x128xf32>
    %69 = math.exp %68 : vector<2x128xf32>
    %cst_21 = arith.constant 1.000000e+00 : f32
    %70 = vector.broadcast %cst_21 : f32 to vector<2x128xf32>
    %71 = arith.addf %70, %69 : vector<2x128xf32>
    %72 = arith.divf %70, %71 : vector<2x128xf32>
    %73 = vector.extract_strided_slice %60 {offsets = [0, 256], sizes = [2, 128], strides = [1, 1]} : vector<2x512xf32> to vector<2x128xf32>
    %74 = math.tanh %73 : vector<2x128xf32>
    %75 = vector.extract_strided_slice %60 {offsets = [0, 384], sizes = [2, 128], strides = [1, 1]} : vector<2x512xf32> to vector<2x128xf32>
    %76 = arith.negf %75 : vector<2x128xf32>
    %77 = math.exp %76 : vector<2x128xf32>
    %cst_22 = arith.constant 1.000000e+00 : f32
    %78 = vector.broadcast %cst_22 : f32 to vector<2x128xf32>
    %79 = arith.addf %78, %77 : vector<2x128xf32>
    %80 = arith.divf %78, %79 : vector<2x128xf32>
    %81 = arith.mulf %72, %22 : vector<2x128xf32>
    %82 = arith.mulf %66, %74 : vector<2x128xf32>
    %83 = arith.addf %81, %82 : vector<2x128xf32>
    %84 = math.tanh %83 : vector<2x128xf32>
    %85 = arith.mulf %80, %84 : vector<2x128xf32>
    %86 = vector.extract_strided_slice %18 {offsets = [2, 0], sizes = [2, 512], strides = [1, 1]} : vector<16x512xf32> to vector<2x512xf32>
    %87 = arith.truncf %52 : vector<2x128xf32> to vector<2x128xbf16>
    %c0_23 = arith.constant 0 : index
    %c0_24 = arith.constant 0 : index
    %88 = vector.load %arg4[%c0_23, %c0_24] : memref<128x512xbf16, #tpu.memory_space<vmem>>, vector<128x512xbf16>
    %cst_25 = arith.constant dense<0.000000e+00> : vector<2x512xf32>
    %89 = tpu.matmul %87, %88, %cst_25 {dimension_numbers = #tpu.dot_dimension_numbers<[1], [0], [0], [1], [0, 0, 1, 1], [], []>} : vector<2x128xbf16>, vector<128x512xbf16>, vector<2x512xf32> -> vector<2x512xf32>
    %90 = arith.addf %86, %89 : vector<2x512xf32>
    %91 = vector.extract_strided_slice %90 {offsets = [0, 0], sizes = [2, 128], strides = [1, 1]} : vector<2x512xf32> to vector<2x128xf32>
    %92 = arith.negf %91 : vector<2x128xf32>
    %93 = math.exp %92 : vector<2x128xf32>
    %cst_26 = arith.constant 1.000000e+00 : f32
    %94 = vector.broadcast %cst_26 : f32 to vector<2x128xf32>
    %95 = arith.addf %94, %93 : vector<2x128xf32>
    %96 = arith.divf %94, %95 : vector<2x128xf32>
    %97 = vector.extract_strided_slice %90 {offsets = [0, 128], sizes = [2, 128], strides = [1, 1]} : vector<2x512xf32> to vector<2x128xf32>
    %98 = arith.negf %97 : vector<2x128xf32>
    %99 = math.exp %98 : vector<2x128xf32>
    %cst_27 = arith.constant 1.000000e+00 : f32
    %100 = vector.broadcast %cst_27 : f32 to vector<2x128xf32>
    %101 = arith.addf %100, %99 : vector<2x128xf32>
    %102 = arith.divf %100, %101 : vector<2x128xf32>
    %103 = vector.extract_strided_slice %90 {offsets = [0, 256], sizes = [2, 128], strides = [1, 1]} : vector<2x512xf32> to vector<2x128xf32>
    %104 = math.tanh %103 : vector<2x128xf32>
    %105 = vector.extract_strided_slice %90 {offsets = [0, 384], sizes = [2, 128], strides = [1, 1]} : vector<2x512xf32> to vector<2x128xf32>
    %106 = arith.negf %105 : vector<2x128xf32>
    %107 = math.exp %106 : vector<2x128xf32>
    %cst_28 = arith.constant 1.000000e+00 : f32
    %108 = vector.broadcast %cst_28 : f32 to vector<2x128xf32>
    %109 = arith.addf %108, %107 : vector<2x128xf32>
    %110 = arith.divf %108, %109 : vector<2x128xf32>
    %111 = arith.mulf %102, %50 : vector<2x128xf32>
    %112 = arith.mulf %96, %104 : vector<2x128xf32>
    %113 = arith.addf %111, %112 : vector<2x128xf32>
    %114 = math.tanh %113 : vector<2x128xf32>
    %115 = arith.mulf %110, %114 : vector<2x128xf32>
    %116 = arith.truncf %115 : vector<2x128xf32> to vector<2x128xbf16>
    %c0_29 = arith.constant 0 : index
    %c0_30 = arith.constant 0 : index
    %117 = vector.load %arg6[%c0_29, %c0_30] : memref<128x512xbf16, #tpu.memory_space<vmem>>, vector<128x512xbf16>
    %cst_31 = arith.constant dense<0.000000e+00> : vector<2x512xf32>
    %118 = tpu.matmul %116, %117, %cst_31 {dimension_numbers = #tpu.dot_dimension_numbers<[1], [0], [0], [1], [0, 0, 1, 1], [], []>} : vector<2x128xbf16>, vector<128x512xbf16>, vector<2x512xf32> -> vector<2x512xf32>
    %119 = arith.truncf %85 : vector<2x128xf32> to vector<2x128xbf16>
    %c0_32 = arith.constant 0 : index
    %c0_33 = arith.constant 0 : index
    %120 = vector.load %arg7[%c0_32, %c0_33] : memref<128x512xbf16, #tpu.memory_space<vmem>>, vector<128x512xbf16>
    %cst_34 = arith.constant dense<0.000000e+00> : vector<2x512xf32>
    %121 = tpu.matmul %119, %120, %cst_34 {dimension_numbers = #tpu.dot_dimension_numbers<[1], [0], [0], [1], [0, 0, 1, 1], [], []>} : vector<2x128xbf16>, vector<128x512xbf16>, vector<2x512xf32> -> vector<2x512xf32>
    %122 = arith.addf %118, %121 : vector<2x512xf32>
    %123 = arith.addf %122, %21 : vector<2x512xf32>
    %124 = vector.extract_strided_slice %123 {offsets = [0, 0], sizes = [2, 128], strides = [1, 1]} : vector<2x512xf32> to vector<2x128xf32>
    %125 = arith.negf %124 : vector<2x128xf32>
    %126 = math.exp %125 : vector<2x128xf32>
    %cst_35 = arith.constant 1.000000e+00 : f32
    %127 = vector.broadcast %cst_35 : f32 to vector<2x128xf32>
    %128 = arith.addf %127, %126 : vector<2x128xf32>
    %129 = arith.divf %127, %128 : vector<2x128xf32>
    %130 = vector.extract_strided_slice %123 {offsets = [0, 128], sizes = [2, 128], strides = [1, 1]} : vector<2x512xf32> to vector<2x128xf32>
    %131 = arith.negf %130 : vector<2x128xf32>
    %132 = math.exp %131 : vector<2x128xf32>
    %cst_36 = arith.constant 1.000000e+00 : f32
    %133 = vector.broadcast %cst_36 : f32 to vector<2x128xf32>
    %134 = arith.addf %133, %132 : vector<2x128xf32>
    %135 = arith.divf %133, %134 : vector<2x128xf32>
    %136 = vector.extract_strided_slice %123 {offsets = [0, 256], sizes = [2, 128], strides = [1, 1]} : vector<2x512xf32> to vector<2x128xf32>
    %137 = math.tanh %136 : vector<2x128xf32>
    %138 = vector.extract_strided_slice %123 {offsets = [0, 384], sizes = [2, 128], strides = [1, 1]} : vector<2x512xf32> to vector<2x128xf32>
    %139 = arith.negf %138 : vector<2x128xf32>
    %140 = math.exp %139 : vector<2x128xf32>
    %cst_37 = arith.constant 1.000000e+00 : f32
    %141 = vector.broadcast %cst_37 : f32 to vector<2x128xf32>
    %142 = arith.addf %141, %140 : vector<2x128xf32>
    %143 = arith.divf %141, %142 : vector<2x128xf32>
    %144 = arith.mulf %135, %83 : vector<2x128xf32>
    %145 = arith.mulf %129, %137 : vector<2x128xf32>
    %146 = arith.addf %144, %145 : vector<2x128xf32>
    %147 = math.tanh %146 : vector<2x128xf32>
    %148 = arith.mulf %143, %147 : vector<2x128xf32>
    %149 = vector.extract_strided_slice %18 {offsets = [4, 0], sizes = [2, 512], strides = [1, 1]} : vector<16x512xf32> to vector<2x512xf32>
    %150 = arith.truncf %115 : vector<2x128xf32> to vector<2x128xbf16>
    %c0_38 = arith.constant 0 : index
    %c0_39 = arith.constant 0 : index
    %151 = vector.load %arg4[%c0_38, %c0_39] : memref<128x512xbf16, #tpu.memory_space<vmem>>, vector<128x512xbf16>
    %cst_40 = arith.constant dense<0.000000e+00> : vector<2x512xf32>
    %152 = tpu.matmul %150, %151, %cst_40 {dimension_numbers = #tpu.dot_dimension_numbers<[1], [0], [0], [1], [0, 0, 1, 1], [], []>} : vector<2x128xbf16>, vector<128x512xbf16>, vector<2x512xf32> -> vector<2x512xf32>
    %153 = arith.addf %149, %152 : vector<2x512xf32>
    %154 = vector.extract_strided_slice %153 {offsets = [0, 0], sizes = [2, 128], strides = [1, 1]} : vector<2x512xf32> to vector<2x128xf32>
    %155 = arith.negf %154 : vector<2x128xf32>
    %156 = math.exp %155 : vector<2x128xf32>
    %cst_41 = arith.constant 1.000000e+00 : f32
    %157 = vector.broadcast %cst_41 : f32 to vector<2x128xf32>
    %158 = arith.addf %157, %156 : vector<2x128xf32>
    %159 = arith.divf %157, %158 : vector<2x128xf32>
    %160 = vector.extract_strided_slice %153 {offsets = [0, 128], sizes = [2, 128], strides = [1, 1]} : vector<2x512xf32> to vector<2x128xf32>
    %161 = arith.negf %160 : vector<2x128xf32>
    %162 = math.exp %161 : vector<2x128xf32>
    %cst_42 = arith.constant 1.000000e+00 : f32
    %163 = vector.broadcast %cst_42 : f32 to vector<2x128xf32>
    %164 = arith.addf %163, %162 : vector<2x128xf32>
    %165 = arith.divf %163, %164 : vector<2x128xf32>
    %166 = vector.extract_strided_slice %153 {offsets = [0, 256], sizes = [2, 128], strides = [1, 1]} : vector<2x512xf32> to vector<2x128xf32>
    %167 = math.tanh %166 : vector<2x128xf32>
    %168 = vector.extract_strided_slice %153 {offsets = [0, 384], sizes = [2, 128], strides = [1, 1]} : vector<2x512xf32> to vector<2x128xf32>
    %169 = arith.negf %168 : vector<2x128xf32>
    %170 = math.exp %169 : vector<2x128xf32>
    %cst_43 = arith.constant 1.000000e+00 : f32
    %171 = vector.broadcast %cst_43 : f32 to vector<2x128xf32>
    %172 = arith.addf %171, %170 : vector<2x128xf32>
    %173 = arith.divf %171, %172 : vector<2x128xf32>
    %174 = arith.mulf %165, %113 : vector<2x128xf32>
    %175 = arith.mulf %159, %167 : vector<2x128xf32>
    %176 = arith.addf %174, %175 : vector<2x128xf32>
    %177 = math.tanh %176 : vector<2x128xf32>
    %178 = arith.mulf %173, %177 : vector<2x128xf32>
    %179 = arith.truncf %178 : vector<2x128xf32> to vector<2x128xbf16>
    %c0_44 = arith.constant 0 : index
    %c0_45 = arith.constant 0 : index
    %180 = vector.load %arg6[%c0_44, %c0_45] : memref<128x512xbf16, #tpu.memory_space<vmem>>, vector<128x512xbf16>
    %cst_46 = arith.constant dense<0.000000e+00> : vector<2x512xf32>
    %181 = tpu.matmul %179, %180, %cst_46 {dimension_numbers = #tpu.dot_dimension_numbers<[1], [0], [0], [1], [0, 0, 1, 1], [], []>} : vector<2x128xbf16>, vector<128x512xbf16>, vector<2x512xf32> -> vector<2x512xf32>
    %182 = arith.truncf %148 : vector<2x128xf32> to vector<2x128xbf16>
    %c0_47 = arith.constant 0 : index
    %c0_48 = arith.constant 0 : index
    %183 = vector.load %arg7[%c0_47, %c0_48] : memref<128x512xbf16, #tpu.memory_space<vmem>>, vector<128x512xbf16>
    %cst_49 = arith.constant dense<0.000000e+00> : vector<2x512xf32>
    %184 = tpu.matmul %182, %183, %cst_49 {dimension_numbers = #tpu.dot_dimension_numbers<[1], [0], [0], [1], [0, 0, 1, 1], [], []>} : vector<2x128xbf16>, vector<128x512xbf16>, vector<2x512xf32> -> vector<2x512xf32>
    %185 = arith.addf %181, %184 : vector<2x512xf32>
    %186 = arith.addf %185, %21 : vector<2x512xf32>
    %187 = vector.extract_strided_slice %186 {offsets = [0, 0], sizes = [2, 128], strides = [1, 1]} : vector<2x512xf32> to vector<2x128xf32>
    %188 = arith.negf %187 : vector<2x128xf32>
    %189 = math.exp %188 : vector<2x128xf32>
    %cst_50 = arith.constant 1.000000e+00 : f32
    %190 = vector.broadcast %cst_50 : f32 to vector<2x128xf32>
    %191 = arith.addf %190, %189 : vector<2x128xf32>
    %192 = arith.divf %190, %191 : vector<2x128xf32>
    %193 = vector.extract_strided_slice %186 {offsets = [0, 128], sizes = [2, 128], strides = [1, 1]} : vector<2x512xf32> to vector<2x128xf32>
    %194 = arith.negf %193 : vector<2x128xf32>
    %195 = math.exp %194 : vector<2x128xf32>
    %cst_51 = arith.constant 1.000000e+00 : f32
    %196 = vector.broadcast %cst_51 : f32 to vector<2x128xf32>
    %197 = arith.addf %196, %195 : vector<2x128xf32>
    %198 = arith.divf %196, %197 : vector<2x128xf32>
    %199 = vector.extract_strided_slice %186 {offsets = [0, 256], sizes = [2, 128], strides = [1, 1]} : vector<2x512xf32> to vector<2x128xf32>
    %200 = math.tanh %199 : vector<2x128xf32>
    %201 = vector.extract_strided_slice %186 {offsets = [0, 384], sizes = [2, 128], strides = [1, 1]} : vector<2x512xf32> to vector<2x128xf32>
    %202 = arith.negf %201 : vector<2x128xf32>
    %203 = math.exp %202 : vector<2x128xf32>
    %cst_52 = arith.constant 1.000000e+00 : f32
    %204 = vector.broadcast %cst_52 : f32 to vector<2x128xf32>
    %205 = arith.addf %204, %203 : vector<2x128xf32>
    %206 = arith.divf %204, %205 : vector<2x128xf32>
    %207 = arith.mulf %198, %146 : vector<2x128xf32>
    %208 = arith.mulf %192, %200 : vector<2x128xf32>
    %209 = arith.addf %207, %208 : vector<2x128xf32>
    %210 = math.tanh %209 : vector<2x128xf32>
    %211 = arith.mulf %206, %210 : vector<2x128xf32>
    %212 = vector.extract_strided_slice %18 {offsets = [6, 0], sizes = [2, 512], strides = [1, 1]} : vector<16x512xf32> to vector<2x512xf32>
    %213 = arith.truncf %178 : vector<2x128xf32> to vector<2x128xbf16>
    %c0_53 = arith.constant 0 : index
    %c0_54 = arith.constant 0 : index
    %214 = vector.load %arg4[%c0_53, %c0_54] : memref<128x512xbf16, #tpu.memory_space<vmem>>, vector<128x512xbf16>
    %cst_55 = arith.constant dense<0.000000e+00> : vector<2x512xf32>
    %215 = tpu.matmul %213, %214, %cst_55 {dimension_numbers = #tpu.dot_dimension_numbers<[1], [0], [0], [1], [0, 0, 1, 1], [], []>} : vector<2x128xbf16>, vector<128x512xbf16>, vector<2x512xf32> -> vector<2x512xf32>
    %216 = arith.addf %212, %215 : vector<2x512xf32>
    %217 = vector.extract_strided_slice %216 {offsets = [0, 0], sizes = [2, 128], strides = [1, 1]} : vector<2x512xf32> to vector<2x128xf32>
    %218 = arith.negf %217 : vector<2x128xf32>
    %219 = math.exp %218 : vector<2x128xf32>
    %cst_56 = arith.constant 1.000000e+00 : f32
    %220 = vector.broadcast %cst_56 : f32 to vector<2x128xf32>
    %221 = arith.addf %220, %219 : vector<2x128xf32>
    %222 = arith.divf %220, %221 : vector<2x128xf32>
    %223 = vector.extract_strided_slice %216 {offsets = [0, 128], sizes = [2, 128], strides = [1, 1]} : vector<2x512xf32> to vector<2x128xf32>
    %224 = arith.negf %223 : vector<2x128xf32>
    %225 = math.exp %224 : vector<2x128xf32>
    %cst_57 = arith.constant 1.000000e+00 : f32
    %226 = vector.broadcast %cst_57 : f32 to vector<2x128xf32>
    %227 = arith.addf %226, %225 : vector<2x128xf32>
    %228 = arith.divf %226, %227 : vector<2x128xf32>
    %229 = vector.extract_strided_slice %216 {offsets = [0, 256], sizes = [2, 128], strides = [1, 1]} : vector<2x512xf32> to vector<2x128xf32>
    %230 = math.tanh %229 : vector<2x128xf32>
    %231 = vector.extract_strided_slice %216 {offsets = [0, 384], sizes = [2, 128], strides = [1, 1]} : vector<2x512xf32> to vector<2x128xf32>
    %232 = arith.negf %231 : vector<2x128xf32>
    %233 = math.exp %232 : vector<2x128xf32>
    %cst_58 = arith.constant 1.000000e+00 : f32
    %234 = vector.broadcast %cst_58 : f32 to vector<2x128xf32>
    %235 = arith.addf %234, %233 : vector<2x128xf32>
    %236 = arith.divf %234, %235 : vector<2x128xf32>
    %237 = arith.mulf %228, %176 : vector<2x128xf32>
    %238 = arith.mulf %222, %230 : vector<2x128xf32>
    %239 = arith.addf %237, %238 : vector<2x128xf32>
    %240 = math.tanh %239 : vector<2x128xf32>
    %241 = arith.mulf %236, %240 : vector<2x128xf32>
    %242 = arith.truncf %241 : vector<2x128xf32> to vector<2x128xbf16>
    %c0_59 = arith.constant 0 : index
    %c0_60 = arith.constant 0 : index
    %243 = vector.load %arg6[%c0_59, %c0_60] : memref<128x512xbf16, #tpu.memory_space<vmem>>, vector<128x512xbf16>
    %cst_61 = arith.constant dense<0.000000e+00> : vector<2x512xf32>
    %244 = tpu.matmul %242, %243, %cst_61 {dimension_numbers = #tpu.dot_dimension_numbers<[1], [0], [0], [1], [0, 0, 1, 1], [], []>} : vector<2x128xbf16>, vector<128x512xbf16>, vector<2x512xf32> -> vector<2x512xf32>
    %245 = arith.truncf %211 : vector<2x128xf32> to vector<2x128xbf16>
    %c0_62 = arith.constant 0 : index
    %c0_63 = arith.constant 0 : index
    %246 = vector.load %arg7[%c0_62, %c0_63] : memref<128x512xbf16, #tpu.memory_space<vmem>>, vector<128x512xbf16>
    %cst_64 = arith.constant dense<0.000000e+00> : vector<2x512xf32>
    %247 = tpu.matmul %245, %246, %cst_64 {dimension_numbers = #tpu.dot_dimension_numbers<[1], [0], [0], [1], [0, 0, 1, 1], [], []>} : vector<2x128xbf16>, vector<128x512xbf16>, vector<2x512xf32> -> vector<2x512xf32>
    %248 = arith.addf %244, %247 : vector<2x512xf32>
    %249 = arith.addf %248, %21 : vector<2x512xf32>
    %250 = vector.extract_strided_slice %249 {offsets = [0, 0], sizes = [2, 128], strides = [1, 1]} : vector<2x512xf32> to vector<2x128xf32>
    %251 = arith.negf %250 : vector<2x128xf32>
    %252 = math.exp %251 : vector<2x128xf32>
    %cst_65 = arith.constant 1.000000e+00 : f32
    %253 = vector.broadcast %cst_65 : f32 to vector<2x128xf32>
    %254 = arith.addf %253, %252 : vector<2x128xf32>
    %255 = arith.divf %253, %254 : vector<2x128xf32>
    %256 = vector.extract_strided_slice %249 {offsets = [0, 128], sizes = [2, 128], strides = [1, 1]} : vector<2x512xf32> to vector<2x128xf32>
    %257 = arith.negf %256 : vector<2x128xf32>
    %258 = math.exp %257 : vector<2x128xf32>
    %cst_66 = arith.constant 1.000000e+00 : f32
    %259 = vector.broadcast %cst_66 : f32 to vector<2x128xf32>
    %260 = arith.addf %259, %258 : vector<2x128xf32>
    %261 = arith.divf %259, %260 : vector<2x128xf32>
    %262 = vector.extract_strided_slice %249 {offsets = [0, 256], sizes = [2, 128], strides = [1, 1]} : vector<2x512xf32> to vector<2x128xf32>
    %263 = math.tanh %262 : vector<2x128xf32>
    %264 = vector.extract_strided_slice %249 {offsets = [0, 384], sizes = [2, 128], strides = [1, 1]} : vector<2x512xf32> to vector<2x128xf32>
    %265 = arith.negf %264 : vector<2x128xf32>
    %266 = math.exp %265 : vector<2x128xf32>
    %cst_67 = arith.constant 1.000000e+00 : f32
    %267 = vector.broadcast %cst_67 : f32 to vector<2x128xf32>
    %268 = arith.addf %267, %266 : vector<2x128xf32>
    %269 = arith.divf %267, %268 : vector<2x128xf32>
    %270 = arith.mulf %261, %209 : vector<2x128xf32>
    %271 = arith.mulf %255, %263 : vector<2x128xf32>
    %272 = arith.addf %270, %271 : vector<2x128xf32>
    %273 = math.tanh %272 : vector<2x128xf32>
    %274 = arith.mulf %269, %273 : vector<2x128xf32>
    %275 = vector.extract_strided_slice %18 {offsets = [8, 0], sizes = [2, 512], strides = [1, 1]} : vector<16x512xf32> to vector<2x512xf32>
    %276 = arith.truncf %241 : vector<2x128xf32> to vector<2x128xbf16>
    %c0_68 = arith.constant 0 : index
    %c0_69 = arith.constant 0 : index
    %277 = vector.load %arg4[%c0_68, %c0_69] : memref<128x512xbf16, #tpu.memory_space<vmem>>, vector<128x512xbf16>
    %cst_70 = arith.constant dense<0.000000e+00> : vector<2x512xf32>
    %278 = tpu.matmul %276, %277, %cst_70 {dimension_numbers = #tpu.dot_dimension_numbers<[1], [0], [0], [1], [0, 0, 1, 1], [], []>} : vector<2x128xbf16>, vector<128x512xbf16>, vector<2x512xf32> -> vector<2x512xf32>
    %279 = arith.addf %275, %278 : vector<2x512xf32>
    %280 = vector.extract_strided_slice %279 {offsets = [0, 0], sizes = [2, 128], strides = [1, 1]} : vector<2x512xf32> to vector<2x128xf32>
    %281 = arith.negf %280 : vector<2x128xf32>
    %282 = math.exp %281 : vector<2x128xf32>
    %cst_71 = arith.constant 1.000000e+00 : f32
    %283 = vector.broadcast %cst_71 : f32 to vector<2x128xf32>
    %284 = arith.addf %283, %282 : vector<2x128xf32>
    %285 = arith.divf %283, %284 : vector<2x128xf32>
    %286 = vector.extract_strided_slice %279 {offsets = [0, 128], sizes = [2, 128], strides = [1, 1]} : vector<2x512xf32> to vector<2x128xf32>
    %287 = arith.negf %286 : vector<2x128xf32>
    %288 = math.exp %287 : vector<2x128xf32>
    %cst_72 = arith.constant 1.000000e+00 : f32
    %289 = vector.broadcast %cst_72 : f32 to vector<2x128xf32>
    %290 = arith.addf %289, %288 : vector<2x128xf32>
    %291 = arith.divf %289, %290 : vector<2x128xf32>
    %292 = vector.extract_strided_slice %279 {offsets = [0, 256], sizes = [2, 128], strides = [1, 1]} : vector<2x512xf32> to vector<2x128xf32>
    %293 = math.tanh %292 : vector<2x128xf32>
    %294 = vector.extract_strided_slice %279 {offsets = [0, 384], sizes = [2, 128], strides = [1, 1]} : vector<2x512xf32> to vector<2x128xf32>
    %295 = arith.negf %294 : vector<2x128xf32>
    %296 = math.exp %295 : vector<2x128xf32>
    %cst_73 = arith.constant 1.000000e+00 : f32
    %297 = vector.broadcast %cst_73 : f32 to vector<2x128xf32>
    %298 = arith.addf %297, %296 : vector<2x128xf32>
    %299 = arith.divf %297, %298 : vector<2x128xf32>
    %300 = arith.mulf %291, %239 : vector<2x128xf32>
    %301 = arith.mulf %285, %293 : vector<2x128xf32>
    %302 = arith.addf %300, %301 : vector<2x128xf32>
    %303 = math.tanh %302 : vector<2x128xf32>
    %304 = arith.mulf %299, %303 : vector<2x128xf32>
    %305 = arith.truncf %304 : vector<2x128xf32> to vector<2x128xbf16>
    %c0_74 = arith.constant 0 : index
    %c0_75 = arith.constant 0 : index
    %306 = vector.load %arg6[%c0_74, %c0_75] : memref<128x512xbf16, #tpu.memory_space<vmem>>, vector<128x512xbf16>
    %cst_76 = arith.constant dense<0.000000e+00> : vector<2x512xf32>
    %307 = tpu.matmul %305, %306, %cst_76 {dimension_numbers = #tpu.dot_dimension_numbers<[1], [0], [0], [1], [0, 0, 1, 1], [], []>} : vector<2x128xbf16>, vector<128x512xbf16>, vector<2x512xf32> -> vector<2x512xf32>
    %308 = arith.truncf %274 : vector<2x128xf32> to vector<2x128xbf16>
    %c0_77 = arith.constant 0 : index
    %c0_78 = arith.constant 0 : index
    %309 = vector.load %arg7[%c0_77, %c0_78] : memref<128x512xbf16, #tpu.memory_space<vmem>>, vector<128x512xbf16>
    %cst_79 = arith.constant dense<0.000000e+00> : vector<2x512xf32>
    %310 = tpu.matmul %308, %309, %cst_79 {dimension_numbers = #tpu.dot_dimension_numbers<[1], [0], [0], [1], [0, 0, 1, 1], [], []>} : vector<2x128xbf16>, vector<128x512xbf16>, vector<2x512xf32> -> vector<2x512xf32>
    %311 = arith.addf %307, %310 : vector<2x512xf32>
    %312 = arith.addf %311, %21 : vector<2x512xf32>
    %313 = vector.extract_strided_slice %312 {offsets = [0, 0], sizes = [2, 128], strides = [1, 1]} : vector<2x512xf32> to vector<2x128xf32>
    %314 = arith.negf %313 : vector<2x128xf32>
    %315 = math.exp %314 : vector<2x128xf32>
    %cst_80 = arith.constant 1.000000e+00 : f32
    %316 = vector.broadcast %cst_80 : f32 to vector<2x128xf32>
    %317 = arith.addf %316, %315 : vector<2x128xf32>
    %318 = arith.divf %316, %317 : vector<2x128xf32>
    %319 = vector.extract_strided_slice %312 {offsets = [0, 128], sizes = [2, 128], strides = [1, 1]} : vector<2x512xf32> to vector<2x128xf32>
    %320 = arith.negf %319 : vector<2x128xf32>
    %321 = math.exp %320 : vector<2x128xf32>
    %cst_81 = arith.constant 1.000000e+00 : f32
    %322 = vector.broadcast %cst_81 : f32 to vector<2x128xf32>
    %323 = arith.addf %322, %321 : vector<2x128xf32>
    %324 = arith.divf %322, %323 : vector<2x128xf32>
    %325 = vector.extract_strided_slice %312 {offsets = [0, 256], sizes = [2, 128], strides = [1, 1]} : vector<2x512xf32> to vector<2x128xf32>
    %326 = math.tanh %325 : vector<2x128xf32>
    %327 = vector.extract_strided_slice %312 {offsets = [0, 384], sizes = [2, 128], strides = [1, 1]} : vector<2x512xf32> to vector<2x128xf32>
    %328 = arith.negf %327 : vector<2x128xf32>
    %329 = math.exp %328 : vector<2x128xf32>
    %cst_82 = arith.constant 1.000000e+00 : f32
    %330 = vector.broadcast %cst_82 : f32 to vector<2x128xf32>
    %331 = arith.addf %330, %329 : vector<2x128xf32>
    %332 = arith.divf %330, %331 : vector<2x128xf32>
    %333 = arith.mulf %324, %272 : vector<2x128xf32>
    %334 = arith.mulf %318, %326 : vector<2x128xf32>
    %335 = arith.addf %333, %334 : vector<2x128xf32>
    %336 = math.tanh %335 : vector<2x128xf32>
    %337 = arith.mulf %332, %336 : vector<2x128xf32>
    %338 = vector.extract_strided_slice %18 {offsets = [10, 0], sizes = [2, 512], strides = [1, 1]} : vector<16x512xf32> to vector<2x512xf32>
    %339 = arith.truncf %304 : vector<2x128xf32> to vector<2x128xbf16>
    %c0_83 = arith.constant 0 : index
    %c0_84 = arith.constant 0 : index
    %340 = vector.load %arg4[%c0_83, %c0_84] : memref<128x512xbf16, #tpu.memory_space<vmem>>, vector<128x512xbf16>
    %cst_85 = arith.constant dense<0.000000e+00> : vector<2x512xf32>
    %341 = tpu.matmul %339, %340, %cst_85 {dimension_numbers = #tpu.dot_dimension_numbers<[1], [0], [0], [1], [0, 0, 1, 1], [], []>} : vector<2x128xbf16>, vector<128x512xbf16>, vector<2x512xf32> -> vector<2x512xf32>
    %342 = arith.addf %338, %341 : vector<2x512xf32>
    %343 = vector.extract_strided_slice %342 {offsets = [0, 0], sizes = [2, 128], strides = [1, 1]} : vector<2x512xf32> to vector<2x128xf32>
    %344 = arith.negf %343 : vector<2x128xf32>
    %345 = math.exp %344 : vector<2x128xf32>
    %cst_86 = arith.constant 1.000000e+00 : f32
    %346 = vector.broadcast %cst_86 : f32 to vector<2x128xf32>
    %347 = arith.addf %346, %345 : vector<2x128xf32>
    %348 = arith.divf %346, %347 : vector<2x128xf32>
    %349 = vector.extract_strided_slice %342 {offsets = [0, 128], sizes = [2, 128], strides = [1, 1]} : vector<2x512xf32> to vector<2x128xf32>
    %350 = arith.negf %349 : vector<2x128xf32>
    %351 = math.exp %350 : vector<2x128xf32>
    %cst_87 = arith.constant 1.000000e+00 : f32
    %352 = vector.broadcast %cst_87 : f32 to vector<2x128xf32>
    %353 = arith.addf %352, %351 : vector<2x128xf32>
    %354 = arith.divf %352, %353 : vector<2x128xf32>
    %355 = vector.extract_strided_slice %342 {offsets = [0, 256], sizes = [2, 128], strides = [1, 1]} : vector<2x512xf32> to vector<2x128xf32>
    %356 = math.tanh %355 : vector<2x128xf32>
    %357 = vector.extract_strided_slice %342 {offsets = [0, 384], sizes = [2, 128], strides = [1, 1]} : vector<2x512xf32> to vector<2x128xf32>
    %358 = arith.negf %357 : vector<2x128xf32>
    %359 = math.exp %358 : vector<2x128xf32>
    %cst_88 = arith.constant 1.000000e+00 : f32
    %360 = vector.broadcast %cst_88 : f32 to vector<2x128xf32>
    %361 = arith.addf %360, %359 : vector<2x128xf32>
    %362 = arith.divf %360, %361 : vector<2x128xf32>
    %363 = arith.mulf %354, %302 : vector<2x128xf32>
    %364 = arith.mulf %348, %356 : vector<2x128xf32>
    %365 = arith.addf %363, %364 : vector<2x128xf32>
    %366 = math.tanh %365 : vector<2x128xf32>
    %367 = arith.mulf %362, %366 : vector<2x128xf32>
    %368 = arith.truncf %367 : vector<2x128xf32> to vector<2x128xbf16>
    %c0_89 = arith.constant 0 : index
    %c0_90 = arith.constant 0 : index
    %369 = vector.load %arg6[%c0_89, %c0_90] : memref<128x512xbf16, #tpu.memory_space<vmem>>, vector<128x512xbf16>
    %cst_91 = arith.constant dense<0.000000e+00> : vector<2x512xf32>
    %370 = tpu.matmul %368, %369, %cst_91 {dimension_numbers = #tpu.dot_dimension_numbers<[1], [0], [0], [1], [0, 0, 1, 1], [], []>} : vector<2x128xbf16>, vector<128x512xbf16>, vector<2x512xf32> -> vector<2x512xf32>
    %371 = arith.truncf %337 : vector<2x128xf32> to vector<2x128xbf16>
    %c0_92 = arith.constant 0 : index
    %c0_93 = arith.constant 0 : index
    %372 = vector.load %arg7[%c0_92, %c0_93] : memref<128x512xbf16, #tpu.memory_space<vmem>>, vector<128x512xbf16>
    %cst_94 = arith.constant dense<0.000000e+00> : vector<2x512xf32>
    %373 = tpu.matmul %371, %372, %cst_94 {dimension_numbers = #tpu.dot_dimension_numbers<[1], [0], [0], [1], [0, 0, 1, 1], [], []>} : vector<2x128xbf16>, vector<128x512xbf16>, vector<2x512xf32> -> vector<2x512xf32>
    %374 = arith.addf %370, %373 : vector<2x512xf32>
    %375 = arith.addf %374, %21 : vector<2x512xf32>
    %376 = vector.extract_strided_slice %375 {offsets = [0, 0], sizes = [2, 128], strides = [1, 1]} : vector<2x512xf32> to vector<2x128xf32>
    %377 = arith.negf %376 : vector<2x128xf32>
    %378 = math.exp %377 : vector<2x128xf32>
    %cst_95 = arith.constant 1.000000e+00 : f32
    %379 = vector.broadcast %cst_95 : f32 to vector<2x128xf32>
    %380 = arith.addf %379, %378 : vector<2x128xf32>
    %381 = arith.divf %379, %380 : vector<2x128xf32>
    %382 = vector.extract_strided_slice %375 {offsets = [0, 128], sizes = [2, 128], strides = [1, 1]} : vector<2x512xf32> to vector<2x128xf32>
    %383 = arith.negf %382 : vector<2x128xf32>
    %384 = math.exp %383 : vector<2x128xf32>
    %cst_96 = arith.constant 1.000000e+00 : f32
    %385 = vector.broadcast %cst_96 : f32 to vector<2x128xf32>
    %386 = arith.addf %385, %384 : vector<2x128xf32>
    %387 = arith.divf %385, %386 : vector<2x128xf32>
    %388 = vector.extract_strided_slice %375 {offsets = [0, 256], sizes = [2, 128], strides = [1, 1]} : vector<2x512xf32> to vector<2x128xf32>
    %389 = math.tanh %388 : vector<2x128xf32>
    %390 = vector.extract_strided_slice %375 {offsets = [0, 384], sizes = [2, 128], strides = [1, 1]} : vector<2x512xf32> to vector<2x128xf32>
    %391 = arith.negf %390 : vector<2x128xf32>
    %392 = math.exp %391 : vector<2x128xf32>
    %cst_97 = arith.constant 1.000000e+00 : f32
    %393 = vector.broadcast %cst_97 : f32 to vector<2x128xf32>
    %394 = arith.addf %393, %392 : vector<2x128xf32>
    %395 = arith.divf %393, %394 : vector<2x128xf32>
    %396 = arith.mulf %387, %335 : vector<2x128xf32>
    %397 = arith.mulf %381, %389 : vector<2x128xf32>
    %398 = arith.addf %396, %397 : vector<2x128xf32>
    %399 = math.tanh %398 : vector<2x128xf32>
    %400 = arith.mulf %395, %399 : vector<2x128xf32>
    %401 = vector.extract_strided_slice %18 {offsets = [12, 0], sizes = [2, 512], strides = [1, 1]} : vector<16x512xf32> to vector<2x512xf32>
    %402 = arith.truncf %367 : vector<2x128xf32> to vector<2x128xbf16>
    %c0_98 = arith.constant 0 : index
    %c0_99 = arith.constant 0 : index
    %403 = vector.load %arg4[%c0_98, %c0_99] : memref<128x512xbf16, #tpu.memory_space<vmem>>, vector<128x512xbf16>
    %cst_100 = arith.constant dense<0.000000e+00> : vector<2x512xf32>
    %404 = tpu.matmul %402, %403, %cst_100 {dimension_numbers = #tpu.dot_dimension_numbers<[1], [0], [0], [1], [0, 0, 1, 1], [], []>} : vector<2x128xbf16>, vector<128x512xbf16>, vector<2x512xf32> -> vector<2x512xf32>
    %405 = arith.addf %401, %404 : vector<2x512xf32>
    %406 = vector.extract_strided_slice %405 {offsets = [0, 0], sizes = [2, 128], strides = [1, 1]} : vector<2x512xf32> to vector<2x128xf32>
    %407 = arith.negf %406 : vector<2x128xf32>
    %408 = math.exp %407 : vector<2x128xf32>
    %cst_101 = arith.constant 1.000000e+00 : f32
    %409 = vector.broadcast %cst_101 : f32 to vector<2x128xf32>
    %410 = arith.addf %409, %408 : vector<2x128xf32>
    %411 = arith.divf %409, %410 : vector<2x128xf32>
    %412 = vector.extract_strided_slice %405 {offsets = [0, 128], sizes = [2, 128], strides = [1, 1]} : vector<2x512xf32> to vector<2x128xf32>
    %413 = arith.negf %412 : vector<2x128xf32>
    %414 = math.exp %413 : vector<2x128xf32>
    %cst_102 = arith.constant 1.000000e+00 : f32
    %415 = vector.broadcast %cst_102 : f32 to vector<2x128xf32>
    %416 = arith.addf %415, %414 : vector<2x128xf32>
    %417 = arith.divf %415, %416 : vector<2x128xf32>
    %418 = vector.extract_strided_slice %405 {offsets = [0, 256], sizes = [2, 128], strides = [1, 1]} : vector<2x512xf32> to vector<2x128xf32>
    %419 = math.tanh %418 : vector<2x128xf32>
    %420 = vector.extract_strided_slice %405 {offsets = [0, 384], sizes = [2, 128], strides = [1, 1]} : vector<2x512xf32> to vector<2x128xf32>
    %421 = arith.negf %420 : vector<2x128xf32>
    %422 = math.exp %421 : vector<2x128xf32>
    %cst_103 = arith.constant 1.000000e+00 : f32
    %423 = vector.broadcast %cst_103 : f32 to vector<2x128xf32>
    %424 = arith.addf %423, %422 : vector<2x128xf32>
    %425 = arith.divf %423, %424 : vector<2x128xf32>
    %426 = arith.mulf %417, %365 : vector<2x128xf32>
    %427 = arith.mulf %411, %419 : vector<2x128xf32>
    %428 = arith.addf %426, %427 : vector<2x128xf32>
    %429 = math.tanh %428 : vector<2x128xf32>
    %430 = arith.mulf %425, %429 : vector<2x128xf32>
    %431 = arith.truncf %430 : vector<2x128xf32> to vector<2x128xbf16>
    %c0_104 = arith.constant 0 : index
    %c0_105 = arith.constant 0 : index
    %432 = vector.load %arg6[%c0_104, %c0_105] : memref<128x512xbf16, #tpu.memory_space<vmem>>, vector<128x512xbf16>
    %cst_106 = arith.constant dense<0.000000e+00> : vector<2x512xf32>
    %433 = tpu.matmul %431, %432, %cst_106 {dimension_numbers = #tpu.dot_dimension_numbers<[1], [0], [0], [1], [0, 0, 1, 1], [], []>} : vector<2x128xbf16>, vector<128x512xbf16>, vector<2x512xf32> -> vector<2x512xf32>
    %434 = arith.truncf %400 : vector<2x128xf32> to vector<2x128xbf16>
    %c0_107 = arith.constant 0 : index
    %c0_108 = arith.constant 0 : index
    %435 = vector.load %arg7[%c0_107, %c0_108] : memref<128x512xbf16, #tpu.memory_space<vmem>>, vector<128x512xbf16>
    %cst_109 = arith.constant dense<0.000000e+00> : vector<2x512xf32>
    %436 = tpu.matmul %434, %435, %cst_109 {dimension_numbers = #tpu.dot_dimension_numbers<[1], [0], [0], [1], [0, 0, 1, 1], [], []>} : vector<2x128xbf16>, vector<128x512xbf16>, vector<2x512xf32> -> vector<2x512xf32>
    %437 = arith.addf %433, %436 : vector<2x512xf32>
    %438 = arith.addf %437, %21 : vector<2x512xf32>
    %439 = vector.extract_strided_slice %438 {offsets = [0, 0], sizes = [2, 128], strides = [1, 1]} : vector<2x512xf32> to vector<2x128xf32>
    %440 = arith.negf %439 : vector<2x128xf32>
    %441 = math.exp %440 : vector<2x128xf32>
    %cst_110 = arith.constant 1.000000e+00 : f32
    %442 = vector.broadcast %cst_110 : f32 to vector<2x128xf32>
    %443 = arith.addf %442, %441 : vector<2x128xf32>
    %444 = arith.divf %442, %443 : vector<2x128xf32>
    %445 = vector.extract_strided_slice %438 {offsets = [0, 128], sizes = [2, 128], strides = [1, 1]} : vector<2x512xf32> to vector<2x128xf32>
    %446 = arith.negf %445 : vector<2x128xf32>
    %447 = math.exp %446 : vector<2x128xf32>
    %cst_111 = arith.constant 1.000000e+00 : f32
    %448 = vector.broadcast %cst_111 : f32 to vector<2x128xf32>
    %449 = arith.addf %448, %447 : vector<2x128xf32>
    %450 = arith.divf %448, %449 : vector<2x128xf32>
    %451 = vector.extract_strided_slice %438 {offsets = [0, 256], sizes = [2, 128], strides = [1, 1]} : vector<2x512xf32> to vector<2x128xf32>
    %452 = math.tanh %451 : vector<2x128xf32>
    %453 = vector.extract_strided_slice %438 {offsets = [0, 384], sizes = [2, 128], strides = [1, 1]} : vector<2x512xf32> to vector<2x128xf32>
    %454 = arith.negf %453 : vector<2x128xf32>
    %455 = math.exp %454 : vector<2x128xf32>
    %cst_112 = arith.constant 1.000000e+00 : f32
    %456 = vector.broadcast %cst_112 : f32 to vector<2x128xf32>
    %457 = arith.addf %456, %455 : vector<2x128xf32>
    %458 = arith.divf %456, %457 : vector<2x128xf32>
    %459 = arith.mulf %450, %398 : vector<2x128xf32>
    %460 = arith.mulf %444, %452 : vector<2x128xf32>
    %461 = arith.addf %459, %460 : vector<2x128xf32>
    %462 = math.tanh %461 : vector<2x128xf32>
    %463 = arith.mulf %458, %462 : vector<2x128xf32>
    %464 = vector.extract_strided_slice %18 {offsets = [14, 0], sizes = [2, 512], strides = [1, 1]} : vector<16x512xf32> to vector<2x512xf32>
    %465 = arith.truncf %430 : vector<2x128xf32> to vector<2x128xbf16>
    %c0_113 = arith.constant 0 : index
    %c0_114 = arith.constant 0 : index
    %466 = vector.load %arg4[%c0_113, %c0_114] : memref<128x512xbf16, #tpu.memory_space<vmem>>, vector<128x512xbf16>
    %cst_115 = arith.constant dense<0.000000e+00> : vector<2x512xf32>
    %467 = tpu.matmul %465, %466, %cst_115 {dimension_numbers = #tpu.dot_dimension_numbers<[1], [0], [0], [1], [0, 0, 1, 1], [], []>} : vector<2x128xbf16>, vector<128x512xbf16>, vector<2x512xf32> -> vector<2x512xf32>
    %468 = arith.addf %464, %467 : vector<2x512xf32>
    %469 = vector.extract_strided_slice %468 {offsets = [0, 0], sizes = [2, 128], strides = [1, 1]} : vector<2x512xf32> to vector<2x128xf32>
    %470 = arith.negf %469 : vector<2x128xf32>
    %471 = math.exp %470 : vector<2x128xf32>
    %cst_116 = arith.constant 1.000000e+00 : f32
    %472 = vector.broadcast %cst_116 : f32 to vector<2x128xf32>
    %473 = arith.addf %472, %471 : vector<2x128xf32>
    %474 = arith.divf %472, %473 : vector<2x128xf32>
    %475 = vector.extract_strided_slice %468 {offsets = [0, 128], sizes = [2, 128], strides = [1, 1]} : vector<2x512xf32> to vector<2x128xf32>
    %476 = arith.negf %475 : vector<2x128xf32>
    %477 = math.exp %476 : vector<2x128xf32>
    %cst_117 = arith.constant 1.000000e+00 : f32
    %478 = vector.broadcast %cst_117 : f32 to vector<2x128xf32>
    %479 = arith.addf %478, %477 : vector<2x128xf32>
    %480 = arith.divf %478, %479 : vector<2x128xf32>
    %481 = vector.extract_strided_slice %468 {offsets = [0, 256], sizes = [2, 128], strides = [1, 1]} : vector<2x512xf32> to vector<2x128xf32>
    %482 = math.tanh %481 : vector<2x128xf32>
    %483 = vector.extract_strided_slice %468 {offsets = [0, 384], sizes = [2, 128], strides = [1, 1]} : vector<2x512xf32> to vector<2x128xf32>
    %484 = arith.negf %483 : vector<2x128xf32>
    %485 = math.exp %484 : vector<2x128xf32>
    %cst_118 = arith.constant 1.000000e+00 : f32
    %486 = vector.broadcast %cst_118 : f32 to vector<2x128xf32>
    %487 = arith.addf %486, %485 : vector<2x128xf32>
    %488 = arith.divf %486, %487 : vector<2x128xf32>
    %489 = arith.mulf %480, %428 : vector<2x128xf32>
    %490 = arith.mulf %474, %482 : vector<2x128xf32>
    %491 = arith.addf %489, %490 : vector<2x128xf32>
    %492 = math.tanh %491 : vector<2x128xf32>
    %493 = arith.mulf %488, %492 : vector<2x128xf32>
    %494 = arith.truncf %493 : vector<2x128xf32> to vector<2x128xbf16>
    %c0_119 = arith.constant 0 : index
    %c0_120 = arith.constant 0 : index
    %495 = vector.load %arg6[%c0_119, %c0_120] : memref<128x512xbf16, #tpu.memory_space<vmem>>, vector<128x512xbf16>
    %cst_121 = arith.constant dense<0.000000e+00> : vector<2x512xf32>
    %496 = tpu.matmul %494, %495, %cst_121 {dimension_numbers = #tpu.dot_dimension_numbers<[1], [0], [0], [1], [0, 0, 1, 1], [], []>} : vector<2x128xbf16>, vector<128x512xbf16>, vector<2x512xf32> -> vector<2x512xf32>
    %497 = arith.truncf %463 : vector<2x128xf32> to vector<2x128xbf16>
    %c0_122 = arith.constant 0 : index
    %c0_123 = arith.constant 0 : index
    %498 = vector.load %arg7[%c0_122, %c0_123] : memref<128x512xbf16, #tpu.memory_space<vmem>>, vector<128x512xbf16>
    %cst_124 = arith.constant dense<0.000000e+00> : vector<2x512xf32>
    %499 = tpu.matmul %497, %498, %cst_124 {dimension_numbers = #tpu.dot_dimension_numbers<[1], [0], [0], [1], [0, 0, 1, 1], [], []>} : vector<2x128xbf16>, vector<128x512xbf16>, vector<2x512xf32> -> vector<2x512xf32>
    %500 = arith.addf %496, %499 : vector<2x512xf32>
    %501 = arith.addf %500, %21 : vector<2x512xf32>
    %502 = vector.extract_strided_slice %501 {offsets = [0, 0], sizes = [2, 128], strides = [1, 1]} : vector<2x512xf32> to vector<2x128xf32>
    %503 = arith.negf %502 : vector<2x128xf32>
    %504 = math.exp %503 : vector<2x128xf32>
    %cst_125 = arith.constant 1.000000e+00 : f32
    %505 = vector.broadcast %cst_125 : f32 to vector<2x128xf32>
    %506 = arith.addf %505, %504 : vector<2x128xf32>
    %507 = arith.divf %505, %506 : vector<2x128xf32>
    %508 = vector.extract_strided_slice %501 {offsets = [0, 128], sizes = [2, 128], strides = [1, 1]} : vector<2x512xf32> to vector<2x128xf32>
    %509 = arith.negf %508 : vector<2x128xf32>
    %510 = math.exp %509 : vector<2x128xf32>
    %cst_126 = arith.constant 1.000000e+00 : f32
    %511 = vector.broadcast %cst_126 : f32 to vector<2x128xf32>
    %512 = arith.addf %511, %510 : vector<2x128xf32>
    %513 = arith.divf %511, %512 : vector<2x128xf32>
    %514 = vector.extract_strided_slice %501 {offsets = [0, 256], sizes = [2, 128], strides = [1, 1]} : vector<2x512xf32> to vector<2x128xf32>
    %515 = math.tanh %514 : vector<2x128xf32>
    %516 = vector.extract_strided_slice %501 {offsets = [0, 384], sizes = [2, 128], strides = [1, 1]} : vector<2x512xf32> to vector<2x128xf32>
    %517 = arith.negf %516 : vector<2x128xf32>
    %518 = math.exp %517 : vector<2x128xf32>
    %cst_127 = arith.constant 1.000000e+00 : f32
    %519 = vector.broadcast %cst_127 : f32 to vector<2x128xf32>
    %520 = arith.addf %519, %518 : vector<2x128xf32>
    %521 = arith.divf %519, %520 : vector<2x128xf32>
    %522 = arith.mulf %513, %461 : vector<2x128xf32>
    %523 = arith.mulf %507, %515 : vector<2x128xf32>
    %524 = arith.addf %522, %523 : vector<2x128xf32>
    %525 = math.tanh %524 : vector<2x128xf32>
    %526 = arith.mulf %521, %525 : vector<2x128xf32>
    %c0_128 = arith.constant 0 : index
    %c0_129 = arith.constant 0 : index
    %527 = vector.load %arg2[%c0_128, %c0_129] : memref<12x59xf32, #tpu.memory_space<vmem>>, vector<12x59xf32>
    %528 = arith.truncf %527 : vector<12x59xf32> to vector<12x59xbf16>
    %c0_130 = arith.constant 0 : index
    %c0_131 = arith.constant 0 : index
    %529 = vector.load %arg9[%c0_130, %c0_131] : memref<59x512xbf16, #tpu.memory_space<vmem>>, vector<59x512xbf16>
    %cst_132 = arith.constant dense<0.000000e+00> : vector<12x512xf32>
    %530 = tpu.matmul %528, %529, %cst_132 {dimension_numbers = #tpu.dot_dimension_numbers<[1], [0], [0], [1], [0, 0, 1, 1], [], []>} : vector<12x59xbf16>, vector<59x512xbf16>, vector<12x512xf32> -> vector<12x512xf32>
    %c0_133 = arith.constant 0 : index
    %c0_134 = arith.constant 0 : index
    %531 = vector.load %arg11[%c0_133, %c0_134] : memref<1x512xf32, #tpu.memory_space<vmem>>, vector<1x512xf32>
    %532 = vector.broadcast %531 : vector<1x512xf32> to vector<12x512xf32>
    %533 = arith.addf %530, %532 : vector<12x512xf32>
    %c0_135 = arith.constant 0 : index
    %c0_136 = arith.constant 0 : index
    %534 = vector.load %arg14[%c0_135, %c0_136] : memref<1x512xf32, #tpu.memory_space<vmem>>, vector<1x512xf32>
    %535 = vector.shape_cast %534 : vector<1x512xf32> to vector<1x512xf32>
    %536 = vector.broadcast %535 : vector<1x512xf32> to vector<2x512xf32>
    %cst_137 = arith.constant 0.000000e+00 : f32
    %537 = vector.broadcast %cst_137 : f32 to vector<2x128xf32>
    %538 = vector.extract_strided_slice %533 {offsets = [0, 0], sizes = [2, 512], strides = [1, 1]} : vector<12x512xf32> to vector<2x512xf32>
    %539 = arith.truncf %537 : vector<2x128xf32> to vector<2x128xbf16>
    %c0_138 = arith.constant 0 : index
    %c0_139 = arith.constant 0 : index
    %540 = vector.load %arg10[%c0_138, %c0_139] : memref<128x512xbf16, #tpu.memory_space<vmem>>, vector<128x512xbf16>
    %cst_140 = arith.constant dense<0.000000e+00> : vector<2x512xf32>
    %541 = tpu.matmul %539, %540, %cst_140 {dimension_numbers = #tpu.dot_dimension_numbers<[1], [0], [0], [1], [0, 0, 1, 1], [], []>} : vector<2x128xbf16>, vector<128x512xbf16>, vector<2x512xf32> -> vector<2x512xf32>
    %542 = arith.addf %538, %541 : vector<2x512xf32>
    %543 = vector.extract_strided_slice %542 {offsets = [0, 0], sizes = [2, 128], strides = [1, 1]} : vector<2x512xf32> to vector<2x128xf32>
    %544 = arith.negf %543 : vector<2x128xf32>
    %545 = math.exp %544 : vector<2x128xf32>
    %cst_141 = arith.constant 1.000000e+00 : f32
    %546 = vector.broadcast %cst_141 : f32 to vector<2x128xf32>
    %547 = arith.addf %546, %545 : vector<2x128xf32>
    %548 = arith.divf %546, %547 : vector<2x128xf32>
    %549 = vector.extract_strided_slice %542 {offsets = [0, 128], sizes = [2, 128], strides = [1, 1]} : vector<2x512xf32> to vector<2x128xf32>
    %550 = arith.negf %549 : vector<2x128xf32>
    %551 = math.exp %550 : vector<2x128xf32>
    %cst_142 = arith.constant 1.000000e+00 : f32
    %552 = vector.broadcast %cst_142 : f32 to vector<2x128xf32>
    %553 = arith.addf %552, %551 : vector<2x128xf32>
    %554 = arith.divf %552, %553 : vector<2x128xf32>
    %555 = vector.extract_strided_slice %542 {offsets = [0, 256], sizes = [2, 128], strides = [1, 1]} : vector<2x512xf32> to vector<2x128xf32>
    %556 = math.tanh %555 : vector<2x128xf32>
    %557 = vector.extract_strided_slice %542 {offsets = [0, 384], sizes = [2, 128], strides = [1, 1]} : vector<2x512xf32> to vector<2x128xf32>
    %558 = arith.negf %557 : vector<2x128xf32>
    %559 = math.exp %558 : vector<2x128xf32>
    %cst_143 = arith.constant 1.000000e+00 : f32
    %560 = vector.broadcast %cst_143 : f32 to vector<2x128xf32>
    %561 = arith.addf %560, %559 : vector<2x128xf32>
    %562 = arith.divf %560, %561 : vector<2x128xf32>
    %563 = arith.mulf %554, %537 : vector<2x128xf32>
    %564 = arith.mulf %548, %556 : vector<2x128xf32>
    %565 = arith.addf %563, %564 : vector<2x128xf32>
    %566 = math.tanh %565 : vector<2x128xf32>
    %567 = arith.mulf %562, %566 : vector<2x128xf32>
    %568 = arith.truncf %567 : vector<2x128xf32> to vector<2x128xbf16>
    %c0_144 = arith.constant 0 : index
    %c0_145 = arith.constant 0 : index
    %569 = vector.load %arg12[%c0_144, %c0_145] : memref<128x512xbf16, #tpu.memory_space<vmem>>, vector<128x512xbf16>
    %cst_146 = arith.constant dense<0.000000e+00> : vector<2x512xf32>
    %570 = tpu.matmul %568, %569, %cst_146 {dimension_numbers = #tpu.dot_dimension_numbers<[1], [0], [0], [1], [0, 0, 1, 1], [], []>} : vector<2x128xbf16>, vector<128x512xbf16>, vector<2x512xf32> -> vector<2x512xf32>
    %571 = arith.truncf %537 : vector<2x128xf32> to vector<2x128xbf16>
    %c0_147 = arith.constant 0 : index
    %c0_148 = arith.constant 0 : index
    %572 = vector.load %arg13[%c0_147, %c0_148] : memref<128x512xbf16, #tpu.memory_space<vmem>>, vector<128x512xbf16>
    %cst_149 = arith.constant dense<0.000000e+00> : vector<2x512xf32>
    %573 = tpu.matmul %571, %572, %cst_149 {dimension_numbers = #tpu.dot_dimension_numbers<[1], [0], [0], [1], [0, 0, 1, 1], [], []>} : vector<2x128xbf16>, vector<128x512xbf16>, vector<2x512xf32> -> vector<2x512xf32>
    %574 = arith.addf %570, %573 : vector<2x512xf32>
    %575 = arith.addf %574, %536 : vector<2x512xf32>
    %576 = vector.extract_strided_slice %575 {offsets = [0, 0], sizes = [2, 128], strides = [1, 1]} : vector<2x512xf32> to vector<2x128xf32>
    %577 = arith.negf %576 : vector<2x128xf32>
    %578 = math.exp %577 : vector<2x128xf32>
    %cst_150 = arith.constant 1.000000e+00 : f32
    %579 = vector.broadcast %cst_150 : f32 to vector<2x128xf32>
    %580 = arith.addf %579, %578 : vector<2x128xf32>
    %581 = arith.divf %579, %580 : vector<2x128xf32>
    %582 = vector.extract_strided_slice %575 {offsets = [0, 128], sizes = [2, 128], strides = [1, 1]} : vector<2x512xf32> to vector<2x128xf32>
    %583 = arith.negf %582 : vector<2x128xf32>
    %584 = math.exp %583 : vector<2x128xf32>
    %cst_151 = arith.constant 1.000000e+00 : f32
    %585 = vector.broadcast %cst_151 : f32 to vector<2x128xf32>
    %586 = arith.addf %585, %584 : vector<2x128xf32>
    %587 = arith.divf %585, %586 : vector<2x128xf32>
    %588 = vector.extract_strided_slice %575 {offsets = [0, 256], sizes = [2, 128], strides = [1, 1]} : vector<2x512xf32> to vector<2x128xf32>
    %589 = math.tanh %588 : vector<2x128xf32>
    %590 = vector.extract_strided_slice %575 {offsets = [0, 384], sizes = [2, 128], strides = [1, 1]} : vector<2x512xf32> to vector<2x128xf32>
    %591 = arith.negf %590 : vector<2x128xf32>
    %592 = math.exp %591 : vector<2x128xf32>
    %cst_152 = arith.constant 1.000000e+00 : f32
    %593 = vector.broadcast %cst_152 : f32 to vector<2x128xf32>
    %594 = arith.addf %593, %592 : vector<2x128xf32>
    %595 = arith.divf %593, %594 : vector<2x128xf32>
    %596 = arith.mulf %587, %537 : vector<2x128xf32>
    %597 = arith.mulf %581, %589 : vector<2x128xf32>
    %598 = arith.addf %596, %597 : vector<2x128xf32>
    %599 = math.tanh %598 : vector<2x128xf32>
    %600 = arith.mulf %595, %599 : vector<2x128xf32>
    %601 = vector.extract_strided_slice %533 {offsets = [2, 0], sizes = [2, 512], strides = [1, 1]} : vector<12x512xf32> to vector<2x512xf32>
    %602 = arith.truncf %567 : vector<2x128xf32> to vector<2x128xbf16>
    %c0_153 = arith.constant 0 : index
    %c0_154 = arith.constant 0 : index
    %603 = vector.load %arg10[%c0_153, %c0_154] : memref<128x512xbf16, #tpu.memory_space<vmem>>, vector<128x512xbf16>
    %cst_155 = arith.constant dense<0.000000e+00> : vector<2x512xf32>
    %604 = tpu.matmul %602, %603, %cst_155 {dimension_numbers = #tpu.dot_dimension_numbers<[1], [0], [0], [1], [0, 0, 1, 1], [], []>} : vector<2x128xbf16>, vector<128x512xbf16>, vector<2x512xf32> -> vector<2x512xf32>
    %605 = arith.addf %601, %604 : vector<2x512xf32>
    %606 = vector.extract_strided_slice %605 {offsets = [0, 0], sizes = [2, 128], strides = [1, 1]} : vector<2x512xf32> to vector<2x128xf32>
    %607 = arith.negf %606 : vector<2x128xf32>
    %608 = math.exp %607 : vector<2x128xf32>
    %cst_156 = arith.constant 1.000000e+00 : f32
    %609 = vector.broadcast %cst_156 : f32 to vector<2x128xf32>
    %610 = arith.addf %609, %608 : vector<2x128xf32>
    %611 = arith.divf %609, %610 : vector<2x128xf32>
    %612 = vector.extract_strided_slice %605 {offsets = [0, 128], sizes = [2, 128], strides = [1, 1]} : vector<2x512xf32> to vector<2x128xf32>
    %613 = arith.negf %612 : vector<2x128xf32>
    %614 = math.exp %613 : vector<2x128xf32>
    %cst_157 = arith.constant 1.000000e+00 : f32
    %615 = vector.broadcast %cst_157 : f32 to vector<2x128xf32>
    %616 = arith.addf %615, %614 : vector<2x128xf32>
    %617 = arith.divf %615, %616 : vector<2x128xf32>
    %618 = vector.extract_strided_slice %605 {offsets = [0, 256], sizes = [2, 128], strides = [1, 1]} : vector<2x512xf32> to vector<2x128xf32>
    %619 = math.tanh %618 : vector<2x128xf32>
    %620 = vector.extract_strided_slice %605 {offsets = [0, 384], sizes = [2, 128], strides = [1, 1]} : vector<2x512xf32> to vector<2x128xf32>
    %621 = arith.negf %620 : vector<2x128xf32>
    %622 = math.exp %621 : vector<2x128xf32>
    %cst_158 = arith.constant 1.000000e+00 : f32
    %623 = vector.broadcast %cst_158 : f32 to vector<2x128xf32>
    %624 = arith.addf %623, %622 : vector<2x128xf32>
    %625 = arith.divf %623, %624 : vector<2x128xf32>
    %626 = arith.mulf %617, %565 : vector<2x128xf32>
    %627 = arith.mulf %611, %619 : vector<2x128xf32>
    %628 = arith.addf %626, %627 : vector<2x128xf32>
    %629 = math.tanh %628 : vector<2x128xf32>
    %630 = arith.mulf %625, %629 : vector<2x128xf32>
    %631 = arith.truncf %630 : vector<2x128xf32> to vector<2x128xbf16>
    %c0_159 = arith.constant 0 : index
    %c0_160 = arith.constant 0 : index
    %632 = vector.load %arg12[%c0_159, %c0_160] : memref<128x512xbf16, #tpu.memory_space<vmem>>, vector<128x512xbf16>
    %cst_161 = arith.constant dense<0.000000e+00> : vector<2x512xf32>
    %633 = tpu.matmul %631, %632, %cst_161 {dimension_numbers = #tpu.dot_dimension_numbers<[1], [0], [0], [1], [0, 0, 1, 1], [], []>} : vector<2x128xbf16>, vector<128x512xbf16>, vector<2x512xf32> -> vector<2x512xf32>
    %634 = arith.truncf %600 : vector<2x128xf32> to vector<2x128xbf16>
    %c0_162 = arith.constant 0 : index
    %c0_163 = arith.constant 0 : index
    %635 = vector.load %arg13[%c0_162, %c0_163] : memref<128x512xbf16, #tpu.memory_space<vmem>>, vector<128x512xbf16>
    %cst_164 = arith.constant dense<0.000000e+00> : vector<2x512xf32>
    %636 = tpu.matmul %634, %635, %cst_164 {dimension_numbers = #tpu.dot_dimension_numbers<[1], [0], [0], [1], [0, 0, 1, 1], [], []>} : vector<2x128xbf16>, vector<128x512xbf16>, vector<2x512xf32> -> vector<2x512xf32>
    %637 = arith.addf %633, %636 : vector<2x512xf32>
    %638 = arith.addf %637, %536 : vector<2x512xf32>
    %639 = vector.extract_strided_slice %638 {offsets = [0, 0], sizes = [2, 128], strides = [1, 1]} : vector<2x512xf32> to vector<2x128xf32>
    %640 = arith.negf %639 : vector<2x128xf32>
    %641 = math.exp %640 : vector<2x128xf32>
    %cst_165 = arith.constant 1.000000e+00 : f32
    %642 = vector.broadcast %cst_165 : f32 to vector<2x128xf32>
    %643 = arith.addf %642, %641 : vector<2x128xf32>
    %644 = arith.divf %642, %643 : vector<2x128xf32>
    %645 = vector.extract_strided_slice %638 {offsets = [0, 128], sizes = [2, 128], strides = [1, 1]} : vector<2x512xf32> to vector<2x128xf32>
    %646 = arith.negf %645 : vector<2x128xf32>
    %647 = math.exp %646 : vector<2x128xf32>
    %cst_166 = arith.constant 1.000000e+00 : f32
    %648 = vector.broadcast %cst_166 : f32 to vector<2x128xf32>
    %649 = arith.addf %648, %647 : vector<2x128xf32>
    %650 = arith.divf %648, %649 : vector<2x128xf32>
    %651 = vector.extract_strided_slice %638 {offsets = [0, 256], sizes = [2, 128], strides = [1, 1]} : vector<2x512xf32> to vector<2x128xf32>
    %652 = math.tanh %651 : vector<2x128xf32>
    %653 = vector.extract_strided_slice %638 {offsets = [0, 384], sizes = [2, 128], strides = [1, 1]} : vector<2x512xf32> to vector<2x128xf32>
    %654 = arith.negf %653 : vector<2x128xf32>
    %655 = math.exp %654 : vector<2x128xf32>
    %cst_167 = arith.constant 1.000000e+00 : f32
    %656 = vector.broadcast %cst_167 : f32 to vector<2x128xf32>
    %657 = arith.addf %656, %655 : vector<2x128xf32>
    %658 = arith.divf %656, %657 : vector<2x128xf32>
    %659 = arith.mulf %650, %598 : vector<2x128xf32>
    %660 = arith.mulf %644, %652 : vector<2x128xf32>
    %661 = arith.addf %659, %660 : vector<2x128xf32>
    %662 = math.tanh %661 : vector<2x128xf32>
    %663 = arith.mulf %658, %662 : vector<2x128xf32>
    %664 = vector.extract_strided_slice %533 {offsets = [4, 0], sizes = [2, 512], strides = [1, 1]} : vector<12x512xf32> to vector<2x512xf32>
    %665 = arith.truncf %630 : vector<2x128xf32> to vector<2x128xbf16>
    %c0_168 = arith.constant 0 : index
    %c0_169 = arith.constant 0 : index
    %666 = vector.load %arg10[%c0_168, %c0_169] : memref<128x512xbf16, #tpu.memory_space<vmem>>, vector<128x512xbf16>
    %cst_170 = arith.constant dense<0.000000e+00> : vector<2x512xf32>
    %667 = tpu.matmul %665, %666, %cst_170 {dimension_numbers = #tpu.dot_dimension_numbers<[1], [0], [0], [1], [0, 0, 1, 1], [], []>} : vector<2x128xbf16>, vector<128x512xbf16>, vector<2x512xf32> -> vector<2x512xf32>
    %668 = arith.addf %664, %667 : vector<2x512xf32>
    %669 = vector.extract_strided_slice %668 {offsets = [0, 0], sizes = [2, 128], strides = [1, 1]} : vector<2x512xf32> to vector<2x128xf32>
    %670 = arith.negf %669 : vector<2x128xf32>
    %671 = math.exp %670 : vector<2x128xf32>
    %cst_171 = arith.constant 1.000000e+00 : f32
    %672 = vector.broadcast %cst_171 : f32 to vector<2x128xf32>
    %673 = arith.addf %672, %671 : vector<2x128xf32>
    %674 = arith.divf %672, %673 : vector<2x128xf32>
    %675 = vector.extract_strided_slice %668 {offsets = [0, 128], sizes = [2, 128], strides = [1, 1]} : vector<2x512xf32> to vector<2x128xf32>
    %676 = arith.negf %675 : vector<2x128xf32>
    %677 = math.exp %676 : vector<2x128xf32>
    %cst_172 = arith.constant 1.000000e+00 : f32
    %678 = vector.broadcast %cst_172 : f32 to vector<2x128xf32>
    %679 = arith.addf %678, %677 : vector<2x128xf32>
    %680 = arith.divf %678, %679 : vector<2x128xf32>
    %681 = vector.extract_strided_slice %668 {offsets = [0, 256], sizes = [2, 128], strides = [1, 1]} : vector<2x512xf32> to vector<2x128xf32>
    %682 = math.tanh %681 : vector<2x128xf32>
    %683 = vector.extract_strided_slice %668 {offsets = [0, 384], sizes = [2, 128], strides = [1, 1]} : vector<2x512xf32> to vector<2x128xf32>
    %684 = arith.negf %683 : vector<2x128xf32>
    %685 = math.exp %684 : vector<2x128xf32>
    %cst_173 = arith.constant 1.000000e+00 : f32
    %686 = vector.broadcast %cst_173 : f32 to vector<2x128xf32>
    %687 = arith.addf %686, %685 : vector<2x128xf32>
    %688 = arith.divf %686, %687 : vector<2x128xf32>
    %689 = arith.mulf %680, %628 : vector<2x128xf32>
    %690 = arith.mulf %674, %682 : vector<2x128xf32>
    %691 = arith.addf %689, %690 : vector<2x128xf32>
    %692 = math.tanh %691 : vector<2x128xf32>
    %693 = arith.mulf %688, %692 : vector<2x128xf32>
    %694 = arith.truncf %693 : vector<2x128xf32> to vector<2x128xbf16>
    %c0_174 = arith.constant 0 : index
    %c0_175 = arith.constant 0 : index
    %695 = vector.load %arg12[%c0_174, %c0_175] : memref<128x512xbf16, #tpu.memory_space<vmem>>, vector<128x512xbf16>
    %cst_176 = arith.constant dense<0.000000e+00> : vector<2x512xf32>
    %696 = tpu.matmul %694, %695, %cst_176 {dimension_numbers = #tpu.dot_dimension_numbers<[1], [0], [0], [1], [0, 0, 1, 1], [], []>} : vector<2x128xbf16>, vector<128x512xbf16>, vector<2x512xf32> -> vector<2x512xf32>
    %697 = arith.truncf %663 : vector<2x128xf32> to vector<2x128xbf16>
    %c0_177 = arith.constant 0 : index
    %c0_178 = arith.constant 0 : index
    %698 = vector.load %arg13[%c0_177, %c0_178] : memref<128x512xbf16, #tpu.memory_space<vmem>>, vector<128x512xbf16>
    %cst_179 = arith.constant dense<0.000000e+00> : vector<2x512xf32>
    %699 = tpu.matmul %697, %698, %cst_179 {dimension_numbers = #tpu.dot_dimension_numbers<[1], [0], [0], [1], [0, 0, 1, 1], [], []>} : vector<2x128xbf16>, vector<128x512xbf16>, vector<2x512xf32> -> vector<2x512xf32>
    %700 = arith.addf %696, %699 : vector<2x512xf32>
    %701 = arith.addf %700, %536 : vector<2x512xf32>
    %702 = vector.extract_strided_slice %701 {offsets = [0, 0], sizes = [2, 128], strides = [1, 1]} : vector<2x512xf32> to vector<2x128xf32>
    %703 = arith.negf %702 : vector<2x128xf32>
    %704 = math.exp %703 : vector<2x128xf32>
    %cst_180 = arith.constant 1.000000e+00 : f32
    %705 = vector.broadcast %cst_180 : f32 to vector<2x128xf32>
    %706 = arith.addf %705, %704 : vector<2x128xf32>
    %707 = arith.divf %705, %706 : vector<2x128xf32>
    %708 = vector.extract_strided_slice %701 {offsets = [0, 128], sizes = [2, 128], strides = [1, 1]} : vector<2x512xf32> to vector<2x128xf32>
    %709 = arith.negf %708 : vector<2x128xf32>
    %710 = math.exp %709 : vector<2x128xf32>
    %cst_181 = arith.constant 1.000000e+00 : f32
    %711 = vector.broadcast %cst_181 : f32 to vector<2x128xf32>
    %712 = arith.addf %711, %710 : vector<2x128xf32>
    %713 = arith.divf %711, %712 : vector<2x128xf32>
    %714 = vector.extract_strided_slice %701 {offsets = [0, 256], sizes = [2, 128], strides = [1, 1]} : vector<2x512xf32> to vector<2x128xf32>
    %715 = math.tanh %714 : vector<2x128xf32>
    %716 = vector.extract_strided_slice %701 {offsets = [0, 384], sizes = [2, 128], strides = [1, 1]} : vector<2x512xf32> to vector<2x128xf32>
    %717 = arith.negf %716 : vector<2x128xf32>
    %718 = math.exp %717 : vector<2x128xf32>
    %cst_182 = arith.constant 1.000000e+00 : f32
    %719 = vector.broadcast %cst_182 : f32 to vector<2x128xf32>
    %720 = arith.addf %719, %718 : vector<2x128xf32>
    %721 = arith.divf %719, %720 : vector<2x128xf32>
    %722 = arith.mulf %713, %661 : vector<2x128xf32>
    %723 = arith.mulf %707, %715 : vector<2x128xf32>
    %724 = arith.addf %722, %723 : vector<2x128xf32>
    %725 = math.tanh %724 : vector<2x128xf32>
    %726 = arith.mulf %721, %725 : vector<2x128xf32>
    %727 = vector.extract_strided_slice %533 {offsets = [6, 0], sizes = [2, 512], strides = [1, 1]} : vector<12x512xf32> to vector<2x512xf32>
    %728 = arith.truncf %693 : vector<2x128xf32> to vector<2x128xbf16>
    %c0_183 = arith.constant 0 : index
    %c0_184 = arith.constant 0 : index
    %729 = vector.load %arg10[%c0_183, %c0_184] : memref<128x512xbf16, #tpu.memory_space<vmem>>, vector<128x512xbf16>
    %cst_185 = arith.constant dense<0.000000e+00> : vector<2x512xf32>
    %730 = tpu.matmul %728, %729, %cst_185 {dimension_numbers = #tpu.dot_dimension_numbers<[1], [0], [0], [1], [0, 0, 1, 1], [], []>} : vector<2x128xbf16>, vector<128x512xbf16>, vector<2x512xf32> -> vector<2x512xf32>
    %731 = arith.addf %727, %730 : vector<2x512xf32>
    %732 = vector.extract_strided_slice %731 {offsets = [0, 0], sizes = [2, 128], strides = [1, 1]} : vector<2x512xf32> to vector<2x128xf32>
    %733 = arith.negf %732 : vector<2x128xf32>
    %734 = math.exp %733 : vector<2x128xf32>
    %cst_186 = arith.constant 1.000000e+00 : f32
    %735 = vector.broadcast %cst_186 : f32 to vector<2x128xf32>
    %736 = arith.addf %735, %734 : vector<2x128xf32>
    %737 = arith.divf %735, %736 : vector<2x128xf32>
    %738 = vector.extract_strided_slice %731 {offsets = [0, 128], sizes = [2, 128], strides = [1, 1]} : vector<2x512xf32> to vector<2x128xf32>
    %739 = arith.negf %738 : vector<2x128xf32>
    %740 = math.exp %739 : vector<2x128xf32>
    %cst_187 = arith.constant 1.000000e+00 : f32
    %741 = vector.broadcast %cst_187 : f32 to vector<2x128xf32>
    %742 = arith.addf %741, %740 : vector<2x128xf32>
    %743 = arith.divf %741, %742 : vector<2x128xf32>
    %744 = vector.extract_strided_slice %731 {offsets = [0, 256], sizes = [2, 128], strides = [1, 1]} : vector<2x512xf32> to vector<2x128xf32>
    %745 = math.tanh %744 : vector<2x128xf32>
    %746 = vector.extract_strided_slice %731 {offsets = [0, 384], sizes = [2, 128], strides = [1, 1]} : vector<2x512xf32> to vector<2x128xf32>
    %747 = arith.negf %746 : vector<2x128xf32>
    %748 = math.exp %747 : vector<2x128xf32>
    %cst_188 = arith.constant 1.000000e+00 : f32
    %749 = vector.broadcast %cst_188 : f32 to vector<2x128xf32>
    %750 = arith.addf %749, %748 : vector<2x128xf32>
    %751 = arith.divf %749, %750 : vector<2x128xf32>
    %752 = arith.mulf %743, %691 : vector<2x128xf32>
    %753 = arith.mulf %737, %745 : vector<2x128xf32>
    %754 = arith.addf %752, %753 : vector<2x128xf32>
    %755 = math.tanh %754 : vector<2x128xf32>
    %756 = arith.mulf %751, %755 : vector<2x128xf32>
    %757 = arith.truncf %756 : vector<2x128xf32> to vector<2x128xbf16>
    %c0_189 = arith.constant 0 : index
    %c0_190 = arith.constant 0 : index
    %758 = vector.load %arg12[%c0_189, %c0_190] : memref<128x512xbf16, #tpu.memory_space<vmem>>, vector<128x512xbf16>
    %cst_191 = arith.constant dense<0.000000e+00> : vector<2x512xf32>
    %759 = tpu.matmul %757, %758, %cst_191 {dimension_numbers = #tpu.dot_dimension_numbers<[1], [0], [0], [1], [0, 0, 1, 1], [], []>} : vector<2x128xbf16>, vector<128x512xbf16>, vector<2x512xf32> -> vector<2x512xf32>
    %760 = arith.truncf %726 : vector<2x128xf32> to vector<2x128xbf16>
    %c0_192 = arith.constant 0 : index
    %c0_193 = arith.constant 0 : index
    %761 = vector.load %arg13[%c0_192, %c0_193] : memref<128x512xbf16, #tpu.memory_space<vmem>>, vector<128x512xbf16>
    %cst_194 = arith.constant dense<0.000000e+00> : vector<2x512xf32>
    %762 = tpu.matmul %760, %761, %cst_194 {dimension_numbers = #tpu.dot_dimension_numbers<[1], [0], [0], [1], [0, 0, 1, 1], [], []>} : vector<2x128xbf16>, vector<128x512xbf16>, vector<2x512xf32> -> vector<2x512xf32>
    %763 = arith.addf %759, %762 : vector<2x512xf32>
    %764 = arith.addf %763, %536 : vector<2x512xf32>
    %765 = vector.extract_strided_slice %764 {offsets = [0, 0], sizes = [2, 128], strides = [1, 1]} : vector<2x512xf32> to vector<2x128xf32>
    %766 = arith.negf %765 : vector<2x128xf32>
    %767 = math.exp %766 : vector<2x128xf32>
    %cst_195 = arith.constant 1.000000e+00 : f32
    %768 = vector.broadcast %cst_195 : f32 to vector<2x128xf32>
    %769 = arith.addf %768, %767 : vector<2x128xf32>
    %770 = arith.divf %768, %769 : vector<2x128xf32>
    %771 = vector.extract_strided_slice %764 {offsets = [0, 128], sizes = [2, 128], strides = [1, 1]} : vector<2x512xf32> to vector<2x128xf32>
    %772 = arith.negf %771 : vector<2x128xf32>
    %773 = math.exp %772 : vector<2x128xf32>
    %cst_196 = arith.constant 1.000000e+00 : f32
    %774 = vector.broadcast %cst_196 : f32 to vector<2x128xf32>
    %775 = arith.addf %774, %773 : vector<2x128xf32>
    %776 = arith.divf %774, %775 : vector<2x128xf32>
    %777 = vector.extract_strided_slice %764 {offsets = [0, 256], sizes = [2, 128], strides = [1, 1]} : vector<2x512xf32> to vector<2x128xf32>
    %778 = math.tanh %777 : vector<2x128xf32>
    %779 = vector.extract_strided_slice %764 {offsets = [0, 384], sizes = [2, 128], strides = [1, 1]} : vector<2x512xf32> to vector<2x128xf32>
    %780 = arith.negf %779 : vector<2x128xf32>
    %781 = math.exp %780 : vector<2x128xf32>
    %cst_197 = arith.constant 1.000000e+00 : f32
    %782 = vector.broadcast %cst_197 : f32 to vector<2x128xf32>
    %783 = arith.addf %782, %781 : vector<2x128xf32>
    %784 = arith.divf %782, %783 : vector<2x128xf32>
    %785 = arith.mulf %776, %724 : vector<2x128xf32>
    %786 = arith.mulf %770, %778 : vector<2x128xf32>
    %787 = arith.addf %785, %786 : vector<2x128xf32>
    %788 = math.tanh %787 : vector<2x128xf32>
    %789 = arith.mulf %784, %788 : vector<2x128xf32>
    %790 = vector.extract_strided_slice %533 {offsets = [8, 0], sizes = [2, 512], strides = [1, 1]} : vector<12x512xf32> to vector<2x512xf32>
    %791 = arith.truncf %756 : vector<2x128xf32> to vector<2x128xbf16>
    %c0_198 = arith.constant 0 : index
    %c0_199 = arith.constant 0 : index
    %792 = vector.load %arg10[%c0_198, %c0_199] : memref<128x512xbf16, #tpu.memory_space<vmem>>, vector<128x512xbf16>
    %cst_200 = arith.constant dense<0.000000e+00> : vector<2x512xf32>
    %793 = tpu.matmul %791, %792, %cst_200 {dimension_numbers = #tpu.dot_dimension_numbers<[1], [0], [0], [1], [0, 0, 1, 1], [], []>} : vector<2x128xbf16>, vector<128x512xbf16>, vector<2x512xf32> -> vector<2x512xf32>
    %794 = arith.addf %790, %793 : vector<2x512xf32>
    %795 = vector.extract_strided_slice %794 {offsets = [0, 0], sizes = [2, 128], strides = [1, 1]} : vector<2x512xf32> to vector<2x128xf32>
    %796 = arith.negf %795 : vector<2x128xf32>
    %797 = math.exp %796 : vector<2x128xf32>
    %cst_201 = arith.constant 1.000000e+00 : f32
    %798 = vector.broadcast %cst_201 : f32 to vector<2x128xf32>
    %799 = arith.addf %798, %797 : vector<2x128xf32>
    %800 = arith.divf %798, %799 : vector<2x128xf32>
    %801 = vector.extract_strided_slice %794 {offsets = [0, 128], sizes = [2, 128], strides = [1, 1]} : vector<2x512xf32> to vector<2x128xf32>
    %802 = arith.negf %801 : vector<2x128xf32>
    %803 = math.exp %802 : vector<2x128xf32>
    %cst_202 = arith.constant 1.000000e+00 : f32
    %804 = vector.broadcast %cst_202 : f32 to vector<2x128xf32>
    %805 = arith.addf %804, %803 : vector<2x128xf32>
    %806 = arith.divf %804, %805 : vector<2x128xf32>
    %807 = vector.extract_strided_slice %794 {offsets = [0, 256], sizes = [2, 128], strides = [1, 1]} : vector<2x512xf32> to vector<2x128xf32>
    %808 = math.tanh %807 : vector<2x128xf32>
    %809 = vector.extract_strided_slice %794 {offsets = [0, 384], sizes = [2, 128], strides = [1, 1]} : vector<2x512xf32> to vector<2x128xf32>
    %810 = arith.negf %809 : vector<2x128xf32>
    %811 = math.exp %810 : vector<2x128xf32>
    %cst_203 = arith.constant 1.000000e+00 : f32
    %812 = vector.broadcast %cst_203 : f32 to vector<2x128xf32>
    %813 = arith.addf %812, %811 : vector<2x128xf32>
    %814 = arith.divf %812, %813 : vector<2x128xf32>
    %815 = arith.mulf %806, %754 : vector<2x128xf32>
    %816 = arith.mulf %800, %808 : vector<2x128xf32>
    %817 = arith.addf %815, %816 : vector<2x128xf32>
    %818 = math.tanh %817 : vector<2x128xf32>
    %819 = arith.mulf %814, %818 : vector<2x128xf32>
    %820 = arith.truncf %819 : vector<2x128xf32> to vector<2x128xbf16>
    %c0_204 = arith.constant 0 : index
    %c0_205 = arith.constant 0 : index
    %821 = vector.load %arg12[%c0_204, %c0_205] : memref<128x512xbf16, #tpu.memory_space<vmem>>, vector<128x512xbf16>
    %cst_206 = arith.constant dense<0.000000e+00> : vector<2x512xf32>
    %822 = tpu.matmul %820, %821, %cst_206 {dimension_numbers = #tpu.dot_dimension_numbers<[1], [0], [0], [1], [0, 0, 1, 1], [], []>} : vector<2x128xbf16>, vector<128x512xbf16>, vector<2x512xf32> -> vector<2x512xf32>
    %823 = arith.truncf %789 : vector<2x128xf32> to vector<2x128xbf16>
    %c0_207 = arith.constant 0 : index
    %c0_208 = arith.constant 0 : index
    %824 = vector.load %arg13[%c0_207, %c0_208] : memref<128x512xbf16, #tpu.memory_space<vmem>>, vector<128x512xbf16>
    %cst_209 = arith.constant dense<0.000000e+00> : vector<2x512xf32>
    %825 = tpu.matmul %823, %824, %cst_209 {dimension_numbers = #tpu.dot_dimension_numbers<[1], [0], [0], [1], [0, 0, 1, 1], [], []>} : vector<2x128xbf16>, vector<128x512xbf16>, vector<2x512xf32> -> vector<2x512xf32>
    %826 = arith.addf %822, %825 : vector<2x512xf32>
    %827 = arith.addf %826, %536 : vector<2x512xf32>
    %828 = vector.extract_strided_slice %827 {offsets = [0, 0], sizes = [2, 128], strides = [1, 1]} : vector<2x512xf32> to vector<2x128xf32>
    %829 = arith.negf %828 : vector<2x128xf32>
    %830 = math.exp %829 : vector<2x128xf32>
    %cst_210 = arith.constant 1.000000e+00 : f32
    %831 = vector.broadcast %cst_210 : f32 to vector<2x128xf32>
    %832 = arith.addf %831, %830 : vector<2x128xf32>
    %833 = arith.divf %831, %832 : vector<2x128xf32>
    %834 = vector.extract_strided_slice %827 {offsets = [0, 128], sizes = [2, 128], strides = [1, 1]} : vector<2x512xf32> to vector<2x128xf32>
    %835 = arith.negf %834 : vector<2x128xf32>
    %836 = math.exp %835 : vector<2x128xf32>
    %cst_211 = arith.constant 1.000000e+00 : f32
    %837 = vector.broadcast %cst_211 : f32 to vector<2x128xf32>
    %838 = arith.addf %837, %836 : vector<2x128xf32>
    %839 = arith.divf %837, %838 : vector<2x128xf32>
    %840 = vector.extract_strided_slice %827 {offsets = [0, 256], sizes = [2, 128], strides = [1, 1]} : vector<2x512xf32> to vector<2x128xf32>
    %841 = math.tanh %840 : vector<2x128xf32>
    %842 = vector.extract_strided_slice %827 {offsets = [0, 384], sizes = [2, 128], strides = [1, 1]} : vector<2x512xf32> to vector<2x128xf32>
    %843 = arith.negf %842 : vector<2x128xf32>
    %844 = math.exp %843 : vector<2x128xf32>
    %cst_212 = arith.constant 1.000000e+00 : f32
    %845 = vector.broadcast %cst_212 : f32 to vector<2x128xf32>
    %846 = arith.addf %845, %844 : vector<2x128xf32>
    %847 = arith.divf %845, %846 : vector<2x128xf32>
    %848 = arith.mulf %839, %787 : vector<2x128xf32>
    %849 = arith.mulf %833, %841 : vector<2x128xf32>
    %850 = arith.addf %848, %849 : vector<2x128xf32>
    %851 = math.tanh %850 : vector<2x128xf32>
    %852 = arith.mulf %847, %851 : vector<2x128xf32>
    %853 = vector.extract_strided_slice %533 {offsets = [10, 0], sizes = [2, 512], strides = [1, 1]} : vector<12x512xf32> to vector<2x512xf32>
    %854 = arith.truncf %819 : vector<2x128xf32> to vector<2x128xbf16>
    %c0_213 = arith.constant 0 : index
    %c0_214 = arith.constant 0 : index
    %855 = vector.load %arg10[%c0_213, %c0_214] : memref<128x512xbf16, #tpu.memory_space<vmem>>, vector<128x512xbf16>
    %cst_215 = arith.constant dense<0.000000e+00> : vector<2x512xf32>
    %856 = tpu.matmul %854, %855, %cst_215 {dimension_numbers = #tpu.dot_dimension_numbers<[1], [0], [0], [1], [0, 0, 1, 1], [], []>} : vector<2x128xbf16>, vector<128x512xbf16>, vector<2x512xf32> -> vector<2x512xf32>
    %857 = arith.addf %853, %856 : vector<2x512xf32>
    %858 = vector.extract_strided_slice %857 {offsets = [0, 0], sizes = [2, 128], strides = [1, 1]} : vector<2x512xf32> to vector<2x128xf32>
    %859 = arith.negf %858 : vector<2x128xf32>
    %860 = math.exp %859 : vector<2x128xf32>
    %cst_216 = arith.constant 1.000000e+00 : f32
    %861 = vector.broadcast %cst_216 : f32 to vector<2x128xf32>
    %862 = arith.addf %861, %860 : vector<2x128xf32>
    %863 = arith.divf %861, %862 : vector<2x128xf32>
    %864 = vector.extract_strided_slice %857 {offsets = [0, 128], sizes = [2, 128], strides = [1, 1]} : vector<2x512xf32> to vector<2x128xf32>
    %865 = arith.negf %864 : vector<2x128xf32>
    %866 = math.exp %865 : vector<2x128xf32>
    %cst_217 = arith.constant 1.000000e+00 : f32
    %867 = vector.broadcast %cst_217 : f32 to vector<2x128xf32>
    %868 = arith.addf %867, %866 : vector<2x128xf32>
    %869 = arith.divf %867, %868 : vector<2x128xf32>
    %870 = vector.extract_strided_slice %857 {offsets = [0, 256], sizes = [2, 128], strides = [1, 1]} : vector<2x512xf32> to vector<2x128xf32>
    %871 = math.tanh %870 : vector<2x128xf32>
    %872 = vector.extract_strided_slice %857 {offsets = [0, 384], sizes = [2, 128], strides = [1, 1]} : vector<2x512xf32> to vector<2x128xf32>
    %873 = arith.negf %872 : vector<2x128xf32>
    %874 = math.exp %873 : vector<2x128xf32>
    %cst_218 = arith.constant 1.000000e+00 : f32
    %875 = vector.broadcast %cst_218 : f32 to vector<2x128xf32>
    %876 = arith.addf %875, %874 : vector<2x128xf32>
    %877 = arith.divf %875, %876 : vector<2x128xf32>
    %878 = arith.mulf %869, %817 : vector<2x128xf32>
    %879 = arith.mulf %863, %871 : vector<2x128xf32>
    %880 = arith.addf %878, %879 : vector<2x128xf32>
    %881 = math.tanh %880 : vector<2x128xf32>
    %882 = arith.mulf %877, %881 : vector<2x128xf32>
    %883 = arith.truncf %882 : vector<2x128xf32> to vector<2x128xbf16>
    %c0_219 = arith.constant 0 : index
    %c0_220 = arith.constant 0 : index
    %884 = vector.load %arg12[%c0_219, %c0_220] : memref<128x512xbf16, #tpu.memory_space<vmem>>, vector<128x512xbf16>
    %cst_221 = arith.constant dense<0.000000e+00> : vector<2x512xf32>
    %885 = tpu.matmul %883, %884, %cst_221 {dimension_numbers = #tpu.dot_dimension_numbers<[1], [0], [0], [1], [0, 0, 1, 1], [], []>} : vector<2x128xbf16>, vector<128x512xbf16>, vector<2x512xf32> -> vector<2x512xf32>
    %886 = arith.truncf %852 : vector<2x128xf32> to vector<2x128xbf16>
    %c0_222 = arith.constant 0 : index
    %c0_223 = arith.constant 0 : index
    %887 = vector.load %arg13[%c0_222, %c0_223] : memref<128x512xbf16, #tpu.memory_space<vmem>>, vector<128x512xbf16>
    %cst_224 = arith.constant dense<0.000000e+00> : vector<2x512xf32>
    %888 = tpu.matmul %886, %887, %cst_224 {dimension_numbers = #tpu.dot_dimension_numbers<[1], [0], [0], [1], [0, 0, 1, 1], [], []>} : vector<2x128xbf16>, vector<128x512xbf16>, vector<2x512xf32> -> vector<2x512xf32>
    %889 = arith.addf %885, %888 : vector<2x512xf32>
    %890 = arith.addf %889, %536 : vector<2x512xf32>
    %891 = vector.extract_strided_slice %890 {offsets = [0, 0], sizes = [2, 128], strides = [1, 1]} : vector<2x512xf32> to vector<2x128xf32>
    %892 = arith.negf %891 : vector<2x128xf32>
    %893 = math.exp %892 : vector<2x128xf32>
    %cst_225 = arith.constant 1.000000e+00 : f32
    %894 = vector.broadcast %cst_225 : f32 to vector<2x128xf32>
    %895 = arith.addf %894, %893 : vector<2x128xf32>
    %896 = arith.divf %894, %895 : vector<2x128xf32>
    %897 = vector.extract_strided_slice %890 {offsets = [0, 128], sizes = [2, 128], strides = [1, 1]} : vector<2x512xf32> to vector<2x128xf32>
    %898 = arith.negf %897 : vector<2x128xf32>
    %899 = math.exp %898 : vector<2x128xf32>
    %cst_226 = arith.constant 1.000000e+00 : f32
    %900 = vector.broadcast %cst_226 : f32 to vector<2x128xf32>
    %901 = arith.addf %900, %899 : vector<2x128xf32>
    %902 = arith.divf %900, %901 : vector<2x128xf32>
    %903 = vector.extract_strided_slice %890 {offsets = [0, 256], sizes = [2, 128], strides = [1, 1]} : vector<2x512xf32> to vector<2x128xf32>
    %904 = math.tanh %903 : vector<2x128xf32>
    %905 = vector.extract_strided_slice %890 {offsets = [0, 384], sizes = [2, 128], strides = [1, 1]} : vector<2x512xf32> to vector<2x128xf32>
    %906 = arith.negf %905 : vector<2x128xf32>
    %907 = math.exp %906 : vector<2x128xf32>
    %cst_227 = arith.constant 1.000000e+00 : f32
    %908 = vector.broadcast %cst_227 : f32 to vector<2x128xf32>
    %909 = arith.addf %908, %907 : vector<2x128xf32>
    %910 = arith.divf %908, %909 : vector<2x128xf32>
    %911 = arith.mulf %902, %850 : vector<2x128xf32>
    %912 = arith.mulf %896, %904 : vector<2x128xf32>
    %913 = arith.addf %911, %912 : vector<2x128xf32>
    %914 = math.tanh %913 : vector<2x128xf32>
    %915 = arith.mulf %910, %914 : vector<2x128xf32>
    %c0_i32_228 = arith.constant 0 : i32
    %916 = tpu.memref_slice %arg36[%c0_i32_228] : memref<6x!tpu.dma_semaphore, #tpu.memory_space<semaphore_mem>> -> memref<1x!tpu.dma_semaphore, #tpu.memory_space<semaphore_mem>>
    %917 = tpu.memref_squeeze %916 : memref<1x!tpu.dma_semaphore, #tpu.memory_space<semaphore_mem>> -> memref<!tpu.dma_semaphore, #tpu.memory_space<semaphore_mem>>
    tpu.wait_dma2 semaphore(%917 : memref<!tpu.dma_semaphore, #tpu.memory_space<semaphore_mem>>) src(%arg23 : memref<357x512xbf16, #tpu.memory_space<any>>) dst(%arg30 : memref<357x512xbf16, #tpu.memory_space<vmem>>)
    %c1_i32_229 = arith.constant 1 : i32
    %918 = tpu.memref_slice %arg36[%c1_i32_229] : memref<6x!tpu.dma_semaphore, #tpu.memory_space<semaphore_mem>> -> memref<1x!tpu.dma_semaphore, #tpu.memory_space<semaphore_mem>>
    %919 = tpu.memref_squeeze %918 : memref<1x!tpu.dma_semaphore, #tpu.memory_space<semaphore_mem>> -> memref<!tpu.dma_semaphore, #tpu.memory_space<semaphore_mem>>
    tpu.wait_dma2 semaphore(%919 : memref<!tpu.dma_semaphore, #tpu.memory_space<semaphore_mem>>) src(%arg24 : memref<128x512xbf16, #tpu.memory_space<any>>) dst(%arg31 : memref<128x512xbf16, #tpu.memory_space<vmem>>)
    %c2_i32_230 = arith.constant 2 : i32
    %920 = tpu.memref_slice %arg36[%c2_i32_230] : memref<6x!tpu.dma_semaphore, #tpu.memory_space<semaphore_mem>> -> memref<1x!tpu.dma_semaphore, #tpu.memory_space<semaphore_mem>>
    %921 = tpu.memref_squeeze %920 : memref<1x!tpu.dma_semaphore, #tpu.memory_space<semaphore_mem>> -> memref<!tpu.dma_semaphore, #tpu.memory_space<semaphore_mem>>
    tpu.wait_dma2 semaphore(%921 : memref<!tpu.dma_semaphore, #tpu.memory_space<semaphore_mem>>) src(%arg25 : memref<128x512xbf16, #tpu.memory_space<any>>) dst(%arg32 : memref<128x512xbf16, #tpu.memory_space<vmem>>)
    %c3_i32_231 = arith.constant 3 : i32
    %922 = tpu.memref_slice %arg36[%c3_i32_231] : memref<6x!tpu.dma_semaphore, #tpu.memory_space<semaphore_mem>> -> memref<1x!tpu.dma_semaphore, #tpu.memory_space<semaphore_mem>>
    %923 = tpu.memref_squeeze %922 : memref<1x!tpu.dma_semaphore, #tpu.memory_space<semaphore_mem>> -> memref<!tpu.dma_semaphore, #tpu.memory_space<semaphore_mem>>
    tpu.wait_dma2 semaphore(%923 : memref<!tpu.dma_semaphore, #tpu.memory_space<semaphore_mem>>) src(%arg26 : memref<512x512xbf16, #tpu.memory_space<any>>) dst(%arg33 : memref<512x512xbf16, #tpu.memory_space<vmem>>)
    %c4_i32_232 = arith.constant 4 : i32
    %924 = tpu.memref_slice %arg36[%c4_i32_232] : memref<6x!tpu.dma_semaphore, #tpu.memory_space<semaphore_mem>> -> memref<1x!tpu.dma_semaphore, #tpu.memory_space<semaphore_mem>>
    %925 = tpu.memref_squeeze %924 : memref<1x!tpu.dma_semaphore, #tpu.memory_space<semaphore_mem>> -> memref<!tpu.dma_semaphore, #tpu.memory_space<semaphore_mem>>
    tpu.wait_dma2 semaphore(%925 : memref<!tpu.dma_semaphore, #tpu.memory_space<semaphore_mem>>) src(%arg27 : memref<512x512xbf16, #tpu.memory_space<any>>) dst(%arg34 : memref<512x512xbf16, #tpu.memory_space<vmem>>)
    %c5_i32_233 = arith.constant 5 : i32
    %926 = tpu.memref_slice %arg36[%c5_i32_233] : memref<6x!tpu.dma_semaphore, #tpu.memory_space<semaphore_mem>> -> memref<1x!tpu.dma_semaphore, #tpu.memory_space<semaphore_mem>>
    %927 = tpu.memref_squeeze %926 : memref<1x!tpu.dma_semaphore, #tpu.memory_space<semaphore_mem>> -> memref<!tpu.dma_semaphore, #tpu.memory_space<semaphore_mem>>
    tpu.wait_dma2 semaphore(%927 : memref<!tpu.dma_semaphore, #tpu.memory_space<semaphore_mem>>) src(%arg28 : memref<512x512xbf16, #tpu.memory_space<any>>) dst(%arg35 : memref<512x512xbf16, #tpu.memory_space<vmem>>)
    %c0_234 = arith.constant 0 : index
    %c0_235 = arith.constant 0 : index
    %928 = vector.load %arg0[%c0_234, %c0_235] : memref<2x357xf32, #tpu.memory_space<vmem>>, vector<2x357xf32>
    %929 = arith.truncf %928 : vector<2x357xf32> to vector<2x357xbf16>
    %c0_236 = arith.constant 0 : index
    %c0_237 = arith.constant 0 : index
    %930 = vector.load %arg30[%c0_236, %c0_237] : memref<357x512xbf16, #tpu.memory_space<vmem>>, vector<357x512xbf16>
    %cst_238 = arith.constant dense<0.000000e+00> : vector<2x512xf32>
    %931 = tpu.matmul %929, %930, %cst_238 {dimension_numbers = #tpu.dot_dimension_numbers<[1], [0], [0], [1], [0, 0, 1, 1], [], []>} : vector<2x357xbf16>, vector<357x512xbf16>, vector<2x512xf32> -> vector<2x512xf32>
    %932 = arith.truncf %526 : vector<2x128xf32> to vector<2x128xbf16>
    %c0_239 = arith.constant 0 : index
    %c0_240 = arith.constant 0 : index
    %933 = vector.load %arg31[%c0_239, %c0_240] : memref<128x512xbf16, #tpu.memory_space<vmem>>, vector<128x512xbf16>
    %cst_241 = arith.constant dense<0.000000e+00> : vector<2x512xf32>
    %934 = tpu.matmul %932, %933, %cst_241 {dimension_numbers = #tpu.dot_dimension_numbers<[1], [0], [0], [1], [0, 0, 1, 1], [], []>} : vector<2x128xbf16>, vector<128x512xbf16>, vector<2x512xf32> -> vector<2x512xf32>
    %935 = arith.addf %931, %934 : vector<2x512xf32>
    %936 = arith.truncf %915 : vector<2x128xf32> to vector<2x128xbf16>
    %c0_242 = arith.constant 0 : index
    %c0_243 = arith.constant 0 : index
    %937 = vector.load %arg32[%c0_242, %c0_243] : memref<128x512xbf16, #tpu.memory_space<vmem>>, vector<128x512xbf16>
    %cst_244 = arith.constant dense<0.000000e+00> : vector<2x512xf32>
    %938 = tpu.matmul %936, %937, %cst_244 {dimension_numbers = #tpu.dot_dimension_numbers<[1], [0], [0], [1], [0, 0, 1, 1], [], []>} : vector<2x128xbf16>, vector<128x512xbf16>, vector<2x512xf32> -> vector<2x512xf32>
    %939 = arith.addf %935, %938 : vector<2x512xf32>
    %c0_245 = arith.constant 0 : index
    %c0_246 = arith.constant 0 : index
    %940 = vector.load %arg15[%c0_245, %c0_246] : memref<1x512xf32, #tpu.memory_space<vmem>>, vector<1x512xf32>
    %941 = vector.broadcast %940 : vector<1x512xf32> to vector<2x512xf32>
    %942 = arith.addf %939, %941 : vector<2x512xf32>
    %943 = math.tanh %942 : vector<2x512xf32>
    %944 = arith.truncf %943 : vector<2x512xf32> to vector<2x512xbf16>
    %c0_247 = arith.constant 0 : index
    %c0_248 = arith.constant 0 : index
    %945 = vector.load %arg33[%c0_247, %c0_248] : memref<512x512xbf16, #tpu.memory_space<vmem>>, vector<512x512xbf16>
    %cst_249 = arith.constant dense<0.000000e+00> : vector<2x512xf32>
    %946 = tpu.matmul %944, %945, %cst_249 {dimension_numbers = #tpu.dot_dimension_numbers<[1], [0], [0], [1], [0, 0, 1, 1], [], []>} : vector<2x512xbf16>, vector<512x512xbf16>, vector<2x512xf32> -> vector<2x512xf32>
    %c0_250 = arith.constant 0 : index
    %c0_251 = arith.constant 0 : index
    %947 = vector.load %arg16[%c0_250, %c0_251] : memref<1x512xf32, #tpu.memory_space<vmem>>, vector<1x512xf32>
    %948 = vector.broadcast %947 : vector<1x512xf32> to vector<2x512xf32>
    %949 = arith.addf %946, %948 : vector<2x512xf32>
    %cst_252 = arith.constant dense<0.000000e+00> : vector<2xf32>
    %950 = vector.multi_reduction <add>, %949, %cst_252 [1] : vector<2x512xf32> to vector<2xf32>
    %951 = vector.shape_cast %950 : vector<2xf32> to vector<2x1xf32>
    %cst_253 = arith.constant 5.120000e+02 : f32
    %952 = vector.broadcast %cst_253 : f32 to vector<2x1xf32>
    %953 = arith.divf %951, %952 : vector<2x1xf32>
    %954 = vector.broadcast %953 : vector<2x1xf32> to vector<2x512xf32>
    %955 = arith.subf %949, %954 : vector<2x512xf32>
    %956 = vector.broadcast %953 : vector<2x1xf32> to vector<2x512xf32>
    %957 = arith.subf %949, %956 : vector<2x512xf32>
    %958 = arith.mulf %955, %957 : vector<2x512xf32>
    %cst_254 = arith.constant dense<0.000000e+00> : vector<2xf32>
    %959 = vector.multi_reduction <add>, %958, %cst_254 [1] : vector<2x512xf32> to vector<2xf32>
    %960 = vector.shape_cast %959 : vector<2xf32> to vector<2x1xf32>
    %cst_255 = arith.constant 5.120000e+02 : f32
    %961 = vector.broadcast %cst_255 : f32 to vector<2x1xf32>
    %962 = arith.divf %960, %961 : vector<2x1xf32>
    %963 = vector.broadcast %953 : vector<2x1xf32> to vector<2x512xf32>
    %964 = arith.subf %949, %963 : vector<2x512xf32>
    %cst_256 = arith.constant 9.99999974E-6 : f32
    %965 = vector.broadcast %cst_256 : f32 to vector<2x1xf32>
    %966 = arith.addf %962, %965 : vector<2x1xf32>
    %967 = math.rsqrt %966 : vector<2x1xf32>
    %968 = vector.broadcast %967 : vector<2x1xf32> to vector<2x512xf32>
    %969 = arith.mulf %964, %968 : vector<2x512xf32>
    %c0_257 = arith.constant 0 : index
    %c0_258 = arith.constant 0 : index
    %970 = vector.load %arg17[%c0_257, %c0_258] : memref<1x512xf32, #tpu.memory_space<vmem>>, vector<1x512xf32>
    %971 = vector.broadcast %970 : vector<1x512xf32> to vector<2x512xf32>
    %972 = arith.mulf %969, %971 : vector<2x512xf32>
    %c0_259 = arith.constant 0 : index
    %c0_260 = arith.constant 0 : index
    %973 = vector.load %arg18[%c0_259, %c0_260] : memref<1x512xf32, #tpu.memory_space<vmem>>, vector<1x512xf32>
    %974 = vector.broadcast %973 : vector<1x512xf32> to vector<2x512xf32>
    %975 = arith.addf %972, %974 : vector<2x512xf32>
    %976 = math.tanh %975 : vector<2x512xf32>
    %977 = arith.truncf %976 : vector<2x512xf32> to vector<2x512xbf16>
    %c0_261 = arith.constant 0 : index
    %c0_262 = arith.constant 0 : index
    %978 = vector.load %arg34[%c0_261, %c0_262] : memref<512x512xbf16, #tpu.memory_space<vmem>>, vector<512x512xbf16>
    %cst_263 = arith.constant dense<0.000000e+00> : vector<2x512xf32>
    %979 = tpu.matmul %977, %978, %cst_263 {dimension_numbers = #tpu.dot_dimension_numbers<[1], [0], [0], [1], [0, 0, 1, 1], [], []>} : vector<2x512xbf16>, vector<512x512xbf16>, vector<2x512xf32> -> vector<2x512xf32>
    %c0_264 = arith.constant 0 : index
    %c0_265 = arith.constant 0 : index
    %980 = vector.load %arg19[%c0_264, %c0_265] : memref<1x512xf32, #tpu.memory_space<vmem>>, vector<1x512xf32>
    %981 = vector.broadcast %980 : vector<1x512xf32> to vector<2x512xf32>
    %982 = arith.addf %979, %981 : vector<2x512xf32>
    %983 = arith.addf %982, %943 : vector<2x512xf32>
    %984 = math.tanh %983 : vector<2x512xf32>
    %985 = arith.truncf %984 : vector<2x512xf32> to vector<2x512xbf16>
    %c0_266 = arith.constant 0 : index
    %c0_267 = arith.constant 0 : index
    %986 = vector.load %arg35[%c0_266, %c0_267] : memref<512x512xbf16, #tpu.memory_space<vmem>>, vector<512x512xbf16>
    %cst_268 = arith.constant dense<0.000000e+00> : vector<2x512xf32>
    %987 = tpu.matmul %985, %986, %cst_268 {dimension_numbers = #tpu.dot_dimension_numbers<[1], [0], [0], [1], [0, 0, 1, 1], [], []>} : vector<2x512xbf16>, vector<512x512xbf16>, vector<2x512xf32> -> vector<2x512xf32>
    %c0_269 = arith.constant 0 : index
    %c0_270 = arith.constant 0 : index
    %988 = vector.load %arg20[%c0_269, %c0_270] : memref<1x512xf32, #tpu.memory_space<vmem>>, vector<1x512xf32>
    %989 = vector.broadcast %988 : vector<1x512xf32> to vector<2x512xf32>
    %990 = arith.addf %987, %989 : vector<2x512xf32>
    %991 = arith.addf %990, %943 : vector<2x512xf32>
    %992 = arith.addf %991, %984 : vector<2x512xf32>
    %993 = math.tanh %992 : vector<2x512xf32>
    %c0_271 = arith.constant 0 : index
    %c0_272 = arith.constant 0 : index
    %994 = vector.load %arg21[%c0_271, %c0_272] : memref<1x512xf32, #tpu.memory_space<vmem>>, vector<1x512xf32>
    %995 = vector.broadcast %994 : vector<1x512xf32> to vector<2x512xf32>
    %996 = arith.mulf %993, %995 : vector<2x512xf32>
    %cst_273 = arith.constant dense<0.000000e+00> : vector<2xf32>
    %997 = vector.multi_reduction <add>, %996, %cst_273 [1] : vector<2x512xf32> to vector<2xf32>
    %998 = vector.shape_cast %997 : vector<2xf32> to vector<2x1xf32>
    %c0_274 = arith.constant 0 : index
    %c0_275 = arith.constant 0 : index
    %999 = vector.load %arg22[%c0_274, %c0_275] : memref<1x1xf32, #tpu.memory_space<vmem>>, vector<1x1xf32>
    %1000 = vector.broadcast %999 : vector<1x1xf32> to vector<2x1xf32>
    %1001 = arith.addf %998, %1000 : vector<2x1xf32>
    %c0_276 = arith.constant 0 : index
    %c0_277 = arith.constant 0 : index
    %1002 = vector.load %arg29[%c0_276, %c0_277] : memref<2x1xf32, #tpu.memory_space<vmem>>, vector<2x1xf32>
    tpu.vector_store %arg29[%c0_276, %c0_277], %1001 {strides = array<i32>} : memref<2x1xf32, #tpu.memory_space<vmem>>, vector<2x1xf32>,
    return
  }
}

</mosaic_0001>

<llo_original>
// kernel: agent_cri_net_forward.1
$region0: #{agent_cri_net_forward.1}
  #allocation0 [shape = 'u32[]', space=smem, size = 0x4, offset = 0x4, fixed_abs, tag = 'smem constant byte address 0x4 - core index']
  #allocation1 [shape = 'u32[144,128]{1,0:T(1,128)}', space=vmem, size = 0x12000, scoped, tag = 'internal scratch']
  #allocation2 [shape = 'bf16[357,512]{1,0:T(8,128)(2,1)}', space=vmem, size = 0x5a000, scoped, tag = 'scratch operand']
  #allocation3 [shape = 'bf16[128,512]{1,0:T(16,128)(2,1)}', space=vmem, size = 0x20000, scoped, tag = 'scratch operand']
  #allocation4 [shape = 'bf16[128,512]{1,0:T(16,128)(2,1)}', space=vmem, size = 0x20000, scoped, tag = 'scratch operand']
  #allocation5 [shape = 'bf16[512,512]{1,0:T(16,128)(2,1)}', space=vmem, size = 0x80000, scoped, tag = 'scratch operand']
  #allocation6 [shape = 'bf16[512,512]{1,0:T(16,128)(2,1)}', space=vmem, size = 0x80000, scoped, tag = 'scratch operand']
  #allocation7 [shape = 'bf16[512,512]{1,0:T(16,128)(2,1)}', space=vmem, size = 0x80000, scoped, tag = 'scratch operand']
  #allocation8 [shape = 's32[6]{0}', space=sflag, size = 0x18, scoped, tag = 'scratch operand']
  #allocation9 [shape = 'f32[1,1]{1,0:T(1,128)S(1)}', space=vmem, size = 0x200, scoped, tag = 'scoped memory for agent_cri_net_forward.1']
  #allocation23 [shape = 's32[]', space=sflag, size = 0x4, offset = 0, fixed_abs, tag = 'sflag constant byte address 0x0 - dummy sync flag']
  #allocation24 [shape = 's32[]', space=sflag, size = 0x4, offset = 0, fixed_abs, tag = 'sflag constant byte address 0x0 - dummy sync flag']
  #allocation25 [shape = 'u32[]', space=smem, size = 0x4, offset = 0x44, fixed_abs, tag = 'smem constant byte address 0x44 - assertion arg 0']
  #allocation26 [shape = 'u32[]', space=smem, size = 0x4, offset = 0x48, fixed_abs, tag = 'smem constant byte address 0x48 - assertion arg 1']
  #allocation27 [shape = 's32[]', space=sflag, size = 0x4, offset = 0, fixed_abs, tag = 'sflag constant byte address 0x0 - dummy sync flag']
  #allocation29 [shape = 's32[]', space=sflag, size = 0x4, offset = 0, fixed_abs, tag = 'sflag constant byte address 0x0 - dummy sync flag']
  #allocation31 [shape = 's32[]', space=sflag, size = 0x4, offset = 0, fixed_abs, tag = 'sflag constant byte address 0x0 - dummy sync flag']
  #allocation33 [shape = 's32[]', space=sflag, size = 0x4, offset = 0, fixed_abs, tag = 'sflag constant byte address 0x0 - dummy sync flag']
  #allocation35 [shape = 's32[]', space=sflag, size = 0x4, offset = 0, fixed_abs, tag = 'sflag constant byte address 0x0 - dummy sync flag']
  %s0 = inlined_call_operand.smem [shape: u32[30], index: -1, kind: input, shape index: {}]
  %s1 = sld [smem:[%s0]]
  %s2 = scalar_lea.smem %s0, 1
  %s3 = sld [smem:[%s2]]
  %s4 = scalar_lea.smem %s0, 2
  %s5 = sld [smem:[%s4]]
  %s6 = scalar_lea.smem %s0, 3
  %s7 = sld [smem:[%s6]]
  %s8 = scalar_lea.smem %s0, 4
  %s9 = sld [smem:[%s8]]
  %s10 = scalar_lea.smem %s0, 5
  %s11 = sld [smem:[%s10]]
  %s12 = scalar_lea.smem %s0, 6
  %s13 = sld [smem:[%s12]]
  %s14 = scalar_lea.smem %s0, 7
  %s15 = sld [smem:[%s14]]
  %s16 = scalar_lea.smem %s0, 8
  %s17 = sld [smem:[%s16]]
  %s18 = scalar_lea.smem %s0, 9
  %s19 = sld [smem:[%s18]]
  %s20 = scalar_lea.smem %s0, 10
  %s21 = sld [smem:[%s20]]
  %s22 = scalar_lea.smem %s0, 11
  %s23 = sld [smem:[%s22]]
  %s24 = scalar_lea.smem %s0, 12
  %s25 = sld [smem:[%s24]]
  %s26 = scalar_lea.smem %s0, 13
  %s27 = sld [smem:[%s26]]
  %s28 = scalar_lea.smem %s0, 14
  %s29 = sld [smem:[%s28]]
  %s30 = scalar_lea.smem %s0, 15
  %s31 = sld [smem:[%s30]]
  %s32 = scalar_lea.smem %s0, 16
  %s33 = sld [smem:[%s32]]
  %s34 = scalar_lea.smem %s0, 17
  %s35 = sld [smem:[%s34]]
  %s36 = scalar_lea.smem %s0, 18
  %s37 = sld [smem:[%s36]]
  %s38 = scalar_lea.smem %s0, 19
  %s39 = sld [smem:[%s38]]
  %s40 = scalar_lea.smem %s0, 20
  %s41 = sld [smem:[%s40]]
  %s42 = scalar_lea.smem %s0, 21
  %s43 = sld [smem:[%s42]]
  %s44 = scalar_lea.smem %s0, 22
  %s45 = sld [smem:[%s44]]
  %s46 = scalar_lea.smem %s0, 23
  %s47 = sld [smem:[%s46]]
  %s48 = scalar_lea.smem %s0, 24
  %s49 = sld [smem:[%s48]]
  %s50 = scalar_lea.smem %s0, 25
  %s51 = sld [smem:[%s50]]
  %s52 = scalar_lea.smem %s0, 26
  %s53 = sld [smem:[%s52]]
  %s54 = scalar_lea.smem %s0, 27
  %s55 = sld [smem:[%s54]]
  %s56 = scalar_lea.smem %s0, 28
  %s57 = sld [smem:[%s56]]
  %s58 = scalar_lea.smem %s0, 29
  %s59 = sld [smem:[%s58]]
  %s60 = sld [smem:[#allocation0]]
  $region138: #{agent_cri_net_forward.1} parent=0
    _
  %s62 = ssub.s32 1, %s60
  %s63 = scalar_select 0, %s62, %s60
  %v64 = vstv %s45
  %65 = vst [vmem:[#allocation9] sm:$0x1] %v64
  $region1: #{agent_cri_net_forward.1} parent=0
    #allocation10 [shape = 'u8[65536]{0}', space=vmem, size = 0x10000, scoped, tag = 'input window, operand 3, single buffered']
    #allocation11 [shape = 's32[1]{0}', space=sflag, size = 0x4, scoped, tag = 'scoped memory for agent_cri_net_forward.1']
    #allocation12 [shape = 'u8[131072]{0}', space=vmem, size = 0x20000, scoped, tag = 'input window, operand 4, single buffered']
    #allocation13 [shape = 's32[1]{0}', space=sflag, size = 0x4, scoped, tag = 'scoped memory for agent_cri_net_forward.1']
    #allocation14 [shape = 'u8[131072]{0}', space=vmem, size = 0x20000, scoped, tag = 'input window, operand 6, single buffered']
    #allocation15 [shape = 'u8[131072]{0}', space=vmem, size = 0x20000, scoped, tag = 'input window, operand 7, single buffered']
    #allocation16 [shape = 's32[1]{0}', space=sflag, size = 0x4, scoped, tag = 'scoped memory for agent_cri_net_forward.1']
    #allocation17 [shape = 'u8[65536]{0}', space=vmem, size = 0x10000, scoped, tag = 'input window, operand 9, single buffered']
    #allocation18 [shape = 'u8[131072]{0}', space=vmem, size = 0x20000, scoped, tag = 'input window, operand 10, single buffered']
    #allocation19 [shape = 's32[1]{0}', space=sflag, size = 0x4, scoped, tag = 'scoped memory for agent_cri_net_forward.1']
    #allocation20 [shape = 'u8[131072]{0}', space=vmem, size = 0x20000, scoped, tag = 'input window, operand 12, single buffered']
    #allocation21 [shape = 'u8[131072]{0}', space=vmem, size = 0x20000, scoped, tag = 'input window, operand 13, single buffered']
    #allocation22 [shape = 's32[1]{0}', space=sflag, size = 0x4, scoped, tag = 'scoped memory for agent_cri_net_forward.1']
    #allocation28 [shape = 'u32[9]{0}', space=smem, size = 0x24, scoped, tag = 'DMA stride descriptor']
    #allocation30 [shape = 'u32[9]{0}', space=smem, size = 0x24, scoped, tag = 'DMA stride descriptor']
    #allocation32 [shape = 'u32[9]{0}', space=smem, size = 0x24, scoped, tag = 'DMA stride descriptor']
    #allocation34 [shape = 'u32[9]{0}', space=smem, size = 0x24, scoped, tag = 'DMA stride descriptor']
    #allocation36 [shape = 'u32[9]{0}', space=smem, size = 0x24, scoped, tag = 'DMA stride descriptor']
    %66 = vsyncpa [#allocation11], 0
    %67 = vsyncpa [#allocation13], 0
    %68 = vsyncpa [#allocation16], 0
    %69 = vsyncpa [#allocation19], 0
    %70 = vsyncpa [#allocation22], 0
    // Predicated region
    $region2: #{agent_cri_net_forward.1} parent=1 // pred_check
      _
    $region3: #{agent_cri_net_forward.1} parent=1 // pred_check_branch
      %72 = sbr.rel (0) target = $region5
    $region4: #{agent_cri_net_forward.1} parent=1 // pred_region
      _
    $region5: #{agent_cri_net_forward.1} parent=1 // pred_fallthru
      _
    // Predicated region
    $region6: #{agent_cri_net_forward.1} parent=1 // pred_check
      _
    $region7: #{agent_cri_net_forward.1} parent=1 // pred_check_branch
      %74 = sbr.rel (0) target = $region9
    $region8: #{agent_cri_net_forward.1} parent=1 // pred_region
      _
    $region9: #{agent_cri_net_forward.1} parent=1 // pred_fallthru
      _
    // Predicated region
    $region10: #{agent_cri_net_forward.1} parent=1 // pred_check
      _
    $region11: #{agent_cri_net_forward.1} parent=1 // pred_check_branch
      %76 = sbr.rel (0) target = $region13
    $region12: #{agent_cri_net_forward.1} parent=1 // pred_region
      _
    $region13: #{agent_cri_net_forward.1} parent=1 // pred_fallthru
      _
    // Predicated region
    $region14: #{agent_cri_net_forward.1} parent=1 // pred_check
      _
    $region15: #{agent_cri_net_forward.1} parent=1 // pred_check_branch
      %78 = sbr.rel (0) target = $region17
    $region16: #{agent_cri_net_forward.1} parent=1 // pred_region
      %s80 = ssub.s32 2048, 2048
      %81 = vsyncadd [#allocation11], %s80
      %s82 = sshll.u32 [#allocation10], 4
      %s83 = int_to_ptr.vmem [resolvable:$true] %s82
      %88 = dma.hbm_to_vmem [thread:$0]  %s7, 2048, %s83, [#allocation11], 256, 256, 16
    $region17: #{agent_cri_net_forward.1} parent=1 // pred_fallthru
      _
    // Predicated region
    $region18: #{agent_cri_net_forward.1} parent=1 // pred_check
      _
    $region19: #{agent_cri_net_forward.1} parent=1 // pred_check_branch
      %90 = sbr.rel (0) target = $region21
    $region20: #{agent_cri_net_forward.1} parent=1 // pred_region
      %s92 = ssub.s32 4096, 4096
      %93 = vsyncadd [#allocation13], %s92
      %s94 = sshll.u32 [#allocation12], 4
      %s95 = int_to_ptr.vmem [resolvable:$true] %s94
      %100 = dma.hbm_to_vmem [thread:$0]  %s9, 4096, %s95, [#allocation13], 256, 256, 16
    $region21: #{agent_cri_net_forward.1} parent=1 // pred_fallthru
      _
    // Predicated region
    $region22: #{agent_cri_net_forward.1} parent=1 // pred_check
      _
    $region23: #{agent_cri_net_forward.1} parent=1 // pred_check_branch
      %102 = sbr.rel (0) target = $region25
    $region24: #{agent_cri_net_forward.1} parent=1 // pred_region
      _
    $region25: #{agent_cri_net_forward.1} parent=1 // pred_fallthru
      _
    // Predicated region
    $region26: #{agent_cri_net_forward.1} parent=1 // pred_check
      _
    $region27: #{agent_cri_net_forward.1} parent=1 // pred_check_branch
      %104 = sbr.rel (0) target = $region29
    $region28: #{agent_cri_net_forward.1} parent=1 // pred_region
      %s106 = ssub.s32 4096, 4096
      %107 = vsyncadd [#allocation13], %s106
      %s108 = sshll.u32 [#allocation14], 4
      %s109 = int_to_ptr.vmem [resolvable:$true] %s108
      %114 = dma.hbm_to_vmem [thread:$0]  %s13, 4096, %s109, [#allocation13], 256, 256, 16
    $region29: #{agent_cri_net_forward.1} parent=1 // pred_fallthru
      _
    // Predicated region
    $region30: #{agent_cri_net_forward.1} parent=1 // pred_check
      _
    $region31: #{agent_cri_net_forward.1} parent=1 // pred_check_branch
      %116 = sbr.rel (0) target = $region33
    $region32: #{agent_cri_net_forward.1} parent=1 // pred_region
      %s118 = ssub.s32 4096, 4096
      %119 = vsyncadd [#allocation16], %s118
      %s120 = sshll.u32 [#allocation15], 4
      %s121 = int_to_ptr.vmem [resolvable:$true] %s120
      %126 = dma.hbm_to_vmem [thread:$0]  %s15, 4096, %s121, [#allocation16], 256, 256, 16
    $region33: #{agent_cri_net_forward.1} parent=1 // pred_fallthru
      _
    // Predicated region
    $region34: #{agent_cri_net_forward.1} parent=1 // pred_check
      _
    $region35: #{agent_cri_net_forward.1} parent=1 // pred_check_branch
      %128 = sbr.rel (0) target = $region37
    $region36: #{agent_cri_net_forward.1} parent=1 // pred_region
      _
    $region37: #{agent_cri_net_forward.1} parent=1 // pred_fallthru
      _
    // Predicated region
    $region38: #{agent_cri_net_forward.1} parent=1 // pred_check
      _
    $region39: #{agent_cri_net_forward.1} parent=1 // pred_check_branch
      %130 = sbr.rel (0) target = $region41
    $region40: #{agent_cri_net_forward.1} parent=1 // pred_region
      %s132 = ssub.s32 2048, 2048
      %133 = vsyncadd [#allocation16], %s132
      %s134 = sshll.u32 [#allocation17], 4
      %s135 = int_to_ptr.vmem [resolvable:$true] %s134
      %140 = dma.hbm_to_vmem [thread:$0]  %s19, 2048, %s135, [#allocation16], 256, 256, 16
    $region41: #{agent_cri_net_forward.1} parent=1 // pred_fallthru
      _
    // Predicated region
    $region42: #{agent_cri_net_forward.1} parent=1 // pred_check
      _
    $region43: #{agent_cri_net_forward.1} parent=1 // pred_check_branch
      %142 = sbr.rel (0) target = $region45
    $region44: #{agent_cri_net_forward.1} parent=1 // pred_region
      %s144 = ssub.s32 4096, 4096
      %145 = vsyncadd [#allocation19], %s144
      %s146 = sshll.u32 [#allocation18], 4
      %s147 = int_to_ptr.vmem [resolvable:$true] %s146
      %152 = dma.hbm_to_vmem [thread:$0]  %s21, 4096, %s147, [#allocation19], 256, 256, 16
    $region45: #{agent_cri_net_forward.1} parent=1 // pred_fallthru
      _
    // Predicated region
    $region46: #{agent_cri_net_forward.1} parent=1 // pred_check
      _
    $region47: #{agent_cri_net_forward.1} parent=1 // pred_check_branch
      %154 = sbr.rel (0) target = $region49
    $region48: #{agent_cri_net_forward.1} parent=1 // pred_region
      _
    $region49: #{agent_cri_net_forward.1} parent=1 // pred_fallthru
      _
    // Predicated region
    $region50: #{agent_cri_net_forward.1} parent=1 // pred_check
      _
    $region51: #{agent_cri_net_forward.1} parent=1 // pred_check_branch
      %156 = sbr.rel (0) target = $region53
    $region52: #{agent_cri_net_forward.1} parent=1 // pred_region
      %s158 = ssub.s32 4096, 4096
      %159 = vsyncadd [#allocation19], %s158
      %s160 = sshll.u32 [#allocation20], 4
      %s161 = int_to_ptr.vmem [resolvable:$true] %s160
      %166 = dma.hbm_to_vmem [thread:$0]  %s25, 4096, %s161, [#allocation19], 256, 256, 16
    $region53: #{agent_cri_net_forward.1} parent=1 // pred_fallthru
      _
    // Predicated region
    $region54: #{agent_cri_net_forward.1} parent=1 // pred_check
      _
    $region55: #{agent_cri_net_forward.1} parent=1 // pred_check_branch
      %168 = sbr.rel (0) target = $region57
    $region56: #{agent_cri_net_forward.1} parent=1 // pred_region
      %s170 = ssub.s32 4096, 4096
      %171 = vsyncadd [#allocation22], %s170
      %s172 = sshll.u32 [#allocation21], 4
      %s173 = int_to_ptr.vmem [resolvable:$true] %s172
      %178 = dma.hbm_to_vmem [thread:$0]  %s27, 4096, %s173, [#allocation22], 256, 256, 16
    $region57: #{agent_cri_net_forward.1} parent=1 // pred_fallthru
      _
    // Predicated region
    $region58: #{agent_cri_net_forward.1} parent=1 // pred_check
      _
    $region59: #{agent_cri_net_forward.1} parent=1 // pred_check_branch
      %180 = sbr.rel (0) target = $region61
    $region60: #{agent_cri_net_forward.1} parent=1 // pred_region
      _
    $region61: #{agent_cri_net_forward.1} parent=1 // pred_fallthru
      _
    // Predicated region
    $region62: #{agent_cri_net_forward.1} parent=1 // pred_check
      _
    $region63: #{agent_cri_net_forward.1} parent=1 // pred_check_branch
      %182 = sbr.rel (0) target = $region65
    $region64: #{agent_cri_net_forward.1} parent=1 // pred_region
      _
    $region65: #{agent_cri_net_forward.1} parent=1 // pred_fallthru
      _
    // Predicated region
    $region66: #{agent_cri_net_forward.1} parent=1 // pred_check
      _
    $region67: #{agent_cri_net_forward.1} parent=1 // pred_check_branch
      %184 = sbr.rel (0) target = $region69
    $region68: #{agent_cri_net_forward.1} parent=1 // pred_region
      _
    $region69: #{agent_cri_net_forward.1} parent=1 // pred_fallthru
      _
    // Predicated region
    $region70: #{agent_cri_net_forward.1} parent=1 // pred_check
      _
    $region71: #{agent_cri_net_forward.1} parent=1 // pred_check_branch
      %186 = sbr.rel (0) target = $region73
    $region72: #{agent_cri_net_forward.1} parent=1 // pred_region
      _
    $region73: #{agent_cri_net_forward.1} parent=1 // pred_fallthru
      _
    // Predicated region
    $region74: #{agent_cri_net_forward.1} parent=1 // pred_check
      _
    $region75: #{agent_cri_net_forward.1} parent=1 // pred_check_branch
      %188 = sbr.rel (0) target = $region77
    $region76: #{agent_cri_net_forward.1} parent=1 // pred_region
      _
    $region77: #{agent_cri_net_forward.1} parent=1 // pred_fallthru
      _
    // Predicated region
    $region78: #{agent_cri_net_forward.1} parent=1 // pred_check
      _
    $region79: #{agent_cri_net_forward.1} parent=1 // pred_check_branch
      %190 = sbr.rel (0) target = $region81
    $region80: #{agent_cri_net_forward.1} parent=1 // pred_region
      _
    $region81: #{agent_cri_net_forward.1} parent=1 // pred_fallthru
      _
    // Predicated region
    $region82: #{agent_cri_net_forward.1} parent=1 // pred_check
      _
    $region83: #{agent_cri_net_forward.1} parent=1 // pred_check_branch
      %192 = sbr.rel (0) target = $region85
    $region84: #{agent_cri_net_forward.1} parent=1 // pred_region
      _
    $region85: #{agent_cri_net_forward.1} parent=1 // pred_fallthru
      _
    // Predicated region
    $region86: #{agent_cri_net_forward.1} parent=1 // pred_check
      _
    $region87: #{agent_cri_net_forward.1} parent=1 // pred_check_branch
      %194 = sbr.rel (0) target = $region89
    $region88: #{agent_cri_net_forward.1} parent=1 // pred_region
      _
    $region89: #{agent_cri_net_forward.1} parent=1 // pred_fallthru
      _
    // Predicated region
    $region90: #{agent_cri_net_forward.1} parent=1 // pred_check
      _
    $region91: #{agent_cri_net_forward.1} parent=1 // pred_check_branch
      %196 = sbr.rel (0) target = $region93
    $region92: #{agent_cri_net_forward.1} parent=1 // pred_region
      _
    $region93: #{agent_cri_net_forward.1} parent=1 // pred_fallthru
      _
    // Predicated region
    $region94: #{agent_cri_net_forward.1} parent=1 // pred_check
      _
    $region95: #{agent_cri_net_forward.1} parent=1 // pred_check_branch
      %198 = sbr.rel (0) target = $region97
    $region96: #{agent_cri_net_forward.1} parent=1 // pred_region
      %199 = dma.done [#allocation11], 2048
    $region97: #{agent_cri_net_forward.1} parent=1 // pred_fallthru
      _
    // Predicated region
    $region98: #{agent_cri_net_forward.1} parent=1 // pred_check
      _
    $region99: #{agent_cri_net_forward.1} parent=1 // pred_check_branch
      %201 = sbr.rel (0) target = $region101
    $region100: #{agent_cri_net_forward.1} parent=1 // pred_region
      %202 = dma.done [#allocation13], 4096
    $region101: #{agent_cri_net_forward.1} parent=1 // pred_fallthru
      _
    // Predicated region
    $region102: #{agent_cri_net_forward.1} parent=1 // pred_check
      _
    $region103: #{agent_cri_net_forward.1} parent=1 // pred_check_branch
      %204 = sbr.rel (0) target = $region105
    $region104: #{agent_cri_net_forward.1} parent=1 // pred_region
      %205 = dma.done [#allocation13], 4096
    $region105: #{agent_cri_net_forward.1} parent=1 // pred_fallthru
      _
    // Predicated region
    $region106: #{agent_cri_net_forward.1} parent=1 // pred_check
      _
    $region107: #{agent_cri_net_forward.1} parent=1 // pred_check_branch
      %207 = sbr.rel (0) target = $region109
    $region108: #{agent_cri_net_forward.1} parent=1 // pred_region
      %208 = dma.done [#allocation16], 4096
    $region109: #{agent_cri_net_forward.1} parent=1 // pred_fallthru
      _
    // Predicated region
    $region110: #{agent_cri_net_forward.1} parent=1 // pred_check
      _
    $region111: #{agent_cri_net_forward.1} parent=1 // pred_check_branch
      %210 = sbr.rel (0) target = $region113
    $region112: #{agent_cri_net_forward.1} parent=1 // pred_region
      %211 = dma.done [#allocation16], 2048
    $region113: #{agent_cri_net_forward.1} parent=1 // pred_fallthru
      _
    // Predicated region
    $region114: #{agent_cri_net_forward.1} parent=1 // pred_check
      _
    $region115: #{agent_cri_net_forward.1} parent=1 // pred_check_branch
      %213 = sbr.rel (0) target = $region117
    $region116: #{agent_cri_net_forward.1} parent=1 // pred_region
      %214 = dma.done [#allocation19], 4096
    $region117: #{agent_cri_net_forward.1} parent=1 // pred_fallthru
      _
    // Predicated region
    $region118: #{agent_cri_net_forward.1} parent=1 // pred_check
      _
    $region119: #{agent_cri_net_forward.1} parent=1 // pred_check_branch
      %216 = sbr.rel (0) target = $region121
    $region120: #{agent_cri_net_forward.1} parent=1 // pred_region
      %217 = dma.done [#allocation19], 4096
    $region121: #{agent_cri_net_forward.1} parent=1 // pred_fallthru
      _
    // Predicated region
    $region122: #{agent_cri_net_forward.1} parent=1 // pred_check
      _
    $region123: #{agent_cri_net_forward.1} parent=1 // pred_check_branch
      %219 = sbr.rel (0) target = $region125
    $region124: #{agent_cri_net_forward.1} parent=1 // pred_region
      %220 = dma.done [#allocation22], 4096
    $region125: #{agent_cri_net_forward.1} parent=1 // pred_fallthru
      _
    // Predicated region
    $region126: #{agent_cri_net_forward.1} parent=1 // pred_check
      _
    $region127: #{agent_cri_net_forward.1} parent=1 // pred_check_branch
      %223 = sbr.rel target = $region129
    $region128: #{agent_cri_net_forward.1} parent=1 // pred_region
      %224 = sst [smem:[#allocation25]] [#allocation24]
      %225 = sst [smem:[#allocation26]] [#allocation23]
    $region129: #{agent_cri_net_forward.1} parent=1 // pred_fallthru
      _
    %227 = shalt.err (0)
    %s229 = sshll.u32 [#allocation2], 4
    %s230 = int_to_ptr.vmem [resolvable:$true] %s229
    %232 = dma.hbm_to_vmem [thread:$0]  %s47, 11520, %s230, [#allocation8]
    %s233 = scalar_lea.sflag [#allocation8], 1
    %s235 = sshll.u32 1, 14
    %s236 = sxor.u32 4294967295, %s235
    %s238 = sld [smem:[#allocation0]]
    %s239 = sadd.s32 2, %s238
    %s241 = sshll.u32 7, 26
    %s242 = sxor.u32 4294967295, %s241
    %s243 = sand.u32 0, %s242
    %s244 = sshll.u32 %s239, 26
    %s245 = sor.u32 %s243, %s244
    %s246 = sshll.u32 [#allocation3], 4
    %s247 = int_to_ptr.vmem [resolvable:$true] %s246
    %250 = sst [smem:[#allocation28]] 512
    %s251 = scalar_lea.smem [#allocation28], 1
    %252 = sst [smem:[%s251]] 512
    %s253 = scalar_lea.smem [#allocation28], 2
    %254 = sst [smem:[%s253]] 4
    %s255 = scalar_lea.smem [#allocation28], 3
    %256 = sst [smem:[%s255]] 64
    %s257 = scalar_lea.smem [#allocation28], 4
    %258 = sst [smem:[%s257]] 128
    %s259 = scalar_lea.smem [#allocation28], 5
    %260 = sst [smem:[%s259]] 2
    %s261 = scalar_lea.smem [#allocation28], 6
    %262 = sst [smem:[%s261]] 256
    %s263 = scalar_lea.smem [#allocation28], 7
    %264 = sst [smem:[%s263]] 64
    %s265 = scalar_lea.smem [#allocation28], 8
    %266 = sst [smem:[%s265]] 4
    %268 = dma.general %s49, 4096, %s247, %s233, [#allocation27], [#allocation28], %s245, 0
    %s269 = scalar_lea.sflag [#allocation8], 2
    %s271 = sshll.u32 1, 14
    %s272 = sxor.u32 4294967295, %s271
    %s274 = sadd.s32 2, %s238
    %s276 = sshll.u32 7, 26
    %s277 = sxor.u32 4294967295, %s276
    %s278 = sand.u32 0, %s277
    %s279 = sshll.u32 %s274, 26
    %s280 = sor.u32 %s278, %s279
    %s281 = sshll.u32 [#allocation4], 4
    %s282 = int_to_ptr.vmem [resolvable:$true] %s281
    %285 = sst [smem:[#allocation30]] 512
    %s286 = scalar_lea.smem [#allocation30], 1
    %287 = sst [smem:[%s286]] 512
    %s288 = scalar_lea.smem [#allocation30], 2
    %289 = sst [smem:[%s288]] 4
    %s290 = scalar_lea.smem [#allocation30], 3
    %291 = sst [smem:[%s290]] 64
    %s292 = scalar_lea.smem [#allocation30], 4
    %293 = sst [smem:[%s292]] 128
    %s294 = scalar_lea.smem [#allocation30], 5
    %295 = sst [smem:[%s294]] 2
    %s296 = scalar_lea.smem [#allocation30], 6
    %297 = sst [smem:[%s296]] 256
    %s298 = scalar_lea.smem [#allocation30], 7
    %299 = sst [smem:[%s298]] 64
    %s300 = scalar_lea.smem [#allocation30], 8
    %301 = sst [smem:[%s300]] 4
    %303 = dma.general %s51, 4096, %s282, %s269, [#allocation29], [#allocation30], %s280, 0
    %s304 = scalar_lea.sflag [#allocation8], 3
    %s306 = sshll.u32 1, 14
    %s307 = sxor.u32 4294967295, %s306
    %s309 = sadd.s32 2, %s238
    %s311 = sshll.u32 7, 26
    %s312 = sxor.u32 4294967295, %s311
    %s313 = sand.u32 0, %s312
    %s314 = sshll.u32 %s309, 26
    %s315 = sor.u32 %s313, %s314
    %s316 = sshll.u32 [#allocation5], 4
    %s317 = int_to_ptr.vmem [resolvable:$true] %s316
    %320 = sst [smem:[#allocation32]] 512
    %s321 = scalar_lea.smem [#allocation32], 1
    %322 = sst [smem:[%s321]] 512
    %s323 = scalar_lea.smem [#allocation32], 2
    %324 = sst [smem:[%s323]] 4
    %s325 = scalar_lea.smem [#allocation32], 3
    %326 = sst [smem:[%s325]] 64
    %s327 = scalar_lea.smem [#allocation32], 4
    %328 = sst [smem:[%s327]] 128
    %s329 = scalar_lea.smem [#allocation32], 5
    %330 = sst [smem:[%s329]] 2
    %s331 = scalar_lea.smem [#allocation32], 6
    %332 = sst [smem:[%s331]] 256
    %s333 = scalar_lea.smem [#allocation32], 7
    %334 = sst [smem:[%s333]] 64
    %s335 = scalar_lea.smem [#allocation32], 8
    %336 = sst [smem:[%s335]] 4
    %338 = dma.general %s53, 16384, %s317, %s304, [#allocation31], [#allocation32], %s315, 0
    %s339 = scalar_lea.sflag [#allocation8], 4
    %s341 = sshll.u32 1, 14
    %s342 = sxor.u32 4294967295, %s341
    %s344 = sadd.s32 2, %s238
    %s346 = sshll.u32 7, 26
    %s347 = sxor.u32 4294967295, %s346
    %s348 = sand.u32 0, %s347
    %s349 = sshll.u32 %s344, 26
    %s350 = sor.u32 %s348, %s349
    %s351 = sshll.u32 [#allocation6], 4
    %s352 = int_to_ptr.vmem [resolvable:$true] %s351
    %355 = sst [smem:[#allocation34]] 512
    %s356 = scalar_lea.smem [#allocation34], 1
    %357 = sst [smem:[%s356]] 512
    %s358 = scalar_lea.smem [#allocation34], 2
    %359 = sst [smem:[%s358]] 4
    %s360 = scalar_lea.smem [#allocation34], 3
    %361 = sst [smem:[%s360]] 64
    %s362 = scalar_lea.smem [#allocation34], 4
    %363 = sst [smem:[%s362]] 128
    %s364 = scalar_lea.smem [#allocation34], 5
    %365 = sst [smem:[%s364]] 2
    %s366 = scalar_lea.smem [#allocation34], 6
    %367 = sst [smem:[%s366]] 256
    %s368 = scalar_lea.smem [#allocation34], 7
    %369 = sst [smem:[%s368]] 64
    %s370 = scalar_lea.smem [#allocation34], 8
    %371 = sst [smem:[%s370]] 4
    %373 = dma.general %s55, 16384, %s352, %s339, [#allocation33], [#allocation34], %s350, 0
    %s374 = scalar_lea.sflag [#allocation8], 5
    %s376 = sshll.u32 1, 14
    %s377 = sxor.u32 4294967295, %s376
    %s379 = sadd.s32 2, %s238
    %s381 = sshll.u32 7, 26
    %s382 = sxor.u32 4294967295, %s381
    %s383 = sand.u32 0, %s382
    %s384 = sshll.u32 %s379, 26
    %s385 = sor.u32 %s383, %s384
    %s386 = sshll.u32 [#allocation7], 4
    %s387 = int_to_ptr.vmem [resolvable:$true] %s386
    %390 = sst [smem:[#allocation36]] 512
    %s391 = scalar_lea.smem [#allocation36], 1
    %392 = sst [smem:[%s391]] 512
    %s393 = scalar_lea.smem [#allocation36], 2
    %394 = sst [smem:[%s393]] 4
    %s395 = scalar_lea.smem [#allocation36], 3
    %396 = sst [smem:[%s395]] 64
    %s397 = scalar_lea.smem [#allocation36], 4
    %398 = sst [smem:[%s397]] 128
    %s399 = scalar_lea.smem [#allocation36], 5
    %400 = sst [smem:[%s399]] 2
    %s401 = scalar_lea.smem [#allocation36], 6
    %402 = sst [smem:[%s401]] 256
    %s403 = scalar_lea.smem [#allocation36], 7
    %404 = sst [smem:[%s403]] 64
    %s405 = scalar_lea.smem [#allocation36], 8
    %406 = sst [smem:[%s405]] 4
    %408 = dma.general %s57, 16384, %s387, %s374, [#allocation35], [#allocation36], %s385, 0
    %v409 = vld [vmem:[%s3] sm:$0xff]
    %v410 = vld [vmem:[%s3 + $0x8] sm:$0xff]
    %v411 = vpack.c.bf16 %v410, %v409
    %v412 = vld [vmem:[#allocation10] sm:$0xff]
    %v413 = vld [vmem:[#allocation10 + $0x8] sm:$0xff]
    %v414 = vld [vmem:[#allocation10 + $0x10] sm:$0xff]
    %v415 = vld [vmem:[#allocation10 + $0x18] sm:$0xff]
    %v416 = vld [vmem:[#allocation10 + $0x20] sm:$0xff]
    %v417 = vld [vmem:[#allocation10 + $0x28] sm:$0xff]
    %v418 = vld [vmem:[#allocation10 + $0x30] sm:$0xff]
    %v419 = vld [vmem:[#allocation10 + $0x38] sm:$0xff]
    %v420 = vld [vmem:[#allocation10 + $0x40] sm:$0xff]
    %v421 = vld [vmem:[#allocation10 + $0x48] sm:$0xff]
    %v422 = vld [vmem:[#allocation10 + $0x50] sm:$0xff]
    %v423 = vld [vmem:[#allocation10 + $0x58] sm:$0xff]
    %v424 = vld [vmem:[#allocation10 + $0x60] sm:$0xff]
    %v425 = vld [vmem:[#allocation10 + $0x68] sm:$0xff]
    %v426 = vld [vmem:[#allocation10 + $0x70] sm:$0x33]
    %v427 = vld [vmem:[#allocation10 + $0x78] sm:$0x33]
    %v428 = vld [vmem:[%s11] sm:$0xf]
    %v430 = vlaneseq
    %v431 = vshrl.u32 %v430, 7
    %v432 = vsub.s32 0, %v431
    %v433 = vrot.slane %v428, %v432
    %v434 = vlaneseq
    %v435 = vshrl.u32 %v434, 7
    %v436 = vsub.s32 1, %v435
    %v437 = vrot.slane %v428, %v436
    %v438 = vlaneseq
    %v439 = vshrl.u32 %v438, 7
    %v440 = vsub.s32 2, %v439
    %v441 = vrot.slane %v428, %v440
    %v442 = vlaneseq
    %v443 = vshrl.u32 %v442, 7
    %v444 = vsub.s32 3, %v443
    %v445 = vrot.slane %v428, %v444
    %v466 = vunpack.c.l.b16 %v412
    %v467 = vunpack.c.h.b16 %v412
    %v468 = vunpack.c.l.b16 %v413
    %v469 = vunpack.c.h.b16 %v413
    %v470 = vunpack.c.l.b16 %v414
    %v471 = vunpack.c.h.b16 %v414
    %v472 = vunpack.c.l.b16 %v415
    %v473 = vunpack.c.h.b16 %v415
    %v474 = vunpack.c.l.b16 %v416
    %v475 = vunpack.c.h.b16 %v416
    %v476 = vunpack.c.l.b16 %v417
    %v477 = vunpack.c.h.b16 %v417
    %v478 = vunpack.c.l.b16 %v418
    %v479 = vunpack.c.h.b16 %v418
    %v480 = vunpack.c.l.b16 %v419
    %v481 = vunpack.c.h.b16 %v419
    %v482 = vunpack.c.l.b16 %v420
    %v483 = vunpack.c.h.b16 %v420
    %v484 = vunpack.c.l.b16 %v421
    %v485 = vunpack.c.h.b16 %v421
    %v486 = vunpack.c.l.b16 %v422
    %v487 = vunpack.c.h.b16 %v422
    %v488 = vunpack.c.l.b16 %v423
    %v489 = vunpack.c.h.b16 %v423
    %v490 = vunpack.c.l.b16 %v424
    %v491 = vunpack.c.h.b16 %v424
    %v492 = vunpack.c.l.b16 %v425
    %v493 = vunpack.c.h.b16 %v425
    %v494 = vunpack.c.l.b16 %v426
    %v495 = vunpack.c.h.b16 %v426
    %v496 = vunpack.c.l.b16 %v427
    %v497 = vunpack.c.h.b16 %v427
    %v498 = vpack.c.b16 %v470, %v466
    %v499 = vpack.c.b16 %v471, %v467
    %v500 = vpack.c.b16 %v472, %v468
    %v501 = vpack.c.b16 %v473, %v469
    %v502 = vpack.c.b16 %v478, %v474
    %v503 = vpack.c.b16 %v479, %v475
    %v504 = vpack.c.b16 %v480, %v476
    %v505 = vpack.c.b16 %v481, %v477
    %v506 = vpack.c.b16 %v486, %v482
    %v507 = vpack.c.b16 %v487, %v483
    %v508 = vpack.c.b16 %v488, %v484
    %v509 = vpack.c.b16 %v489, %v485
    %v510 = vpack.c.b16 %v494, %v490
    %v511 = vpack.c.b16 %v495, %v491
    %v512 = vpack.c.b16 %v496, %v492
    %v513 = vpack.c.b16 %v497, %v493
    %vm526 = vcmask 482304
    %v528 = vsel %vm526, %v411, 0
    %vm530 = vcmask 1044480
    %vm531 = vcmask 1045504
    %v532 = vsel %vm530, 4294967295, 65535
    %v533 = vsel %vm531, %v532, 0
    %v535 = vand.u32 %v510, %v533
    %v538 = vand.u32 %v511, %v533
    %v541 = vand.u32 %v512, %v533
    %v544 = vand.u32 %v513, %v533
    %546 = vmatprep.subr.bf16.mxu0 %v499
    %547 = vmatpush1.bf16.msra.mxu0 %v498
    %548 = vmatprep.subr.bf16.mxu0 %v503
    %549 = vmatpush1.bf16.msra.mxu0 %v502
    %550 = vmatprep.subr.bf16.mxu0 %v507
    %551 = vmatpush1.bf16.msra.mxu0 %v506
    %552 = vmatprep.subr.bf16.mxu0 %v538
    %553 = vmatpush1.bf16.msra.mxu0 %v535
    %554 = vmatprep.subr.bf16.mxu0 0
    %555 = vmatpush1.bf16.msra.mxu0 0
    %556 = vmatprep.subr.bf16.mxu0 0
    %557 = vmatpush1.bf16.msra.mxu0 0
    %558 = vmatprep.subr.bf16.mxu0 0
    %559 = vmatpush1.bf16.msra.mxu0 0
    %560 = vmatprep.subr.bf16.mxu0 0
    %561 = vmatpush1.bf16.msra.mxu0 0
    %562 = vmatprep.subr.bf16.mxu0 0
    %563 = vmatpush1.bf16.msra.mxu0 0
    %564 = vmatprep.subr.bf16.mxu0 0
    %565 = vmatpush1.bf16.msra.mxu0 0
    %566 = vmatprep.subr.bf16.mxu0 0
    %567 = vmatpush1.bf16.msra.mxu0 0
    %568 = vmatprep.subr.bf16.mxu0 0
    %569 = vmatpush1.bf16.msra.mxu0 0
    %570 = vmatprep.subr.bf16.mxu0 0
    %571 = vmatpush1.bf16.msra.mxu0 0
    %572 = vmatprep.subr.bf16.mxu0 0
    %573 = vmatpush1.bf16.msra.mxu0 0
    %574 = vmatprep.subr.bf16.mxu0 0
    %575 = vmatpush1.bf16.msra.mxu0 0
    %576 = vmatprep.subr.bf16.mxu0 0
    %577 = vmatpush1.bf16.msra.mxu0 0
    %578 = vmatprep.mubr.bf16.mxu0 0
    %579 = vmatmul.mubr.bf16.gmra.mrb[0].mxu0 %v528
    %v580 = vpop.f32.mrb[0].mxu0
    %v581 = vadd.f32 %v433, %v580
    %v582 = vpop.f32.mrb[0].mxu0
    %v583 = vadd.f32 %v437, %v582
    %v584 = vpop.f32.mrb[0].mxu0
    %v585 = vadd.f32 %v433, %v584
    %v586 = vpop.f32.mrb[0].mxu0
    %v587 = vadd.f32 %v437, %v586
    %588 = vdwg.mxu0
    %589 = vmatprep.subr.bf16.mxu0 %v501
    %590 = vmatpush1.bf16.msra.mxu0 %v500
    %591 = vmatprep.subr.bf16.mxu0 %v505
    %592 = vmatpush1.bf16.msra.mxu0 %v504
    %593 = vmatprep.subr.bf16.mxu0 %v509
    %594 = vmatpush1.bf16.msra.mxu0 %v508
    %595 = vmatprep.subr.bf16.mxu0 %v544
    %596 = vmatpush1.bf16.msra.mxu0 %v541
    %597 = vmatprep.subr.bf16.mxu0 0
    %598 = vmatpush1.bf16.msra.mxu0 0
    %599 = vmatprep.subr.bf16.mxu0 0
    %600 = vmatpush1.bf16.msra.mxu0 0
    %601 = vmatprep.subr.bf16.mxu0 0
    %602 = vmatpush1.bf16.msra.mxu0 0
    %603 = vmatprep.subr.bf16.mxu0 0
    %604 = vmatpush1.bf16.msra.mxu0 0
    %605 = vmatprep.subr.bf16.mxu0 0
    %606 = vmatpush1.bf16.msra.mxu0 0
    %607 = vmatprep.subr.bf16.mxu0 0
    %608 = vmatpush1.bf16.msra.mxu0 0
    %609 = vmatprep.subr.bf16.mxu0 0
    %610 = vmatpush1.bf16.msra.mxu0 0
    %611 = vmatprep.subr.bf16.mxu0 0
    %612 = vmatpush1.bf16.msra.mxu0 0
    %613 = vmatprep.subr.bf16.mxu0 0
    %614 = vmatpush1.bf16.msra.mxu0 0
    %615 = vmatprep.subr.bf16.mxu0 0
    %616 = vmatpush1.bf16.msra.mxu0 0
    %617 = vmatprep.subr.bf16.mxu0 0
    %618 = vmatpush1.bf16.msra.mxu0 0
    %619 = vmatprep.subr.bf16.mxu0 0
    %620 = vmatpush1.bf16.msra.mxu0 0
    %621 = vmatprep.mubr.bf16.mxu0 0
    %622 = vmatmul.mubr.bf16.gmra.mrb[0].mxu0 %v528
    %v623 = vpop.f32.mrb[0].mxu0
    %v624 = vadd.f32 %v441, %v623
    %v625 = vpop.f32.mrb[0].mxu0
    %v626 = vadd.f32 %v445, %v625
    %v627 = vpop.f32.mrb[0].mxu0
    %v628 = vadd.f32 %v441, %v627
    %v629 = vpop.f32.mrb[0].mxu0
    %v630 = vadd.f32 %v445, %v629
    %631 = vdwg.mxu0
    %v632 = vld [vmem:[%s17] sm:$0xf]
    %v634 = vlaneseq
    %v635 = vshrl.u32 %v634, 7
    %v636 = vsub.s32 0, %v635
    %v637 = vrot.slane %v632, %v636
    %v638 = vlaneseq
    %v639 = vshrl.u32 %v638, 7
    %v640 = vsub.s32 1, %v639
    %v641 = vrot.slane %v632, %v640
    %v642 = vlaneseq
    %v643 = vshrl.u32 %v642, 7
    %v644 = vsub.s32 2, %v643
    %v645 = vrot.slane %v632, %v644
    %v646 = vlaneseq
    %v647 = vshrl.u32 %v646, 7
    %v648 = vsub.s32 3, %v647
    %v649 = vrot.slane %v632, %v648
    %v654 = vld [vmem:[#allocation12] sm:$0xff]
    %v655 = vld [vmem:[#allocation12 + $0x8] sm:$0xff]
    %v656 = vld [vmem:[#allocation12 + $0x10] sm:$0xff]
    %v657 = vld [vmem:[#allocation12 + $0x18] sm:$0xff]
    %v658 = vld [vmem:[#allocation12 + $0x20] sm:$0xff]
    %v659 = vld [vmem:[#allocation12 + $0x28] sm:$0xff]
    %v660 = vld [vmem:[#allocation12 + $0x30] sm:$0xff]
    %v661 = vld [vmem:[#allocation12 + $0x38] sm:$0xff]
    %v662 = vld [vmem:[#allocation12 + $0x40] sm:$0xff]
    %v663 = vld [vmem:[#allocation12 + $0x48] sm:$0xff]
    %v664 = vld [vmem:[#allocation12 + $0x50] sm:$0xff]
    %v665 = vld [vmem:[#allocation12 + $0x58] sm:$0xff]
    %v666 = vld [vmem:[#allocation12 + $0x60] sm:$0xff]
    %v667 = vld [vmem:[#allocation12 + $0x68] sm:$0xff]
    %v668 = vld [vmem:[#allocation12 + $0x70] sm:$0xff]
    %v669 = vld [vmem:[#allocation12 + $0x78] sm:$0xff]
    %v670 = vld [vmem:[#allocation12 + $0x80] sm:$0xff]
    %v671 = vld [vmem:[#allocation12 + $0x88] sm:$0xff]
    %v672 = vld [vmem:[#allocation12 + $0x90] sm:$0xff]
    %v673 = vld [vmem:[#allocation12 + $0x98] sm:$0xff]
    %v674 = vld [vmem:[#allocation12 + $0xa0] sm:$0xff]
    %v675 = vld [vmem:[#allocation12 + $0xa8] sm:$0xff]
    %v676 = vld [vmem:[#allocation12 + $0xb0] sm:$0xff]
    %v677 = vld [vmem:[#allocation12 + $0xb8] sm:$0xff]
    %v678 = vld [vmem:[#allocation12 + $0xc0] sm:$0xff]
    %v679 = vld [vmem:[#allocation12 + $0xc8] sm:$0xff]
    %v680 = vld [vmem:[#allocation12 + $0xd0] sm:$0xff]
    %v681 = vld [vmem:[#allocation12 + $0xd8] sm:$0xff]
    %v682 = vld [vmem:[#allocation12 + $0xe0] sm:$0xff]
    %v683 = vld [vmem:[#allocation12 + $0xe8] sm:$0xff]
    %v684 = vld [vmem:[#allocation12 + $0xf0] sm:$0xff]
    %v685 = vld [vmem:[#allocation12 + $0xf8] sm:$0xff]
    %v718 = vunpack.c.l.b16 %v654
    %v719 = vunpack.c.h.b16 %v654
    %v720 = vunpack.c.l.b16 %v655
    %v721 = vunpack.c.h.b16 %v655
    %v722 = vunpack.c.l.b16 %v656
    %v723 = vunpack.c.h.b16 %v656
    %v724 = vunpack.c.l.b16 %v657
    %v725 = vunpack.c.h.b16 %v657
    %v726 = vunpack.c.l.b16 %v658
    %v727 = vunpack.c.h.b16 %v658
    %v728 = vunpack.c.l.b16 %v659
    %v729 = vunpack.c.h.b16 %v659
    %v730 = vunpack.c.l.b16 %v660
    %v731 = vunpack.c.h.b16 %v660
    %v732 = vunpack.c.l.b16 %v661
    %v733 = vunpack.c.h.b16 %v661
    %v734 = vunpack.c.l.b16 %v662
    %v735 = vunpack.c.h.b16 %v662
    %v736 = vunpack.c.l.b16 %v663
    %v737 = vunpack.c.h.b16 %v663
    %v738 = vunpack.c.l.b16 %v664
    %v739 = vunpack.c.h.b16 %v664
    %v740 = vunpack.c.l.b16 %v665
    %v741 = vunpack.c.h.b16 %v665
    %v742 = vunpack.c.l.b16 %v666
    %v743 = vunpack.c.h.b16 %v666
    %v744 = vunpack.c.l.b16 %v667
    %v745 = vunpack.c.h.b16 %v667
    %v746 = vunpack.c.l.b16 %v668
    %v747 = vunpack.c.h.b16 %v668
    %v748 = vunpack.c.l.b16 %v669
    %v749 = vunpack.c.h.b16 %v669
    %v750 = vunpack.c.l.b16 %v670
    %v751 = vunpack.c.h.b16 %v670
    %v752 = vunpack.c.l.b16 %v671
    %v753 = vunpack.c.h.b16 %v671
    %v754 = vunpack.c.l.b16 %v672
    %v755 = vunpack.c.h.b16 %v672
    %v756 = vunpack.c.l.b16 %v673
    %v757 = vunpack.c.h.b16 %v673
    %v758 = vunpack.c.l.b16 %v674
    %v759 = vunpack.c.h.b16 %v674
    %v760 = vunpack.c.l.b16 %v675
    %v761 = vunpack.c.h.b16 %v675
    %v762 = vunpack.c.l.b16 %v676
    %v763 = vunpack.c.h.b16 %v676
    %v764 = vunpack.c.l.b16 %v677
    %v765 = vunpack.c.h.b16 %v677
    %v766 = vunpack.c.l.b16 %v678
    %v767 = vunpack.c.h.b16 %v678
    %v768 = vunpack.c.l.b16 %v679
    %v769 = vunpack.c.h.b16 %v679
    %v770 = vunpack.c.l.b16 %v680
    %v771 = vunpack.c.h.b16 %v680
    %v772 = vunpack.c.l.b16 %v681
    %v773 = vunpack.c.h.b16 %v681
    %v774 = vunpack.c.l.b16 %v682
    %v775 = vunpack.c.h.b16 %v682
    %v776 = vunpack.c.l.b16 %v683
    %v777 = vunpack.c.h.b16 %v683
    %v778 = vunpack.c.l.b16 %v684
    %v779 = vunpack.c.h.b16 %v684
    %v780 = vunpack.c.l.b16 %v685
    %v781 = vunpack.c.h.b16 %v685
    %v782 = vpack.c.b16 %v722, %v718
    %v783 = vpack.c.b16 %v723, %v719
    %v784 = vpack.c.b16 %v724, %v720
    %v785 = vpack.c.b16 %v725, %v721
    %v786 = vpack.c.b16 %v730, %v726
    %v787 = vpack.c.b16 %v731, %v727
    %v788 = vpack.c.b16 %v732, %v728
    %v789 = vpack.c.b16 %v733, %v729
    %v790 = vpack.c.b16 %v738, %v734
    %v791 = vpack.c.b16 %v739, %v735
    %v792 = vpack.c.b16 %v740, %v736
    %v793 = vpack.c.b16 %v741, %v737
    %v794 = vpack.c.b16 %v746, %v742
    %v795 = vpack.c.b16 %v747, %v743
    %v796 = vpack.c.b16 %v748, %v744
    %v797 = vpack.c.b16 %v749, %v745
    %v798 = vpack.c.b16 %v754, %v750
    %v799 = vpack.c.b16 %v755, %v751
    %v800 = vpack.c.b16 %v756, %v752
    %v801 = vpack.c.b16 %v757, %v753
    %v802 = vpack.c.b16 %v762, %v758
    %v803 = vpack.c.b16 %v763, %v759
    %v804 = vpack.c.b16 %v764, %v760
    %v805 = vpack.c.b16 %v765, %v761
    %v806 = vpack.c.b16 %v770, %v766
    %v807 = vpack.c.b16 %v771, %v767
    %v808 = vpack.c.b16 %v772, %v768
    %v809 = vpack.c.b16 %v773, %v769
    %v810 = vpack.c.b16 %v778, %v774
    %v811 = vpack.c.b16 %v779, %v775
    %v812 = vpack.c.b16 %v780, %v776
    %v813 = vpack.c.b16 %v781, %v777
    %846 = vmatprep.subr.bf16.mxu0 %v783
    %847 = vmatpush1.bf16.msra.mxu0 %v782
    %848 = vmatprep.subr.bf16.mxu0 %v787
    %849 = vmatpush1.bf16.msra.mxu0 %v786
    %850 = vmatprep.subr.bf16.mxu0 %v791
    %851 = vmatpush1.bf16.msra.mxu0 %v790
    %852 = vmatprep.subr.bf16.mxu0 %v795
    %853 = vmatpush1.bf16.msra.mxu0 %v794
    %854 = vmatprep.subr.bf16.mxu0 %v799
    %855 = vmatpush1.bf16.msra.mxu0 %v798
    %856 = vmatprep.subr.bf16.mxu0 %v803
    %857 = vmatpush1.bf16.msra.mxu0 %v802
    %858 = vmatprep.subr.bf16.mxu0 %v807
    %859 = vmatpush1.bf16.msra.mxu0 %v806
    %860 = vmatprep.subr.bf16.mxu0 %v811
    %861 = vmatpush1.bf16.msra.mxu0 %v810
    %862 = vmatprep.subr.bf16.mxu0 0
    %863 = vmatpush1.bf16.msra.mxu0 0
    %864 = vmatprep.subr.bf16.mxu0 0
    %865 = vmatpush1.bf16.msra.mxu0 0
    %866 = vmatprep.subr.bf16.mxu0 0
    %867 = vmatpush1.bf16.msra.mxu0 0
    %868 = vmatprep.subr.bf16.mxu0 0
    %869 = vmatpush1.bf16.msra.mxu0 0
    %870 = vmatprep.subr.bf16.mxu0 0
    %871 = vmatpush1.bf16.msra.mxu0 0
    %872 = vmatprep.subr.bf16.mxu0 0
    %873 = vmatpush1.bf16.msra.mxu0 0
    %874 = vmatprep.subr.bf16.mxu0 0
    %875 = vmatpush1.bf16.msra.mxu0 0
    %876 = vmatprep.subr.bf16.mxu0 0
    %877 = vmatpush1.bf16.msra.mxu0 0
    %878 = vmatprep.mubr.bf16.mxu0 0
    %879 = vmatmul.mubr.bf16.gmra.mrb[0].mxu0 0
    %v880 = vpop.f32.mrb[0].mxu0
    %v881 = vadd.f32 0.0, %v880
    %v882 = vpop.f32.mrb[0].mxu0
    %v883 = vadd.f32 0.0, %v882
    %v884 = vpop.f32.mrb[0].mxu0
    %v885 = vpop.f32.mrb[0].mxu0
    %886 = vdwg.mxu0
    %887 = vmatprep.subr.bf16.mxu0 %v785
    %888 = vmatpush1.bf16.msra.mxu0 %v784
    %889 = vmatprep.subr.bf16.mxu0 %v789
    %890 = vmatpush1.bf16.msra.mxu0 %v788
    %891 = vmatprep.subr.bf16.mxu0 %v793
    %892 = vmatpush1.bf16.msra.mxu0 %v792
    %893 = vmatprep.subr.bf16.mxu0 %v797
    %894 = vmatpush1.bf16.msra.mxu0 %v796
    %895 = vmatprep.subr.bf16.mxu0 %v801
    %896 = vmatpush1.bf16.msra.mxu0 %v800
    %897 = vmatprep.subr.bf16.mxu0 %v805
    %898 = vmatpush1.bf16.msra.mxu0 %v804
    %899 = vmatprep.subr.bf16.mxu0 %v809
    %900 = vmatpush1.bf16.msra.mxu0 %v808
    %901 = vmatprep.subr.bf16.mxu0 %v813
    %902 = vmatpush1.bf16.msra.mxu0 %v812
    %903 = vmatprep.subr.bf16.mxu0 0
    %904 = vmatpush1.bf16.msra.mxu0 0
    %905 = vmatprep.subr.bf16.mxu0 0
    %906 = vmatpush1.bf16.msra.mxu0 0
    %907 = vmatprep.subr.bf16.mxu0 0
    %908 = vmatpush1.bf16.msra.mxu0 0
    %909 = vmatprep.subr.bf16.mxu0 0
    %910 = vmatpush1.bf16.msra.mxu0 0
    %911 = vmatprep.subr.bf16.mxu0 0
    %912 = vmatpush1.bf16.msra.mxu0 0
    %913 = vmatprep.subr.bf16.mxu0 0
    %914 = vmatpush1.bf16.msra.mxu0 0
    %915 = vmatprep.subr.bf16.mxu0 0
    %916 = vmatpush1.bf16.msra.mxu0 0
    %917 = vmatprep.subr.bf16.mxu0 0
    %918 = vmatpush1.bf16.msra.mxu0 0
    %919 = vmatprep.mubr.bf16.mxu0 0
    %920 = vmatmul.mubr.bf16.gmra.mrb[0].mxu0 0
    %v921 = vpop.f32.mrb[0].mxu0
    %v922 = vadd.f32 0.0, %v921
    %v923 = vpop.f32.mrb[0].mxu0
    %v924 = vadd.f32 0.0, %v923
    %v925 = vpop.f32.mrb[0].mxu0
    %v926 = vpop.f32.mrb[0].mxu0
    %927 = vdwg.mxu0
    %v928 = vadd.f32 %v581, %v881
    %v929 = vadd.f32 %v583, %v883
    %v930 = vadd.f32 %v624, %v922
    %v931 = vadd.f32 %v626, %v924
    %v932 = vxor.u32 %v928, 2147483648
    %v933 = vmul.f32 %v932, 1.442695
    %v934 = vpow.pop %v933
    %v935 = vadd.f32 %v934, 1.0
    %v936 = vrcp.pop %v935
    %v937 = vmul.f32 1.0, %v936
    %v938 = vxor.u32 %v929, 2147483648
    %v939 = vmul.f32 %v938, 1.442695
    %v940 = vpow.pop %v939
    %v941 = vadd.f32 %v940, 1.0
    %v942 = vrcp.pop %v941
    %v943 = vmul.f32 1.0, %v942
    %v944 = vtanh.pop %v930
    %v945 = vxor.u32 %v931, 2147483648
    %v946 = vmul.f32 %v945, 1.442695
    %v947 = vpow.pop %v946
    %v948 = vadd.f32 %v947, 1.0
    %v949 = vrcp.pop %v948
    %v950 = vmul.f32 1.0, %v949
    %v951 = vmul.f32 %v943, 0.0
    %v952 = vmul.f32 %v937, %v944
    %v953 = vadd.f32 %v951, %v952
    %v954 = vtanh.pop %v953
    %v955 = vmul.f32 %v950, %v954
    %v956 = vpack.c.bf16 %v955, %v955
    %v957 = vld [vmem:[#allocation14] sm:$0xff]
    %v958 = vld [vmem:[#allocation14 + $0x8] sm:$0xff]
    %v959 = vld [vmem:[#allocation14 + $0x10] sm:$0xff]
    %v960 = vld [vmem:[#allocation14 + $0x18] sm:$0xff]
    %v961 = vld [vmem:[#allocation14 + $0x20] sm:$0xff]
    %v962 = vld [vmem:[#allocation14 + $0x28] sm:$0xff]
    %v963 = vld [vmem:[#allocation14 + $0x30] sm:$0xff]
    %v964 = vld [vmem:[#allocation14 + $0x38] sm:$0xff]
    %v965 = vld [vmem:[#allocation14 + $0x40] sm:$0xff]
    %v966 = vld [vmem:[#allocation14 + $0x48] sm:$0xff]
    %v967 = vld [vmem:[#allocation14 + $0x50] sm:$0xff]
    %v968 = vld [vmem:[#allocation14 + $0x58] sm:$0xff]
    %v969 = vld [vmem:[#allocation14 + $0x60] sm:$0xff]
    %v970 = vld [vmem:[#allocation14 + $0x68] sm:$0xff]
    %v971 = vld [vmem:[#allocation14 + $0x70] sm:$0xff]
    %v972 = vld [vmem:[#allocation14 + $0x78] sm:$0xff]
    %v973 = vld [vmem:[#allocation14 + $0x80] sm:$0xff]
    %v974 = vld [vmem:[#allocation14 + $0x88] sm:$0xff]
    %v975 = vld [vmem:[#allocation14 + $0x90] sm:$0xff]
    %v976 = vld [vmem:[#allocation14 + $0x98] sm:$0xff]
    %v977 = vld [vmem:[#allocation14 + $0xa0] sm:$0xff]
    %v978 = vld [vmem:[#allocation14 + $0xa8] sm:$0xff]
    %v979 = vld [vmem:[#allocation14 + $0xb0] sm:$0xff]
    %v980 = vld [vmem:[#allocation14 + $0xb8] sm:$0xff]
    %v981 = vld [vmem:[#allocation14 + $0xc0] sm:$0xff]
    %v982 = vld [vmem:[#allocation14 + $0xc8] sm:$0xff]
    %v983 = vld [vmem:[#allocation14 + $0xd0] sm:$0xff]
    %v984 = vld [vmem:[#allocation14 + $0xd8] sm:$0xff]
    %v985 = vld [vmem:[#allocation14 + $0xe0] sm:$0xff]
    %v986 = vld [vmem:[#allocation14 + $0xe8] sm:$0xff]
    %v987 = vld [vmem:[#allocation14 + $0xf0] sm:$0xff]
    %v988 = vld [vmem:[#allocation14 + $0xf8] sm:$0xff]
    %v989 = vld [vmem:[#allocation15] sm:$0xff]
    %v990 = vld [vmem:[#allocation15 + $0x8] sm:$0xff]
    %v991 = vld [vmem:[#allocation15 + $0x10] sm:$0xff]
    %v992 = vld [vmem:[#allocation15 + $0x18] sm:$0xff]
    %v993 = vld [vmem:[#allocation15 + $0x20] sm:$0xff]
    %v994 = vld [vmem:[#allocation15 + $0x28] sm:$0xff]
    %v995 = vld [vmem:[#allocation15 + $0x30] sm:$0xff]
    %v996 = vld [vmem:[#allocation15 + $0x38] sm:$0xff]
    %v997 = vld [vmem:[#allocation15 + $0x40] sm:$0xff]
    %v998 = vld [vmem:[#allocation15 + $0x48] sm:$0xff]
    %v999 = vld [vmem:[#allocation15 + $0x50] sm:$0xff]
    %v1000 = vld [vmem:[#allocation15 + $0x58] sm:$0xff]
    %v1001 = vld [vmem:[#allocation15 + $0x60] sm:$0xff]
    %v1002 = vld [vmem:[#allocation15 + $0x68] sm:$0xff]
    %v1003 = vld [vmem:[#allocation15 + $0x70] sm:$0xff]
    %v1004 = vld [vmem:[#allocation15 + $0x78] sm:$0xff]
    %v1005 = vld [vmem:[#allocation15 + $0x80] sm:$0xff]
    %v1006 = vld [vmem:[#allocation15 + $0x88] sm:$0xff]
    %v1007 = vld [vmem:[#allocation15 + $0x90] sm:$0xff]
    %v1008 = vld [vmem:[#allocation15 + $0x98] sm:$0xff]
    %v1009 = vld [vmem:[#allocation15 + $0xa0] sm:$0xff]
    %v1010 = vld [vmem:[#allocation15 + $0xa8] sm:$0xff]
    %v1011 = vld [vmem:[#allocation15 + $0xb0] sm:$0xff]
    %v1012 = vld [vmem:[#allocation15 + $0xb8] sm:$0xff]
    %v1013 = vld [vmem:[#allocation15 + $0xc0] sm:$0xff]
    %v1014 = vld [vmem:[#allocation15 + $0xc8] sm:$0xff]
    %v1015 = vld [vmem:[#allocation15 + $0xd0] sm:$0xff]
    %v1016 = vld [vmem:[#allocation15 + $0xd8] sm:$0xff]
    %v1017 = vld [vmem:[#allocation15 + $0xe0] sm:$0xff]
    %v1018 = vld [vmem:[#allocation15 + $0xe8] sm:$0xff]
    %v1019 = vld [vmem:[#allocation15 + $0xf0] sm:$0xff]
    %v1020 = vld [vmem:[#allocation15 + $0xf8] sm:$0xff]
    %v1053 = vunpack.c.l.b16 %v989
    %v1054 = vunpack.c.h.b16 %v989
    %v1055 = vunpack.c.l.b16 %v990
    %v1056 = vunpack.c.h.b16 %v990
    %v1057 = vunpack.c.l.b16 %v991
    %v1058 = vunpack.c.h.b16 %v991
    %v1059 = vunpack.c.l.b16 %v992
    %v1060 = vunpack.c.h.b16 %v992
    %v1061 = vunpack.c.l.b16 %v993
    %v1062 = vunpack.c.h.b16 %v993
    %v1063 = vunpack.c.l.b16 %v994
    %v1064 = vunpack.c.h.b16 %v994
    %v1065 = vunpack.c.l.b16 %v995
    %v1066 = vunpack.c.h.b16 %v995
    %v1067 = vunpack.c.l.b16 %v996
    %v1068 = vunpack.c.h.b16 %v996
    %v1069 = vunpack.c.l.b16 %v997
    %v1070 = vunpack.c.h.b16 %v997
    %v1071 = vunpack.c.l.b16 %v998
    %v1072 = vunpack.c.h.b16 %v998
    %v1073 = vunpack.c.l.b16 %v999
    %v1074 = vunpack.c.h.b16 %v999
    %v1075 = vunpack.c.l.b16 %v1000
    %v1076 = vunpack.c.h.b16 %v1000
    %v1077 = vunpack.c.l.b16 %v1001
    %v1078 = vunpack.c.h.b16 %v1001
    %v1079 = vunpack.c.l.b16 %v1002
    %v1080 = vunpack.c.h.b16 %v1002
    %v1081 = vunpack.c.l.b16 %v1003
    %v1082 = vunpack.c.h.b16 %v1003
    %v1083 = vunpack.c.l.b16 %v1004
    %v1084 = vunpack.c.h.b16 %v1004
    %v1085 = vunpack.c.l.b16 %v1005
    %v1086 = vunpack.c.h.b16 %v1005
    %v1087 = vunpack.c.l.b16 %v1006
    %v1088 = vunpack.c.h.b16 %v1006
    %v1089 = vunpack.c.l.b16 %v1007
    %v1090 = vunpack.c.h.b16 %v1007
    %v1091 = vunpack.c.l.b16 %v1008
    %v1092 = vunpack.c.h.b16 %v1008
    %v1093 = vunpack.c.l.b16 %v1009
    %v1094 = vunpack.c.h.b16 %v1009
    %v1095 = vunpack.c.l.b16 %v1010
    %v1096 = vunpack.c.h.b16 %v1010
    %v1097 = vunpack.c.l.b16 %v1011
    %v1098 = vunpack.c.h.b16 %v1011
    %v1099 = vunpack.c.l.b16 %v1012
    %v1100 = vunpack.c.h.b16 %v1012
    %v1101 = vunpack.c.l.b16 %v1013
    %v1102 = vunpack.c.h.b16 %v1013
    %v1103 = vunpack.c.l.b16 %v1014
    %v1104 = vunpack.c.h.b16 %v1014
    %v1105 = vunpack.c.l.b16 %v1015
    %v1106 = vunpack.c.h.b16 %v1015
    %v1107 = vunpack.c.l.b16 %v1016
    %v1108 = vunpack.c.h.b16 %v1016
    %v1109 = vunpack.c.l.b16 %v1017
    %v1110 = vunpack.c.h.b16 %v1017
    %v1111 = vunpack.c.l.b16 %v1018
    %v1112 = vunpack.c.h.b16 %v1018
    %v1113 = vunpack.c.l.b16 %v1019
    %v1114 = vunpack.c.h.b16 %v1019
    %v1115 = vunpack.c.l.b16 %v1020
    %v1116 = vunpack.c.h.b16 %v1020
    %v1117 = vpack.c.b16 %v1057, %v1053
    %v1118 = vpack.c.b16 %v1058, %v1054
    %v1119 = vpack.c.b16 %v1059, %v1055
    %v1120 = vpack.c.b16 %v1060, %v1056
    %v1121 = vpack.c.b16 %v1065, %v1061
    %v1122 = vpack.c.b16 %v1066, %v1062
    %v1123 = vpack.c.b16 %v1067, %v1063
    %v1124 = vpack.c.b16 %v1068, %v1064
    %v1125 = vpack.c.b16 %v1073, %v1069
    %v1126 = vpack.c.b16 %v1074, %v1070
    %v1127 = vpack.c.b16 %v1075, %v1071
    %v1128 = vpack.c.b16 %v1076, %v1072
    %v1129 = vpack.c.b16 %v1081, %v1077
    %v1130 = vpack.c.b16 %v1082, %v1078
    %v1131 = vpack.c.b16 %v1083, %v1079
    %v1132 = vpack.c.b16 %v1084, %v1080
    %v1133 = vpack.c.b16 %v1089, %v1085
    %v1134 = vpack.c.b16 %v1090, %v1086
    %v1135 = vpack.c.b16 %v1091, %v1087
    %v1136 = vpack.c.b16 %v1092, %v1088
    %v1137 = vpack.c.b16 %v1097, %v1093
    %v1138 = vpack.c.b16 %v1098, %v1094
    %v1139 = vpack.c.b16 %v1099, %v1095
    %v1140 = vpack.c.b16 %v1100, %v1096
    %v1141 = vpack.c.b16 %v1105, %v1101
    %v1142 = vpack.c.b16 %v1106, %v1102
    %v1143 = vpack.c.b16 %v1107, %v1103
    %v1144 = vpack.c.b16 %v1108, %v1104
    %v1145 = vpack.c.b16 %v1113, %v1109
    %v1146 = vpack.c.b16 %v1114, %v1110
    %v1147 = vpack.c.b16 %v1115, %v1111
    %v1148 = vpack.c.b16 %v1116, %v1112
    %1181 = vmatprep.subr.bf16.mxu0 %v1118
    %1182 = vmatpush1.bf16.msra.mxu0 %v1117
    %1183 = vmatprep.subr.bf16.mxu0 %v1122
    %1184 = vmatpush1.bf16.msra.mxu0 %v1121
    %1185 = vmatprep.subr.bf16.mxu0 %v1126
    %1186 = vmatpush1.bf16.msra.mxu0 %v1125
    %1187 = vmatprep.subr.bf16.mxu0 %v1130
    %1188 = vmatpush1.bf16.msra.mxu0 %v1129
    %1189 = vmatprep.subr.bf16.mxu0 %v1134
    %1190 = vmatpush1.bf16.msra.mxu0 %v1133
    %1191 = vmatprep.subr.bf16.mxu0 %v1138
    %1192 = vmatpush1.bf16.msra.mxu0 %v1137
    %1193 = vmatprep.subr.bf16.mxu0 %v1142
    %1194 = vmatpush1.bf16.msra.mxu0 %v1141
    %1195 = vmatprep.subr.bf16.mxu0 %v1146
    %1196 = vmatpush1.bf16.msra.mxu0 %v1145
    %1197 = vmatprep.subr.bf16.mxu0 0
    %1198 = vmatpush1.bf16.msra.mxu0 0
    %1199 = vmatprep.subr.bf16.mxu0 0
    %1200 = vmatpush1.bf16.msra.mxu0 0
    %1201 = vmatprep.subr.bf16.mxu0 0
    %1202 = vmatpush1.bf16.msra.mxu0 0
    %1203 = vmatprep.subr.bf16.mxu0 0
    %1204 = vmatpush1.bf16.msra.mxu0 0
    %1205 = vmatprep.subr.bf16.mxu0 0
    %1206 = vmatpush1.bf16.msra.mxu0 0
    %1207 = vmatprep.subr.bf16.mxu0 0
    %1208 = vmatpush1.bf16.msra.mxu0 0
    %1209 = vmatprep.subr.bf16.mxu0 0
    %1210 = vmatpush1.bf16.msra.mxu0 0
    %1211 = vmatprep.subr.bf16.mxu0 0
    %1212 = vmatpush1.bf16.msra.mxu0 0
    %1213 = vmatprep.mubr.bf16.mxu0 0
    %1214 = vmatmul.mubr.bf16.gmra.mrb[0].mxu0 0
    %v1215 = vpop.f32.mrb[0].mxu0
    %v1216 = vadd.f32 0.0, %v1215
    %v1217 = vpop.f32.mrb[0].mxu0
    %v1218 = vadd.f32 0.0, %v1217
    %v1219 = vpop.f32.mrb[0].mxu0
    %v1220 = vpop.f32.mrb[0].mxu0
    %1221 = vdwg.mxu0
    %1222 = vmatprep.subr.bf16.mxu0 %v1120
    %1223 = vmatpush1.bf16.msra.mxu0 %v1119
    %1224 = vmatprep.subr.bf16.mxu0 %v1124
    %1225 = vmatpush1.bf16.msra.mxu0 %v1123
    %1226 = vmatprep.subr.bf16.mxu0 %v1128
    %1227 = vmatpush1.bf16.msra.mxu0 %v1127
    %1228 = vmatprep.subr.bf16.mxu0 %v1132
    %1229 = vmatpush1.bf16.msra.mxu0 %v1131
    %1230 = vmatprep.subr.bf16.mxu0 %v1136
    %1231 = vmatpush1.bf16.msra.mxu0 %v1135
    %1232 = vmatprep.subr.bf16.mxu0 %v1140
    %1233 = vmatpush1.bf16.msra.mxu0 %v1139
    %1234 = vmatprep.subr.bf16.mxu0 %v1144
    %1235 = vmatpush1.bf16.msra.mxu0 %v1143
    %1236 = vmatprep.subr.bf16.mxu0 %v1148
    %1237 = vmatpush1.bf16.msra.mxu0 %v1147
    %1238 = vmatprep.subr.bf16.mxu0 0
    %1239 = vmatpush1.bf16.msra.mxu0 0
    %1240 = vmatprep.subr.bf16.mxu0 0
    %1241 = vmatpush1.bf16.msra.mxu0 0
    %1242 = vmatprep.subr.bf16.mxu0 0
    %1243 = vmatpush1.bf16.msra.mxu0 0
    %1244 = vmatprep.subr.bf16.mxu0 0
    %1245 = vmatpush1.bf16.msra.mxu0 0
    %1246 = vmatprep.subr.bf16.mxu0 0
    %1247 = vmatpush1.bf16.msra.mxu0 0
    %1248 = vmatprep.subr.bf16.mxu0 0
    %1249 = vmatpush1.bf16.msra.mxu0 0
    %1250 = vmatprep.subr.bf16.mxu0 0
    %1251 = vmatpush1.bf16.msra.mxu0 0
    %1252 = vmatprep.subr.bf16.mxu0 0
    %1253 = vmatpush1.bf16.msra.mxu0 0
    %1254 = vmatprep.mubr.bf16.mxu0 0
    %1255 = vmatmul.mubr.bf16.gmra.mrb[0].mxu0 0
    %v1256 = vpop.f32.mrb[0].mxu0
    %v1257 = vadd.f32 0.0, %v1256
    %v1258 = vpop.f32.mrb[0].mxu0
    %v1259 = vadd.f32 0.0, %v1258
    %v1260 = vpop.f32.mrb[0].mxu0
    %v1261 = vpop.f32.mrb[0].mxu0
    %1262 = vdwg.mxu0
    %v1295 = vunpack.c.l.b16 %v957
    %v1296 = vunpack.c.h.b16 %v957
    %v1297 = vunpack.c.l.b16 %v958
    %v1298 = vunpack.c.h.b16 %v958
    %v1299 = vunpack.c.l.b16 %v959
    %v1300 = vunpack.c.h.b16 %v959
    %v1301 = vunpack.c.l.b16 %v960
    %v1302 = vunpack.c.h.b16 %v960
    %v1303 = vunpack.c.l.b16 %v961
    %v1304 = vunpack.c.h.b16 %v961
    %v1305 = vunpack.c.l.b16 %v962
    %v1306 = vunpack.c.h.b16 %v962
    %v1307 = vunpack.c.l.b16 %v963
    %v1308 = vunpack.c.h.b16 %v963
    %v1309 = vunpack.c.l.b16 %v964
    %v1310 = vunpack.c.h.b16 %v964
    %v1311 = vunpack.c.l.b16 %v965
    %v1312 = vunpack.c.h.b16 %v965
    %v1313 = vunpack.c.l.b16 %v966
    %v1314 = vunpack.c.h.b16 %v966
    %v1315 = vunpack.c.l.b16 %v967
    %v1316 = vunpack.c.h.b16 %v967
    %v1317 = vunpack.c.l.b16 %v968
    %v1318 = vunpack.c.h.b16 %v968
    %v1319 = vunpack.c.l.b16 %v969
    %v1320 = vunpack.c.h.b16 %v969
    %v1321 = vunpack.c.l.b16 %v970
    %v1322 = vunpack.c.h.b16 %v970
    %v1323 = vunpack.c.l.b16 %v971
    %v1324 = vunpack.c.h.b16 %v971
    %v1325 = vunpack.c.l.b16 %v972
    %v1326 = vunpack.c.h.b16 %v972
    %v1327 = vunpack.c.l.b16 %v973
    %v1328 = vunpack.c.h.b16 %v973
    %v1329 = vunpack.c.l.b16 %v974
    %v1330 = vunpack.c.h.b16 %v974
    %v1331 = vunpack.c.l.b16 %v975
    %v1332 = vunpack.c.h.b16 %v975
    %v1333 = vunpack.c.l.b16 %v976
    %v1334 = vunpack.c.h.b16 %v976
    %v1335 = vunpack.c.l.b16 %v977
    %v1336 = vunpack.c.h.b16 %v977
    %v1337 = vunpack.c.l.b16 %v978
    %v1338 = vunpack.c.h.b16 %v978
    %v1339 = vunpack.c.l.b16 %v979
    %v1340 = vunpack.c.h.b16 %v979
    %v1341 = vunpack.c.l.b16 %v980
    %v1342 = vunpack.c.h.b16 %v980
    %v1343 = vunpack.c.l.b16 %v981
    %v1344 = vunpack.c.h.b16 %v981
    %v1345 = vunpack.c.l.b16 %v982
    %v1346 = vunpack.c.h.b16 %v982
    %v1347 = vunpack.c.l.b16 %v983
    %v1348 = vunpack.c.h.b16 %v983
    %v1349 = vunpack.c.l.b16 %v984
    %v1350 = vunpack.c.h.b16 %v984
    %v1351 = vunpack.c.l.b16 %v985
    %v1352 = vunpack.c.h.b16 %v985
    %v1353 = vunpack.c.l.b16 %v986
    %v1354 = vunpack.c.h.b16 %v986
    %v1355 = vunpack.c.l.b16 %v987
    %v1356 = vunpack.c.h.b16 %v987
    %v1357 = vunpack.c.l.b16 %v988
    %v1358 = vunpack.c.h.b16 %v988
    %v1359 = vpack.c.b16 %v1299, %v1295
    %v1360 = vpack.c.b16 %v1300, %v1296
    %v1361 = vpack.c.b16 %v1301, %v1297
    %v1362 = vpack.c.b16 %v1302, %v1298
    %v1363 = vpack.c.b16 %v1307, %v1303
    %v1364 = vpack.c.b16 %v1308, %v1304
    %v1365 = vpack.c.b16 %v1309, %v1305
    %v1366 = vpack.c.b16 %v1310, %v1306
    %v1367 = vpack.c.b16 %v1315, %v1311
    %v1368 = vpack.c.b16 %v1316, %v1312
    %v1369 = vpack.c.b16 %v1317, %v1313
    %v1370 = vpack.c.b16 %v1318, %v1314
    %v1371 = vpack.c.b16 %v1323, %v1319
    %v1372 = vpack.c.b16 %v1324, %v1320
    %v1373 = vpack.c.b16 %v1325, %v1321
    %v1374 = vpack.c.b16 %v1326, %v1322
    %v1375 = vpack.c.b16 %v1331, %v1327
    %v1376 = vpack.c.b16 %v1332, %v1328
    %v1377 = vpack.c.b16 %v1333, %v1329
    %v1378 = vpack.c.b16 %v1334, %v1330
    %v1379 = vpack.c.b16 %v1339, %v1335
    %v1380 = vpack.c.b16 %v1340, %v1336
    %v1381 = vpack.c.b16 %v1341, %v1337
    %v1382 = vpack.c.b16 %v1342, %v1338
    %v1383 = vpack.c.b16 %v1347, %v1343
    %v1384 = vpack.c.b16 %v1348, %v1344
    %v1385 = vpack.c.b16 %v1349, %v1345
    %v1386 = vpack.c.b16 %v1350, %v1346
    %v1387 = vpack.c.b16 %v1355, %v1351
    %v1388 = vpack.c.b16 %v1356, %v1352
    %v1389 = vpack.c.b16 %v1357, %v1353
    %v1390 = vpack.c.b16 %v1358, %v1354
    %1423 = vmatprep.subr.bf16.mxu0 %v1360
    %1424 = vmatpush1.bf16.msra.mxu0 %v1359
    %1425 = vmatprep.subr.bf16.mxu0 %v1364
    %1426 = vmatpush1.bf16.msra.mxu0 %v1363
    %1427 = vmatprep.subr.bf16.mxu0 %v1368
    %1428 = vmatpush1.bf16.msra.mxu0 %v1367
    %1429 = vmatprep.subr.bf16.mxu0 %v1372
    %1430 = vmatpush1.bf16.msra.mxu0 %v1371
    %1431 = vmatprep.subr.bf16.mxu0 %v1376
    %1432 = vmatpush1.bf16.msra.mxu0 %v1375
    %1433 = vmatprep.subr.bf16.mxu0 %v1380
    %1434 = vmatpush1.bf16.msra.mxu0 %v1379
    %1435 = vmatprep.subr.bf16.mxu0 %v1384
    %1436 = vmatpush1.bf16.msra.mxu0 %v1383
    %1437 = vmatprep.subr.bf16.mxu0 %v1388
    %1438 = vmatpush1.bf16.msra.mxu0 %v1387
    %1439 = vmatprep.subr.bf16.mxu0 0
    %1440 = vmatpush1.bf16.msra.mxu0 0
    %1441 = vmatprep.subr.bf16.mxu0 0
    %1442 = vmatpush1.bf16.msra.mxu0 0
    %1443 = vmatprep.subr.bf16.mxu0 0
    %1444 = vmatpush1.bf16.msra.mxu0 0
    %1445 = vmatprep.subr.bf16.mxu0 0
    %1446 = vmatpush1.bf16.msra.mxu0 0
    %1447 = vmatprep.subr.bf16.mxu0 0
    %1448 = vmatpush1.bf16.msra.mxu0 0
    %1449 = vmatprep.subr.bf16.mxu0 0
    %1450 = vmatpush1.bf16.msra.mxu0 0
    %1451 = vmatprep.subr.bf16.mxu0 0
    %1452 = vmatpush1.bf16.msra.mxu0 0
    %1453 = vmatprep.subr.bf16.mxu0 0
    %1454 = vmatpush1.bf16.msra.mxu0 0
    %1455 = vmatprep.mubr.bf16.mxu0 0
    %1456 = vmatmul.mubr.bf16.gmra.mrb[0].mxu0 %v956
    %v1457 = vpop.f32.mrb[0].mxu0
    %v1458 = vadd.f32 %v1216, %v1457
    %v1459 = vpop.f32.mrb[0].mxu0
    %v1460 = vadd.f32 %v1218, %v1459
    %v1461 = vpop.f32.mrb[0].mxu0
    %v1462 = vpop.f32.mrb[0].mxu0
    %1463 = vdwg.mxu0
    %1464 = vmatprep.subr.bf16.mxu0 %v1362
    %1465 = vmatpush1.bf16.msra.mxu0 %v1361
    %1466 = vmatprep.subr.bf16.mxu0 %v1366
    %1467 = vmatpush1.bf16.msra.mxu0 %v1365
    %1468 = vmatprep.subr.bf16.mxu0 %v1370
    %1469 = vmatpush1.bf16.msra.mxu0 %v1369
    %1470 = vmatprep.subr.bf16.mxu0 %v1374
    %1471 = vmatpush1.bf16.msra.mxu0 %v1373
    %1472 = vmatprep.subr.bf16.mxu0 %v1378
    %1473 = vmatpush1.bf16.msra.mxu0 %v1377
    %1474 = vmatprep.subr.bf16.mxu0 %v1382
    %1475 = vmatpush1.bf16.msra.mxu0 %v1381
    %1476 = vmatprep.subr.bf16.mxu0 %v1386
    %1477 = vmatpush1.bf16.msra.mxu0 %v1385
    %1478 = vmatprep.subr.bf16.mxu0 %v1390
    %1479 = vmatpush1.bf16.msra.mxu0 %v1389
    %1480 = vmatprep.subr.bf16.mxu0 0
    %1481 = vmatpush1.bf16.msra.mxu0 0
    %1482 = vmatprep.subr.bf16.mxu0 0
    %1483 = vmatpush1.bf16.msra.mxu0 0
    %1484 = vmatprep.subr.bf16.mxu0 0
    %1485 = vmatpush1.bf16.msra.mxu0 0
    %1486 = vmatprep.subr.bf16.mxu0 0
    %1487 = vmatpush1.bf16.msra.mxu0 0
    %1488 = vmatprep.subr.bf16.mxu0 0
    %1489 = vmatpush1.bf16.msra.mxu0 0
    %1490 = vmatprep.subr.bf16.mxu0 0
    %1491 = vmatpush1.bf16.msra.mxu0 0
    %1492 = vmatprep.subr.bf16.mxu0 0
    %1493 = vmatpush1.bf16.msra.mxu0 0
    %1494 = vmatprep.subr.bf16.mxu0 0
    %1495 = vmatpush1.bf16.msra.mxu0 0
    %1496 = vmatprep.mubr.bf16.mxu0 0
    %1497 = vmatmul.mubr.bf16.gmra.mrb[0].mxu0 %v956
    %v1498 = vpop.f32.mrb[0].mxu0
    %v1499 = vadd.f32 %v1257, %v1498
    %v1500 = vpop.f32.mrb[0].mxu0
    %v1501 = vadd.f32 %v1259, %v1500
    %v1502 = vpop.f32.mrb[0].mxu0
    %v1503 = vpop.f32.mrb[0].mxu0
    %1504 = vdwg.mxu0
    %v1505 = vadd.f32 %v1458, %v637
    %v1506 = vadd.f32 %v1460, %v641
    %v1507 = vadd.f32 %v1499, %v645
    %v1508 = vadd.f32 %v1501, %v649
    %v1509 = vxor.u32 %v1505, 2147483648
    %v1510 = vmul.f32 %v1509, 1.442695
    %v1511 = vpow.pop %v1510
    %v1512 = vadd.f32 %v1511, 1.0
    %v1513 = vrcp.pop %v1512
    %v1514 = vmul.f32 1.0, %v1513
    %v1515 = vxor.u32 %v1506, 2147483648
    %v1516 = vmul.f32 %v1515, 1.442695
    %v1517 = vpow.pop %v1516
    %v1518 = vadd.f32 %v1517, 1.0
    %v1519 = vrcp.pop %v1518
    %v1520 = vmul.f32 1.0, %v1519
    %v1521 = vtanh.pop %v1507
    %v1522 = vxor.u32 %v1508, 2147483648
    %v1523 = vmul.f32 %v1522, 1.442695
    %v1524 = vpow.pop %v1523
    %v1525 = vadd.f32 %v1524, 1.0
    %v1526 = vrcp.pop %v1525
    %v1527 = vmul.f32 1.0, %v1526
    %v1528 = vmul.f32 %v1520, 0.0
    %v1529 = vmul.f32 %v1514, %v1521
    %v1530 = vadd.f32 %v1528, %v1529
    %v1531 = vtanh.pop %v1530
    %v1532 = vmul.f32 %v1527, %v1531
    %1533 = vmatprep.subr.bf16.mxu0 %v783
    %1534 = vmatpush1.bf16.msra.mxu0 %v782
    %1535 = vmatprep.subr.bf16.mxu0 %v787
    %1536 = vmatpush1.bf16.msra.mxu0 %v786
    %1537 = vmatprep.subr.bf16.mxu0 %v791
    %1538 = vmatpush1.bf16.msra.mxu0 %v790
    %1539 = vmatprep.subr.bf16.mxu0 %v795
    %1540 = vmatpush1.bf16.msra.mxu0 %v794
    %1541 = vmatprep.subr.bf16.mxu0 %v799
    %1542 = vmatpush1.bf16.msra.mxu0 %v798
    %1543 = vmatprep.subr.bf16.mxu0 %v803
    %1544 = vmatpush1.bf16.msra.mxu0 %v802
    %1545 = vmatprep.subr.bf16.mxu0 %v807
    %1546 = vmatpush1.bf16.msra.mxu0 %v806
    %1547 = vmatprep.subr.bf16.mxu0 %v811
    %1548 = vmatpush1.bf16.msra.mxu0 %v810
    %1549 = vmatprep.subr.bf16.mxu0 0
    %1550 = vmatpush1.bf16.msra.mxu0 0
    %1551 = vmatprep.subr.bf16.mxu0 0
    %1552 = vmatpush1.bf16.msra.mxu0 0
    %1553 = vmatprep.subr.bf16.mxu0 0
    %1554 = vmatpush1.bf16.msra.mxu0 0
    %1555 = vmatprep.subr.bf16.mxu0 0
    %1556 = vmatpush1.bf16.msra.mxu0 0
    %1557 = vmatprep.subr.bf16.mxu0 0
    %1558 = vmatpush1.bf16.msra.mxu0 0
    %1559 = vmatprep.subr.bf16.mxu0 0
    %1560 = vmatpush1.bf16.msra.mxu0 0
    %1561 = vmatprep.subr.bf16.mxu0 0
    %1562 = vmatpush1.bf16.msra.mxu0 0
    %1563 = vmatprep.subr.bf16.mxu0 0
    %1564 = vmatpush1.bf16.msra.mxu0 0
    %1565 = vmatprep.mubr.bf16.mxu0 0
    %1566 = vmatmul.mubr.bf16.gmra.mrb[0].mxu0 %v956
    %v1567 = vpop.f32.mrb[0].mxu0
    %v1568 = vadd.f32 0.0, %v1567
    %v1569 = vpop.f32.mrb[0].mxu0
    %v1570 = vadd.f32 0.0, %v1569
    %v1571 = vpop.f32.mrb[0].mxu0
    %v1572 = vpop.f32.mrb[0].mxu0
    %1573 = vdwg.mxu0
    %1574 = vmatprep.subr.bf16.mxu0 %v785
    %1575 = vmatpush1.bf16.msra.mxu0 %v784
    %1576 = vmatprep.subr.bf16.mxu0 %v789
    %1577 = vmatpush1.bf16.msra.mxu0 %v788
    %1578 = vmatprep.subr.bf16.mxu0 %v793
    %1579 = vmatpush1.bf16.msra.mxu0 %v792
    %1580 = vmatprep.subr.bf16.mxu0 %v797
    %1581 = vmatpush1.bf16.msra.mxu0 %v796
    %1582 = vmatprep.subr.bf16.mxu0 %v801
    %1583 = vmatpush1.bf16.msra.mxu0 %v800
    %1584 = vmatprep.subr.bf16.mxu0 %v805
    %1585 = vmatpush1.bf16.msra.mxu0 %v804
    %1586 = vmatprep.subr.bf16.mxu0 %v809
    %1587 = vmatpush1.bf16.msra.mxu0 %v808
    %1588 = vmatprep.subr.bf16.mxu0 %v813
    %1589 = vmatpush1.bf16.msra.mxu0 %v812
    %1590 = vmatprep.subr.bf16.mxu0 0
    %1591 = vmatpush1.bf16.msra.mxu0 0
    %1592 = vmatprep.subr.bf16.mxu0 0
    %1593 = vmatpush1.bf16.msra.mxu0 0
    %1594 = vmatprep.subr.bf16.mxu0 0
    %1595 = vmatpush1.bf16.msra.mxu0 0
    %1596 = vmatprep.subr.bf16.mxu0 0
    %1597 = vmatpush1.bf16.msra.mxu0 0
    %1598 = vmatprep.subr.bf16.mxu0 0
    %1599 = vmatpush1.bf16.msra.mxu0 0
    %1600 = vmatprep.subr.bf16.mxu0 0
    %1601 = vmatpush1.bf16.msra.mxu0 0
    %1602 = vmatprep.subr.bf16.mxu0 0
    %1603 = vmatpush1.bf16.msra.mxu0 0
    %1604 = vmatprep.subr.bf16.mxu0 0
    %1605 = vmatpush1.bf16.msra.mxu0 0
    %1606 = vmatprep.mubr.bf16.mxu0 0
    %1607 = vmatmul.mubr.bf16.gmra.mrb[0].mxu0 %v956
    %v1608 = vpop.f32.mrb[0].mxu0
    %v1609 = vadd.f32 0.0, %v1608
    %v1610 = vpop.f32.mrb[0].mxu0
    %v1611 = vadd.f32 0.0, %v1610
    %v1612 = vpop.f32.mrb[0].mxu0
    %v1613 = vpop.f32.mrb[0].mxu0
    %1614 = vdwg.mxu0
    %v1619 = vrot.slane %v1568, 6
    %v1620 = vrot.slane %v1570, 6
    %v1621 = vrot.slane %v1609, 6
    %v1622 = vrot.slane %v1611, 6
    %v1627 = vadd.f32 %v581, %v1619
    %v1628 = vadd.f32 %v583, %v1620
    %v1629 = vadd.f32 %v624, %v1621
    %v1630 = vadd.f32 %v626, %v1622
    %v1631 = vxor.u32 %v1627, 2147483648
    %v1632 = vmul.f32 %v1631, 1.442695
    %v1633 = vpow.pop %v1632
    %v1634 = vadd.f32 %v1633, 1.0
    %v1635 = vrcp.pop %v1634
    %v1636 = vmul.f32 1.0, %v1635
    %v1637 = vxor.u32 %v1628, 2147483648
    %v1638 = vmul.f32 %v1637, 1.442695
    %v1639 = vpow.pop %v1638
    %v1640 = vadd.f32 %v1639, 1.0
    %v1641 = vrcp.pop %v1640
    %v1642 = vmul.f32 1.0, %v1641
    %v1643 = vtanh.pop %v1629
    %v1644 = vxor.u32 %v1630, 2147483648
    %v1645 = vmul.f32 %v1644, 1.442695
    %v1646 = vpow.pop %v1645
    %v1647 = vadd.f32 %v1646, 1.0
    %v1648 = vrcp.pop %v1647
    %v1649 = vmul.f32 1.0, %v1648
    %v1651 = vrot.slane %v953, 6
    %v1653 = vmul.f32 %v1642, %v1651
    %v1654 = vmul.f32 %v1636, %v1643
    %v1655 = vadd.f32 %v1653, %v1654
    %v1656 = vtanh.pop %v1655
    %v1657 = vmul.f32 %v1649, %v1656
    %v1658 = vpack.c.bf16 %v1657, %v1657
    %v1659 = vpack.c.bf16 %v1532, %v1532
    %1660 = vmatprep.subr.bf16.mxu0 %v1118
    %1661 = vmatpush1.bf16.msra.mxu0 %v1117
    %1662 = vmatprep.subr.bf16.mxu0 %v1122
    %1663 = vmatpush1.bf16.msra.mxu0 %v1121
    %1664 = vmatprep.subr.bf16.mxu0 %v1126
    %1665 = vmatpush1.bf16.msra.mxu0 %v1125
    %1666 = vmatprep.subr.bf16.mxu0 %v1130
    %1667 = vmatpush1.bf16.msra.mxu0 %v1129
    %1668 = vmatprep.subr.bf16.mxu0 %v1134
    %1669 = vmatpush1.bf16.msra.mxu0 %v1133
    %1670 = vmatprep.subr.bf16.mxu0 %v1138
    %1671 = vmatpush1.bf16.msra.mxu0 %v1137
    %1672 = vmatprep.subr.bf16.mxu0 %v1142
    %1673 = vmatpush1.bf16.msra.mxu0 %v1141
    %1674 = vmatprep.subr.bf16.mxu0 %v1146
    %1675 = vmatpush1.bf16.msra.mxu0 %v1145
    %1676 = vmatprep.subr.bf16.mxu0 0
    %1677 = vmatpush1.bf16.msra.mxu0 0
    %1678 = vmatprep.subr.bf16.mxu0 0
    %1679 = vmatpush1.bf16.msra.mxu0 0
    %1680 = vmatprep.subr.bf16.mxu0 0
    %1681 = vmatpush1.bf16.msra.mxu0 0
    %1682 = vmatprep.subr.bf16.mxu0 0
    %1683 = vmatpush1.bf16.msra.mxu0 0
    %1684 = vmatprep.subr.bf16.mxu0 0
    %1685 = vmatpush1.bf16.msra.mxu0 0
    %1686 = vmatprep.subr.bf16.mxu0 0
    %1687 = vmatpush1.bf16.msra.mxu0 0
    %1688 = vmatprep.subr.bf16.mxu0 0
    %1689 = vmatpush1.bf16.msra.mxu0 0
    %1690 = vmatprep.subr.bf16.mxu0 0
    %1691 = vmatpush1.bf16.msra.mxu0 0
    %1692 = vmatprep.mubr.bf16.mxu0 0
    %1693 = vmatmul.mubr.bf16.gmra.mrb[0].mxu0 %v1659
    %v1694 = vpop.f32.mrb[0].mxu0
    %v1695 = vadd.f32 0.0, %v1694
    %v1696 = vpop.f32.mrb[0].mxu0
    %v1697 = vadd.f32 0.0, %v1696
    %v1698 = vpop.f32.mrb[0].mxu0
    %v1699 = vpop.f32.mrb[0].mxu0
    %1700 = vdwg.mxu0
    %1701 = vmatprep.subr.bf16.mxu0 %v1120
    %1702 = vmatpush1.bf16.msra.mxu0 %v1119
    %1703 = vmatprep.subr.bf16.mxu0 %v1124
    %1704 = vmatpush1.bf16.msra.mxu0 %v1123
    %1705 = vmatprep.subr.bf16.mxu0 %v1128
    %1706 = vmatpush1.bf16.msra.mxu0 %v1127
    %1707 = vmatprep.subr.bf16.mxu0 %v1132
    %1708 = vmatpush1.bf16.msra.mxu0 %v1131
    %1709 = vmatprep.subr.bf16.mxu0 %v1136
    %1710 = vmatpush1.bf16.msra.mxu0 %v1135
    %1711 = vmatprep.subr.bf16.mxu0 %v1140
    %1712 = vmatpush1.bf16.msra.mxu0 %v1139
    %1713 = vmatprep.subr.bf16.mxu0 %v1144
    %1714 = vmatpush1.bf16.msra.mxu0 %v1143
    %1715 = vmatprep.subr.bf16.mxu0 %v1148
    %1716 = vmatpush1.bf16.msra.mxu0 %v1147
    %1717 = vmatprep.subr.bf16.mxu0 0
    %1718 = vmatpush1.bf16.msra.mxu0 0
    %1719 = vmatprep.subr.bf16.mxu0 0
    %1720 = vmatpush1.bf16.msra.mxu0 0
    %1721 = vmatprep.subr.bf16.mxu0 0
    %1722 = vmatpush1.bf16.msra.mxu0 0
    %1723 = vmatprep.subr.bf16.mxu0 0
    %1724 = vmatpush1.bf16.msra.mxu0 0
    %1725 = vmatprep.subr.bf16.mxu0 0
    %1726 = vmatpush1.bf16.msra.mxu0 0
    %1727 = vmatprep.subr.bf16.mxu0 0
    %1728 = vmatpush1.bf16.msra.mxu0 0
    %1729 = vmatprep.subr.bf16.mxu0 0
    %1730 = vmatpush1.bf16.msra.mxu0 0
    %1731 = vmatprep.subr.bf16.mxu0 0
    %1732 = vmatpush1.bf16.msra.mxu0 0
    %1733 = vmatprep.mubr.bf16.mxu0 0
    %1734 = vmatmul.mubr.bf16.gmra.mrb[0].mxu0 %v1659
    %v1735 = vpop.f32.mrb[0].mxu0
    %v1736 = vadd.f32 0.0, %v1735
    %v1737 = vpop.f32.mrb[0].mxu0
    %v1738 = vadd.f32 0.0, %v1737
    %v1739 = vpop.f32.mrb[0].mxu0
    %v1740 = vpop.f32.mrb[0].mxu0
    %1741 = vdwg.mxu0
    %v1743 = vrot.slane %v1658, 1
    %1745 = vmatprep.subr.bf16.mxu0 %v1360
    %1746 = vmatpush1.bf16.msra.mxu0 %v1359
    %1747 = vmatprep.subr.bf16.mxu0 %v1364
    %1748 = vmatpush1.bf16.msra.mxu0 %v1363
    %1749 = vmatprep.subr.bf16.mxu0 %v1368
    %1750 = vmatpush1.bf16.msra.mxu0 %v1367
    %1751 = vmatprep.subr.bf16.mxu0 %v1372
    %1752 = vmatpush1.bf16.msra.mxu0 %v1371
    %1753 = vmatprep.subr.bf16.mxu0 %v1376
    %1754 = vmatpush1.bf16.msra.mxu0 %v1375
    %1755 = vmatprep.subr.bf16.mxu0 %v1380
    %1756 = vmatpush1.bf16.msra.mxu0 %v1379
    %1757 = vmatprep.subr.bf16.mxu0 %v1384
    %1758 = vmatpush1.bf16.msra.mxu0 %v1383
    %1759 = vmatprep.subr.bf16.mxu0 %v1388
    %1760 = vmatpush1.bf16.msra.mxu0 %v1387
    %1761 = vmatprep.subr.bf16.mxu0 0
    %1762 = vmatpush1.bf16.msra.mxu0 0
    %1763 = vmatprep.subr.bf16.mxu0 0
    %1764 = vmatpush1.bf16.msra.mxu0 0
    %1765 = vmatprep.subr.bf16.mxu0 0
    %1766 = vmatpush1.bf16.msra.mxu0 0
    %1767 = vmatprep.subr.bf16.mxu0 0
    %1768 = vmatpush1.bf16.msra.mxu0 0
    %1769 = vmatprep.subr.bf16.mxu0 0
    %1770 = vmatpush1.bf16.msra.mxu0 0
    %1771 = vmatprep.subr.bf16.mxu0 0
    %1772 = vmatpush1.bf16.msra.mxu0 0
    %1773 = vmatprep.subr.bf16.mxu0 0
    %1774 = vmatpush1.bf16.msra.mxu0 0
    %1775 = vmatprep.subr.bf16.mxu0 0
    %1776 = vmatpush1.bf16.msra.mxu0 0
    %1777 = vmatprep.mubr.bf16.mxu0 0
    %1778 = vmatmul.mubr.bf16.gmra.mrb[0].mxu0 %v1743
    %v1779 = vpop.f32.mrb[0].mxu0
    %v1780 = vadd.f32 %v1695, %v1779
    %v1781 = vpop.f32.mrb[0].mxu0
    %v1782 = vadd.f32 %v1697, %v1781
    %v1783 = vpop.f32.mrb[0].mxu0
    %v1784 = vpop.f32.mrb[0].mxu0
    %1785 = vdwg.mxu0
    %1786 = vmatprep.subr.bf16.mxu0 %v1362
    %1787 = vmatpush1.bf16.msra.mxu0 %v1361
    %1788 = vmatprep.subr.bf16.mxu0 %v1366
    %1789 = vmatpush1.bf16.msra.mxu0 %v1365
    %1790 = vmatprep.subr.bf16.mxu0 %v1370
    %1791 = vmatpush1.bf16.msra.mxu0 %v1369
    %1792 = vmatprep.subr.bf16.mxu0 %v1374
    %1793 = vmatpush1.bf16.msra.mxu0 %v1373
    %1794 = vmatprep.subr.bf16.mxu0 %v1378
    %1795 = vmatpush1.bf16.msra.mxu0 %v1377
    %1796 = vmatprep.subr.bf16.mxu0 %v1382
    %1797 = vmatpush1.bf16.msra.mxu0 %v1381
    %1798 = vmatprep.subr.bf16.mxu0 %v1386
    %1799 = vmatpush1.bf16.msra.mxu0 %v1385
    %1800 = vmatprep.subr.bf16.mxu0 %v1390
    %1801 = vmatpush1.bf16.msra.mxu0 %v1389
    %1802 = vmatprep.subr.bf16.mxu0 0
    %1803 = vmatpush1.bf16.msra.mxu0 0
    %1804 = vmatprep.subr.bf16.mxu0 0
    %1805 = vmatpush1.bf16.msra.mxu0 0
    %1806 = vmatprep.subr.bf16.mxu0 0
    %1807 = vmatpush1.bf16.msra.mxu0 0
    %1808 = vmatprep.subr.bf16.mxu0 0
    %1809 = vmatpush1.bf16.msra.mxu0 0
    %1810 = vmatprep.subr.bf16.mxu0 0
    %1811 = vmatpush1.bf16.msra.mxu0 0
    %1812 = vmatprep.subr.bf16.mxu0 0
    %1813 = vmatpush1.bf16.msra.mxu0 0
    %1814 = vmatprep.subr.bf16.mxu0 0
    %1815 = vmatpush1.bf16.msra.mxu0 0
    %1816 = vmatprep.subr.bf16.mxu0 0
    %1817 = vmatpush1.bf16.msra.mxu0 0
    %1818 = vmatprep.mubr.bf16.mxu0 0
    %1819 = vmatmul.mubr.bf16.gmra.mrb[0].mxu0 %v1743
    %v1820 = vpop.f32.mrb[0].mxu0
    %v1821 = vadd.f32 %v1736, %v1820
    %v1822 = vpop.f32.mrb[0].mxu0
    %v1823 = vadd.f32 %v1738, %v1822
    %v1824 = vpop.f32.mrb[0].mxu0
    %v1825 = vpop.f32.mrb[0].mxu0
    %1826 = vdwg.mxu0
    %v1827 = vadd.f32 %v1780, %v637
    %v1828 = vadd.f32 %v1782, %v641
    %v1829 = vadd.f32 %v1821, %v645
    %v1830 = vadd.f32 %v1823, %v649
    %v1831 = vxor.u32 %v1827, 2147483648
    %v1832 = vmul.f32 %v1831, 1.442695
    %v1833 = vpow.pop %v1832
    %v1834 = vadd.f32 %v1833, 1.0
    %v1835 = vrcp.pop %v1834
    %v1836 = vmul.f32 1.0, %v1835
    %v1837 = vxor.u32 %v1828, 2147483648
    %v1838 = vmul.f32 %v1837, 1.442695
    %v1839 = vpow.pop %v1838
    %v1840 = vadd.f32 %v1839, 1.0
    %v1841 = vrcp.pop %v1840
    %v1842 = vmul.f32 1.0, %v1841
    %v1843 = vtanh.pop %v1829
    %v1844 = vxor.u32 %v1830, 2147483648
    %v1845 = vmul.f32 %v1844, 1.442695
    %v1846 = vpow.pop %v1845
    %v1847 = vadd.f32 %v1846, 1.0
    %v1848 = vrcp.pop %v1847
    %v1849 = vmul.f32 1.0, %v1848
    %v1850 = vmul.f32 %v1842, %v1530
    %v1851 = vmul.f32 %v1836, %v1843
    %v1852 = vadd.f32 %v1850, %v1851
    %v1853 = vtanh.pop %v1852
    %v1854 = vmul.f32 %v1849, %v1853
    %1855 = vmatprep.subr.bf16.mxu0 %v783
    %1856 = vmatpush1.bf16.msra.mxu0 %v782
    %1857 = vmatprep.subr.bf16.mxu0 %v787
    %1858 = vmatpush1.bf16.msra.mxu0 %v786
    %1859 = vmatprep.subr.bf16.mxu0 %v791
    %1860 = vmatpush1.bf16.msra.mxu0 %v790
    %1861 = vmatprep.subr.bf16.mxu0 %v795
    %1862 = vmatpush1.bf16.msra.mxu0 %v794
    %1863 = vmatprep.subr.bf16.mxu0 %v799
    %1864 = vmatpush1.bf16.msra.mxu0 %v798
    %1865 = vmatprep.subr.bf16.mxu0 %v803
    %1866 = vmatpush1.bf16.msra.mxu0 %v802
    %1867 = vmatprep.subr.bf16.mxu0 %v807
    %1868 = vmatpush1.bf16.msra.mxu0 %v806
    %1869 = vmatprep.subr.bf16.mxu0 %v811
    %1870 = vmatpush1.bf16.msra.mxu0 %v810
    %1871 = vmatprep.subr.bf16.mxu0 0
    %1872 = vmatpush1.bf16.msra.mxu0 0
    %1873 = vmatprep.subr.bf16.mxu0 0
    %1874 = vmatpush1.bf16.msra.mxu0 0
    %1875 = vmatprep.subr.bf16.mxu0 0
    %1876 = vmatpush1.bf16.msra.mxu0 0
    %1877 = vmatprep.subr.bf16.mxu0 0
    %1878 = vmatpush1.bf16.msra.mxu0 0
    %1879 = vmatprep.subr.bf16.mxu0 0
    %1880 = vmatpush1.bf16.msra.mxu0 0
    %1881 = vmatprep.subr.bf16.mxu0 0
    %1882 = vmatpush1.bf16.msra.mxu0 0
    %1883 = vmatprep.subr.bf16.mxu0 0
    %1884 = vmatpush1.bf16.msra.mxu0 0
    %1885 = vmatprep.subr.bf16.mxu0 0
    %1886 = vmatpush1.bf16.msra.mxu0 0
    %1887 = vmatprep.mubr.bf16.mxu0 0
    %1888 = vmatmul.mubr.bf16.gmra.mrb[0].mxu0 %v1743
    %v1889 = vpop.f32.mrb[0].mxu0
    %v1890 = vadd.f32 0.0, %v1889
    %v1891 = vpop.f32.mrb[0].mxu0
    %v1892 = vadd.f32 0.0, %v1891
    %v1893 = vpop.f32.mrb[0].mxu0
    %v1894 = vpop.f32.mrb[0].mxu0
    %1895 = vdwg.mxu0
    %1896 = vmatprep.subr.bf16.mxu0 %v785
    %1897 = vmatpush1.bf16.msra.mxu0 %v784
    %1898 = vmatprep.subr.bf16.mxu0 %v789
    %1899 = vmatpush1.bf16.msra.mxu0 %v788
    %1900 = vmatprep.subr.bf16.mxu0 %v793
    %1901 = vmatpush1.bf16.msra.mxu0 %v792
    %1902 = vmatprep.subr.bf16.mxu0 %v797
    %1903 = vmatpush1.bf16.msra.mxu0 %v796
    %1904 = vmatprep.subr.bf16.mxu0 %v801
    %1905 = vmatpush1.bf16.msra.mxu0 %v800
    %1906 = vmatprep.subr.bf16.mxu0 %v805
    %1907 = vmatpush1.bf16.msra.mxu0 %v804
    %1908 = vmatprep.subr.bf16.mxu0 %v809
    %1909 = vmatpush1.bf16.msra.mxu0 %v808
    %1910 = vmatprep.subr.bf16.mxu0 %v813
    %1911 = vmatpush1.bf16.msra.mxu0 %v812
    %1912 = vmatprep.subr.bf16.mxu0 0
    %1913 = vmatpush1.bf16.msra.mxu0 0
    %1914 = vmatprep.subr.bf16.mxu0 0
    %1915 = vmatpush1.bf16.msra.mxu0 0
    %1916 = vmatprep.subr.bf16.mxu0 0
    %1917 = vmatpush1.bf16.msra.mxu0 0
    %1918 = vmatprep.subr.bf16.mxu0 0
    %1919 = vmatpush1.bf16.msra.mxu0 0
    %1920 = vmatprep.subr.bf16.mxu0 0
    %1921 = vmatpush1.bf16.msra.mxu0 0
    %1922 = vmatprep.subr.bf16.mxu0 0
    %1923 = vmatpush1.bf16.msra.mxu0 0
    %1924 = vmatprep.subr.bf16.mxu0 0
    %1925 = vmatpush1.bf16.msra.mxu0 0
    %1926 = vmatprep.subr.bf16.mxu0 0
    %1927 = vmatpush1.bf16.msra.mxu0 0
    %1928 = vmatprep.mubr.bf16.mxu0 0
    %1929 = vmatmul.mubr.bf16.gmra.mrb[0].mxu0 %v1743
    %v1930 = vpop.f32.mrb[0].mxu0
    %v1931 = vadd.f32 0.0, %v1930
    %v1932 = vpop.f32.mrb[0].mxu0
    %v1933 = vadd.f32 0.0, %v1932
    %v1934 = vpop.f32.mrb[0].mxu0
    %v1935 = vpop.f32.mrb[0].mxu0
    %1936 = vdwg.mxu0
    %v1941 = vrot.slane %v1890, 4
    %v1942 = vrot.slane %v1892, 4
    %v1943 = vrot.slane %v1931, 4
    %v1944 = vrot.slane %v1933, 4
    %v1949 = vadd.f32 %v581, %v1941
    %v1950 = vadd.f32 %v583, %v1942
    %v1951 = vadd.f32 %v624, %v1943
    %v1952 = vadd.f32 %v626, %v1944
    %v1953 = vxor.u32 %v1949, 2147483648
    %v1954 = vmul.f32 %v1953, 1.442695
    %v1955 = vpow.pop %v1954
    %v1956 = vadd.f32 %v1955, 1.0
    %v1957 = vrcp.pop %v1956
    %v1958 = vmul.f32 1.0, %v1957
    %v1959 = vxor.u32 %v1950, 2147483648
    %v1960 = vmul.f32 %v1959, 1.442695
    %v1961 = vpow.pop %v1960
    %v1962 = vadd.f32 %v1961, 1.0
    %v1963 = vrcp.pop %v1962
    %v1964 = vmul.f32 1.0, %v1963
    %v1965 = vtanh.pop %v1951
    %v1966 = vxor.u32 %v1952, 2147483648
    %v1967 = vmul.f32 %v1966, 1.442695
    %v1968 = vpow.pop %v1967
    %v1969 = vadd.f32 %v1968, 1.0
    %v1970 = vrcp.pop %v1969
    %v1971 = vmul.f32 1.0, %v1970
    %v1973 = vrot.slane %v1655, 6
    %v1975 = vmul.f32 %v1964, %v1973
    %v1976 = vmul.f32 %v1958, %v1965
    %v1977 = vadd.f32 %v1975, %v1976
    %v1978 = vtanh.pop %v1977
    %v1979 = vmul.f32 %v1971, %v1978
    %v1980 = vpack.c.bf16 %v1979, %v1979
    %v1981 = vpack.c.bf16 %v1854, %v1854
    %1982 = vmatprep.subr.bf16.mxu0 %v1118
    %1983 = vmatpush1.bf16.msra.mxu0 %v1117
    %1984 = vmatprep.subr.bf16.mxu0 %v1122
    %1985 = vmatpush1.bf16.msra.mxu0 %v1121
    %1986 = vmatprep.subr.bf16.mxu0 %v1126
    %1987 = vmatpush1.bf16.msra.mxu0 %v1125
    %1988 = vmatprep.subr.bf16.mxu0 %v1130
    %1989 = vmatpush1.bf16.msra.mxu0 %v1129
    %1990 = vmatprep.subr.bf16.mxu0 %v1134
    %1991 = vmatpush1.bf16.msra.mxu0 %v1133
    %1992 = vmatprep.subr.bf16.mxu0 %v1138
    %1993 = vmatpush1.bf16.msra.mxu0 %v1137
    %1994 = vmatprep.subr.bf16.mxu0 %v1142
    %1995 = vmatpush1.bf16.msra.mxu0 %v1141
    %1996 = vmatprep.subr.bf16.mxu0 %v1146
    %1997 = vmatpush1.bf16.msra.mxu0 %v1145
    %1998 = vmatprep.subr.bf16.mxu0 0
    %1999 = vmatpush1.bf16.msra.mxu0 0
    %2000 = vmatprep.subr.bf16.mxu0 0
    %2001 = vmatpush1.bf16.msra.mxu0 0
    %2002 = vmatprep.subr.bf16.mxu0 0
    %2003 = vmatpush1.bf16.msra.mxu0 0
    %2004 = vmatprep.subr.bf16.mxu0 0
    %2005 = vmatpush1.bf16.msra.mxu0 0
    %2006 = vmatprep.subr.bf16.mxu0 0
    %2007 = vmatpush1.bf16.msra.mxu0 0
    %2008 = vmatprep.subr.bf16.mxu0 0
    %2009 = vmatpush1.bf16.msra.mxu0 0
    %2010 = vmatprep.subr.bf16.mxu0 0
    %2011 = vmatpush1.bf16.msra.mxu0 0
    %2012 = vmatprep.subr.bf16.mxu0 0
    %2013 = vmatpush1.bf16.msra.mxu0 0
    %2014 = vmatprep.mubr.bf16.mxu0 0
    %2015 = vmatmul.mubr.bf16.gmra.mrb[0].mxu0 %v1981
    %v2016 = vpop.f32.mrb[0].mxu0
    %v2017 = vadd.f32 0.0, %v2016
    %v2018 = vpop.f32.mrb[0].mxu0
    %v2019 = vadd.f32 0.0, %v2018
    %v2020 = vpop.f32.mrb[0].mxu0
    %v2021 = vpop.f32.mrb[0].mxu0
    %2022 = vdwg.mxu0
    %2023 = vmatprep.subr.bf16.mxu0 %v1120
    %2024 = vmatpush1.bf16.msra.mxu0 %v1119
    %2025 = vmatprep.subr.bf16.mxu0 %v1124
    %2026 = vmatpush1.bf16.msra.mxu0 %v1123
    %2027 = vmatprep.subr.bf16.mxu0 %v1128
    %2028 = vmatpush1.bf16.msra.mxu0 %v1127
    %2029 = vmatprep.subr.bf16.mxu0 %v1132
    %2030 = vmatpush1.bf16.msra.mxu0 %v1131
    %2031 = vmatprep.subr.bf16.mxu0 %v1136
    %2032 = vmatpush1.bf16.msra.mxu0 %v1135
    %2033 = vmatprep.subr.bf16.mxu0 %v1140
    %2034 = vmatpush1.bf16.msra.mxu0 %v1139
    %2035 = vmatprep.subr.bf16.mxu0 %v1144
    %2036 = vmatpush1.bf16.msra.mxu0 %v1143
    %2037 = vmatprep.subr.bf16.mxu0 %v1148
    %2038 = vmatpush1.bf16.msra.mxu0 %v1147
    %2039 = vmatprep.subr.bf16.mxu0 0
    %2040 = vmatpush1.bf16.msra.mxu0 0
    %2041 = vmatprep.subr.bf16.mxu0 0
    %2042 = vmatpush1.bf16.msra.mxu0 0
    %2043 = vmatprep.subr.bf16.mxu0 0
    %2044 = vmatpush1.bf16.msra.mxu0 0
    %2045 = vmatprep.subr.bf16.mxu0 0
    %2046 = vmatpush1.bf16.msra.mxu0 0
    %2047 = vmatprep.subr.bf16.mxu0 0
    %2048 = vmatpush1.bf16.msra.mxu0 0
    %2049 = vmatprep.subr.bf16.mxu0 0
    %2050 = vmatpush1.bf16.msra.mxu0 0
    %2051 = vmatprep.subr.bf16.mxu0 0
    %2052 = vmatpush1.bf16.msra.mxu0 0
    %2053 = vmatprep.subr.bf16.mxu0 0
    %2054 = vmatpush1.bf16.msra.mxu0 0
    %2055 = vmatprep.mubr.bf16.mxu0 0
    %2056 = vmatmul.mubr.bf16.gmra.mrb[0].mxu0 %v1981
    %v2057 = vpop.f32.mrb[0].mxu0
    %v2058 = vadd.f32 0.0, %v2057
    %v2059 = vpop.f32.mrb[0].mxu0
    %v2060 = vadd.f32 0.0, %v2059
    %v2061 = vpop.f32.mrb[0].mxu0
    %v2062 = vpop.f32.mrb[0].mxu0
    %2063 = vdwg.mxu0
    %v2065 = vrot.slane %v1980, 2
    %2067 = vmatprep.subr.bf16.mxu0 %v1360
    %2068 = vmatpush1.bf16.msra.mxu0 %v1359
    %2069 = vmatprep.subr.bf16.mxu0 %v1364
    %2070 = vmatpush1.bf16.msra.mxu0 %v1363
    %2071 = vmatprep.subr.bf16.mxu0 %v1368
    %2072 = vmatpush1.bf16.msra.mxu0 %v1367
    %2073 = vmatprep.subr.bf16.mxu0 %v1372
    %2074 = vmatpush1.bf16.msra.mxu0 %v1371
    %2075 = vmatprep.subr.bf16.mxu0 %v1376
    %2076 = vmatpush1.bf16.msra.mxu0 %v1375
    %2077 = vmatprep.subr.bf16.mxu0 %v1380
    %2078 = vmatpush1.bf16.msra.mxu0 %v1379
    %2079 = vmatprep.subr.bf16.mxu0 %v1384
    %2080 = vmatpush1.bf16.msra.mxu0 %v1383
    %2081 = vmatprep.subr.bf16.mxu0 %v1388
    %2082 = vmatpush1.bf16.msra.mxu0 %v1387
    %2083 = vmatprep.subr.bf16.mxu0 0
    %2084 = vmatpush1.bf16.msra.mxu0 0
    %2085 = vmatprep.subr.bf16.mxu0 0
    %2086 = vmatpush1.bf16.msra.mxu0 0
    %2087 = vmatprep.subr.bf16.mxu0 0
    %2088 = vmatpush1.bf16.msra.mxu0 0
    %2089 = vmatprep.subr.bf16.mxu0 0
    %2090 = vmatpush1.bf16.msra.mxu0 0
    %2091 = vmatprep.subr.bf16.mxu0 0
    %2092 = vmatpush1.bf16.msra.mxu0 0
    %2093 = vmatprep.subr.bf16.mxu0 0
    %2094 = vmatpush1.bf16.msra.mxu0 0
    %2095 = vmatprep.subr.bf16.mxu0 0
    %2096 = vmatpush1.bf16.msra.mxu0 0
    %2097 = vmatprep.subr.bf16.mxu0 0
    %2098 = vmatpush1.bf16.msra.mxu0 0
    %2099 = vmatprep.mubr.bf16.mxu0 0
    %2100 = vmatmul.mubr.bf16.gmra.mrb[0].mxu0 %v2065
    %v2101 = vpop.f32.mrb[0].mxu0
    %v2102 = vadd.f32 %v2017, %v2101
    %v2103 = vpop.f32.mrb[0].mxu0
    %v2104 = vadd.f32 %v2019, %v2103
    %v2105 = vpop.f32.mrb[0].mxu0
    %v2106 = vpop.f32.mrb[0].mxu0
    %2107 = vdwg.mxu0
    %2108 = vmatprep.subr.bf16.mxu0 %v1362
    %2109 = vmatpush1.bf16.msra.mxu0 %v1361
    %2110 = vmatprep.subr.bf16.mxu0 %v1366
    %2111 = vmatpush1.bf16.msra.mxu0 %v1365
    %2112 = vmatprep.subr.bf16.mxu0 %v1370
    %2113 = vmatpush1.bf16.msra.mxu0 %v1369
    %2114 = vmatprep.subr.bf16.mxu0 %v1374
    %2115 = vmatpush1.bf16.msra.mxu0 %v1373
    %2116 = vmatprep.subr.bf16.mxu0 %v1378
    %2117 = vmatpush1.bf16.msra.mxu0 %v1377
    %2118 = vmatprep.subr.bf16.mxu0 %v1382
    %2119 = vmatpush1.bf16.msra.mxu0 %v1381
    %2120 = vmatprep.subr.bf16.mxu0 %v1386
    %2121 = vmatpush1.bf16.msra.mxu0 %v1385
    %2122 = vmatprep.subr.bf16.mxu0 %v1390
    %2123 = vmatpush1.bf16.msra.mxu0 %v1389
    %2124 = vmatprep.subr.bf16.mxu0 0
    %2125 = vmatpush1.bf16.msra.mxu0 0
    %2126 = vmatprep.subr.bf16.mxu0 0
    %2127 = vmatpush1.bf16.msra.mxu0 0
    %2128 = vmatprep.subr.bf16.mxu0 0
    %2129 = vmatpush1.bf16.msra.mxu0 0
    %2130 = vmatprep.subr.bf16.mxu0 0
    %2131 = vmatpush1.bf16.msra.mxu0 0
    %2132 = vmatprep.subr.bf16.mxu0 0
    %2133 = vmatpush1.bf16.msra.mxu0 0
    %2134 = vmatprep.subr.bf16.mxu0 0
    %2135 = vmatpush1.bf16.msra.mxu0 0
    %2136 = vmatprep.subr.bf16.mxu0 0
    %2137 = vmatpush1.bf16.msra.mxu0 0
    %2138 = vmatprep.subr.bf16.mxu0 0
    %2139 = vmatpush1.bf16.msra.mxu0 0
    %2140 = vmatprep.mubr.bf16.mxu0 0
    %2141 = vmatmul.mubr.bf16.gmra.mrb[0].mxu0 %v2065
    %v2142 = vpop.f32.mrb[0].mxu0
    %v2143 = vadd.f32 %v2058, %v2142
    %v2144 = vpop.f32.mrb[0].mxu0
    %v2145 = vadd.f32 %v2060, %v2144
    %v2146 = vpop.f32.mrb[0].mxu0
    %v2147 = vpop.f32.mrb[0].mxu0
    %2148 = vdwg.mxu0
    %v2149 = vadd.f32 %v2102, %v637
    %v2150 = vadd.f32 %v2104, %v641
    %v2151 = vadd.f32 %v2143, %v645
    %v2152 = vadd.f32 %v2145, %v649
    %v2153 = vxor.u32 %v2149, 2147483648
    %v2154 = vmul.f32 %v2153, 1.442695
    %v2155 = vpow.pop %v2154
    %v2156 = vadd.f32 %v2155, 1.0
    %v2157 = vrcp.pop %v2156
    %v2158 = vmul.f32 1.0, %v2157
    %v2159 = vxor.u32 %v2150, 2147483648
    %v2160 = vmul.f32 %v2159, 1.442695
    %v2161 = vpow.pop %v2160
    %v2162 = vadd.f32 %v2161, 1.0
    %v2163 = vrcp.pop %v2162
    %v2164 = vmul.f32 1.0, %v2163
    %v2165 = vtanh.pop %v2151
    %v2166 = vxor.u32 %v2152, 2147483648
    %v2167 = vmul.f32 %v2166, 1.442695
    %v2168 = vpow.pop %v2167
    %v2169 = vadd.f32 %v2168, 1.0
    %v2170 = vrcp.pop %v2169
    %v2171 = vmul.f32 1.0, %v2170
    %v2172 = vmul.f32 %v2164, %v1852
    %v2173 = vmul.f32 %v2158, %v2165
    %v2174 = vadd.f32 %v2172, %v2173
    %v2175 = vtanh.pop %v2174
    %v2176 = vmul.f32 %v2171, %v2175
    %2177 = vmatprep.subr.bf16.mxu0 %v783
    %2178 = vmatpush1.bf16.msra.mxu0 %v782
    %2179 = vmatprep.subr.bf16.mxu0 %v787
    %2180 = vmatpush1.bf16.msra.mxu0 %v786
    %2181 = vmatprep.subr.bf16.mxu0 %v791
    %2182 = vmatpush1.bf16.msra.mxu0 %v790
    %2183 = vmatprep.subr.bf16.mxu0 %v795
    %2184 = vmatpush1.bf16.msra.mxu0 %v794
    %2185 = vmatprep.subr.bf16.mxu0 %v799
    %2186 = vmatpush1.bf16.msra.mxu0 %v798
    %2187 = vmatprep.subr.bf16.mxu0 %v803
    %2188 = vmatpush1.bf16.msra.mxu0 %v802
    %2189 = vmatprep.subr.bf16.mxu0 %v807
    %2190 = vmatpush1.bf16.msra.mxu0 %v806
    %2191 = vmatprep.subr.bf16.mxu0 %v811
    %2192 = vmatpush1.bf16.msra.mxu0 %v810
    %2193 = vmatprep.subr.bf16.mxu0 0
    %2194 = vmatpush1.bf16.msra.mxu0 0
    %2195 = vmatprep.subr.bf16.mxu0 0
    %2196 = vmatpush1.bf16.msra.mxu0 0
    %2197 = vmatprep.subr.bf16.mxu0 0
    %2198 = vmatpush1.bf16.msra.mxu0 0
    %2199 = vmatprep.subr.bf16.mxu0 0
    %2200 = vmatpush1.bf16.msra.mxu0 0
    %2201 = vmatprep.subr.bf16.mxu0 0
    %2202 = vmatpush1.bf16.msra.mxu0 0
    %2203 = vmatprep.subr.bf16.mxu0 0
    %2204 = vmatpush1.bf16.msra.mxu0 0
    %2205 = vmatprep.subr.bf16.mxu0 0
    %2206 = vmatpush1.bf16.msra.mxu0 0
    %2207 = vmatprep.subr.bf16.mxu0 0
    %2208 = vmatpush1.bf16.msra.mxu0 0
    %2209 = vmatprep.mubr.bf16.mxu0 0
    %2210 = vmatmul.mubr.bf16.gmra.mrb[0].mxu0 %v2065
    %v2211 = vpop.f32.mrb[0].mxu0
    %v2212 = vadd.f32 0.0, %v2211
    %v2213 = vpop.f32.mrb[0].mxu0
    %v2214 = vadd.f32 0.0, %v2213
    %v2215 = vpop.f32.mrb[0].mxu0
    %v2216 = vpop.f32.mrb[0].mxu0
    %2217 = vdwg.mxu0
    %2218 = vmatprep.subr.bf16.mxu0 %v785
    %2219 = vmatpush1.bf16.msra.mxu0 %v784
    %2220 = vmatprep.subr.bf16.mxu0 %v789
    %2221 = vmatpush1.bf16.msra.mxu0 %v788
    %2222 = vmatprep.subr.bf16.mxu0 %v793
    %2223 = vmatpush1.bf16.msra.mxu0 %v792
    %2224 = vmatprep.subr.bf16.mxu0 %v797
    %2225 = vmatpush1.bf16.msra.mxu0 %v796
    %2226 = vmatprep.subr.bf16.mxu0 %v801
    %2227 = vmatpush1.bf16.msra.mxu0 %v800
    %2228 = vmatprep.subr.bf16.mxu0 %v805
    %2229 = vmatpush1.bf16.msra.mxu0 %v804
    %2230 = vmatprep.subr.bf16.mxu0 %v809
    %2231 = vmatpush1.bf16.msra.mxu0 %v808
    %2232 = vmatprep.subr.bf16.mxu0 %v813
    %2233 = vmatpush1.bf16.msra.mxu0 %v812
    %2234 = vmatprep.subr.bf16.mxu0 0
    %2235 = vmatpush1.bf16.msra.mxu0 0
    %2236 = vmatprep.subr.bf16.mxu0 0
    %2237 = vmatpush1.bf16.msra.mxu0 0
    %2238 = vmatprep.subr.bf16.mxu0 0
    %2239 = vmatpush1.bf16.msra.mxu0 0
    %2240 = vmatprep.subr.bf16.mxu0 0
    %2241 = vmatpush1.bf16.msra.mxu0 0
    %2242 = vmatprep.subr.bf16.mxu0 0
    %2243 = vmatpush1.bf16.msra.mxu0 0
    %2244 = vmatprep.subr.bf16.mxu0 0
    %2245 = vmatpush1.bf16.msra.mxu0 0
    %2246 = vmatprep.subr.bf16.mxu0 0
    %2247 = vmatpush1.bf16.msra.mxu0 0
    %2248 = vmatprep.subr.bf16.mxu0 0
    %2249 = vmatpush1.bf16.msra.mxu0 0
    %2250 = vmatprep.mubr.bf16.mxu0 0
    %2251 = vmatmul.mubr.bf16.gmra.mrb[0].mxu0 %v2065
    %v2252 = vpop.f32.mrb[0].mxu0
    %v2253 = vadd.f32 0.0, %v2252
    %v2254 = vpop.f32.mrb[0].mxu0
    %v2255 = vadd.f32 0.0, %v2254
    %v2256 = vpop.f32.mrb[0].mxu0
    %v2257 = vpop.f32.mrb[0].mxu0
    %2258 = vdwg.mxu0
    %v2263 = vrot.slane %v2212, 2
    %v2264 = vrot.slane %v2214, 2
    %v2265 = vrot.slane %v2253, 2
    %v2266 = vrot.slane %v2255, 2
    %v2271 = vadd.f32 %v581, %v2263
    %v2272 = vadd.f32 %v583, %v2264
    %v2273 = vadd.f32 %v624, %v2265
    %v2274 = vadd.f32 %v626, %v2266
    %v2275 = vxor.u32 %v2271, 2147483648
    %v2276 = vmul.f32 %v2275, 1.442695
    %v2277 = vpow.pop %v2276
    %v2278 = vadd.f32 %v2277, 1.0
    %v2279 = vrcp.pop %v2278
    %v2280 = vmul.f32 1.0, %v2279
    %v2281 = vxor.u32 %v2272, 2147483648
    %v2282 = vmul.f32 %v2281, 1.442695
    %v2283 = vpow.pop %v2282
    %v2284 = vadd.f32 %v2283, 1.0
    %v2285 = vrcp.pop %v2284
    %v2286 = vmul.f32 1.0, %v2285
    %v2287 = vtanh.pop %v2273
    %v2288 = vxor.u32 %v2274, 2147483648
    %v2289 = vmul.f32 %v2288, 1.442695
    %v2290 = vpow.pop %v2289
    %v2291 = vadd.f32 %v2290, 1.0
    %v2292 = vrcp.pop %v2291
    %v2293 = vmul.f32 1.0, %v2292
    %v2295 = vrot.slane %v1977, 6
    %v2297 = vmul.f32 %v2286, %v2295
    %v2298 = vmul.f32 %v2280, %v2287
    %v2299 = vadd.f32 %v2297, %v2298
    %v2300 = vtanh.pop %v2299
    %v2301 = vmul.f32 %v2293, %v2300
    %v2302 = vpack.c.bf16 %v2301, %v2301
    %v2303 = vpack.c.bf16 %v2176, %v2176
    %2304 = vmatprep.subr.bf16.mxu0 %v1118
    %2305 = vmatpush1.bf16.msra.mxu0 %v1117
    %2306 = vmatprep.subr.bf16.mxu0 %v1122
    %2307 = vmatpush1.bf16.msra.mxu0 %v1121
    %2308 = vmatprep.subr.bf16.mxu0 %v1126
    %2309 = vmatpush1.bf16.msra.mxu0 %v1125
    %2310 = vmatprep.subr.bf16.mxu0 %v1130
    %2311 = vmatpush1.bf16.msra.mxu0 %v1129
    %2312 = vmatprep.subr.bf16.mxu0 %v1134
    %2313 = vmatpush1.bf16.msra.mxu0 %v1133
    %2314 = vmatprep.subr.bf16.mxu0 %v1138
    %2315 = vmatpush1.bf16.msra.mxu0 %v1137
    %2316 = vmatprep.subr.bf16.mxu0 %v1142
    %2317 = vmatpush1.bf16.msra.mxu0 %v1141
    %2318 = vmatprep.subr.bf16.mxu0 %v1146
    %2319 = vmatpush1.bf16.msra.mxu0 %v1145
    %2320 = vmatprep.subr.bf16.mxu0 0
    %2321 = vmatpush1.bf16.msra.mxu0 0
    %2322 = vmatprep.subr.bf16.mxu0 0
    %2323 = vmatpush1.bf16.msra.mxu0 0
    %2324 = vmatprep.subr.bf16.mxu0 0
    %2325 = vmatpush1.bf16.msra.mxu0 0
    %2326 = vmatprep.subr.bf16.mxu0 0
    %2327 = vmatpush1.bf16.msra.mxu0 0
    %2328 = vmatprep.subr.bf16.mxu0 0
    %2329 = vmatpush1.bf16.msra.mxu0 0
    %2330 = vmatprep.subr.bf16.mxu0 0
    %2331 = vmatpush1.bf16.msra.mxu0 0
    %2332 = vmatprep.subr.bf16.mxu0 0
    %2333 = vmatpush1.bf16.msra.mxu0 0
    %2334 = vmatprep.subr.bf16.mxu0 0
    %2335 = vmatpush1.bf16.msra.mxu0 0
    %2336 = vmatprep.mubr.bf16.mxu0 0
    %2337 = vmatmul.mubr.bf16.gmra.mrb[0].mxu0 %v2303
    %v2338 = vpop.f32.mrb[0].mxu0
    %v2339 = vadd.f32 0.0, %v2338
    %v2340 = vpop.f32.mrb[0].mxu0
    %v2341 = vadd.f32 0.0, %v2340
    %v2342 = vpop.f32.mrb[0].mxu0
    %v2343 = vpop.f32.mrb[0].mxu0
    %2344 = vdwg.mxu0
    %2345 = vmatprep.subr.bf16.mxu0 %v1120
    %2346 = vmatpush1.bf16.msra.mxu0 %v1119
    %2347 = vmatprep.subr.bf16.mxu0 %v1124
    %2348 = vmatpush1.bf16.msra.mxu0 %v1123
    %2349 = vmatprep.subr.bf16.mxu0 %v1128
    %2350 = vmatpush1.bf16.msra.mxu0 %v1127
    %2351 = vmatprep.subr.bf16.mxu0 %v1132
    %2352 = vmatpush1.bf16.msra.mxu0 %v1131
    %2353 = vmatprep.subr.bf16.mxu0 %v1136
    %2354 = vmatpush1.bf16.msra.mxu0 %v1135
    %2355 = vmatprep.subr.bf16.mxu0 %v1140
    %2356 = vmatpush1.bf16.msra.mxu0 %v1139
    %2357 = vmatprep.subr.bf16.mxu0 %v1144
    %2358 = vmatpush1.bf16.msra.mxu0 %v1143
    %2359 = vmatprep.subr.bf16.mxu0 %v1148
    %2360 = vmatpush1.bf16.msra.mxu0 %v1147
    %2361 = vmatprep.subr.bf16.mxu0 0
    %2362 = vmatpush1.bf16.msra.mxu0 0
    %2363 = vmatprep.subr.bf16.mxu0 0
    %2364 = vmatpush1.bf16.msra.mxu0 0
    %2365 = vmatprep.subr.bf16.mxu0 0
    %2366 = vmatpush1.bf16.msra.mxu0 0
    %2367 = vmatprep.subr.bf16.mxu0 0
    %2368 = vmatpush1.bf16.msra.mxu0 0
    %2369 = vmatprep.subr.bf16.mxu0 0
    %2370 = vmatpush1.bf16.msra.mxu0 0
    %2371 = vmatprep.subr.bf16.mxu0 0
    %2372 = vmatpush1.bf16.msra.mxu0 0
    %2373 = vmatprep.subr.bf16.mxu0 0
    %2374 = vmatpush1.bf16.msra.mxu0 0
    %2375 = vmatprep.subr.bf16.mxu0 0
    %2376 = vmatpush1.bf16.msra.mxu0 0
    %2377 = vmatprep.mubr.bf16.mxu0 0
    %2378 = vmatmul.mubr.bf16.gmra.mrb[0].mxu0 %v2303
    %v2379 = vpop.f32.mrb[0].mxu0
    %v2380 = vadd.f32 0.0, %v2379
    %v2381 = vpop.f32.mrb[0].mxu0
    %v2382 = vadd.f32 0.0, %v2381
    %v2383 = vpop.f32.mrb[0].mxu0
    %v2384 = vpop.f32.mrb[0].mxu0
    %2385 = vdwg.mxu0
    %v2387 = vrot.slane %v2302, 3
    %2389 = vmatprep.subr.bf16.mxu0 %v1360
    %2390 = vmatpush1.bf16.msra.mxu0 %v1359
    %2391 = vmatprep.subr.bf16.mxu0 %v1364
    %2392 = vmatpush1.bf16.msra.mxu0 %v1363
    %2393 = vmatprep.subr.bf16.mxu0 %v1368
    %2394 = vmatpush1.bf16.msra.mxu0 %v1367
    %2395 = vmatprep.subr.bf16.mxu0 %v1372
    %2396 = vmatpush1.bf16.msra.mxu0 %v1371
    %2397 = vmatprep.subr.bf16.mxu0 %v1376
    %2398 = vmatpush1.bf16.msra.mxu0 %v1375
    %2399 = vmatprep.subr.bf16.mxu0 %v1380
    %2400 = vmatpush1.bf16.msra.mxu0 %v1379
    %2401 = vmatprep.subr.bf16.mxu0 %v1384
    %2402 = vmatpush1.bf16.msra.mxu0 %v1383
    %2403 = vmatprep.subr.bf16.mxu0 %v1388
    %2404 = vmatpush1.bf16.msra.mxu0 %v1387
    %2405 = vmatprep.subr.bf16.mxu0 0
    %2406 = vmatpush1.bf16.msra.mxu0 0
    %2407 = vmatprep.subr.bf16.mxu0 0
    %2408 = vmatpush1.bf16.msra.mxu0 0
    %2409 = vmatprep.subr.bf16.mxu0 0
    %2410 = vmatpush1.bf16.msra.mxu0 0
    %2411 = vmatprep.subr.bf16.mxu0 0
    %2412 = vmatpush1.bf16.msra.mxu0 0
    %2413 = vmatprep.subr.bf16.mxu0 0
    %2414 = vmatpush1.bf16.msra.mxu0 0
    %2415 = vmatprep.subr.bf16.mxu0 0
    %2416 = vmatpush1.bf16.msra.mxu0 0
    %2417 = vmatprep.subr.bf16.mxu0 0
    %2418 = vmatpush1.bf16.msra.mxu0 0
    %2419 = vmatprep.subr.bf16.mxu0 0
    %2420 = vmatpush1.bf16.msra.mxu0 0
    %2421 = vmatprep.mubr.bf16.mxu0 0
    %2422 = vmatmul.mubr.bf16.gmra.mrb[0].mxu0 %v2387
    %v2423 = vpop.f32.mrb[0].mxu0
    %v2424 = vadd.f32 %v2339, %v2423
    %v2425 = vpop.f32.mrb[0].mxu0
    %v2426 = vadd.f32 %v2341, %v2425
    %v2427 = vpop.f32.mrb[0].mxu0
    %v2428 = vpop.f32.mrb[0].mxu0
    %2429 = vdwg.mxu0
    %2430 = vmatprep.subr.bf16.mxu0 %v1362
    %2431 = vmatpush1.bf16.msra.mxu0 %v1361
    %2432 = vmatprep.subr.bf16.mxu0 %v1366
    %2433 = vmatpush1.bf16.msra.mxu0 %v1365
    %2434 = vmatprep.subr.bf16.mxu0 %v1370
    %2435 = vmatpush1.bf16.msra.mxu0 %v1369
    %2436 = vmatprep.subr.bf16.mxu0 %v1374
    %2437 = vmatpush1.bf16.msra.mxu0 %v1373
    %2438 = vmatprep.subr.bf16.mxu0 %v1378
    %2439 = vmatpush1.bf16.msra.mxu0 %v1377
    %2440 = vmatprep.subr.bf16.mxu0 %v1382
    %2441 = vmatpush1.bf16.msra.mxu0 %v1381
    %2442 = vmatprep.subr.bf16.mxu0 %v1386
    %2443 = vmatpush1.bf16.msra.mxu0 %v1385
    %2444 = vmatprep.subr.bf16.mxu0 %v1390
    %2445 = vmatpush1.bf16.msra.mxu0 %v1389
    %2446 = vmatprep.subr.bf16.mxu0 0
    %2447 = vmatpush1.bf16.msra.mxu0 0
    %2448 = vmatprep.subr.bf16.mxu0 0
    %2449 = vmatpush1.bf16.msra.mxu0 0
    %2450 = vmatprep.subr.bf16.mxu0 0
    %2451 = vmatpush1.bf16.msra.mxu0 0
    %2452 = vmatprep.subr.bf16.mxu0 0
    %2453 = vmatpush1.bf16.msra.mxu0 0
    %2454 = vmatprep.subr.bf16.mxu0 0
    %2455 = vmatpush1.bf16.msra.mxu0 0
    %2456 = vmatprep.subr.bf16.mxu0 0
    %2457 = vmatpush1.bf16.msra.mxu0 0
    %2458 = vmatprep.subr.bf16.mxu0 0
    %2459 = vmatpush1.bf16.msra.mxu0 0
    %2460 = vmatprep.subr.bf16.mxu0 0
    %2461 = vmatpush1.bf16.msra.mxu0 0
    %2462 = vmatprep.mubr.bf16.mxu0 0
    %2463 = vmatmul.mubr.bf16.gmra.mrb[0].mxu0 %v2387
    %v2464 = vpop.f32.mrb[0].mxu0
    %v2465 = vadd.f32 %v2380, %v2464
    %v2466 = vpop.f32.mrb[0].mxu0
    %v2467 = vadd.f32 %v2382, %v2466
    %v2468 = vpop.f32.mrb[0].mxu0
    %v2469 = vpop.f32.mrb[0].mxu0
    %2470 = vdwg.mxu0
    %v2471 = vadd.f32 %v2424, %v637
    %v2472 = vadd.f32 %v2426, %v641
    %v2473 = vadd.f32 %v2465, %v645
    %v2474 = vadd.f32 %v2467, %v649
    %v2475 = vxor.u32 %v2471, 2147483648
    %v2476 = vmul.f32 %v2475, 1.442695
    %v2477 = vpow.pop %v2476
    %v2478 = vadd.f32 %v2477, 1.0
    %v2479 = vrcp.pop %v2478
    %v2480 = vmul.f32 1.0, %v2479
    %v2481 = vxor.u32 %v2472, 2147483648
    %v2482 = vmul.f32 %v2481, 1.442695
    %v2483 = vpow.pop %v2482
    %v2484 = vadd.f32 %v2483, 1.0
    %v2485 = vrcp.pop %v2484
    %v2486 = vmul.f32 1.0, %v2485
    %v2487 = vtanh.pop %v2473
    %v2488 = vxor.u32 %v2474, 2147483648
    %v2489 = vmul.f32 %v2488, 1.442695
    %v2490 = vpow.pop %v2489
    %v2491 = vadd.f32 %v2490, 1.0
    %v2492 = vrcp.pop %v2491
    %v2493 = vmul.f32 1.0, %v2492
    %v2494 = vmul.f32 %v2486, %v2174
    %v2495 = vmul.f32 %v2480, %v2487
    %v2496 = vadd.f32 %v2494, %v2495
    %v2497 = vtanh.pop %v2496
    %v2498 = vmul.f32 %v2493, %v2497
    %2499 = vmatprep.subr.bf16.mxu0 %v783
    %2500 = vmatpush1.bf16.msra.mxu0 %v782
    %2501 = vmatprep.subr.bf16.mxu0 %v787
    %2502 = vmatpush1.bf16.msra.mxu0 %v786
    %2503 = vmatprep.subr.bf16.mxu0 %v791
    %2504 = vmatpush1.bf16.msra.mxu0 %v790
    %2505 = vmatprep.subr.bf16.mxu0 %v795
    %2506 = vmatpush1.bf16.msra.mxu0 %v794
    %2507 = vmatprep.subr.bf16.mxu0 %v799
    %2508 = vmatpush1.bf16.msra.mxu0 %v798
    %2509 = vmatprep.subr.bf16.mxu0 %v803
    %2510 = vmatpush1.bf16.msra.mxu0 %v802
    %2511 = vmatprep.subr.bf16.mxu0 %v807
    %2512 = vmatpush1.bf16.msra.mxu0 %v806
    %2513 = vmatprep.subr.bf16.mxu0 %v811
    %2514 = vmatpush1.bf16.msra.mxu0 %v810
    %2515 = vmatprep.subr.bf16.mxu0 0
    %2516 = vmatpush1.bf16.msra.mxu0 0
    %2517 = vmatprep.subr.bf16.mxu0 0
    %2518 = vmatpush1.bf16.msra.mxu0 0
    %2519 = vmatprep.subr.bf16.mxu0 0
    %2520 = vmatpush1.bf16.msra.mxu0 0
    %2521 = vmatprep.subr.bf16.mxu0 0
    %2522 = vmatpush1.bf16.msra.mxu0 0
    %2523 = vmatprep.subr.bf16.mxu0 0
    %2524 = vmatpush1.bf16.msra.mxu0 0
    %2525 = vmatprep.subr.bf16.mxu0 0
    %2526 = vmatpush1.bf16.msra.mxu0 0
    %2527 = vmatprep.subr.bf16.mxu0 0
    %2528 = vmatpush1.bf16.msra.mxu0 0
    %2529 = vmatprep.subr.bf16.mxu0 0
    %2530 = vmatpush1.bf16.msra.mxu0 0
    %2531 = vmatprep.mubr.bf16.mxu0 0
    %2532 = vmatmul.mubr.bf16.gmra.mrb[0].mxu0 %v2387
    %v2533 = vpop.f32.mrb[0].mxu0
    %v2534 = vadd.f32 0.0, %v2533
    %v2535 = vpop.f32.mrb[0].mxu0
    %v2536 = vadd.f32 0.0, %v2535
    %v2537 = vpop.f32.mrb[0].mxu0
    %v2538 = vpop.f32.mrb[0].mxu0
    %2539 = vdwg.mxu0
    %2540 = vmatprep.subr.bf16.mxu0 %v785
    %2541 = vmatpush1.bf16.msra.mxu0 %v784
    %2542 = vmatprep.subr.bf16.mxu0 %v789
    %2543 = vmatpush1.bf16.msra.mxu0 %v788
    %2544 = vmatprep.subr.bf16.mxu0 %v793
    %2545 = vmatpush1.bf16.msra.mxu0 %v792
    %2546 = vmatprep.subr.bf16.mxu0 %v797
    %2547 = vmatpush1.bf16.msra.mxu0 %v796
    %2548 = vmatprep.subr.bf16.mxu0 %v801
    %2549 = vmatpush1.bf16.msra.mxu0 %v800
    %2550 = vmatprep.subr.bf16.mxu0 %v805
    %2551 = vmatpush1.bf16.msra.mxu0 %v804
    %2552 = vmatprep.subr.bf16.mxu0 %v809
    %2553 = vmatpush1.bf16.msra.mxu0 %v808
    %2554 = vmatprep.subr.bf16.mxu0 %v813
    %2555 = vmatpush1.bf16.msra.mxu0 %v812
    %2556 = vmatprep.subr.bf16.mxu0 0
    %2557 = vmatpush1.bf16.msra.mxu0 0
    %2558 = vmatprep.subr.bf16.mxu0 0
    %2559 = vmatpush1.bf16.msra.mxu0 0
    %2560 = vmatprep.subr.bf16.mxu0 0
    %2561 = vmatpush1.bf16.msra.mxu0 0
    %2562 = vmatprep.subr.bf16.mxu0 0
    %2563 = vmatpush1.bf16.msra.mxu0 0
    %2564 = vmatprep.subr.bf16.mxu0 0
    %2565 = vmatpush1.bf16.msra.mxu0 0
    %2566 = vmatprep.subr.bf16.mxu0 0
    %2567 = vmatpush1.bf16.msra.mxu0 0
    %2568 = vmatprep.subr.bf16.mxu0 0
    %2569 = vmatpush1.bf16.msra.mxu0 0
    %2570 = vmatprep.subr.bf16.mxu0 0
    %2571 = vmatpush1.bf16.msra.mxu0 0
    %2572 = vmatprep.mubr.bf16.mxu0 0
    %2573 = vmatmul.mubr.bf16.gmra.mrb[0].mxu0 %v2387
    %v2574 = vpop.f32.mrb[0].mxu0
    %v2575 = vadd.f32 0.0, %v2574
    %v2576 = vpop.f32.mrb[0].mxu0
    %v2577 = vadd.f32 0.0, %v2576
    %v2578 = vpop.f32.mrb[0].mxu0
    %v2579 = vpop.f32.mrb[0].mxu0
    %2580 = vdwg.mxu0
    %v2581 = vadd.f32 %v585, %v2534
    %v2582 = vadd.f32 %v587, %v2536
    %v2583 = vadd.f32 %v628, %v2575
    %v2584 = vadd.f32 %v630, %v2577
    %v2585 = vxor.u32 %v2581, 2147483648
    %v2586 = vmul.f32 %v2585, 1.442695
    %v2587 = vpow.pop %v2586
    %v2588 = vadd.f32 %v2587, 1.0
    %v2589 = vrcp.pop %v2588
    %v2590 = vmul.f32 1.0, %v2589
    %v2591 = vxor.u32 %v2582, 2147483648
    %v2592 = vmul.f32 %v2591, 1.442695
    %v2593 = vpow.pop %v2592
    %v2594 = vadd.f32 %v2593, 1.0
    %v2595 = vrcp.pop %v2594
    %v2596 = vmul.f32 1.0, %v2595
    %v2597 = vtanh.pop %v2583
    %v2598 = vxor.u32 %v2584, 2147483648
    %v2599 = vmul.f32 %v2598, 1.442695
    %v2600 = vpow.pop %v2599
    %v2601 = vadd.f32 %v2600, 1.0
    %v2602 = vrcp.pop %v2601
    %v2603 = vmul.f32 1.0, %v2602
    %v2605 = vrot.slane %v2299, 6
    %v2607 = vmul.f32 %v2596, %v2605
    %v2608 = vmul.f32 %v2590, %v2597
    %v2609 = vadd.f32 %v2607, %v2608
    %v2610 = vtanh.pop %v2609
    %v2611 = vmul.f32 %v2603, %v2610
    %v2612 = vpack.c.bf16 %v2611, %v2611
    %v2613 = vpack.c.bf16 %v2498, %v2498
    %2614 = vmatprep.subr.bf16.mxu0 %v1118
    %2615 = vmatpush1.bf16.msra.mxu0 %v1117
    %2616 = vmatprep.subr.bf16.mxu0 %v1122
    %2617 = vmatpush1.bf16.msra.mxu0 %v1121
    %2618 = vmatprep.subr.bf16.mxu0 %v1126
    %2619 = vmatpush1.bf16.msra.mxu0 %v1125
    %2620 = vmatprep.subr.bf16.mxu0 %v1130
    %2621 = vmatpush1.bf16.msra.mxu0 %v1129
    %2622 = vmatprep.subr.bf16.mxu0 %v1134
    %2623 = vmatpush1.bf16.msra.mxu0 %v1133
    %2624 = vmatprep.subr.bf16.mxu0 %v1138
    %2625 = vmatpush1.bf16.msra.mxu0 %v1137
    %2626 = vmatprep.subr.bf16.mxu0 %v1142
    %2627 = vmatpush1.bf16.msra.mxu0 %v1141
    %2628 = vmatprep.subr.bf16.mxu0 %v1146
    %2629 = vmatpush1.bf16.msra.mxu0 %v1145
    %2630 = vmatprep.subr.bf16.mxu0 0
    %2631 = vmatpush1.bf16.msra.mxu0 0
    %2632 = vmatprep.subr.bf16.mxu0 0
    %2633 = vmatpush1.bf16.msra.mxu0 0
    %2634 = vmatprep.subr.bf16.mxu0 0
    %2635 = vmatpush1.bf16.msra.mxu0 0
    %2636 = vmatprep.subr.bf16.mxu0 0
    %2637 = vmatpush1.bf16.msra.mxu0 0
    %2638 = vmatprep.subr.bf16.mxu0 0
    %2639 = vmatpush1.bf16.msra.mxu0 0
    %2640 = vmatprep.subr.bf16.mxu0 0
    %2641 = vmatpush1.bf16.msra.mxu0 0
    %2642 = vmatprep.subr.bf16.mxu0 0
    %2643 = vmatpush1.bf16.msra.mxu0 0
    %2644 = vmatprep.subr.bf16.mxu0 0
    %2645 = vmatpush1.bf16.msra.mxu0 0
    %2646 = vmatprep.mubr.bf16.mxu0 0
    %2647 = vmatmul.mubr.bf16.gmra.mrb[0].mxu0 %v2613
    %v2648 = vpop.f32.mrb[0].mxu0
    %v2649 = vadd.f32 0.0, %v2648
    %v2650 = vpop.f32.mrb[0].mxu0
    %v2651 = vadd.f32 0.0, %v2650
    %v2652 = vpop.f32.mrb[0].mxu0
    %v2653 = vpop.f32.mrb[0].mxu0
    %2654 = vdwg.mxu0
    %2655 = vmatprep.subr.bf16.mxu0 %v1120
    %2656 = vmatpush1.bf16.msra.mxu0 %v1119
    %2657 = vmatprep.subr.bf16.mxu0 %v1124
    %2658 = vmatpush1.bf16.msra.mxu0 %v1123
    %2659 = vmatprep.subr.bf16.mxu0 %v1128
    %2660 = vmatpush1.bf16.msra.mxu0 %v1127
    %2661 = vmatprep.subr.bf16.mxu0 %v1132
    %2662 = vmatpush1.bf16.msra.mxu0 %v1131
    %2663 = vmatprep.subr.bf16.mxu0 %v1136
    %2664 = vmatpush1.bf16.msra.mxu0 %v1135
    %2665 = vmatprep.subr.bf16.mxu0 %v1140
    %2666 = vmatpush1.bf16.msra.mxu0 %v1139
    %2667 = vmatprep.subr.bf16.mxu0 %v1144
    %2668 = vmatpush1.bf16.msra.mxu0 %v1143
    %2669 = vmatprep.subr.bf16.mxu0 %v1148
    %2670 = vmatpush1.bf16.msra.mxu0 %v1147
    %2671 = vmatprep.subr.bf16.mxu0 0
    %2672 = vmatpush1.bf16.msra.mxu0 0
    %2673 = vmatprep.subr.bf16.mxu0 0
    %2674 = vmatpush1.bf16.msra.mxu0 0
    %2675 = vmatprep.subr.bf16.mxu0 0
    %2676 = vmatpush1.bf16.msra.mxu0 0
    %2677 = vmatprep.subr.bf16.mxu0 0
    %2678 = vmatpush1.bf16.msra.mxu0 0
    %2679 = vmatprep.subr.bf16.mxu0 0
    %2680 = vmatpush1.bf16.msra.mxu0 0
    %2681 = vmatprep.subr.bf16.mxu0 0
    %2682 = vmatpush1.bf16.msra.mxu0 0
    %2683 = vmatprep.subr.bf16.mxu0 0
    %2684 = vmatpush1.bf16.msra.mxu0 0
    %2685 = vmatprep.subr.bf16.mxu0 0
    %2686 = vmatpush1.bf16.msra.mxu0 0
    %2687 = vmatprep.mubr.bf16.mxu0 0
    %2688 = vmatmul.mubr.bf16.gmra.mrb[0].mxu0 %v2613
    %v2689 = vpop.f32.mrb[0].mxu0
    %v2690 = vadd.f32 0.0, %v2689
    %v2691 = vpop.f32.mrb[0].mxu0
    %v2692 = vadd.f32 0.0, %v2691
    %v2693 = vpop.f32.mrb[0].mxu0
    %v2694 = vpop.f32.mrb[0].mxu0
    %2695 = vdwg.mxu0
    %2696 = vmatprep.subr.bf16.mxu0 %v1360
    %2697 = vmatpush1.bf16.msra.mxu0 %v1359
    %2698 = vmatprep.subr.bf16.mxu0 %v1364
    %2699 = vmatpush1.bf16.msra.mxu0 %v1363
    %2700 = vmatprep.subr.bf16.mxu0 %v1368
    %2701 = vmatpush1.bf16.msra.mxu0 %v1367
    %2702 = vmatprep.subr.bf16.mxu0 %v1372
    %2703 = vmatpush1.bf16.msra.mxu0 %v1371
    %2704 = vmatprep.subr.bf16.mxu0 %v1376
    %2705 = vmatpush1.bf16.msra.mxu0 %v1375
    %2706 = vmatprep.subr.bf16.mxu0 %v1380
    %2707 = vmatpush1.bf16.msra.mxu0 %v1379
    %2708 = vmatprep.subr.bf16.mxu0 %v1384
    %2709 = vmatpush1.bf16.msra.mxu0 %v1383
    %2710 = vmatprep.subr.bf16.mxu0 %v1388
    %2711 = vmatpush1.bf16.msra.mxu0 %v1387
    %2712 = vmatprep.subr.bf16.mxu0 0
    %2713 = vmatpush1.bf16.msra.mxu0 0
    %2714 = vmatprep.subr.bf16.mxu0 0
    %2715 = vmatpush1.bf16.msra.mxu0 0
    %2716 = vmatprep.subr.bf16.mxu0 0
    %2717 = vmatpush1.bf16.msra.mxu0 0
    %2718 = vmatprep.subr.bf16.mxu0 0
    %2719 = vmatpush1.bf16.msra.mxu0 0
    %2720 = vmatprep.subr.bf16.mxu0 0
    %2721 = vmatpush1.bf16.msra.mxu0 0
    %2722 = vmatprep.subr.bf16.mxu0 0
    %2723 = vmatpush1.bf16.msra.mxu0 0
    %2724 = vmatprep.subr.bf16.mxu0 0
    %2725 = vmatpush1.bf16.msra.mxu0 0
    %2726 = vmatprep.subr.bf16.mxu0 0
    %2727 = vmatpush1.bf16.msra.mxu0 0
    %2728 = vmatprep.mubr.bf16.mxu0 0
    %2729 = vmatmul.mubr.bf16.gmra.mrb[0].mxu0 %v2612
    %v2730 = vpop.f32.mrb[0].mxu0
    %v2731 = vadd.f32 %v2649, %v2730
    %v2732 = vpop.f32.mrb[0].mxu0
    %v2733 = vadd.f32 %v2651, %v2732
    %v2734 = vpop.f32.mrb[0].mxu0
    %v2735 = vpop.f32.mrb[0].mxu0
    %2736 = vdwg.mxu0
    %2737 = vmatprep.subr.bf16.mxu0 %v1362
    %2738 = vmatpush1.bf16.msra.mxu0 %v1361
    %2739 = vmatprep.subr.bf16.mxu0 %v1366
    %2740 = vmatpush1.bf16.msra.mxu0 %v1365
    %2741 = vmatprep.subr.bf16.mxu0 %v1370
    %2742 = vmatpush1.bf16.msra.mxu0 %v1369
    %2743 = vmatprep.subr.bf16.mxu0 %v1374
    %2744 = vmatpush1.bf16.msra.mxu0 %v1373
    %2745 = vmatprep.subr.bf16.mxu0 %v1378
    %2746 = vmatpush1.bf16.msra.mxu0 %v1377
    %2747 = vmatprep.subr.bf16.mxu0 %v1382
    %2748 = vmatpush1.bf16.msra.mxu0 %v1381
    %2749 = vmatprep.subr.bf16.mxu0 %v1386
    %2750 = vmatpush1.bf16.msra.mxu0 %v1385
    %2751 = vmatprep.subr.bf16.mxu0 %v1390
    %2752 = vmatpush1.bf16.msra.mxu0 %v1389
    %2753 = vmatprep.subr.bf16.mxu0 0
    %2754 = vmatpush1.bf16.msra.mxu0 0
    %2755 = vmatprep.subr.bf16.mxu0 0
    %2756 = vmatpush1.bf16.msra.mxu0 0
    %2757 = vmatprep.subr.bf16.mxu0 0
    %2758 = vmatpush1.bf16.msra.mxu0 0
    %2759 = vmatprep.subr.bf16.mxu0 0
    %2760 = vmatpush1.bf16.msra.mxu0 0
    %2761 = vmatprep.subr.bf16.mxu0 0
    %2762 = vmatpush1.bf16.msra.mxu0 0
    %2763 = vmatprep.subr.bf16.mxu0 0
    %2764 = vmatpush1.bf16.msra.mxu0 0
    %2765 = vmatprep.subr.bf16.mxu0 0
    %2766 = vmatpush1.bf16.msra.mxu0 0
    %2767 = vmatprep.subr.bf16.mxu0 0
    %2768 = vmatpush1.bf16.msra.mxu0 0
    %2769 = vmatprep.mubr.bf16.mxu0 0
    %2770 = vmatmul.mubr.bf16.gmra.mrb[0].mxu0 %v2612
    %v2771 = vpop.f32.mrb[0].mxu0
    %v2772 = vadd.f32 %v2690, %v2771
    %v2773 = vpop.f32.mrb[0].mxu0
    %v2774 = vadd.f32 %v2692, %v2773
    %v2775 = vpop.f32.mrb[0].mxu0
    %v2776 = vpop.f32.mrb[0].mxu0
    %2777 = vdwg.mxu0
    %v2778 = vadd.f32 %v2731, %v637
    %v2779 = vadd.f32 %v2733, %v641
    %v2780 = vadd.f32 %v2772, %v645
    %v2781 = vadd.f32 %v2774, %v649
    %v2782 = vxor.u32 %v2778, 2147483648
    %v2783 = vmul.f32 %v2782, 1.442695
    %v2784 = vpow.pop %v2783
    %v2785 = vadd.f32 %v2784, 1.0
    %v2786 = vrcp.pop %v2785
    %v2787 = vmul.f32 1.0, %v2786
    %v2788 = vxor.u32 %v2779, 2147483648
    %v2789 = vmul.f32 %v2788, 1.442695
    %v2790 = vpow.pop %v2789
    %v2791 = vadd.f32 %v2790, 1.0
    %v2792 = vrcp.pop %v2791
    %v2793 = vmul.f32 1.0, %v2792
    %v2794 = vtanh.pop %v2780
    %v2795 = vxor.u32 %v2781, 2147483648
    %v2796 = vmul.f32 %v2795, 1.442695
    %v2797 = vpow.pop %v2796
    %v2798 = vadd.f32 %v2797, 1.0
    %v2799 = vrcp.pop %v2798
    %v2800 = vmul.f32 1.0, %v2799
    %v2801 = vmul.f32 %v2793, %v2496
    %v2802 = vmul.f32 %v2787, %v2794
    %v2803 = vadd.f32 %v2801, %v2802
    %v2804 = vtanh.pop %v2803
    %v2805 = vmul.f32 %v2800, %v2804
    %2806 = vmatprep.subr.bf16.mxu0 %v783
    %2807 = vmatpush1.bf16.msra.mxu0 %v782
    %2808 = vmatprep.subr.bf16.mxu0 %v787
    %2809 = vmatpush1.bf16.msra.mxu0 %v786
    %2810 = vmatprep.subr.bf16.mxu0 %v791
    %2811 = vmatpush1.bf16.msra.mxu0 %v790
    %2812 = vmatprep.subr.bf16.mxu0 %v795
    %2813 = vmatpush1.bf16.msra.mxu0 %v794
    %2814 = vmatprep.subr.bf16.mxu0 %v799
    %2815 = vmatpush1.bf16.msra.mxu0 %v798
    %2816 = vmatprep.subr.bf16.mxu0 %v803
    %2817 = vmatpush1.bf16.msra.mxu0 %v802
    %2818 = vmatprep.subr.bf16.mxu0 %v807
    %2819 = vmatpush1.bf16.msra.mxu0 %v806
    %2820 = vmatprep.subr.bf16.mxu0 %v811
    %2821 = vmatpush1.bf16.msra.mxu0 %v810
    %2822 = vmatprep.subr.bf16.mxu0 0
    %2823 = vmatpush1.bf16.msra.mxu0 0
    %2824 = vmatprep.subr.bf16.mxu0 0
    %2825 = vmatpush1.bf16.msra.mxu0 0
    %2826 = vmatprep.subr.bf16.mxu0 0
    %2827 = vmatpush1.bf16.msra.mxu0 0
    %2828 = vmatprep.subr.bf16.mxu0 0
    %2829 = vmatpush1.bf16.msra.mxu0 0
    %2830 = vmatprep.subr.bf16.mxu0 0
    %2831 = vmatpush1.bf16.msra.mxu0 0
    %2832 = vmatprep.subr.bf16.mxu0 0
    %2833 = vmatpush1.bf16.msra.mxu0 0
    %2834 = vmatprep.subr.bf16.mxu0 0
    %2835 = vmatpush1.bf16.msra.mxu0 0
    %2836 = vmatprep.subr.bf16.mxu0 0
    %2837 = vmatpush1.bf16.msra.mxu0 0
    %2838 = vmatprep.mubr.bf16.mxu0 0
    %2839 = vmatmul.mubr.bf16.gmra.mrb[0].mxu0 %v2612
    %v2840 = vpop.f32.mrb[0].mxu0
    %v2841 = vadd.f32 0.0, %v2840
    %v2842 = vpop.f32.mrb[0].mxu0
    %v2843 = vadd.f32 0.0, %v2842
    %v2844 = vpop.f32.mrb[0].mxu0
    %v2845 = vpop.f32.mrb[0].mxu0
    %2846 = vdwg.mxu0
    %2847 = vmatprep.subr.bf16.mxu0 %v785
    %2848 = vmatpush1.bf16.msra.mxu0 %v784
    %2849 = vmatprep.subr.bf16.mxu0 %v789
    %2850 = vmatpush1.bf16.msra.mxu0 %v788
    %2851 = vmatprep.subr.bf16.mxu0 %v793
    %2852 = vmatpush1.bf16.msra.mxu0 %v792
    %2853 = vmatprep.subr.bf16.mxu0 %v797
    %2854 = vmatpush1.bf16.msra.mxu0 %v796
    %2855 = vmatprep.subr.bf16.mxu0 %v801
    %2856 = vmatpush1.bf16.msra.mxu0 %v800
    %2857 = vmatprep.subr.bf16.mxu0 %v805
    %2858 = vmatpush1.bf16.msra.mxu0 %v804
    %2859 = vmatprep.subr.bf16.mxu0 %v809
    %2860 = vmatpush1.bf16.msra.mxu0 %v808
    %2861 = vmatprep.subr.bf16.mxu0 %v813
    %2862 = vmatpush1.bf16.msra.mxu0 %v812
    %2863 = vmatprep.subr.bf16.mxu0 0
    %2864 = vmatpush1.bf16.msra.mxu0 0
    %2865 = vmatprep.subr.bf16.mxu0 0
    %2866 = vmatpush1.bf16.msra.mxu0 0
    %2867 = vmatprep.subr.bf16.mxu0 0
    %2868 = vmatpush1.bf16.msra.mxu0 0
    %2869 = vmatprep.subr.bf16.mxu0 0
    %2870 = vmatpush1.bf16.msra.mxu0 0
    %2871 = vmatprep.subr.bf16.mxu0 0
    %2872 = vmatpush1.bf16.msra.mxu0 0
    %2873 = vmatprep.subr.bf16.mxu0 0
    %2874 = vmatpush1.bf16.msra.mxu0 0
    %2875 = vmatprep.subr.bf16.mxu0 0
    %2876 = vmatpush1.bf16.msra.mxu0 0
    %2877 = vmatprep.subr.bf16.mxu0 0
    %2878 = vmatpush1.bf16.msra.mxu0 0
    %2879 = vmatprep.mubr.bf16.mxu0 0
    %2880 = vmatmul.mubr.bf16.gmra.mrb[0].mxu0 %v2612
    %v2881 = vpop.f32.mrb[0].mxu0
    %v2882 = vadd.f32 0.0, %v2881
    %v2883 = vpop.f32.mrb[0].mxu0
    %v2884 = vadd.f32 0.0, %v2883
    %v2885 = vpop.f32.mrb[0].mxu0
    %v2886 = vpop.f32.mrb[0].mxu0
    %2887 = vdwg.mxu0
    %v2892 = vrot.slane %v2841, 6
    %v2893 = vrot.slane %v2843, 6
    %v2894 = vrot.slane %v2882, 6
    %v2895 = vrot.slane %v2884, 6
    %v2900 = vadd.f32 %v585, %v2892
    %v2901 = vadd.f32 %v587, %v2893
    %v2902 = vadd.f32 %v628, %v2894
    %v2903 = vadd.f32 %v630, %v2895
    %v2904 = vxor.u32 %v2900, 2147483648
    %v2905 = vmul.f32 %v2904, 1.442695
    %v2906 = vpow.pop %v2905
    %v2907 = vadd.f32 %v2906, 1.0
    %v2908 = vrcp.pop %v2907
    %v2909 = vmul.f32 1.0, %v2908
    %v2910 = vxor.u32 %v2901, 2147483648
    %v2911 = vmul.f32 %v2910, 1.442695
    %v2912 = vpow.pop %v2911
    %v2913 = vadd.f32 %v2912, 1.0
    %v2914 = vrcp.pop %v2913
    %v2915 = vmul.f32 1.0, %v2914
    %v2916 = vtanh.pop %v2902
    %v2917 = vxor.u32 %v2903, 2147483648
    %v2918 = vmul.f32 %v2917, 1.442695
    %v2919 = vpow.pop %v2918
    %v2920 = vadd.f32 %v2919, 1.0
    %v2921 = vrcp.pop %v2920
    %v2922 = vmul.f32 1.0, %v2921
    %v2924 = vrot.slane %v2609, 6
    %v2926 = vmul.f32 %v2915, %v2924
    %v2927 = vmul.f32 %v2909, %v2916
    %v2928 = vadd.f32 %v2926, %v2927
    %v2929 = vtanh.pop %v2928
    %v2930 = vmul.f32 %v2922, %v2929
    %v2931 = vpack.c.bf16 %v2930, %v2930
    %v2932 = vpack.c.bf16 %v2805, %v2805
    %2933 = vmatprep.subr.bf16.mxu0 %v1118
    %2934 = vmatpush1.bf16.msra.mxu0 %v1117
    %2935 = vmatprep.subr.bf16.mxu0 %v1122
    %2936 = vmatpush1.bf16.msra.mxu0 %v1121
    %2937 = vmatprep.subr.bf16.mxu0 %v1126
    %2938 = vmatpush1.bf16.msra.mxu0 %v1125
    %2939 = vmatprep.subr.bf16.mxu0 %v1130
    %2940 = vmatpush1.bf16.msra.mxu0 %v1129
    %2941 = vmatprep.subr.bf16.mxu0 %v1134
    %2942 = vmatpush1.bf16.msra.mxu0 %v1133
    %2943 = vmatprep.subr.bf16.mxu0 %v1138
    %2944 = vmatpush1.bf16.msra.mxu0 %v1137
    %2945 = vmatprep.subr.bf16.mxu0 %v1142
    %2946 = vmatpush1.bf16.msra.mxu0 %v1141
    %2947 = vmatprep.subr.bf16.mxu0 %v1146
    %2948 = vmatpush1.bf16.msra.mxu0 %v1145
    %2949 = vmatprep.subr.bf16.mxu0 0
    %2950 = vmatpush1.bf16.msra.mxu0 0
    %2951 = vmatprep.subr.bf16.mxu0 0
    %2952 = vmatpush1.bf16.msra.mxu0 0
    %2953 = vmatprep.subr.bf16.mxu0 0
    %2954 = vmatpush1.bf16.msra.mxu0 0
    %2955 = vmatprep.subr.bf16.mxu0 0
    %2956 = vmatpush1.bf16.msra.mxu0 0
    %2957 = vmatprep.subr.bf16.mxu0 0
    %2958 = vmatpush1.bf16.msra.mxu0 0
    %2959 = vmatprep.subr.bf16.mxu0 0
    %2960 = vmatpush1.bf16.msra.mxu0 0
    %2961 = vmatprep.subr.bf16.mxu0 0
    %2962 = vmatpush1.bf16.msra.mxu0 0
    %2963 = vmatprep.subr.bf16.mxu0 0
    %2964 = vmatpush1.bf16.msra.mxu0 0
    %2965 = vmatprep.mubr.bf16.mxu0 0
    %2966 = vmatmul.mubr.bf16.gmra.mrb[0].mxu0 %v2932
    %v2967 = vpop.f32.mrb[0].mxu0
    %v2968 = vadd.f32 0.0, %v2967
    %v2969 = vpop.f32.mrb[0].mxu0
    %v2970 = vadd.f32 0.0, %v2969
    %v2971 = vpop.f32.mrb[0].mxu0
    %v2972 = vpop.f32.mrb[0].mxu0
    %2973 = vdwg.mxu0
    %2974 = vmatprep.subr.bf16.mxu0 %v1120
    %2975 = vmatpush1.bf16.msra.mxu0 %v1119
    %2976 = vmatprep.subr.bf16.mxu0 %v1124
    %2977 = vmatpush1.bf16.msra.mxu0 %v1123
    %2978 = vmatprep.subr.bf16.mxu0 %v1128
    %2979 = vmatpush1.bf16.msra.mxu0 %v1127
    %2980 = vmatprep.subr.bf16.mxu0 %v1132
    %2981 = vmatpush1.bf16.msra.mxu0 %v1131
    %2982 = vmatprep.subr.bf16.mxu0 %v1136
    %2983 = vmatpush1.bf16.msra.mxu0 %v1135
    %2984 = vmatprep.subr.bf16.mxu0 %v1140
    %2985 = vmatpush1.bf16.msra.mxu0 %v1139
    %2986 = vmatprep.subr.bf16.mxu0 %v1144
    %2987 = vmatpush1.bf16.msra.mxu0 %v1143
    %2988 = vmatprep.subr.bf16.mxu0 %v1148
    %2989 = vmatpush1.bf16.msra.mxu0 %v1147
    %2990 = vmatprep.subr.bf16.mxu0 0
    %2991 = vmatpush1.bf16.msra.mxu0 0
    %2992 = vmatprep.subr.bf16.mxu0 0
    %2993 = vmatpush1.bf16.msra.mxu0 0
    %2994 = vmatprep.subr.bf16.mxu0 0
    %2995 = vmatpush1.bf16.msra.mxu0 0
    %2996 = vmatprep.subr.bf16.mxu0 0
    %2997 = vmatpush1.bf16.msra.mxu0 0
    %2998 = vmatprep.subr.bf16.mxu0 0
    %2999 = vmatpush1.bf16.msra.mxu0 0
    %3000 = vmatprep.subr.bf16.mxu0 0
    %3001 = vmatpush1.bf16.msra.mxu0 0
    %3002 = vmatprep.subr.bf16.mxu0 0
    %3003 = vmatpush1.bf16.msra.mxu0 0
    %3004 = vmatprep.subr.bf16.mxu0 0
    %3005 = vmatpush1.bf16.msra.mxu0 0
    %3006 = vmatprep.mubr.bf16.mxu0 0
    %3007 = vmatmul.mubr.bf16.gmra.mrb[0].mxu0 %v2932
    %v3008 = vpop.f32.mrb[0].mxu0
    %v3009 = vadd.f32 0.0, %v3008
    %v3010 = vpop.f32.mrb[0].mxu0
    %v3011 = vadd.f32 0.0, %v3010
    %v3012 = vpop.f32.mrb[0].mxu0
    %v3013 = vpop.f32.mrb[0].mxu0
    %3014 = vdwg.mxu0
    %v3016 = vrot.slane %v2931, 1
    %3018 = vmatprep.subr.bf16.mxu0 %v1360
    %3019 = vmatpush1.bf16.msra.mxu0 %v1359
    %3020 = vmatprep.subr.bf16.mxu0 %v1364
    %3021 = vmatpush1.bf16.msra.mxu0 %v1363
    %3022 = vmatprep.subr.bf16.mxu0 %v1368
    %3023 = vmatpush1.bf16.msra.mxu0 %v1367
    %3024 = vmatprep.subr.bf16.mxu0 %v1372
    %3025 = vmatpush1.bf16.msra.mxu0 %v1371
    %3026 = vmatprep.subr.bf16.mxu0 %v1376
    %3027 = vmatpush1.bf16.msra.mxu0 %v1375
    %3028 = vmatprep.subr.bf16.mxu0 %v1380
    %3029 = vmatpush1.bf16.msra.mxu0 %v1379
    %3030 = vmatprep.subr.bf16.mxu0 %v1384
    %3031 = vmatpush1.bf16.msra.mxu0 %v1383
    %3032 = vmatprep.subr.bf16.mxu0 %v1388
    %3033 = vmatpush1.bf16.msra.mxu0 %v1387
    %3034 = vmatprep.subr.bf16.mxu0 0
    %3035 = vmatpush1.bf16.msra.mxu0 0
    %3036 = vmatprep.subr.bf16.mxu0 0
    %3037 = vmatpush1.bf16.msra.mxu0 0
    %3038 = vmatprep.subr.bf16.mxu0 0
    %3039 = vmatpush1.bf16.msra.mxu0 0
    %3040 = vmatprep.subr.bf16.mxu0 0
    %3041 = vmatpush1.bf16.msra.mxu0 0
    %3042 = vmatprep.subr.bf16.mxu0 0
    %3043 = vmatpush1.bf16.msra.mxu0 0
    %3044 = vmatprep.subr.bf16.mxu0 0
    %3045 = vmatpush1.bf16.msra.mxu0 0
    %3046 = vmatprep.subr.bf16.mxu0 0
    %3047 = vmatpush1.bf16.msra.mxu0 0
    %3048 = vmatprep.subr.bf16.mxu0 0
    %3049 = vmatpush1.bf16.msra.mxu0 0
    %3050 = vmatprep.mubr.bf16.mxu0 0
    %3051 = vmatmul.mubr.bf16.gmra.mrb[0].mxu0 %v3016
    %v3052 = vpop.f32.mrb[0].mxu0
    %v3053 = vadd.f32 %v2968, %v3052
    %v3054 = vpop.f32.mrb[0].mxu0
    %v3055 = vadd.f32 %v2970, %v3054
    %v3056 = vpop.f32.mrb[0].mxu0
    %v3057 = vpop.f32.mrb[0].mxu0
    %3058 = vdwg.mxu0
    %3059 = vmatprep.subr.bf16.mxu0 %v1362
    %3060 = vmatpush1.bf16.msra.mxu0 %v1361
    %3061 = vmatprep.subr.bf16.mxu0 %v1366
    %3062 = vmatpush1.bf16.msra.mxu0 %v1365
    %3063 = vmatprep.subr.bf16.mxu0 %v1370
    %3064 = vmatpush1.bf16.msra.mxu0 %v1369
    %3065 = vmatprep.subr.bf16.mxu0 %v1374
    %3066 = vmatpush1.bf16.msra.mxu0 %v1373
    %3067 = vmatprep.subr.bf16.mxu0 %v1378
    %3068 = vmatpush1.bf16.msra.mxu0 %v1377
    %3069 = vmatprep.subr.bf16.mxu0 %v1382
    %3070 = vmatpush1.bf16.msra.mxu0 %v1381
    %3071 = vmatprep.subr.bf16.mxu0 %v1386
    %3072 = vmatpush1.bf16.msra.mxu0 %v1385
    %3073 = vmatprep.subr.bf16.mxu0 %v1390
    %3074 = vmatpush1.bf16.msra.mxu0 %v1389
    %3075 = vmatprep.subr.bf16.mxu0 0
    %3076 = vmatpush1.bf16.msra.mxu0 0
    %3077 = vmatprep.subr.bf16.mxu0 0
    %3078 = vmatpush1.bf16.msra.mxu0 0
    %3079 = vmatprep.subr.bf16.mxu0 0
    %3080 = vmatpush1.bf16.msra.mxu0 0
    %3081 = vmatprep.subr.bf16.mxu0 0
    %3082 = vmatpush1.bf16.msra.mxu0 0
    %3083 = vmatprep.subr.bf16.mxu0 0
    %3084 = vmatpush1.bf16.msra.mxu0 0
    %3085 = vmatprep.subr.bf16.mxu0 0
    %3086 = vmatpush1.bf16.msra.mxu0 0
    %3087 = vmatprep.subr.bf16.mxu0 0
    %3088 = vmatpush1.bf16.msra.mxu0 0
    %3089 = vmatprep.subr.bf16.mxu0 0
    %3090 = vmatpush1.bf16.msra.mxu0 0
    %3091 = vmatprep.mubr.bf16.mxu0 0
    %3092 = vmatmul.mubr.bf16.gmra.mrb[0].mxu0 %v3016
    %v3093 = vpop.f32.mrb[0].mxu0
    %v3094 = vadd.f32 %v3009, %v3093
    %v3095 = vpop.f32.mrb[0].mxu0
    %v3096 = vadd.f32 %v3011, %v3095
    %v3097 = vpop.f32.mrb[0].mxu0
    %v3098 = vpop.f32.mrb[0].mxu0
    %3099 = vdwg.mxu0
    %v3100 = vadd.f32 %v3053, %v637
    %v3101 = vadd.f32 %v3055, %v641
    %v3102 = vadd.f32 %v3094, %v645
    %v3103 = vadd.f32 %v3096, %v649
    %v3104 = vxor.u32 %v3100, 2147483648
    %v3105 = vmul.f32 %v3104, 1.442695
    %v3106 = vpow.pop %v3105
    %v3107 = vadd.f32 %v3106, 1.0
    %v3108 = vrcp.pop %v3107
    %v3109 = vmul.f32 1.0, %v3108
    %v3110 = vxor.u32 %v3101, 2147483648
    %v3111 = vmul.f32 %v3110, 1.442695
    %v3112 = vpow.pop %v3111
    %v3113 = vadd.f32 %v3112, 1.0
    %v3114 = vrcp.pop %v3113
    %v3115 = vmul.f32 1.0, %v3114
    %v3116 = vtanh.pop %v3102
    %v3117 = vxor.u32 %v3103, 2147483648
    %v3118 = vmul.f32 %v3117, 1.442695
    %v3119 = vpow.pop %v3118
    %v3120 = vadd.f32 %v3119, 1.0
    %v3121 = vrcp.pop %v3120
    %v3122 = vmul.f32 1.0, %v3121
    %v3123 = vmul.f32 %v3115, %v2803
    %v3124 = vmul.f32 %v3109, %v3116
    %v3125 = vadd.f32 %v3123, %v3124
    %v3126 = vtanh.pop %v3125
    %v3127 = vmul.f32 %v3122, %v3126
    %3128 = vmatprep.subr.bf16.mxu0 %v783
    %3129 = vmatpush1.bf16.msra.mxu0 %v782
    %3130 = vmatprep.subr.bf16.mxu0 %v787
    %3131 = vmatpush1.bf16.msra.mxu0 %v786
    %3132 = vmatprep.subr.bf16.mxu0 %v791
    %3133 = vmatpush1.bf16.msra.mxu0 %v790
    %3134 = vmatprep.subr.bf16.mxu0 %v795
    %3135 = vmatpush1.bf16.msra.mxu0 %v794
    %3136 = vmatprep.subr.bf16.mxu0 %v799
    %3137 = vmatpush1.bf16.msra.mxu0 %v798
    %3138 = vmatprep.subr.bf16.mxu0 %v803
    %3139 = vmatpush1.bf16.msra.mxu0 %v802
    %3140 = vmatprep.subr.bf16.mxu0 %v807
    %3141 = vmatpush1.bf16.msra.mxu0 %v806
    %3142 = vmatprep.subr.bf16.mxu0 %v811
    %3143 = vmatpush1.bf16.msra.mxu0 %v810
    %3144 = vmatprep.subr.bf16.mxu0 0
    %3145 = vmatpush1.bf16.msra.mxu0 0
    %3146 = vmatprep.subr.bf16.mxu0 0
    %3147 = vmatpush1.bf16.msra.mxu0 0
    %3148 = vmatprep.subr.bf16.mxu0 0
    %3149 = vmatpush1.bf16.msra.mxu0 0
    %3150 = vmatprep.subr.bf16.mxu0 0
    %3151 = vmatpush1.bf16.msra.mxu0 0
    %3152 = vmatprep.subr.bf16.mxu0 0
    %3153 = vmatpush1.bf16.msra.mxu0 0
    %3154 = vmatprep.subr.bf16.mxu0 0
    %3155 = vmatpush1.bf16.msra.mxu0 0
    %3156 = vmatprep.subr.bf16.mxu0 0
    %3157 = vmatpush1.bf16.msra.mxu0 0
    %3158 = vmatprep.subr.bf16.mxu0 0
    %3159 = vmatpush1.bf16.msra.mxu0 0
    %3160 = vmatprep.mubr.bf16.mxu0 0
    %3161 = vmatmul.mubr.bf16.gmra.mrb[0].mxu0 %v3016
    %v3162 = vpop.f32.mrb[0].mxu0
    %v3163 = vadd.f32 0.0, %v3162
    %v3164 = vpop.f32.mrb[0].mxu0
    %v3165 = vadd.f32 0.0, %v3164
    %v3166 = vpop.f32.mrb[0].mxu0
    %v3167 = vpop.f32.mrb[0].mxu0
    %3168 = vdwg.mxu0
    %3169 = vmatprep.subr.bf16.mxu0 %v785
    %3170 = vmatpush1.bf16.msra.mxu0 %v784
    %3171 = vmatprep.subr.bf16.mxu0 %v789
    %3172 = vmatpush1.bf16.msra.mxu0 %v788
    %3173 = vmatprep.subr.bf16.mxu0 %v793
    %3174 = vmatpush1.bf16.msra.mxu0 %v792
    %3175 = vmatprep.subr.bf16.mxu0 %v797
    %3176 = vmatpush1.bf16.msra.mxu0 %v796
    %3177 = vmatprep.subr.bf16.mxu0 %v801
    %3178 = vmatpush1.bf16.msra.mxu0 %v800
    %3179 = vmatprep.subr.bf16.mxu0 %v805
    %3180 = vmatpush1.bf16.msra.mxu0 %v804
    %3181 = vmatprep.subr.bf16.mxu0 %v809
    %3182 = vmatpush1.bf16.msra.mxu0 %v808
    %3183 = vmatprep.subr.bf16.mxu0 %v813
    %3184 = vmatpush1.bf16.msra.mxu0 %v812
    %3185 = vmatprep.subr.bf16.mxu0 0
    %3186 = vmatpush1.bf16.msra.mxu0 0
    %3187 = vmatprep.subr.bf16.mxu0 0
    %3188 = vmatpush1.bf16.msra.mxu0 0
    %3189 = vmatprep.subr.bf16.mxu0 0
    %3190 = vmatpush1.bf16.msra.mxu0 0
    %3191 = vmatprep.subr.bf16.mxu0 0
    %3192 = vmatpush1.bf16.msra.mxu0 0
    %3193 = vmatprep.subr.bf16.mxu0 0
    %3194 = vmatpush1.bf16.msra.mxu0 0
    %3195 = vmatprep.subr.bf16.mxu0 0
    %3196 = vmatpush1.bf16.msra.mxu0 0
    %3197 = vmatprep.subr.bf16.mxu0 0
    %3198 = vmatpush1.bf16.msra.mxu0 0
    %3199 = vmatprep.subr.bf16.mxu0 0
    %3200 = vmatpush1.bf16.msra.mxu0 0
    %3201 = vmatprep.mubr.bf16.mxu0 0
    %3202 = vmatmul.mubr.bf16.gmra.mrb[0].mxu0 %v3016
    %v3203 = vpop.f32.mrb[0].mxu0
    %v3204 = vadd.f32 0.0, %v3203
    %v3205 = vpop.f32.mrb[0].mxu0
    %v3206 = vadd.f32 0.0, %v3205
    %v3207 = vpop.f32.mrb[0].mxu0
    %v3208 = vpop.f32.mrb[0].mxu0
    %3209 = vdwg.mxu0
    %v3214 = vrot.slane %v3163, 4
    %v3215 = vrot.slane %v3165, 4
    %v3216 = vrot.slane %v3204, 4
    %v3217 = vrot.slane %v3206, 4
    %v3222 = vadd.f32 %v585, %v3214
    %v3223 = vadd.f32 %v587, %v3215
    %v3224 = vadd.f32 %v628, %v3216
    %v3225 = vadd.f32 %v630, %v3217
    %v3226 = vxor.u32 %v3222, 2147483648
    %v3227 = vmul.f32 %v3226, 1.442695
    %v3228 = vpow.pop %v3227
    %v3229 = vadd.f32 %v3228, 1.0
    %v3230 = vrcp.pop %v3229
    %v3231 = vmul.f32 1.0, %v3230
    %v3232 = vxor.u32 %v3223, 2147483648
    %v3233 = vmul.f32 %v3232, 1.442695
    %v3234 = vpow.pop %v3233
    %v3235 = vadd.f32 %v3234, 1.0
    %v3236 = vrcp.pop %v3235
    %v3237 = vmul.f32 1.0, %v3236
    %v3238 = vtanh.pop %v3224
    %v3239 = vxor.u32 %v3225, 2147483648
    %v3240 = vmul.f32 %v3239, 1.442695
    %v3241 = vpow.pop %v3240
    %v3242 = vadd.f32 %v3241, 1.0
    %v3243 = vrcp.pop %v3242
    %v3244 = vmul.f32 1.0, %v3243
    %v3246 = vrot.slane %v2928, 6
    %v3248 = vmul.f32 %v3237, %v3246
    %v3249 = vmul.f32 %v3231, %v3238
    %v3250 = vadd.f32 %v3248, %v3249
    %v3251 = vtanh.pop %v3250
    %v3252 = vmul.f32 %v3244, %v3251
    %v3253 = vpack.c.bf16 %v3252, %v3252
    %v3254 = vpack.c.bf16 %v3127, %v3127
    %3255 = vmatprep.subr.bf16.mxu0 %v1118
    %3256 = vmatpush1.bf16.msra.mxu0 %v1117
    %3257 = vmatprep.subr.bf16.mxu0 %v1122
    %3258 = vmatpush1.bf16.msra.mxu0 %v1121
    %3259 = vmatprep.subr.bf16.mxu0 %v1126
    %3260 = vmatpush1.bf16.msra.mxu0 %v1125
    %3261 = vmatprep.subr.bf16.mxu0 %v1130
    %3262 = vmatpush1.bf16.msra.mxu0 %v1129
    %3263 = vmatprep.subr.bf16.mxu0 %v1134
    %3264 = vmatpush1.bf16.msra.mxu0 %v1133
    %3265 = vmatprep.subr.bf16.mxu0 %v1138
    %3266 = vmatpush1.bf16.msra.mxu0 %v1137
    %3267 = vmatprep.subr.bf16.mxu0 %v1142
    %3268 = vmatpush1.bf16.msra.mxu0 %v1141
    %3269 = vmatprep.subr.bf16.mxu0 %v1146
    %3270 = vmatpush1.bf16.msra.mxu0 %v1145
    %3271 = vmatprep.subr.bf16.mxu0 0
    %3272 = vmatpush1.bf16.msra.mxu0 0
    %3273 = vmatprep.subr.bf16.mxu0 0
    %3274 = vmatpush1.bf16.msra.mxu0 0
    %3275 = vmatprep.subr.bf16.mxu0 0
    %3276 = vmatpush1.bf16.msra.mxu0 0
    %3277 = vmatprep.subr.bf16.mxu0 0
    %3278 = vmatpush1.bf16.msra.mxu0 0
    %3279 = vmatprep.subr.bf16.mxu0 0
    %3280 = vmatpush1.bf16.msra.mxu0 0
    %3281 = vmatprep.subr.bf16.mxu0 0
    %3282 = vmatpush1.bf16.msra.mxu0 0
    %3283 = vmatprep.subr.bf16.mxu0 0
    %3284 = vmatpush1.bf16.msra.mxu0 0
    %3285 = vmatprep.subr.bf16.mxu0 0
    %3286 = vmatpush1.bf16.msra.mxu0 0
    %3287 = vmatprep.mubr.bf16.mxu0 0
    %3288 = vmatmul.mubr.bf16.gmra.mrb[0].mxu0 %v3254
    %v3289 = vpop.f32.mrb[0].mxu0
    %v3290 = vadd.f32 0.0, %v3289
    %v3291 = vpop.f32.mrb[0].mxu0
    %v3292 = vadd.f32 0.0, %v3291
    %v3293 = vpop.f32.mrb[0].mxu0
    %v3294 = vpop.f32.mrb[0].mxu0
    %3295 = vdwg.mxu0
    %3296 = vmatprep.subr.bf16.mxu0 %v1120
    %3297 = vmatpush1.bf16.msra.mxu0 %v1119
    %3298 = vmatprep.subr.bf16.mxu0 %v1124
    %3299 = vmatpush1.bf16.msra.mxu0 %v1123
    %3300 = vmatprep.subr.bf16.mxu0 %v1128
    %3301 = vmatpush1.bf16.msra.mxu0 %v1127
    %3302 = vmatprep.subr.bf16.mxu0 %v1132
    %3303 = vmatpush1.bf16.msra.mxu0 %v1131
    %3304 = vmatprep.subr.bf16.mxu0 %v1136
    %3305 = vmatpush1.bf16.msra.mxu0 %v1135
    %3306 = vmatprep.subr.bf16.mxu0 %v1140
    %3307 = vmatpush1.bf16.msra.mxu0 %v1139
    %3308 = vmatprep.subr.bf16.mxu0 %v1144
    %3309 = vmatpush1.bf16.msra.mxu0 %v1143
    %3310 = vmatprep.subr.bf16.mxu0 %v1148
    %3311 = vmatpush1.bf16.msra.mxu0 %v1147
    %3312 = vmatprep.subr.bf16.mxu0 0
    %3313 = vmatpush1.bf16.msra.mxu0 0
    %3314 = vmatprep.subr.bf16.mxu0 0
    %3315 = vmatpush1.bf16.msra.mxu0 0
    %3316 = vmatprep.subr.bf16.mxu0 0
    %3317 = vmatpush1.bf16.msra.mxu0 0
    %3318 = vmatprep.subr.bf16.mxu0 0
    %3319 = vmatpush1.bf16.msra.mxu0 0
    %3320 = vmatprep.subr.bf16.mxu0 0
    %3321 = vmatpush1.bf16.msra.mxu0 0
    %3322 = vmatprep.subr.bf16.mxu0 0
    %3323 = vmatpush1.bf16.msra.mxu0 0
    %3324 = vmatprep.subr.bf16.mxu0 0
    %3325 = vmatpush1.bf16.msra.mxu0 0
    %3326 = vmatprep.subr.bf16.mxu0 0
    %3327 = vmatpush1.bf16.msra.mxu0 0
    %3328 = vmatprep.mubr.bf16.mxu0 0
    %3329 = vmatmul.mubr.bf16.gmra.mrb[0].mxu0 %v3254
    %v3330 = vpop.f32.mrb[0].mxu0
    %v3331 = vadd.f32 0.0, %v3330
    %v3332 = vpop.f32.mrb[0].mxu0
    %v3333 = vadd.f32 0.0, %v3332
    %v3334 = vpop.f32.mrb[0].mxu0
    %v3335 = vpop.f32.mrb[0].mxu0
    %3336 = vdwg.mxu0
    %v3338 = vrot.slane %v3253, 2
    %3340 = vmatprep.subr.bf16.mxu0 %v1360
    %3341 = vmatpush1.bf16.msra.mxu0 %v1359
    %3342 = vmatprep.subr.bf16.mxu0 %v1364
    %3343 = vmatpush1.bf16.msra.mxu0 %v1363
    %3344 = vmatprep.subr.bf16.mxu0 %v1368
    %3345 = vmatpush1.bf16.msra.mxu0 %v1367
    %3346 = vmatprep.subr.bf16.mxu0 %v1372
    %3347 = vmatpush1.bf16.msra.mxu0 %v1371
    %3348 = vmatprep.subr.bf16.mxu0 %v1376
    %3349 = vmatpush1.bf16.msra.mxu0 %v1375
    %3350 = vmatprep.subr.bf16.mxu0 %v1380
    %3351 = vmatpush1.bf16.msra.mxu0 %v1379
    %3352 = vmatprep.subr.bf16.mxu0 %v1384
    %3353 = vmatpush1.bf16.msra.mxu0 %v1383
    %3354 = vmatprep.subr.bf16.mxu0 %v1388
    %3355 = vmatpush1.bf16.msra.mxu0 %v1387
    %3356 = vmatprep.subr.bf16.mxu0 0
    %3357 = vmatpush1.bf16.msra.mxu0 0
    %3358 = vmatprep.subr.bf16.mxu0 0
    %3359 = vmatpush1.bf16.msra.mxu0 0
    %3360 = vmatprep.subr.bf16.mxu0 0
    %3361 = vmatpush1.bf16.msra.mxu0 0
    %3362 = vmatprep.subr.bf16.mxu0 0
    %3363 = vmatpush1.bf16.msra.mxu0 0
    %3364 = vmatprep.subr.bf16.mxu0 0
    %3365 = vmatpush1.bf16.msra.mxu0 0
    %3366 = vmatprep.subr.bf16.mxu0 0
    %3367 = vmatpush1.bf16.msra.mxu0 0
    %3368 = vmatprep.subr.bf16.mxu0 0
    %3369 = vmatpush1.bf16.msra.mxu0 0
    %3370 = vmatprep.subr.bf16.mxu0 0
    %3371 = vmatpush1.bf16.msra.mxu0 0
    %3372 = vmatprep.mubr.bf16.mxu0 0
    %3373 = vmatmul.mubr.bf16.gmra.mrb[0].mxu0 %v3338
    %v3374 = vpop.f32.mrb[0].mxu0
    %v3375 = vadd.f32 %v3290, %v3374
    %v3376 = vpop.f32.mrb[0].mxu0
    %v3377 = vadd.f32 %v3292, %v3376
    %v3378 = vpop.f32.mrb[0].mxu0
    %v3379 = vpop.f32.mrb[0].mxu0
    %3380 = vdwg.mxu0
    %3381 = vmatprep.subr.bf16.mxu0 %v1362
    %3382 = vmatpush1.bf16.msra.mxu0 %v1361
    %3383 = vmatprep.subr.bf16.mxu0 %v1366
    %3384 = vmatpush1.bf16.msra.mxu0 %v1365
    %3385 = vmatprep.subr.bf16.mxu0 %v1370
    %3386 = vmatpush1.bf16.msra.mxu0 %v1369
    %3387 = vmatprep.subr.bf16.mxu0 %v1374
    %3388 = vmatpush1.bf16.msra.mxu0 %v1373
    %3389 = vmatprep.subr.bf16.mxu0 %v1378
    %3390 = vmatpush1.bf16.msra.mxu0 %v1377
    %3391 = vmatprep.subr.bf16.mxu0 %v1382
    %3392 = vmatpush1.bf16.msra.mxu0 %v1381
    %3393 = vmatprep.subr.bf16.mxu0 %v1386
    %3394 = vmatpush1.bf16.msra.mxu0 %v1385
    %3395 = vmatprep.subr.bf16.mxu0 %v1390
    %3396 = vmatpush1.bf16.msra.mxu0 %v1389
    %3397 = vmatprep.subr.bf16.mxu0 0
    %3398 = vmatpush1.bf16.msra.mxu0 0
    %3399 = vmatprep.subr.bf16.mxu0 0
    %3400 = vmatpush1.bf16.msra.mxu0 0
    %3401 = vmatprep.subr.bf16.mxu0 0
    %3402 = vmatpush1.bf16.msra.mxu0 0
    %3403 = vmatprep.subr.bf16.mxu0 0
    %3404 = vmatpush1.bf16.msra.mxu0 0
    %3405 = vmatprep.subr.bf16.mxu0 0
    %3406 = vmatpush1.bf16.msra.mxu0 0
    %3407 = vmatprep.subr.bf16.mxu0 0
    %3408 = vmatpush1.bf16.msra.mxu0 0
    %3409 = vmatprep.subr.bf16.mxu0 0
    %3410 = vmatpush1.bf16.msra.mxu0 0
    %3411 = vmatprep.subr.bf16.mxu0 0
    %3412 = vmatpush1.bf16.msra.mxu0 0
    %3413 = vmatprep.mubr.bf16.mxu0 0
    %3414 = vmatmul.mubr.bf16.gmra.mrb[0].mxu0 %v3338
    %v3415 = vpop.f32.mrb[0].mxu0
    %v3416 = vadd.f32 %v3331, %v3415
    %v3417 = vpop.f32.mrb[0].mxu0
    %v3418 = vadd.f32 %v3333, %v3417
    %v3419 = vpop.f32.mrb[0].mxu0
    %v3420 = vpop.f32.mrb[0].mxu0
    %3421 = vdwg.mxu0
    %v3422 = vadd.f32 %v3375, %v637
    %v3423 = vadd.f32 %v3377, %v641
    %v3424 = vadd.f32 %v3416, %v645
    %v3425 = vadd.f32 %v3418, %v649
    %v3426 = vxor.u32 %v3422, 2147483648
    %v3427 = vmul.f32 %v3426, 1.442695
    %v3428 = vpow.pop %v3427
    %v3429 = vadd.f32 %v3428, 1.0
    %v3430 = vrcp.pop %v3429
    %v3431 = vmul.f32 1.0, %v3430
    %v3432 = vxor.u32 %v3423, 2147483648
    %v3433 = vmul.f32 %v3432, 1.442695
    %v3434 = vpow.pop %v3433
    %v3435 = vadd.f32 %v3434, 1.0
    %v3436 = vrcp.pop %v3435
    %v3437 = vmul.f32 1.0, %v3436
    %v3438 = vtanh.pop %v3424
    %v3439 = vxor.u32 %v3425, 2147483648
    %v3440 = vmul.f32 %v3439, 1.442695
    %v3441 = vpow.pop %v3440
    %v3442 = vadd.f32 %v3441, 1.0
    %v3443 = vrcp.pop %v3442
    %v3444 = vmul.f32 1.0, %v3443
    %v3445 = vmul.f32 %v3437, %v3125
    %v3446 = vmul.f32 %v3431, %v3438
    %v3447 = vadd.f32 %v3445, %v3446
    %v3448 = vtanh.pop %v3447
    %v3449 = vmul.f32 %v3444, %v3448
    %3450 = vmatprep.subr.bf16.mxu0 %v783
    %3451 = vmatpush1.bf16.msra.mxu0 %v782
    %3452 = vmatprep.subr.bf16.mxu0 %v787
    %3453 = vmatpush1.bf16.msra.mxu0 %v786
    %3454 = vmatprep.subr.bf16.mxu0 %v791
    %3455 = vmatpush1.bf16.msra.mxu0 %v790
    %3456 = vmatprep.subr.bf16.mxu0 %v795
    %3457 = vmatpush1.bf16.msra.mxu0 %v794
    %3458 = vmatprep.subr.bf16.mxu0 %v799
    %3459 = vmatpush1.bf16.msra.mxu0 %v798
    %3460 = vmatprep.subr.bf16.mxu0 %v803
    %3461 = vmatpush1.bf16.msra.mxu0 %v802
    %3462 = vmatprep.subr.bf16.mxu0 %v807
    %3463 = vmatpush1.bf16.msra.mxu0 %v806
    %3464 = vmatprep.subr.bf16.mxu0 %v811
    %3465 = vmatpush1.bf16.msra.mxu0 %v810
    %3466 = vmatprep.subr.bf16.mxu0 0
    %3467 = vmatpush1.bf16.msra.mxu0 0
    %3468 = vmatprep.subr.bf16.mxu0 0
    %3469 = vmatpush1.bf16.msra.mxu0 0
    %3470 = vmatprep.subr.bf16.mxu0 0
    %3471 = vmatpush1.bf16.msra.mxu0 0
    %3472 = vmatprep.subr.bf16.mxu0 0
    %3473 = vmatpush1.bf16.msra.mxu0 0
    %3474 = vmatprep.subr.bf16.mxu0 0
    %3475 = vmatpush1.bf16.msra.mxu0 0
    %3476 = vmatprep.subr.bf16.mxu0 0
    %3477 = vmatpush1.bf16.msra.mxu0 0
    %3478 = vmatprep.subr.bf16.mxu0 0
    %3479 = vmatpush1.bf16.msra.mxu0 0
    %3480 = vmatprep.subr.bf16.mxu0 0
    %3481 = vmatpush1.bf16.msra.mxu0 0
    %3482 = vmatprep.mubr.bf16.mxu0 0
    %3483 = vmatmul.mubr.bf16.gmra.mrb[0].mxu0 %v3338
    %v3484 = vpop.f32.mrb[0].mxu0
    %v3485 = vadd.f32 0.0, %v3484
    %v3486 = vpop.f32.mrb[0].mxu0
    %v3487 = vadd.f32 0.0, %v3486
    %v3488 = vpop.f32.mrb[0].mxu0
    %v3489 = vpop.f32.mrb[0].mxu0
    %3490 = vdwg.mxu0
    %3491 = vmatprep.subr.bf16.mxu0 %v785
    %3492 = vmatpush1.bf16.msra.mxu0 %v784
    %3493 = vmatprep.subr.bf16.mxu0 %v789
    %3494 = vmatpush1.bf16.msra.mxu0 %v788
    %3495 = vmatprep.subr.bf16.mxu0 %v793
    %3496 = vmatpush1.bf16.msra.mxu0 %v792
    %3497 = vmatprep.subr.bf16.mxu0 %v797
    %3498 = vmatpush1.bf16.msra.mxu0 %v796
    %3499 = vmatprep.subr.bf16.mxu0 %v801
    %3500 = vmatpush1.bf16.msra.mxu0 %v800
    %3501 = vmatprep.subr.bf16.mxu0 %v805
    %3502 = vmatpush1.bf16.msra.mxu0 %v804
    %3503 = vmatprep.subr.bf16.mxu0 %v809
    %3504 = vmatpush1.bf16.msra.mxu0 %v808
    %3505 = vmatprep.subr.bf16.mxu0 %v813
    %3506 = vmatpush1.bf16.msra.mxu0 %v812
    %3507 = vmatprep.subr.bf16.mxu0 0
    %3508 = vmatpush1.bf16.msra.mxu0 0
    %3509 = vmatprep.subr.bf16.mxu0 0
    %3510 = vmatpush1.bf16.msra.mxu0 0
    %3511 = vmatprep.subr.bf16.mxu0 0
    %3512 = vmatpush1.bf16.msra.mxu0 0
    %3513 = vmatprep.subr.bf16.mxu0 0
    %3514 = vmatpush1.bf16.msra.mxu0 0
    %3515 = vmatprep.subr.bf16.mxu0 0
    %3516 = vmatpush1.bf16.msra.mxu0 0
    %3517 = vmatprep.subr.bf16.mxu0 0
    %3518 = vmatpush1.bf16.msra.mxu0 0
    %3519 = vmatprep.subr.bf16.mxu0 0
    %3520 = vmatpush1.bf16.msra.mxu0 0
    %3521 = vmatprep.subr.bf16.mxu0 0
    %3522 = vmatpush1.bf16.msra.mxu0 0
    %3523 = vmatprep.mubr.bf16.mxu0 0
    %3524 = vmatmul.mubr.bf16.gmra.mrb[0].mxu0 %v3338
    %v3525 = vpop.f32.mrb[0].mxu0
    %v3526 = vadd.f32 0.0, %v3525
    %v3527 = vpop.f32.mrb[0].mxu0
    %v3528 = vadd.f32 0.0, %v3527
    %v3529 = vpop.f32.mrb[0].mxu0
    %v3530 = vpop.f32.mrb[0].mxu0
    %3531 = vdwg.mxu0
    %v3536 = vrot.slane %v3485, 2
    %v3537 = vrot.slane %v3487, 2
    %v3538 = vrot.slane %v3526, 2
    %v3539 = vrot.slane %v3528, 2
    %v3544 = vadd.f32 %v585, %v3536
    %v3545 = vadd.f32 %v587, %v3537
    %v3546 = vadd.f32 %v628, %v3538
    %v3547 = vadd.f32 %v630, %v3539
    %v3548 = vxor.u32 %v3544, 2147483648
    %v3549 = vmul.f32 %v3548, 1.442695
    %v3550 = vpow.pop %v3549
    %v3551 = vadd.f32 %v3550, 1.0
    %v3552 = vrcp.pop %v3551
    %v3553 = vmul.f32 1.0, %v3552
    %v3554 = vxor.u32 %v3545, 2147483648
    %v3555 = vmul.f32 %v3554, 1.442695
    %v3556 = vpow.pop %v3555
    %v3557 = vadd.f32 %v3556, 1.0
    %v3558 = vrcp.pop %v3557
    %v3559 = vmul.f32 1.0, %v3558
    %v3560 = vtanh.pop %v3546
    %v3561 = vxor.u32 %v3547, 2147483648
    %v3562 = vmul.f32 %v3561, 1.442695
    %v3563 = vpow.pop %v3562
    %v3564 = vadd.f32 %v3563, 1.0
    %v3565 = vrcp.pop %v3564
    %v3566 = vmul.f32 1.0, %v3565
    %v3568 = vrot.slane %v3250, 6
    %v3570 = vmul.f32 %v3559, %v3568
    %v3571 = vmul.f32 %v3553, %v3560
    %v3572 = vadd.f32 %v3570, %v3571
    %v3573 = vtanh.pop %v3572
    %v3574 = vmul.f32 %v3566, %v3573
    %v3575 = vpack.c.bf16 %v3574, %v3574
    %v3576 = vpack.c.bf16 %v3449, %v3449
    %3577 = vmatprep.subr.bf16.mxu0 %v1118
    %3578 = vmatpush1.bf16.msra.mxu0 %v1117
    %3579 = vmatprep.subr.bf16.mxu0 %v1122
    %3580 = vmatpush1.bf16.msra.mxu0 %v1121
    %3581 = vmatprep.subr.bf16.mxu0 %v1126
    %3582 = vmatpush1.bf16.msra.mxu0 %v1125
    %3583 = vmatprep.subr.bf16.mxu0 %v1130
    %3584 = vmatpush1.bf16.msra.mxu0 %v1129
    %3585 = vmatprep.subr.bf16.mxu0 %v1134
    %3586 = vmatpush1.bf16.msra.mxu0 %v1133
    %3587 = vmatprep.subr.bf16.mxu0 %v1138
    %3588 = vmatpush1.bf16.msra.mxu0 %v1137
    %3589 = vmatprep.subr.bf16.mxu0 %v1142
    %3590 = vmatpush1.bf16.msra.mxu0 %v1141
    %3591 = vmatprep.subr.bf16.mxu0 %v1146
    %3592 = vmatpush1.bf16.msra.mxu0 %v1145
    %3593 = vmatprep.subr.bf16.mxu0 0
    %3594 = vmatpush1.bf16.msra.mxu0 0
    %3595 = vmatprep.subr.bf16.mxu0 0
    %3596 = vmatpush1.bf16.msra.mxu0 0
    %3597 = vmatprep.subr.bf16.mxu0 0
    %3598 = vmatpush1.bf16.msra.mxu0 0
    %3599 = vmatprep.subr.bf16.mxu0 0
    %3600 = vmatpush1.bf16.msra.mxu0 0
    %3601 = vmatprep.subr.bf16.mxu0 0
    %3602 = vmatpush1.bf16.msra.mxu0 0
    %3603 = vmatprep.subr.bf16.mxu0 0
    %3604 = vmatpush1.bf16.msra.mxu0 0
    %3605 = vmatprep.subr.bf16.mxu0 0
    %3606 = vmatpush1.bf16.msra.mxu0 0
    %3607 = vmatprep.subr.bf16.mxu0 0
    %3608 = vmatpush1.bf16.msra.mxu0 0
    %3609 = vmatprep.mubr.bf16.mxu0 0
    %3610 = vmatmul.mubr.bf16.gmra.mrb[0].mxu0 %v3576
    %v3611 = vpop.f32.mrb[0].mxu0
    %v3612 = vadd.f32 0.0, %v3611
    %v3613 = vpop.f32.mrb[0].mxu0
    %v3614 = vadd.f32 0.0, %v3613
    %v3615 = vpop.f32.mrb[0].mxu0
    %v3616 = vpop.f32.mrb[0].mxu0
    %3617 = vdwg.mxu0
    %3618 = vmatprep.subr.bf16.mxu0 %v1120
    %3619 = vmatpush1.bf16.msra.mxu0 %v1119
    %3620 = vmatprep.subr.bf16.mxu0 %v1124
    %3621 = vmatpush1.bf16.msra.mxu0 %v1123
    %3622 = vmatprep.subr.bf16.mxu0 %v1128
    %3623 = vmatpush1.bf16.msra.mxu0 %v1127
    %3624 = vmatprep.subr.bf16.mxu0 %v1132
    %3625 = vmatpush1.bf16.msra.mxu0 %v1131
    %3626 = vmatprep.subr.bf16.mxu0 %v1136
    %3627 = vmatpush1.bf16.msra.mxu0 %v1135
    %3628 = vmatprep.subr.bf16.mxu0 %v1140
    %3629 = vmatpush1.bf16.msra.mxu0 %v1139
    %3630 = vmatprep.subr.bf16.mxu0 %v1144
    %3631 = vmatpush1.bf16.msra.mxu0 %v1143
    %3632 = vmatprep.subr.bf16.mxu0 %v1148
    %3633 = vmatpush1.bf16.msra.mxu0 %v1147
    %3634 = vmatprep.subr.bf16.mxu0 0
    %3635 = vmatpush1.bf16.msra.mxu0 0
    %3636 = vmatprep.subr.bf16.mxu0 0
    %3637 = vmatpush1.bf16.msra.mxu0 0
    %3638 = vmatprep.subr.bf16.mxu0 0
    %3639 = vmatpush1.bf16.msra.mxu0 0
    %3640 = vmatprep.subr.bf16.mxu0 0
    %3641 = vmatpush1.bf16.msra.mxu0 0
    %3642 = vmatprep.subr.bf16.mxu0 0
    %3643 = vmatpush1.bf16.msra.mxu0 0
    %3644 = vmatprep.subr.bf16.mxu0 0
    %3645 = vmatpush1.bf16.msra.mxu0 0
    %3646 = vmatprep.subr.bf16.mxu0 0
    %3647 = vmatpush1.bf16.msra.mxu0 0
    %3648 = vmatprep.subr.bf16.mxu0 0
    %3649 = vmatpush1.bf16.msra.mxu0 0
    %3650 = vmatprep.mubr.bf16.mxu0 0
    %3651 = vmatmul.mubr.bf16.gmra.mrb[0].mxu0 %v3576
    %v3652 = vpop.f32.mrb[0].mxu0
    %v3653 = vadd.f32 0.0, %v3652
    %v3654 = vpop.f32.mrb[0].mxu0
    %v3655 = vadd.f32 0.0, %v3654
    %v3656 = vpop.f32.mrb[0].mxu0
    %v3657 = vpop.f32.mrb[0].mxu0
    %3658 = vdwg.mxu0
    %v3660 = vrot.slane %v3575, 3
    %3662 = vmatprep.subr.bf16.mxu0 %v1360
    %3663 = vmatpush1.bf16.msra.mxu0 %v1359
    %3664 = vmatprep.subr.bf16.mxu0 %v1364
    %3665 = vmatpush1.bf16.msra.mxu0 %v1363
    %3666 = vmatprep.subr.bf16.mxu0 %v1368
    %3667 = vmatpush1.bf16.msra.mxu0 %v1367
    %3668 = vmatprep.subr.bf16.mxu0 %v1372
    %3669 = vmatpush1.bf16.msra.mxu0 %v1371
    %3670 = vmatprep.subr.bf16.mxu0 %v1376
    %3671 = vmatpush1.bf16.msra.mxu0 %v1375
    %3672 = vmatprep.subr.bf16.mxu0 %v1380
    %3673 = vmatpush1.bf16.msra.mxu0 %v1379
    %3674 = vmatprep.subr.bf16.mxu0 %v1384
    %3675 = vmatpush1.bf16.msra.mxu0 %v1383
    %3676 = vmatprep.subr.bf16.mxu0 %v1388
    %3677 = vmatpush1.bf16.msra.mxu0 %v1387
    %3678 = vmatprep.subr.bf16.mxu0 0
    %3679 = vmatpush1.bf16.msra.mxu0 0
    %3680 = vmatprep.subr.bf16.mxu0 0
    %3681 = vmatpush1.bf16.msra.mxu0 0
    %3682 = vmatprep.subr.bf16.mxu0 0
    %3683 = vmatpush1.bf16.msra.mxu0 0
    %3684 = vmatprep.subr.bf16.mxu0 0
    %3685 = vmatpush1.bf16.msra.mxu0 0
    %3686 = vmatprep.subr.bf16.mxu0 0
    %3687 = vmatpush1.bf16.msra.mxu0 0
    %3688 = vmatprep.subr.bf16.mxu0 0
    %3689 = vmatpush1.bf16.msra.mxu0 0
    %3690 = vmatprep.subr.bf16.mxu0 0
    %3691 = vmatpush1.bf16.msra.mxu0 0
    %3692 = vmatprep.subr.bf16.mxu0 0
    %3693 = vmatpush1.bf16.msra.mxu0 0
    %3694 = vmatprep.mubr.bf16.mxu0 0
    %3695 = vmatmul.mubr.bf16.gmra.mrb[0].mxu0 %v3660
    %v3696 = vpop.f32.mrb[0].mxu0
    %v3697 = vadd.f32 %v3612, %v3696
    %v3698 = vpop.f32.mrb[0].mxu0
    %v3699 = vadd.f32 %v3614, %v3698
    %v3700 = vpop.f32.mrb[0].mxu0
    %v3701 = vpop.f32.mrb[0].mxu0
    %3702 = vdwg.mxu0
    %3703 = vmatprep.subr.bf16.mxu0 %v1362
    %3704 = vmatpush1.bf16.msra.mxu0 %v1361
    %3705 = vmatprep.subr.bf16.mxu0 %v1366
    %3706 = vmatpush1.bf16.msra.mxu0 %v1365
    %3707 = vmatprep.subr.bf16.mxu0 %v1370
    %3708 = vmatpush1.bf16.msra.mxu0 %v1369
    %3709 = vmatprep.subr.bf16.mxu0 %v1374
    %3710 = vmatpush1.bf16.msra.mxu0 %v1373
    %3711 = vmatprep.subr.bf16.mxu0 %v1378
    %3712 = vmatpush1.bf16.msra.mxu0 %v1377
    %3713 = vmatprep.subr.bf16.mxu0 %v1382
    %3714 = vmatpush1.bf16.msra.mxu0 %v1381
    %3715 = vmatprep.subr.bf16.mxu0 %v1386
    %3716 = vmatpush1.bf16.msra.mxu0 %v1385
    %3717 = vmatprep.subr.bf16.mxu0 %v1390
    %3718 = vmatpush1.bf16.msra.mxu0 %v1389
    %3719 = vmatprep.subr.bf16.mxu0 0
    %3720 = vmatpush1.bf16.msra.mxu0 0
    %3721 = vmatprep.subr.bf16.mxu0 0
    %3722 = vmatpush1.bf16.msra.mxu0 0
    %3723 = vmatprep.subr.bf16.mxu0 0
    %3724 = vmatpush1.bf16.msra.mxu0 0
    %3725 = vmatprep.subr.bf16.mxu0 0
    %3726 = vmatpush1.bf16.msra.mxu0 0
    %3727 = vmatprep.subr.bf16.mxu0 0
    %3728 = vmatpush1.bf16.msra.mxu0 0
    %3729 = vmatprep.subr.bf16.mxu0 0
    %3730 = vmatpush1.bf16.msra.mxu0 0
    %3731 = vmatprep.subr.bf16.mxu0 0
    %3732 = vmatpush1.bf16.msra.mxu0 0
    %3733 = vmatprep.subr.bf16.mxu0 0
    %3734 = vmatpush1.bf16.msra.mxu0 0
    %3735 = vmatprep.mubr.bf16.mxu0 0
    %3736 = vmatmul.mubr.bf16.gmra.mrb[0].mxu0 %v3660
    %v3737 = vpop.f32.mrb[0].mxu0
    %v3738 = vadd.f32 %v3653, %v3737
    %v3739 = vpop.f32.mrb[0].mxu0
    %v3740 = vadd.f32 %v3655, %v3739
    %v3741 = vpop.f32.mrb[0].mxu0
    %v3742 = vpop.f32.mrb[0].mxu0
    %3743 = vdwg.mxu0
    %v3744 = vadd.f32 %v3697, %v637
    %v3745 = vadd.f32 %v3699, %v641
    %v3746 = vadd.f32 %v3738, %v645
    %v3747 = vadd.f32 %v3740, %v649
    %v3748 = vxor.u32 %v3744, 2147483648
    %v3749 = vmul.f32 %v3748, 1.442695
    %v3750 = vpow.pop %v3749
    %v3751 = vadd.f32 %v3750, 1.0
    %v3752 = vrcp.pop %v3751
    %v3753 = vmul.f32 1.0, %v3752
    %v3754 = vxor.u32 %v3745, 2147483648
    %v3755 = vmul.f32 %v3754, 1.442695
    %v3756 = vpow.pop %v3755
    %v3757 = vadd.f32 %v3756, 1.0
    %v3758 = vrcp.pop %v3757
    %v3759 = vmul.f32 1.0, %v3758
    %v3760 = vtanh.pop %v3746
    %v3761 = vxor.u32 %v3747, 2147483648
    %v3762 = vmul.f32 %v3761, 1.442695
    %v3763 = vpow.pop %v3762
    %v3764 = vadd.f32 %v3763, 1.0
    %v3765 = vrcp.pop %v3764
    %v3766 = vmul.f32 1.0, %v3765
    %v3767 = vmul.f32 %v3759, %v3447
    %v3768 = vmul.f32 %v3753, %v3760
    %v3769 = vadd.f32 %v3767, %v3768
    %v3770 = vtanh.pop %v3769
    %v3771 = vmul.f32 %v3766, %v3770
    %v3772 = vld [vmem:[%s5] sm:$0xff]
    %v3773 = vld [vmem:[%s5 + $0x8] sm:$0xf]
    %v3774 = vpack.c.bf16 %v3773, %v3772
    %v3775 = vld [vmem:[#allocation17] sm:$0xff]
    %v3776 = vld [vmem:[#allocation17 + $0x8] sm:$0xff]
    %v3777 = vld [vmem:[#allocation17 + $0x10] sm:$0xff]
    %v3778 = vld [vmem:[#allocation17 + $0x18] sm:$0xff]
    %v3779 = vld [vmem:[#allocation17 + $0x20] sm:$0xff]
    %v3780 = vld [vmem:[#allocation17 + $0x28] sm:$0xff]
    %v3781 = vld [vmem:[#allocation17 + $0x30] sm:$0xff]
    %v3782 = vld [vmem:[#allocation17 + $0x38] sm:$0xff]
    %v3783 = vld [vmem:[#allocation17 + $0x40] sm:$0xff]
    %v3784 = vld [vmem:[#allocation17 + $0x48] sm:$0xff]
    %v3785 = vld [vmem:[#allocation17 + $0x50] sm:$0xff]
    %v3786 = vld [vmem:[#allocation17 + $0x58] sm:$0xff]
    %v3787 = vld [vmem:[#allocation17 + $0x60] sm:$0xff]
    %v3788 = vld [vmem:[#allocation17 + $0x68] sm:$0xff]
    %v3789 = vld [vmem:[#allocation17 + $0x70] sm:$0x33]
    %v3790 = vld [vmem:[#allocation17 + $0x78] sm:$0x33]
    %v3791 = vld [vmem:[%s23] sm:$0xf]
    %v3793 = vlaneseq
    %v3794 = vshrl.u32 %v3793, 7
    %v3795 = vsub.s32 0, %v3794
    %v3796 = vrot.slane %v3791, %v3795
    %v3797 = vlaneseq
    %v3798 = vshrl.u32 %v3797, 7
    %v3799 = vsub.s32 1, %v3798
    %v3800 = vrot.slane %v3791, %v3799
    %v3801 = vlaneseq
    %v3802 = vshrl.u32 %v3801, 7
    %v3803 = vsub.s32 2, %v3802
    %v3804 = vrot.slane %v3791, %v3803
    %v3805 = vlaneseq
    %v3806 = vshrl.u32 %v3805, 7
    %v3807 = vsub.s32 3, %v3806
    %v3808 = vrot.slane %v3791, %v3807
    %v3829 = vunpack.c.l.b16 %v3775
    %v3830 = vunpack.c.h.b16 %v3775
    %v3831 = vunpack.c.l.b16 %v3776
    %v3832 = vunpack.c.h.b16 %v3776
    %v3833 = vunpack.c.l.b16 %v3777
    %v3834 = vunpack.c.h.b16 %v3777
    %v3835 = vunpack.c.l.b16 %v3778
    %v3836 = vunpack.c.h.b16 %v3778
    %v3837 = vunpack.c.l.b16 %v3779
    %v3838 = vunpack.c.h.b16 %v3779
    %v3839 = vunpack.c.l.b16 %v3780
    %v3840 = vunpack.c.h.b16 %v3780
    %v3841 = vunpack.c.l.b16 %v3781
    %v3842 = vunpack.c.h.b16 %v3781
    %v3843 = vunpack.c.l.b16 %v3782
    %v3844 = vunpack.c.h.b16 %v3782
    %v3845 = vunpack.c.l.b16 %v3783
    %v3846 = vunpack.c.h.b16 %v3783
    %v3847 = vunpack.c.l.b16 %v3784
    %v3848 = vunpack.c.h.b16 %v3784
    %v3849 = vunpack.c.l.b16 %v3785
    %v3850 = vunpack.c.h.b16 %v3785
    %v3851 = vunpack.c.l.b16 %v3786
    %v3852 = vunpack.c.h.b16 %v3786
    %v3853 = vunpack.c.l.b16 %v3787
    %v3854 = vunpack.c.h.b16 %v3787
    %v3855 = vunpack.c.l.b16 %v3788
    %v3856 = vunpack.c.h.b16 %v3788
    %v3857 = vunpack.c.l.b16 %v3789
    %v3858 = vunpack.c.h.b16 %v3789
    %v3859 = vunpack.c.l.b16 %v3790
    %v3860 = vunpack.c.h.b16 %v3790
    %v3861 = vpack.c.b16 %v3833, %v3829
    %v3862 = vpack.c.b16 %v3834, %v3830
    %v3863 = vpack.c.b16 %v3835, %v3831
    %v3864 = vpack.c.b16 %v3836, %v3832
    %v3865 = vpack.c.b16 %v3841, %v3837
    %v3866 = vpack.c.b16 %v3842, %v3838
    %v3867 = vpack.c.b16 %v3843, %v3839
    %v3868 = vpack.c.b16 %v3844, %v3840
    %v3869 = vpack.c.b16 %v3849, %v3845
    %v3870 = vpack.c.b16 %v3850, %v3846
    %v3871 = vpack.c.b16 %v3851, %v3847
    %v3872 = vpack.c.b16 %v3852, %v3848
    %v3873 = vpack.c.b16 %v3857, %v3853
    %v3874 = vpack.c.b16 %v3858, %v3854
    %v3875 = vpack.c.b16 %v3859, %v3855
    %v3876 = vpack.c.b16 %v3860, %v3856
    %v3890 = vsel %vm526, %v3774, 0
    %v3893 = vand.u32 %v3873, %v533
    %v3896 = vand.u32 %v3874, %v533
    %v3899 = vand.u32 %v3875, %v533
    %v3902 = vand.u32 %v3876, %v533
    %3904 = vmatprep.subr.bf16.mxu0 %v3862
    %3905 = vmatpush1.bf16.msra.mxu0 %v3861
    %3906 = vmatprep.subr.bf16.mxu0 %v3866
    %3907 = vmatpush1.bf16.msra.mxu0 %v3865
    %3908 = vmatprep.subr.bf16.mxu0 %v3870
    %3909 = vmatpush1.bf16.msra.mxu0 %v3869
    %3910 = vmatprep.subr.bf16.mxu0 %v3896
    %3911 = vmatpush1.bf16.msra.mxu0 %v3893
    %3912 = vmatprep.subr.bf16.mxu0 0
    %3913 = vmatpush1.bf16.msra.mxu0 0
    %3914 = vmatprep.subr.bf16.mxu0 0
    %3915 = vmatpush1.bf16.msra.mxu0 0
    %3916 = vmatprep.subr.bf16.mxu0 0
    %3917 = vmatpush1.bf16.msra.mxu0 0
    %3918 = vmatprep.subr.bf16.mxu0 0
    %3919 = vmatpush1.bf16.msra.mxu0 0
    %3920 = vmatprep.subr.bf16.mxu0 0
    %3921 = vmatpush1.bf16.msra.mxu0 0
    %3922 = vmatprep.subr.bf16.mxu0 0
    %3923 = vmatpush1.bf16.msra.mxu0 0
    %3924 = vmatprep.subr.bf16.mxu0 0
    %3925 = vmatpush1.bf16.msra.mxu0 0
    %3926 = vmatprep.subr.bf16.mxu0 0
    %3927 = vmatpush1.bf16.msra.mxu0 0
    %3928 = vmatprep.subr.bf16.mxu0 0
    %3929 = vmatpush1.bf16.msra.mxu0 0
    %3930 = vmatprep.subr.bf16.mxu0 0
    %3931 = vmatpush1.bf16.msra.mxu0 0
    %3932 = vmatprep.subr.bf16.mxu0 0
    %3933 = vmatpush1.bf16.msra.mxu0 0
    %3934 = vmatprep.subr.bf16.mxu0 0
    %3935 = vmatpush1.bf16.msra.mxu0 0
    %3936 = vmatprep.mubr.bf16.mxu0 0
    %3937 = vmatmul.mubr.bf16.gmra.mrb[0].mxu0 %v3890
    %v3938 = vpop.f32.mrb[0].mxu0
    %v3939 = vadd.f32 %v3796, %v3938
    %v3940 = vpop.f32.mrb[0].mxu0
    %v3941 = vadd.f32 %v3800, %v3940
    %v3942 = vpop.f32.mrb[0].mxu0
    %v3943 = vadd.f32 %v3796, %v3942
    %v3944 = vpop.f32.mrb[0].mxu0
    %v3945 = vadd.f32 %v3800, %v3944
    %3946 = vdwg.mxu0
    %3947 = vmatprep.subr.bf16.mxu0 %v3864
    %3948 = vmatpush1.bf16.msra.mxu0 %v3863
    %3949 = vmatprep.subr.bf16.mxu0 %v3868
    %3950 = vmatpush1.bf16.msra.mxu0 %v3867
    %3951 = vmatprep.subr.bf16.mxu0 %v3872
    %3952 = vmatpush1.bf16.msra.mxu0 %v3871
    %3953 = vmatprep.subr.bf16.mxu0 %v3902
    %3954 = vmatpush1.bf16.msra.mxu0 %v3899
    %3955 = vmatprep.subr.bf16.mxu0 0
    %3956 = vmatpush1.bf16.msra.mxu0 0
    %3957 = vmatprep.subr.bf16.mxu0 0
    %3958 = vmatpush1.bf16.msra.mxu0 0
    %3959 = vmatprep.subr.bf16.mxu0 0
    %3960 = vmatpush1.bf16.msra.mxu0 0
    %3961 = vmatprep.subr.bf16.mxu0 0
    %3962 = vmatpush1.bf16.msra.mxu0 0
    %3963 = vmatprep.subr.bf16.mxu0 0
    %3964 = vmatpush1.bf16.msra.mxu0 0
    %3965 = vmatprep.subr.bf16.mxu0 0
    %3966 = vmatpush1.bf16.msra.mxu0 0
    %3967 = vmatprep.subr.bf16.mxu0 0
    %3968 = vmatpush1.bf16.msra.mxu0 0
    %3969 = vmatprep.subr.bf16.mxu0 0
    %3970 = vmatpush1.bf16.msra.mxu0 0
    %3971 = vmatprep.subr.bf16.mxu0 0
    %3972 = vmatpush1.bf16.msra.mxu0 0
    %3973 = vmatprep.subr.bf16.mxu0 0
    %3974 = vmatpush1.bf16.msra.mxu0 0
    %3975 = vmatprep.subr.bf16.mxu0 0
    %3976 = vmatpush1.bf16.msra.mxu0 0
    %3977 = vmatprep.subr.bf16.mxu0 0
    %3978 = vmatpush1.bf16.msra.mxu0 0
    %3979 = vmatprep.mubr.bf16.mxu0 0
    %3980 = vmatmul.mubr.bf16.gmra.mrb[0].mxu0 %v3890
    %v3981 = vpop.f32.mrb[0].mxu0
    %v3982 = vadd.f32 %v3804, %v3981
    %v3983 = vpop.f32.mrb[0].mxu0
    %v3984 = vadd.f32 %v3808, %v3983
    %v3985 = vpop.f32.mrb[0].mxu0
    %v3986 = vadd.f32 %v3804, %v3985
    %v3987 = vpop.f32.mrb[0].mxu0
    %v3988 = vadd.f32 %v3808, %v3987
    %3989 = vdwg.mxu0
    %v3990 = vld [vmem:[%s29] sm:$0xf]
    %v3992 = vlaneseq
    %v3993 = vshrl.u32 %v3992, 7
    %v3994 = vsub.s32 0, %v3993
    %v3995 = vrot.slane %v3990, %v3994
    %v3996 = vlaneseq
    %v3997 = vshrl.u32 %v3996, 7
    %v3998 = vsub.s32 1, %v3997
    %v3999 = vrot.slane %v3990, %v3998
    %v4000 = vlaneseq
    %v4001 = vshrl.u32 %v4000, 7
    %v4002 = vsub.s32 2, %v4001
    %v4003 = vrot.slane %v3990, %v4002
    %v4004 = vlaneseq
    %v4005 = vshrl.u32 %v4004, 7
    %v4006 = vsub.s32 3, %v4005
    %v4007 = vrot.slane %v3990, %v4006
    %v4012 = vld [vmem:[#allocation18] sm:$0xff]
    %v4013 = vld [vmem:[#allocation18 + $0x8] sm:$0xff]
    %v4014 = vld [vmem:[#allocation18 + $0x10] sm:$0xff]
    %v4015 = vld [vmem:[#allocation18 + $0x18] sm:$0xff]
    %v4016 = vld [vmem:[#allocation18 + $0x20] sm:$0xff]
    %v4017 = vld [vmem:[#allocation18 + $0x28] sm:$0xff]
    %v4018 = vld [vmem:[#allocation18 + $0x30] sm:$0xff]
    %v4019 = vld [vmem:[#allocation18 + $0x38] sm:$0xff]
    %v4020 = vld [vmem:[#allocation18 + $0x40] sm:$0xff]
    %v4021 = vld [vmem:[#allocation18 + $0x48] sm:$0xff]
    %v4022 = vld [vmem:[#allocation18 + $0x50] sm:$0xff]
    %v4023 = vld [vmem:[#allocation18 + $0x58] sm:$0xff]
    %v4024 = vld [vmem:[#allocation18 + $0x60] sm:$0xff]
    %v4025 = vld [vmem:[#allocation18 + $0x68] sm:$0xff]
    %v4026 = vld [vmem:[#allocation18 + $0x70] sm:$0xff]
    %v4027 = vld [vmem:[#allocation18 + $0x78] sm:$0xff]
    %v4028 = vld [vmem:[#allocation18 + $0x80] sm:$0xff]
    %v4029 = vld [vmem:[#allocation18 + $0x88] sm:$0xff]
    %v4030 = vld [vmem:[#allocation18 + $0x90] sm:$0xff]
    %v4031 = vld [vmem:[#allocation18 + $0x98] sm:$0xff]
    %v4032 = vld [vmem:[#allocation18 + $0xa0] sm:$0xff]
    %v4033 = vld [vmem:[#allocation18 + $0xa8] sm:$0xff]
    %v4034 = vld [vmem:[#allocation18 + $0xb0] sm:$0xff]
    %v4035 = vld [vmem:[#allocation18 + $0xb8] sm:$0xff]
    %v4036 = vld [vmem:[#allocation18 + $0xc0] sm:$0xff]
    %v4037 = vld [vmem:[#allocation18 + $0xc8] sm:$0xff]
    %v4038 = vld [vmem:[#allocation18 + $0xd0] sm:$0xff]
    %v4039 = vld [vmem:[#allocation18 + $0xd8] sm:$0xff]
    %v4040 = vld [vmem:[#allocation18 + $0xe0] sm:$0xff]
    %v4041 = vld [vmem:[#allocation18 + $0xe8] sm:$0xff]
    %v4042 = vld [vmem:[#allocation18 + $0xf0] sm:$0xff]
    %v4043 = vld [vmem:[#allocation18 + $0xf8] sm:$0xff]
    %v4076 = vunpack.c.l.b16 %v4012
    %v4077 = vunpack.c.h.b16 %v4012
    %v4078 = vunpack.c.l.b16 %v4013
    %v4079 = vunpack.c.h.b16 %v4013
    %v4080 = vunpack.c.l.b16 %v4014
    %v4081 = vunpack.c.h.b16 %v4014
    %v4082 = vunpack.c.l.b16 %v4015
    %v4083 = vunpack.c.h.b16 %v4015
    %v4084 = vunpack.c.l.b16 %v4016
    %v4085 = vunpack.c.h.b16 %v4016
    %v4086 = vunpack.c.l.b16 %v4017
    %v4087 = vunpack.c.h.b16 %v4017
    %v4088 = vunpack.c.l.b16 %v4018
    %v4089 = vunpack.c.h.b16 %v4018
    %v4090 = vunpack.c.l.b16 %v4019
    %v4091 = vunpack.c.h.b16 %v4019
    %v4092 = vunpack.c.l.b16 %v4020
    %v4093 = vunpack.c.h.b16 %v4020
    %v4094 = vunpack.c.l.b16 %v4021
    %v4095 = vunpack.c.h.b16 %v4021
    %v4096 = vunpack.c.l.b16 %v4022
    %v4097 = vunpack.c.h.b16 %v4022
    %v4098 = vunpack.c.l.b16 %v4023
    %v4099 = vunpack.c.h.b16 %v4023
    %v4100 = vunpack.c.l.b16 %v4024
    %v4101 = vunpack.c.h.b16 %v4024
    %v4102 = vunpack.c.l.b16 %v4025
    %v4103 = vunpack.c.h.b16 %v4025
    %v4104 = vunpack.c.l.b16 %v4026
    %v4105 = vunpack.c.h.b16 %v4026
    %v4106 = vunpack.c.l.b16 %v4027
    %v4107 = vunpack.c.h.b16 %v4027
    %v4108 = vunpack.c.l.b16 %v4028
    %v4109 = vunpack.c.h.b16 %v4028
    %v4110 = vunpack.c.l.b16 %v4029
    %v4111 = vunpack.c.h.b16 %v4029
    %v4112 = vunpack.c.l.b16 %v4030
    %v4113 = vunpack.c.h.b16 %v4030
    %v4114 = vunpack.c.l.b16 %v4031
    %v4115 = vunpack.c.h.b16 %v4031
    %v4116 = vunpack.c.l.b16 %v4032
    %v4117 = vunpack.c.h.b16 %v4032
    %v4118 = vunpack.c.l.b16 %v4033
    %v4119 = vunpack.c.h.b16 %v4033
    %v4120 = vunpack.c.l.b16 %v4034
    %v4121 = vunpack.c.h.b16 %v4034
    %v4122 = vunpack.c.l.b16 %v4035
    %v4123 = vunpack.c.h.b16 %v4035
    %v4124 = vunpack.c.l.b16 %v4036
    %v4125 = vunpack.c.h.b16 %v4036
    %v4126 = vunpack.c.l.b16 %v4037
    %v4127 = vunpack.c.h.b16 %v4037
    %v4128 = vunpack.c.l.b16 %v4038
    %v4129 = vunpack.c.h.b16 %v4038
    %v4130 = vunpack.c.l.b16 %v4039
    %v4131 = vunpack.c.h.b16 %v4039
    %v4132 = vunpack.c.l.b16 %v4040
    %v4133 = vunpack.c.h.b16 %v4040
    %v4134 = vunpack.c.l.b16 %v4041
    %v4135 = vunpack.c.h.b16 %v4041
    %v4136 = vunpack.c.l.b16 %v4042
    %v4137 = vunpack.c.h.b16 %v4042
    %v4138 = vunpack.c.l.b16 %v4043
    %v4139 = vunpack.c.h.b16 %v4043
    %v4140 = vpack.c.b16 %v4080, %v4076
    %v4141 = vpack.c.b16 %v4081, %v4077
    %v4142 = vpack.c.b16 %v4082, %v4078
    %v4143 = vpack.c.b16 %v4083, %v4079
    %v4144 = vpack.c.b16 %v4088, %v4084
    %v4145 = vpack.c.b16 %v4089, %v4085
    %v4146 = vpack.c.b16 %v4090, %v4086
    %v4147 = vpack.c.b16 %v4091, %v4087
    %v4148 = vpack.c.b16 %v4096, %v4092
    %v4149 = vpack.c.b16 %v4097, %v4093
    %v4150 = vpack.c.b16 %v4098, %v4094
    %v4151 = vpack.c.b16 %v4099, %v4095
    %v4152 = vpack.c.b16 %v4104, %v4100
    %v4153 = vpack.c.b16 %v4105, %v4101
    %v4154 = vpack.c.b16 %v4106, %v4102
    %v4155 = vpack.c.b16 %v4107, %v4103
    %v4156 = vpack.c.b16 %v4112, %v4108
    %v4157 = vpack.c.b16 %v4113, %v4109
    %v4158 = vpack.c.b16 %v4114, %v4110
    %v4159 = vpack.c.b16 %v4115, %v4111
    %v4160 = vpack.c.b16 %v4120, %v4116
    %v4161 = vpack.c.b16 %v4121, %v4117
    %v4162 = vpack.c.b16 %v4122, %v4118
    %v4163 = vpack.c.b16 %v4123, %v4119
    %v4164 = vpack.c.b16 %v4128, %v4124
    %v4165 = vpack.c.b16 %v4129, %v4125
    %v4166 = vpack.c.b16 %v4130, %v4126
    %v4167 = vpack.c.b16 %v4131, %v4127
    %v4168 = vpack.c.b16 %v4136, %v4132
    %v4169 = vpack.c.b16 %v4137, %v4133
    %v4170 = vpack.c.b16 %v4138, %v4134
    %v4171 = vpack.c.b16 %v4139, %v4135
    %4204 = vmatprep.subr.bf16.mxu0 %v4141
    %4205 = vmatpush1.bf16.msra.mxu0 %v4140
    %4206 = vmatprep.subr.bf16.mxu0 %v4145
    %4207 = vmatpush1.bf16.msra.mxu0 %v4144
    %4208 = vmatprep.subr.bf16.mxu0 %v4149
    %4209 = vmatpush1.bf16.msra.mxu0 %v4148
    %4210 = vmatprep.subr.bf16.mxu0 %v4153
    %4211 = vmatpush1.bf16.msra.mxu0 %v4152
    %4212 = vmatprep.subr.bf16.mxu0 %v4157
    %4213 = vmatpush1.bf16.msra.mxu0 %v4156
    %4214 = vmatprep.subr.bf16.mxu0 %v4161
    %4215 = vmatpush1.bf16.msra.mxu0 %v4160
    %4216 = vmatprep.subr.bf16.mxu0 %v4165
    %4217 = vmatpush1.bf16.msra.mxu0 %v4164
    %4218 = vmatprep.subr.bf16.mxu0 %v4169
    %4219 = vmatpush1.bf16.msra.mxu0 %v4168
    %4220 = vmatprep.subr.bf16.mxu0 0
    %4221 = vmatpush1.bf16.msra.mxu0 0
    %4222 = vmatprep.subr.bf16.mxu0 0
    %4223 = vmatpush1.bf16.msra.mxu0 0
    %4224 = vmatprep.subr.bf16.mxu0 0
    %4225 = vmatpush1.bf16.msra.mxu0 0
    %4226 = vmatprep.subr.bf16.mxu0 0
    %4227 = vmatpush1.bf16.msra.mxu0 0
    %4228 = vmatprep.subr.bf16.mxu0 0
    %4229 = vmatpush1.bf16.msra.mxu0 0
    %4230 = vmatprep.subr.bf16.mxu0 0
    %4231 = vmatpush1.bf16.msra.mxu0 0
    %4232 = vmatprep.subr.bf16.mxu0 0
    %4233 = vmatpush1.bf16.msra.mxu0 0
    %4234 = vmatprep.subr.bf16.mxu0 0
    %4235 = vmatpush1.bf16.msra.mxu0 0
    %4236 = vmatprep.mubr.bf16.mxu0 0
    %4237 = vmatmul.mubr.bf16.gmra.mrb[0].mxu0 0
    %v4238 = vpop.f32.mrb[0].mxu0
    %v4239 = vadd.f32 0.0, %v4238
    %v4240 = vpop.f32.mrb[0].mxu0
    %v4241 = vadd.f32 0.0, %v4240
    %v4242 = vpop.f32.mrb[0].mxu0
    %v4243 = vpop.f32.mrb[0].mxu0
    %4244 = vdwg.mxu0
    %4245 = vmatprep.subr.bf16.mxu0 %v4143
    %4246 = vmatpush1.bf16.msra.mxu0 %v4142
    %4247 = vmatprep.subr.bf16.mxu0 %v4147
    %4248 = vmatpush1.bf16.msra.mxu0 %v4146
    %4249 = vmatprep.subr.bf16.mxu0 %v4151
    %4250 = vmatpush1.bf16.msra.mxu0 %v4150
    %4251 = vmatprep.subr.bf16.mxu0 %v4155
    %4252 = vmatpush1.bf16.msra.mxu0 %v4154
    %4253 = vmatprep.subr.bf16.mxu0 %v4159
    %4254 = vmatpush1.bf16.msra.mxu0 %v4158
    %4255 = vmatprep.subr.bf16.mxu0 %v4163
    %4256 = vmatpush1.bf16.msra.mxu0 %v4162
    %4257 = vmatprep.subr.bf16.mxu0 %v4167
    %4258 = vmatpush1.bf16.msra.mxu0 %v4166
    %4259 = vmatprep.subr.bf16.mxu0 %v4171
    %4260 = vmatpush1.bf16.msra.mxu0 %v4170
    %4261 = vmatprep.subr.bf16.mxu0 0
    %4262 = vmatpush1.bf16.msra.mxu0 0
    %4263 = vmatprep.subr.bf16.mxu0 0
    %4264 = vmatpush1.bf16.msra.mxu0 0
    %4265 = vmatprep.subr.bf16.mxu0 0
    %4266 = vmatpush1.bf16.msra.mxu0 0
    %4267 = vmatprep.subr.bf16.mxu0 0
    %4268 = vmatpush1.bf16.msra.mxu0 0
    %4269 = vmatprep.subr.bf16.mxu0 0
    %4270 = vmatpush1.bf16.msra.mxu0 0
    %4271 = vmatprep.subr.bf16.mxu0 0
    %4272 = vmatpush1.bf16.msra.mxu0 0
    %4273 = vmatprep.subr.bf16.mxu0 0
    %4274 = vmatpush1.bf16.msra.mxu0 0
    %4275 = vmatprep.subr.bf16.mxu0 0
    %4276 = vmatpush1.bf16.msra.mxu0 0
    %4277 = vmatprep.mubr.bf16.mxu0 0
    %4278 = vmatmul.mubr.bf16.gmra.mrb[0].mxu0 0
    %v4279 = vpop.f32.mrb[0].mxu0
    %v4280 = vadd.f32 0.0, %v4279
    %v4281 = vpop.f32.mrb[0].mxu0
    %v4282 = vadd.f32 0.0, %v4281
    %v4283 = vpop.f32.mrb[0].mxu0
    %v4284 = vpop.f32.mrb[0].mxu0
    %4285 = vdwg.mxu0
    %v4286 = vadd.f32 %v3939, %v4239
    %v4287 = vadd.f32 %v3941, %v4241
    %v4288 = vadd.f32 %v3982, %v4280
    %v4289 = vadd.f32 %v3984, %v4282
    %v4290 = vxor.u32 %v4286, 2147483648
    %v4291 = vmul.f32 %v4290, 1.442695
    %v4292 = vpow.pop %v4291
    %v4293 = vadd.f32 %v4292, 1.0
    %v4294 = vrcp.pop %v4293
    %v4295 = vmul.f32 1.0, %v4294
    %v4296 = vxor.u32 %v4287, 2147483648
    %v4297 = vmul.f32 %v4296, 1.442695
    %v4298 = vpow.pop %v4297
    %v4299 = vadd.f32 %v4298, 1.0
    %v4300 = vrcp.pop %v4299
    %v4301 = vmul.f32 1.0, %v4300
    %v4302 = vtanh.pop %v4288
    %v4303 = vxor.u32 %v4289, 2147483648
    %v4304 = vmul.f32 %v4303, 1.442695
    %v4305 = vpow.pop %v4304
    %v4306 = vadd.f32 %v4305, 1.0
    %v4307 = vrcp.pop %v4306
    %v4308 = vmul.f32 1.0, %v4307
    %v4309 = vmul.f32 %v4301, 0.0
    %v4310 = vmul.f32 %v4295, %v4302
    %v4311 = vadd.f32 %v4309, %v4310
    %v4312 = vtanh.pop %v4311
    %v4313 = vmul.f32 %v4308, %v4312
    %v4314 = vpack.c.bf16 %v4313, %v4313
    %v4315 = vld [vmem:[#allocation20] sm:$0xff]
    %v4316 = vld [vmem:[#allocation20 + $0x8] sm:$0xff]
    %v4317 = vld [vmem:[#allocation20 + $0x10] sm:$0xff]
    %v4318 = vld [vmem:[#allocation20 + $0x18] sm:$0xff]
    %v4319 = vld [vmem:[#allocation20 + $0x20] sm:$0xff]
    %v4320 = vld [vmem:[#allocation20 + $0x28] sm:$0xff]
    %v4321 = vld [vmem:[#allocation20 + $0x30] sm:$0xff]
    %v4322 = vld [vmem:[#allocation20 + $0x38] sm:$0xff]
    %v4323 = vld [vmem:[#allocation20 + $0x40] sm:$0xff]
    %v4324 = vld [vmem:[#allocation20 + $0x48] sm:$0xff]
    %v4325 = vld [vmem:[#allocation20 + $0x50] sm:$0xff]
    %v4326 = vld [vmem:[#allocation20 + $0x58] sm:$0xff]
    %v4327 = vld [vmem:[#allocation20 + $0x60] sm:$0xff]
    %v4328 = vld [vmem:[#allocation20 + $0x68] sm:$0xff]
    %v4329 = vld [vmem:[#allocation20 + $0x70] sm:$0xff]
    %v4330 = vld [vmem:[#allocation20 + $0x78] sm:$0xff]
    %v4331 = vld [vmem:[#allocation20 + $0x80] sm:$0xff]
    %v4332 = vld [vmem:[#allocation20 + $0x88] sm:$0xff]
    %v4333 = vld [vmem:[#allocation20 + $0x90] sm:$0xff]
    %v4334 = vld [vmem:[#allocation20 + $0x98] sm:$0xff]
    %v4335 = vld [vmem:[#allocation20 + $0xa0] sm:$0xff]
    %v4336 = vld [vmem:[#allocation20 + $0xa8] sm:$0xff]
    %v4337 = vld [vmem:[#allocation20 + $0xb0] sm:$0xff]
    %v4338 = vld [vmem:[#allocation20 + $0xb8] sm:$0xff]
    %v4339 = vld [vmem:[#allocation20 + $0xc0] sm:$0xff]
    %v4340 = vld [vmem:[#allocation20 + $0xc8] sm:$0xff]
    %v4341 = vld [vmem:[#allocation20 + $0xd0] sm:$0xff]
    %v4342 = vld [vmem:[#allocation20 + $0xd8] sm:$0xff]
    %v4343 = vld [vmem:[#allocation20 + $0xe0] sm:$0xff]
    %v4344 = vld [vmem:[#allocation20 + $0xe8] sm:$0xff]
    %v4345 = vld [vmem:[#allocation20 + $0xf0] sm:$0xff]
    %v4346 = vld [vmem:[#allocation20 + $0xf8] sm:$0xff]
    %v4347 = vld [vmem:[#allocation21] sm:$0xff]
    %v4348 = vld [vmem:[#allocation21 + $0x8] sm:$0xff]
    %v4349 = vld [vmem:[#allocation21 + $0x10] sm:$0xff]
    %v4350 = vld [vmem:[#allocation21 + $0x18] sm:$0xff]
    %v4351 = vld [vmem:[#allocation21 + $0x20] sm:$0xff]
    %v4352 = vld [vmem:[#allocation21 + $0x28] sm:$0xff]
    %v4353 = vld [vmem:[#allocation21 + $0x30] sm:$0xff]
    %v4354 = vld [vmem:[#allocation21 + $0x38] sm:$0xff]
    %v4355 = vld [vmem:[#allocation21 + $0x40] sm:$0xff]
    %v4356 = vld [vmem:[#allocation21 + $0x48] sm:$0xff]
    %v4357 = vld [vmem:[#allocation21 + $0x50] sm:$0xff]
    %v4358 = vld [vmem:[#allocation21 + $0x58] sm:$0xff]
    %v4359 = vld [vmem:[#allocation21 + $0x60] sm:$0xff]
    %v4360 = vld [vmem:[#allocation21 + $0x68] sm:$0xff]
    %v4361 = vld [vmem:[#allocation21 + $0x70] sm:$0xff]
    %v4362 = vld [vmem:[#allocation21 + $0x78] sm:$0xff]
    %v4363 = vld [vmem:[#allocation21 + $0x80] sm:$0xff]
    %v4364 = vld [vmem:[#allocation21 + $0x88] sm:$0xff]
    %v4365 = vld [vmem:[#allocation21 + $0x90] sm:$0xff]
    %v4366 = vld [vmem:[#allocation21 + $0x98] sm:$0xff]
    %v4367 = vld [vmem:[#allocation21 + $0xa0] sm:$0xff]
    %v4368 = vld [vmem:[#allocation21 + $0xa8] sm:$0xff]
    %v4369 = vld [vmem:[#allocation21 + $0xb0] sm:$0xff]
    %v4370 = vld [vmem:[#allocation21 + $0xb8] sm:$0xff]
    %v4371 = vld [vmem:[#allocation21 + $0xc0] sm:$0xff]
    %v4372 = vld [vmem:[#allocation21 + $0xc8] sm:$0xff]
    %v4373 = vld [vmem:[#allocation21 + $0xd0] sm:$0xff]
    %v4374 = vld [vmem:[#allocation21 + $0xd8] sm:$0xff]
    %v4375 = vld [vmem:[#allocation21 + $0xe0] sm:$0xff]
    %v4376 = vld [vmem:[#allocation21 + $0xe8] sm:$0xff]
    %v4377 = vld [vmem:[#allocation21 + $0xf0] sm:$0xff]
    %v4378 = vld [vmem:[#allocation21 + $0xf8] sm:$0xff]
    %v4411 = vunpack.c.l.b16 %v4347
    %v4412 = vunpack.c.h.b16 %v4347
    %v4413 = vunpack.c.l.b16 %v4348
    %v4414 = vunpack.c.h.b16 %v4348
    %v4415 = vunpack.c.l.b16 %v4349
    %v4416 = vunpack.c.h.b16 %v4349
    %v4417 = vunpack.c.l.b16 %v4350
    %v4418 = vunpack.c.h.b16 %v4350
    %v4419 = vunpack.c.l.b16 %v4351
    %v4420 = vunpack.c.h.b16 %v4351
    %v4421 = vunpack.c.l.b16 %v4352
    %v4422 = vunpack.c.h.b16 %v4352
    %v4423 = vunpack.c.l.b16 %v4353
    %v4424 = vunpack.c.h.b16 %v4353
    %v4425 = vunpack.c.l.b16 %v4354
    %v4426 = vunpack.c.h.b16 %v4354
    %v4427 = vunpack.c.l.b16 %v4355
    %v4428 = vunpack.c.h.b16 %v4355
    %v4429 = vunpack.c.l.b16 %v4356
    %v4430 = vunpack.c.h.b16 %v4356
    %v4431 = vunpack.c.l.b16 %v4357
    %v4432 = vunpack.c.h.b16 %v4357
    %v4433 = vunpack.c.l.b16 %v4358
    %v4434 = vunpack.c.h.b16 %v4358
    %v4435 = vunpack.c.l.b16 %v4359
    %v4436 = vunpack.c.h.b16 %v4359
    %v4437 = vunpack.c.l.b16 %v4360
    %v4438 = vunpack.c.h.b16 %v4360
    %v4439 = vunpack.c.l.b16 %v4361
    %v4440 = vunpack.c.h.b16 %v4361
    %v4441 = vunpack.c.l.b16 %v4362
    %v4442 = vunpack.c.h.b16 %v4362
    %v4443 = vunpack.c.l.b16 %v4363
    %v4444 = vunpack.c.h.b16 %v4363
    %v4445 = vunpack.c.l.b16 %v4364
    %v4446 = vunpack.c.h.b16 %v4364
    %v4447 = vunpack.c.l.b16 %v4365
    %v4448 = vunpack.c.h.b16 %v4365
    %v4449 = vunpack.c.l.b16 %v4366
    %v4450 = vunpack.c.h.b16 %v4366
    %v4451 = vunpack.c.l.b16 %v4367
    %v4452 = vunpack.c.h.b16 %v4367
    %v4453 = vunpack.c.l.b16 %v4368
    %v4454 = vunpack.c.h.b16 %v4368
    %v4455 = vunpack.c.l.b16 %v4369
    %v4456 = vunpack.c.h.b16 %v4369
    %v4457 = vunpack.c.l.b16 %v4370
    %v4458 = vunpack.c.h.b16 %v4370
    %v4459 = vunpack.c.l.b16 %v4371
    %v4460 = vunpack.c.h.b16 %v4371
    %v4461 = vunpack.c.l.b16 %v4372
    %v4462 = vunpack.c.h.b16 %v4372
    %v4463 = vunpack.c.l.b16 %v4373
    %v4464 = vunpack.c.h.b16 %v4373
    %v4465 = vunpack.c.l.b16 %v4374
    %v4466 = vunpack.c.h.b16 %v4374
    %v4467 = vunpack.c.l.b16 %v4375
    %v4468 = vunpack.c.h.b16 %v4375
    %v4469 = vunpack.c.l.b16 %v4376
    %v4470 = vunpack.c.h.b16 %v4376
    %v4471 = vunpack.c.l.b16 %v4377
    %v4472 = vunpack.c.h.b16 %v4377
    %v4473 = vunpack.c.l.b16 %v4378
    %v4474 = vunpack.c.h.b16 %v4378
    %v4475 = vpack.c.b16 %v4415, %v4411
    %v4476 = vpack.c.b16 %v4416, %v4412
    %v4477 = vpack.c.b16 %v4417, %v4413
    %v4478 = vpack.c.b16 %v4418, %v4414
    %v4479 = vpack.c.b16 %v4423, %v4419
    %v4480 = vpack.c.b16 %v4424, %v4420
    %v4481 = vpack.c.b16 %v4425, %v4421
    %v4482 = vpack.c.b16 %v4426, %v4422
    %v4483 = vpack.c.b16 %v4431, %v4427
    %v4484 = vpack.c.b16 %v4432, %v4428
    %v4485 = vpack.c.b16 %v4433, %v4429
    %v4486 = vpack.c.b16 %v4434, %v4430
    %v4487 = vpack.c.b16 %v4439, %v4435
    %v4488 = vpack.c.b16 %v4440, %v4436
    %v4489 = vpack.c.b16 %v4441, %v4437
    %v4490 = vpack.c.b16 %v4442, %v4438
    %v4491 = vpack.c.b16 %v4447, %v4443
    %v4492 = vpack.c.b16 %v4448, %v4444
    %v4493 = vpack.c.b16 %v4449, %v4445
    %v4494 = vpack.c.b16 %v4450, %v4446
    %v4495 = vpack.c.b16 %v4455, %v4451
    %v4496 = vpack.c.b16 %v4456, %v4452
    %v4497 = vpack.c.b16 %v4457, %v4453
    %v4498 = vpack.c.b16 %v4458, %v4454
    %v4499 = vpack.c.b16 %v4463, %v4459
    %v4500 = vpack.c.b16 %v4464, %v4460
    %v4501 = vpack.c.b16 %v4465, %v4461
    %v4502 = vpack.c.b16 %v4466, %v4462
    %v4503 = vpack.c.b16 %v4471, %v4467
    %v4504 = vpack.c.b16 %v4472, %v4468
    %v4505 = vpack.c.b16 %v4473, %v4469
    %v4506 = vpack.c.b16 %v4474, %v4470
    %4539 = vmatprep.subr.bf16.mxu0 %v4476
    %4540 = vmatpush1.bf16.msra.mxu0 %v4475
    %4541 = vmatprep.subr.bf16.mxu0 %v4480
    %4542 = vmatpush1.bf16.msra.mxu0 %v4479
    %4543 = vmatprep.subr.bf16.mxu0 %v4484
    %4544 = vmatpush1.bf16.msra.mxu0 %v4483
    %4545 = vmatprep.subr.bf16.mxu0 %v4488
    %4546 = vmatpush1.bf16.msra.mxu0 %v4487
    %4547 = vmatprep.subr.bf16.mxu0 %v4492
    %4548 = vmatpush1.bf16.msra.mxu0 %v4491
    %4549 = vmatprep.subr.bf16.mxu0 %v4496
    %4550 = vmatpush1.bf16.msra.mxu0 %v4495
    %4551 = vmatprep.subr.bf16.mxu0 %v4500
    %4552 = vmatpush1.bf16.msra.mxu0 %v4499
    %4553 = vmatprep.subr.bf16.mxu0 %v4504
    %4554 = vmatpush1.bf16.msra.mxu0 %v4503
    %4555 = vmatprep.subr.bf16.mxu0 0
    %4556 = vmatpush1.bf16.msra.mxu0 0
    %4557 = vmatprep.subr.bf16.mxu0 0
    %4558 = vmatpush1.bf16.msra.mxu0 0
    %4559 = vmatprep.subr.bf16.mxu0 0
    %4560 = vmatpush1.bf16.msra.mxu0 0
    %4561 = vmatprep.subr.bf16.mxu0 0
    %4562 = vmatpush1.bf16.msra.mxu0 0
    %4563 = vmatprep.subr.bf16.mxu0 0
    %4564 = vmatpush1.bf16.msra.mxu0 0
    %4565 = vmatprep.subr.bf16.mxu0 0
    %4566 = vmatpush1.bf16.msra.mxu0 0
    %4567 = vmatprep.subr.bf16.mxu0 0
    %4568 = vmatpush1.bf16.msra.mxu0 0
    %4569 = vmatprep.subr.bf16.mxu0 0
    %4570 = vmatpush1.bf16.msra.mxu0 0
    %4571 = vmatprep.mubr.bf16.mxu0 0
    %4572 = vmatmul.mubr.bf16.gmra.mrb[0].mxu0 0
    %v4573 = vpop.f32.mrb[0].mxu0
    %v4574 = vadd.f32 0.0, %v4573
    %v4575 = vpop.f32.mrb[0].mxu0
    %v4576 = vadd.f32 0.0, %v4575
    %v4577 = vpop.f32.mrb[0].mxu0
    %v4578 = vpop.f32.mrb[0].mxu0
    %4579 = vdwg.mxu0
    %4580 = vmatprep.subr.bf16.mxu0 %v4478
    %4581 = vmatpush1.bf16.msra.mxu0 %v4477
    %4582 = vmatprep.subr.bf16.mxu0 %v4482
    %4583 = vmatpush1.bf16.msra.mxu0 %v4481
    %4584 = vmatprep.subr.bf16.mxu0 %v4486
    %4585 = vmatpush1.bf16.msra.mxu0 %v4485
    %4586 = vmatprep.subr.bf16.mxu0 %v4490
    %4587 = vmatpush1.bf16.msra.mxu0 %v4489
    %4588 = vmatprep.subr.bf16.mxu0 %v4494
    %4589 = vmatpush1.bf16.msra.mxu0 %v4493
    %4590 = vmatprep.subr.bf16.mxu0 %v4498
    %4591 = vmatpush1.bf16.msra.mxu0 %v4497
    %4592 = vmatprep.subr.bf16.mxu0 %v4502
    %4593 = vmatpush1.bf16.msra.mxu0 %v4501
    %4594 = vmatprep.subr.bf16.mxu0 %v4506
    %4595 = vmatpush1.bf16.msra.mxu0 %v4505
    %4596 = vmatprep.subr.bf16.mxu0 0
    %4597 = vmatpush1.bf16.msra.mxu0 0
    %4598 = vmatprep.subr.bf16.mxu0 0
    %4599 = vmatpush1.bf16.msra.mxu0 0
    %4600 = vmatprep.subr.bf16.mxu0 0
    %4601 = vmatpush1.bf16.msra.mxu0 0
    %4602 = vmatprep.subr.bf16.mxu0 0
    %4603 = vmatpush1.bf16.msra.mxu0 0
    %4604 = vmatprep.subr.bf16.mxu0 0
    %4605 = vmatpush1.bf16.msra.mxu0 0
    %4606 = vmatprep.subr.bf16.mxu0 0
    %4607 = vmatpush1.bf16.msra.mxu0 0
    %4608 = vmatprep.subr.bf16.mxu0 0
    %4609 = vmatpush1.bf16.msra.mxu0 0
    %4610 = vmatprep.subr.bf16.mxu0 0
    %4611 = vmatpush1.bf16.msra.mxu0 0
    %4612 = vmatprep.mubr.bf16.mxu0 0
    %4613 = vmatmul.mubr.bf16.gmra.mrb[0].mxu0 0
    %v4614 = vpop.f32.mrb[0].mxu0
    %v4615 = vadd.f32 0.0, %v4614
    %v4616 = vpop.f32.mrb[0].mxu0
    %v4617 = vadd.f32 0.0, %v4616
    %v4618 = vpop.f32.mrb[0].mxu0
    %v4619 = vpop.f32.mrb[0].mxu0
    %4620 = vdwg.mxu0
    %v4653 = vunpack.c.l.b16 %v4315
    %v4654 = vunpack.c.h.b16 %v4315
    %v4655 = vunpack.c.l.b16 %v4316
    %v4656 = vunpack.c.h.b16 %v4316
    %v4657 = vunpack.c.l.b16 %v4317
    %v4658 = vunpack.c.h.b16 %v4317
    %v4659 = vunpack.c.l.b16 %v4318
    %v4660 = vunpack.c.h.b16 %v4318
    %v4661 = vunpack.c.l.b16 %v4319
    %v4662 = vunpack.c.h.b16 %v4319
    %v4663 = vunpack.c.l.b16 %v4320
    %v4664 = vunpack.c.h.b16 %v4320
    %v4665 = vunpack.c.l.b16 %v4321
    %v4666 = vunpack.c.h.b16 %v4321
    %v4667 = vunpack.c.l.b16 %v4322
    %v4668 = vunpack.c.h.b16 %v4322
    %v4669 = vunpack.c.l.b16 %v4323
    %v4670 = vunpack.c.h.b16 %v4323
    %v4671 = vunpack.c.l.b16 %v4324
    %v4672 = vunpack.c.h.b16 %v4324
    %v4673 = vunpack.c.l.b16 %v4325
    %v4674 = vunpack.c.h.b16 %v4325
    %v4675 = vunpack.c.l.b16 %v4326
    %v4676 = vunpack.c.h.b16 %v4326
    %v4677 = vunpack.c.l.b16 %v4327
    %v4678 = vunpack.c.h.b16 %v4327
    %v4679 = vunpack.c.l.b16 %v4328
    %v4680 = vunpack.c.h.b16 %v4328
    %v4681 = vunpack.c.l.b16 %v4329
    %v4682 = vunpack.c.h.b16 %v4329
    %v4683 = vunpack.c.l.b16 %v4330
    %v4684 = vunpack.c.h.b16 %v4330
    %v4685 = vunpack.c.l.b16 %v4331
    %v4686 = vunpack.c.h.b16 %v4331
    %v4687 = vunpack.c.l.b16 %v4332
    %v4688 = vunpack.c.h.b16 %v4332
    %v4689 = vunpack.c.l.b16 %v4333
    %v4690 = vunpack.c.h.b16 %v4333
    %v4691 = vunpack.c.l.b16 %v4334
    %v4692 = vunpack.c.h.b16 %v4334
    %v4693 = vunpack.c.l.b16 %v4335
    %v4694 = vunpack.c.h.b16 %v4335
    %v4695 = vunpack.c.l.b16 %v4336
    %v4696 = vunpack.c.h.b16 %v4336
    %v4697 = vunpack.c.l.b16 %v4337
    %v4698 = vunpack.c.h.b16 %v4337
    %v4699 = vunpack.c.l.b16 %v4338
    %v4700 = vunpack.c.h.b16 %v4338
    %v4701 = vunpack.c.l.b16 %v4339
    %v4702 = vunpack.c.h.b16 %v4339
    %v4703 = vunpack.c.l.b16 %v4340
    %v4704 = vunpack.c.h.b16 %v4340
    %v4705 = vunpack.c.l.b16 %v4341
    %v4706 = vunpack.c.h.b16 %v4341
    %v4707 = vunpack.c.l.b16 %v4342
    %v4708 = vunpack.c.h.b16 %v4342
    %v4709 = vunpack.c.l.b16 %v4343
    %v4710 = vunpack.c.h.b16 %v4343
    %v4711 = vunpack.c.l.b16 %v4344
    %v4712 = vunpack.c.h.b16 %v4344
    %v4713 = vunpack.c.l.b16 %v4345
    %v4714 = vunpack.c.h.b16 %v4345
    %v4715 = vunpack.c.l.b16 %v4346
    %v4716 = vunpack.c.h.b16 %v4346
    %v4717 = vpack.c.b16 %v4657, %v4653
    %v4718 = vpack.c.b16 %v4658, %v4654
    %v4719 = vpack.c.b16 %v4659, %v4655
    %v4720 = vpack.c.b16 %v4660, %v4656
    %v4721 = vpack.c.b16 %v4665, %v4661
    %v4722 = vpack.c.b16 %v4666, %v4662
    %v4723 = vpack.c.b16 %v4667, %v4663
    %v4724 = vpack.c.b16 %v4668, %v4664
    %v4725 = vpack.c.b16 %v4673, %v4669
    %v4726 = vpack.c.b16 %v4674, %v4670
    %v4727 = vpack.c.b16 %v4675, %v4671
    %v4728 = vpack.c.b16 %v4676, %v4672
    %v4729 = vpack.c.b16 %v4681, %v4677
    %v4730 = vpack.c.b16 %v4682, %v4678
    %v4731 = vpack.c.b16 %v4683, %v4679
    %v4732 = vpack.c.b16 %v4684, %v4680
    %v4733 = vpack.c.b16 %v4689, %v4685
    %v4734 = vpack.c.b16 %v4690, %v4686
    %v4735 = vpack.c.b16 %v4691, %v4687
    %v4736 = vpack.c.b16 %v4692, %v4688
    %v4737 = vpack.c.b16 %v4697, %v4693
    %v4738 = vpack.c.b16 %v4698, %v4694
    %v4739 = vpack.c.b16 %v4699, %v4695
    %v4740 = vpack.c.b16 %v4700, %v4696
    %v4741 = vpack.c.b16 %v4705, %v4701
    %v4742 = vpack.c.b16 %v4706, %v4702
    %v4743 = vpack.c.b16 %v4707, %v4703
    %v4744 = vpack.c.b16 %v4708, %v4704
    %v4745 = vpack.c.b16 %v4713, %v4709
    %v4746 = vpack.c.b16 %v4714, %v4710
    %v4747 = vpack.c.b16 %v4715, %v4711
    %v4748 = vpack.c.b16 %v4716, %v4712
    %4781 = vmatprep.subr.bf16.mxu0 %v4718
    %4782 = vmatpush1.bf16.msra.mxu0 %v4717
    %4783 = vmatprep.subr.bf16.mxu0 %v4722
    %4784 = vmatpush1.bf16.msra.mxu0 %v4721
    %4785 = vmatprep.subr.bf16.mxu0 %v4726
    %4786 = vmatpush1.bf16.msra.mxu0 %v4725
    %4787 = vmatprep.subr.bf16.mxu0 %v4730
    %4788 = vmatpush1.bf16.msra.mxu0 %v4729
    %4789 = vmatprep.subr.bf16.mxu0 %v4734
    %4790 = vmatpush1.bf16.msra.mxu0 %v4733
    %4791 = vmatprep.subr.bf16.mxu0 %v4738
    %4792 = vmatpush1.bf16.msra.mxu0 %v4737
    %4793 = vmatprep.subr.bf16.mxu0 %v4742
    %4794 = vmatpush1.bf16.msra.mxu0 %v4741
    %4795 = vmatprep.subr.bf16.mxu0 %v4746
    %4796 = vmatpush1.bf16.msra.mxu0 %v4745
    %4797 = vmatprep.subr.bf16.mxu0 0
    %4798 = vmatpush1.bf16.msra.mxu0 0
    %4799 = vmatprep.subr.bf16.mxu0 0
    %4800 = vmatpush1.bf16.msra.mxu0 0
    %4801 = vmatprep.subr.bf16.mxu0 0
    %4802 = vmatpush1.bf16.msra.mxu0 0
    %4803 = vmatprep.subr.bf16.mxu0 0
    %4804 = vmatpush1.bf16.msra.mxu0 0
    %4805 = vmatprep.subr.bf16.mxu0 0
    %4806 = vmatpush1.bf16.msra.mxu0 0
    %4807 = vmatprep.subr.bf16.mxu0 0
    %4808 = vmatpush1.bf16.msra.mxu0 0
    %4809 = vmatprep.subr.bf16.mxu0 0
    %4810 = vmatpush1.bf16.msra.mxu0 0
    %4811 = vmatprep.subr.bf16.mxu0 0
    %4812 = vmatpush1.bf16.msra.mxu0 0
    %4813 = vmatprep.mubr.bf16.mxu0 0
    %4814 = vmatmul.mubr.bf16.gmra.mrb[0].mxu0 %v4314
    %v4815 = vpop.f32.mrb[0].mxu0
    %v4816 = vadd.f32 %v4574, %v4815
    %v4817 = vpop.f32.mrb[0].mxu0
    %v4818 = vadd.f32 %v4576, %v4817
    %v4819 = vpop.f32.mrb[0].mxu0
    %v4820 = vpop.f32.mrb[0].mxu0
    %4821 = vdwg.mxu0
    %4822 = vmatprep.subr.bf16.mxu0 %v4720
    %4823 = vmatpush1.bf16.msra.mxu0 %v4719
    %4824 = vmatprep.subr.bf16.mxu0 %v4724
    %4825 = vmatpush1.bf16.msra.mxu0 %v4723
    %4826 = vmatprep.subr.bf16.mxu0 %v4728
    %4827 = vmatpush1.bf16.msra.mxu0 %v4727
    %4828 = vmatprep.subr.bf16.mxu0 %v4732
    %4829 = vmatpush1.bf16.msra.mxu0 %v4731
    %4830 = vmatprep.subr.bf16.mxu0 %v4736
    %4831 = vmatpush1.bf16.msra.mxu0 %v4735
    %4832 = vmatprep.subr.bf16.mxu0 %v4740
    %4833 = vmatpush1.bf16.msra.mxu0 %v4739
    %4834 = vmatprep.subr.bf16.mxu0 %v4744
    %4835 = vmatpush1.bf16.msra.mxu0 %v4743
    %4836 = vmatprep.subr.bf16.mxu0 %v4748
    %4837 = vmatpush1.bf16.msra.mxu0 %v4747
    %4838 = vmatprep.subr.bf16.mxu0 0
    %4839 = vmatpush1.bf16.msra.mxu0 0
    %4840 = vmatprep.subr.bf16.mxu0 0
    %4841 = vmatpush1.bf16.msra.mxu0 0
    %4842 = vmatprep.subr.bf16.mxu0 0
    %4843 = vmatpush1.bf16.msra.mxu0 0
    %4844 = vmatprep.subr.bf16.mxu0 0
    %4845 = vmatpush1.bf16.msra.mxu0 0
    %4846 = vmatprep.subr.bf16.mxu0 0
    %4847 = vmatpush1.bf16.msra.mxu0 0
    %4848 = vmatprep.subr.bf16.mxu0 0
    %4849 = vmatpush1.bf16.msra.mxu0 0
    %4850 = vmatprep.subr.bf16.mxu0 0
    %4851 = vmatpush1.bf16.msra.mxu0 0
    %4852 = vmatprep.subr.bf16.mxu0 0
    %4853 = vmatpush1.bf16.msra.mxu0 0
    %4854 = vmatprep.mubr.bf16.mxu0 0
    %4855 = vmatmul.mubr.bf16.gmra.mrb[0].mxu0 %v4314
    %v4856 = vpop.f32.mrb[0].mxu0
    %v4857 = vadd.f32 %v4615, %v4856
    %v4858 = vpop.f32.mrb[0].mxu0
    %v4859 = vadd.f32 %v4617, %v4858
    %v4860 = vpop.f32.mrb[0].mxu0
    %v4861 = vpop.f32.mrb[0].mxu0
    %4862 = vdwg.mxu0
    %v4863 = vadd.f32 %v4816, %v3995
    %v4864 = vadd.f32 %v4818, %v3999
    %v4865 = vadd.f32 %v4857, %v4003
    %v4866 = vadd.f32 %v4859, %v4007
    %v4867 = vxor.u32 %v4863, 2147483648
    %v4868 = vmul.f32 %v4867, 1.442695
    %v4869 = vpow.pop %v4868
    %v4870 = vadd.f32 %v4869, 1.0
    %v4871 = vrcp.pop %v4870
    %v4872 = vmul.f32 1.0, %v4871
    %v4873 = vxor.u32 %v4864, 2147483648
    %v4874 = vmul.f32 %v4873, 1.442695
    %v4875 = vpow.pop %v4874
    %v4876 = vadd.f32 %v4875, 1.0
    %v4877 = vrcp.pop %v4876
    %v4878 = vmul.f32 1.0, %v4877
    %v4879 = vtanh.pop %v4865
    %v4880 = vxor.u32 %v4866, 2147483648
    %v4881 = vmul.f32 %v4880, 1.442695
    %v4882 = vpow.pop %v4881
    %v4883 = vadd.f32 %v4882, 1.0
    %v4884 = vrcp.pop %v4883
    %v4885 = vmul.f32 1.0, %v4884
    %v4886 = vmul.f32 %v4878, 0.0
    %v4887 = vmul.f32 %v4872, %v4879
    %v4888 = vadd.f32 %v4886, %v4887
    %v4889 = vtanh.pop %v4888
    %v4890 = vmul.f32 %v4885, %v4889
    %4891 = vmatprep.subr.bf16.mxu0 %v4141
    %4892 = vmatpush1.bf16.msra.mxu0 %v4140
    %4893 = vmatprep.subr.bf16.mxu0 %v4145
    %4894 = vmatpush1.bf16.msra.mxu0 %v4144
    %4895 = vmatprep.subr.bf16.mxu0 %v4149
    %4896 = vmatpush1.bf16.msra.mxu0 %v4148
    %4897 = vmatprep.subr.bf16.mxu0 %v4153
    %4898 = vmatpush1.bf16.msra.mxu0 %v4152
    %4899 = vmatprep.subr.bf16.mxu0 %v4157
    %4900 = vmatpush1.bf16.msra.mxu0 %v4156
    %4901 = vmatprep.subr.bf16.mxu0 %v4161
    %4902 = vmatpush1.bf16.msra.mxu0 %v4160
    %4903 = vmatprep.subr.bf16.mxu0 %v4165
    %4904 = vmatpush1.bf16.msra.mxu0 %v4164
    %4905 = vmatprep.subr.bf16.mxu0 %v4169
    %4906 = vmatpush1.bf16.msra.mxu0 %v4168
    %4907 = vmatprep.subr.bf16.mxu0 0
    %4908 = vmatpush1.bf16.msra.mxu0 0
    %4909 = vmatprep.subr.bf16.mxu0 0
    %4910 = vmatpush1.bf16.msra.mxu0 0
    %4911 = vmatprep.subr.bf16.mxu0 0
    %4912 = vmatpush1.bf16.msra.mxu0 0
    %4913 = vmatprep.subr.bf16.mxu0 0
    %4914 = vmatpush1.bf16.msra.mxu0 0
    %4915 = vmatprep.subr.bf16.mxu0 0
    %4916 = vmatpush1.bf16.msra.mxu0 0
    %4917 = vmatprep.subr.bf16.mxu0 0
    %4918 = vmatpush1.bf16.msra.mxu0 0
    %4919 = vmatprep.subr.bf16.mxu0 0
    %4920 = vmatpush1.bf16.msra.mxu0 0
    %4921 = vmatprep.subr.bf16.mxu0 0
    %4922 = vmatpush1.bf16.msra.mxu0 0
    %4923 = vmatprep.mubr.bf16.mxu0 0
    %4924 = vmatmul.mubr.bf16.gmra.mrb[0].mxu0 %v4314
    %v4925 = vpop.f32.mrb[0].mxu0
    %v4926 = vadd.f32 0.0, %v4925
    %v4927 = vpop.f32.mrb[0].mxu0
    %v4928 = vadd.f32 0.0, %v4927
    %v4929 = vpop.f32.mrb[0].mxu0
    %v4930 = vpop.f32.mrb[0].mxu0
    %4931 = vdwg.mxu0
    %4932 = vmatprep.subr.bf16.mxu0 %v4143
    %4933 = vmatpush1.bf16.msra.mxu0 %v4142
    %4934 = vmatprep.subr.bf16.mxu0 %v4147
    %4935 = vmatpush1.bf16.msra.mxu0 %v4146
    %4936 = vmatprep.subr.bf16.mxu0 %v4151
    %4937 = vmatpush1.bf16.msra.mxu0 %v4150
    %4938 = vmatprep.subr.bf16.mxu0 %v4155
    %4939 = vmatpush1.bf16.msra.mxu0 %v4154
    %4940 = vmatprep.subr.bf16.mxu0 %v4159
    %4941 = vmatpush1.bf16.msra.mxu0 %v4158
    %4942 = vmatprep.subr.bf16.mxu0 %v4163
    %4943 = vmatpush1.bf16.msra.mxu0 %v4162
    %4944 = vmatprep.subr.bf16.mxu0 %v4167
    %4945 = vmatpush1.bf16.msra.mxu0 %v4166
    %4946 = vmatprep.subr.bf16.mxu0 %v4171
    %4947 = vmatpush1.bf16.msra.mxu0 %v4170
    %4948 = vmatprep.subr.bf16.mxu0 0
    %4949 = vmatpush1.bf16.msra.mxu0 0
    %4950 = vmatprep.subr.bf16.mxu0 0
    %4951 = vmatpush1.bf16.msra.mxu0 0
    %4952 = vmatprep.subr.bf16.mxu0 0
    %4953 = vmatpush1.bf16.msra.mxu0 0
    %4954 = vmatprep.subr.bf16.mxu0 0
    %4955 = vmatpush1.bf16.msra.mxu0 0
    %4956 = vmatprep.subr.bf16.mxu0 0
    %4957 = vmatpush1.bf16.msra.mxu0 0
    %4958 = vmatprep.subr.bf16.mxu0 0
    %4959 = vmatpush1.bf16.msra.mxu0 0
    %4960 = vmatprep.subr.bf16.mxu0 0
    %4961 = vmatpush1.bf16.msra.mxu0 0
    %4962 = vmatprep.subr.bf16.mxu0 0
    %4963 = vmatpush1.bf16.msra.mxu0 0
    %4964 = vmatprep.mubr.bf16.mxu0 0
    %4965 = vmatmul.mubr.bf16.gmra.mrb[0].mxu0 %v4314
    %v4966 = vpop.f32.mrb[0].mxu0
    %v4967 = vadd.f32 0.0, %v4966
    %v4968 = vpop.f32.mrb[0].mxu0
    %v4969 = vadd.f32 0.0, %v4968
    %v4970 = vpop.f32.mrb[0].mxu0
    %v4971 = vpop.f32.mrb[0].mxu0
    %4972 = vdwg.mxu0
    %v4977 = vrot.slane %v4926, 6
    %v4978 = vrot.slane %v4928, 6
    %v4979 = vrot.slane %v4967, 6
    %v4980 = vrot.slane %v4969, 6
    %v4985 = vadd.f32 %v3939, %v4977
    %v4986 = vadd.f32 %v3941, %v4978
    %v4987 = vadd.f32 %v3982, %v4979
    %v4988 = vadd.f32 %v3984, %v4980
    %v4989 = vxor.u32 %v4985, 2147483648
    %v4990 = vmul.f32 %v4989, 1.442695
    %v4991 = vpow.pop %v4990
    %v4992 = vadd.f32 %v4991, 1.0
    %v4993 = vrcp.pop %v4992
    %v4994 = vmul.f32 1.0, %v4993
    %v4995 = vxor.u32 %v4986, 2147483648
    %v4996 = vmul.f32 %v4995, 1.442695
    %v4997 = vpow.pop %v4996
    %v4998 = vadd.f32 %v4997, 1.0
    %v4999 = vrcp.pop %v4998
    %v5000 = vmul.f32 1.0, %v4999
    %v5001 = vtanh.pop %v4987
    %v5002 = vxor.u32 %v4988, 2147483648
    %v5003 = vmul.f32 %v5002, 1.442695
    %v5004 = vpow.pop %v5003
    %v5005 = vadd.f32 %v5004, 1.0
    %v5006 = vrcp.pop %v5005
    %v5007 = vmul.f32 1.0, %v5006
    %v5009 = vrot.slane %v4311, 6
    %v5011 = vmul.f32 %v5000, %v5009
    %v5012 = vmul.f32 %v4994, %v5001
    %v5013 = vadd.f32 %v5011, %v5012
    %v5014 = vtanh.pop %v5013
    %v5015 = vmul.f32 %v5007, %v5014
    %v5016 = vpack.c.bf16 %v5015, %v5015
    %v5017 = vpack.c.bf16 %v4890, %v4890
    %5018 = vmatprep.subr.bf16.mxu0 %v4476
    %5019 = vmatpush1.bf16.msra.mxu0 %v4475
    %5020 = vmatprep.subr.bf16.mxu0 %v4480
    %5021 = vmatpush1.bf16.msra.mxu0 %v4479
    %5022 = vmatprep.subr.bf16.mxu0 %v4484
    %5023 = vmatpush1.bf16.msra.mxu0 %v4483
    %5024 = vmatprep.subr.bf16.mxu0 %v4488
    %5025 = vmatpush1.bf16.msra.mxu0 %v4487
    %5026 = vmatprep.subr.bf16.mxu0 %v4492
    %5027 = vmatpush1.bf16.msra.mxu0 %v4491
    %5028 = vmatprep.subr.bf16.mxu0 %v4496
    %5029 = vmatpush1.bf16.msra.mxu0 %v4495
    %5030 = vmatprep.subr.bf16.mxu0 %v4500
    %5031 = vmatpush1.bf16.msra.mxu0 %v4499
    %5032 = vmatprep.subr.bf16.mxu0 %v4504
    %5033 = vmatpush1.bf16.msra.mxu0 %v4503
    %5034 = vmatprep.subr.bf16.mxu0 0
    %5035 = vmatpush1.bf16.msra.mxu0 0
    %5036 = vmatprep.subr.bf16.mxu0 0
    %5037 = vmatpush1.bf16.msra.mxu0 0
    %5038 = vmatprep.subr.bf16.mxu0 0
    %5039 = vmatpush1.bf16.msra.mxu0 0
    %5040 = vmatprep.subr.bf16.mxu0 0
    %5041 = vmatpush1.bf16.msra.mxu0 0
    %5042 = vmatprep.subr.bf16.mxu0 0
    %5043 = vmatpush1.bf16.msra.mxu0 0
    %5044 = vmatprep.subr.bf16.mxu0 0
    %5045 = vmatpush1.bf16.msra.mxu0 0
    %5046 = vmatprep.subr.bf16.mxu0 0
    %5047 = vmatpush1.bf16.msra.mxu0 0
    %5048 = vmatprep.subr.bf16.mxu0 0
    %5049 = vmatpush1.bf16.msra.mxu0 0
    %5050 = vmatprep.mubr.bf16.mxu0 0
    %5051 = vmatmul.mubr.bf16.gmra.mrb[0].mxu0 %v5017
    %v5052 = vpop.f32.mrb[0].mxu0
    %v5053 = vadd.f32 0.0, %v5052
    %v5054 = vpop.f32.mrb[0].mxu0
    %v5055 = vadd.f32 0.0, %v5054
    %v5056 = vpop.f32.mrb[0].mxu0
    %v5057 = vpop.f32.mrb[0].mxu0
    %5058 = vdwg.mxu0
    %5059 = vmatprep.subr.bf16.mxu0 %v4478
    %5060 = vmatpush1.bf16.msra.mxu0 %v4477
    %5061 = vmatprep.subr.bf16.mxu0 %v4482
    %5062 = vmatpush1.bf16.msra.mxu0 %v4481
    %5063 = vmatprep.subr.bf16.mxu0 %v4486
    %5064 = vmatpush1.bf16.msra.mxu0 %v4485
    %5065 = vmatprep.subr.bf16.mxu0 %v4490
    %5066 = vmatpush1.bf16.msra.mxu0 %v4489
    %5067 = vmatprep.subr.bf16.mxu0 %v4494
    %5068 = vmatpush1.bf16.msra.mxu0 %v4493
    %5069 = vmatprep.subr.bf16.mxu0 %v4498
    %5070 = vmatpush1.bf16.msra.mxu0 %v4497
    %5071 = vmatprep.subr.bf16.mxu0 %v4502
    %5072 = vmatpush1.bf16.msra.mxu0 %v4501
    %5073 = vmatprep.subr.bf16.mxu0 %v4506
    %5074 = vmatpush1.bf16.msra.mxu0 %v4505
    %5075 = vmatprep.subr.bf16.mxu0 0
    %5076 = vmatpush1.bf16.msra.mxu0 0
    %5077 = vmatprep.subr.bf16.mxu0 0
    %5078 = vmatpush1.bf16.msra.mxu0 0
    %5079 = vmatprep.subr.bf16.mxu0 0
    %5080 = vmatpush1.bf16.msra.mxu0 0
    %5081 = vmatprep.subr.bf16.mxu0 0
    %5082 = vmatpush1.bf16.msra.mxu0 0
    %5083 = vmatprep.subr.bf16.mxu0 0
    %5084 = vmatpush1.bf16.msra.mxu0 0
    %5085 = vmatprep.subr.bf16.mxu0 0
    %5086 = vmatpush1.bf16.msra.mxu0 0
    %5087 = vmatprep.subr.bf16.mxu0 0
    %5088 = vmatpush1.bf16.msra.mxu0 0
    %5089 = vmatprep.subr.bf16.mxu0 0
    %5090 = vmatpush1.bf16.msra.mxu0 0
    %5091 = vmatprep.mubr.bf16.mxu0 0
    %5092 = vmatmul.mubr.bf16.gmra.mrb[0].mxu0 %v5017
    %v5093 = vpop.f32.mrb[0].mxu0
    %v5094 = vadd.f32 0.0, %v5093
    %v5095 = vpop.f32.mrb[0].mxu0
    %v5096 = vadd.f32 0.0, %v5095
    %v5097 = vpop.f32.mrb[0].mxu0
    %v5098 = vpop.f32.mrb[0].mxu0
    %5099 = vdwg.mxu0
    %v5101 = vrot.slane %v5016, 1
    %5103 = vmatprep.subr.bf16.mxu0 %v4718
    %5104 = vmatpush1.bf16.msra.mxu0 %v4717
    %5105 = vmatprep.subr.bf16.mxu0 %v4722
    %5106 = vmatpush1.bf16.msra.mxu0 %v4721
    %5107 = vmatprep.subr.bf16.mxu0 %v4726
    %5108 = vmatpush1.bf16.msra.mxu0 %v4725
    %5109 = vmatprep.subr.bf16.mxu0 %v4730
    %5110 = vmatpush1.bf16.msra.mxu0 %v4729
    %5111 = vmatprep.subr.bf16.mxu0 %v4734
    %5112 = vmatpush1.bf16.msra.mxu0 %v4733
    %5113 = vmatprep.subr.bf16.mxu0 %v4738
    %5114 = vmatpush1.bf16.msra.mxu0 %v4737
    %5115 = vmatprep.subr.bf16.mxu0 %v4742
    %5116 = vmatpush1.bf16.msra.mxu0 %v4741
    %5117 = vmatprep.subr.bf16.mxu0 %v4746
    %5118 = vmatpush1.bf16.msra.mxu0 %v4745
    %5119 = vmatprep.subr.bf16.mxu0 0
    %5120 = vmatpush1.bf16.msra.mxu0 0
    %5121 = vmatprep.subr.bf16.mxu0 0
    %5122 = vmatpush1.bf16.msra.mxu0 0
    %5123 = vmatprep.subr.bf16.mxu0 0
    %5124 = vmatpush1.bf16.msra.mxu0 0
    %5125 = vmatprep.subr.bf16.mxu0 0
    %5126 = vmatpush1.bf16.msra.mxu0 0
    %5127 = vmatprep.subr.bf16.mxu0 0
    %5128 = vmatpush1.bf16.msra.mxu0 0
    %5129 = vmatprep.subr.bf16.mxu0 0
    %5130 = vmatpush1.bf16.msra.mxu0 0
    %5131 = vmatprep.subr.bf16.mxu0 0
    %5132 = vmatpush1.bf16.msra.mxu0 0
    %5133 = vmatprep.subr.bf16.mxu0 0
    %5134 = vmatpush1.bf16.msra.mxu0 0
    %5135 = vmatprep.mubr.bf16.mxu0 0
    %5136 = vmatmul.mubr.bf16.gmra.mrb[0].mxu0 %v5101
    %v5137 = vpop.f32.mrb[0].mxu0
    %v5138 = vadd.f32 %v5053, %v5137
    %v5139 = vpop.f32.mrb[0].mxu0
    %v5140 = vadd.f32 %v5055, %v5139
    %v5141 = vpop.f32.mrb[0].mxu0
    %v5142 = vpop.f32.mrb[0].mxu0
    %5143 = vdwg.mxu0
    %5144 = vmatprep.subr.bf16.mxu0 %v4720
    %5145 = vmatpush1.bf16.msra.mxu0 %v4719
    %5146 = vmatprep.subr.bf16.mxu0 %v4724
    %5147 = vmatpush1.bf16.msra.mxu0 %v4723
    %5148 = vmatprep.subr.bf16.mxu0 %v4728
    %5149 = vmatpush1.bf16.msra.mxu0 %v4727
    %5150 = vmatprep.subr.bf16.mxu0 %v4732
    %5151 = vmatpush1.bf16.msra.mxu0 %v4731
    %5152 = vmatprep.subr.bf16.mxu0 %v4736
    %5153 = vmatpush1.bf16.msra.mxu0 %v4735
    %5154 = vmatprep.subr.bf16.mxu0 %v4740
    %5155 = vmatpush1.bf16.msra.mxu0 %v4739
    %5156 = vmatprep.subr.bf16.mxu0 %v4744
    %5157 = vmatpush1.bf16.msra.mxu0 %v4743
    %5158 = vmatprep.subr.bf16.mxu0 %v4748
    %5159 = vmatpush1.bf16.msra.mxu0 %v4747
    %5160 = vmatprep.subr.bf16.mxu0 0
    %5161 = vmatpush1.bf16.msra.mxu0 0
    %5162 = vmatprep.subr.bf16.mxu0 0
    %5163 = vmatpush1.bf16.msra.mxu0 0
    %5164 = vmatprep.subr.bf16.mxu0 0
    %5165 = vmatpush1.bf16.msra.mxu0 0
    %5166 = vmatprep.subr.bf16.mxu0 0
    %5167 = vmatpush1.bf16.msra.mxu0 0
    %5168 = vmatprep.subr.bf16.mxu0 0
    %5169 = vmatpush1.bf16.msra.mxu0 0
    %5170 = vmatprep.subr.bf16.mxu0 0
    %5171 = vmatpush1.bf16.msra.mxu0 0
    %5172 = vmatprep.subr.bf16.mxu0 0
    %5173 = vmatpush1.bf16.msra.mxu0 0
    %5174 = vmatprep.subr.bf16.mxu0 0
    %5175 = vmatpush1.bf16.msra.mxu0 0
    %5176 = vmatprep.mubr.bf16.mxu0 0
    %5177 = vmatmul.mubr.bf16.gmra.mrb[0].mxu0 %v5101
    %v5178 = vpop.f32.mrb[0].mxu0
    %v5179 = vadd.f32 %v5094, %v5178
    %v5180 = vpop.f32.mrb[0].mxu0
    %v5181 = vadd.f32 %v5096, %v5180
    %v5182 = vpop.f32.mrb[0].mxu0
    %v5183 = vpop.f32.mrb[0].mxu0
    %5184 = vdwg.mxu0
    %v5185 = vadd.f32 %v5138, %v3995
    %v5186 = vadd.f32 %v5140, %v3999
    %v5187 = vadd.f32 %v5179, %v4003
    %v5188 = vadd.f32 %v5181, %v4007
    %v5189 = vxor.u32 %v5185, 2147483648
    %v5190 = vmul.f32 %v5189, 1.442695
    %v5191 = vpow.pop %v5190
    %v5192 = vadd.f32 %v5191, 1.0
    %v5193 = vrcp.pop %v5192
    %v5194 = vmul.f32 1.0, %v5193
    %v5195 = vxor.u32 %v5186, 2147483648
    %v5196 = vmul.f32 %v5195, 1.442695
    %v5197 = vpow.pop %v5196
    %v5198 = vadd.f32 %v5197, 1.0
    %v5199 = vrcp.pop %v5198
    %v5200 = vmul.f32 1.0, %v5199
    %v5201 = vtanh.pop %v5187
    %v5202 = vxor.u32 %v5188, 2147483648
    %v5203 = vmul.f32 %v5202, 1.442695
    %v5204 = vpow.pop %v5203
    %v5205 = vadd.f32 %v5204, 1.0
    %v5206 = vrcp.pop %v5205
    %v5207 = vmul.f32 1.0, %v5206
    %v5208 = vmul.f32 %v5200, %v4888
    %v5209 = vmul.f32 %v5194, %v5201
    %v5210 = vadd.f32 %v5208, %v5209
    %v5211 = vtanh.pop %v5210
    %v5212 = vmul.f32 %v5207, %v5211
    %5213 = vmatprep.subr.bf16.mxu0 %v4141
    %5214 = vmatpush1.bf16.msra.mxu0 %v4140
    %5215 = vmatprep.subr.bf16.mxu0 %v4145
    %5216 = vmatpush1.bf16.msra.mxu0 %v4144
    %5217 = vmatprep.subr.bf16.mxu0 %v4149
    %5218 = vmatpush1.bf16.msra.mxu0 %v4148
    %5219 = vmatprep.subr.bf16.mxu0 %v4153
    %5220 = vmatpush1.bf16.msra.mxu0 %v4152
    %5221 = vmatprep.subr.bf16.mxu0 %v4157
    %5222 = vmatpush1.bf16.msra.mxu0 %v4156
    %5223 = vmatprep.subr.bf16.mxu0 %v4161
    %5224 = vmatpush1.bf16.msra.mxu0 %v4160
    %5225 = vmatprep.subr.bf16.mxu0 %v4165
    %5226 = vmatpush1.bf16.msra.mxu0 %v4164
    %5227 = vmatprep.subr.bf16.mxu0 %v4169
    %5228 = vmatpush1.bf16.msra.mxu0 %v4168
    %5229 = vmatprep.subr.bf16.mxu0 0
    %5230 = vmatpush1.bf16.msra.mxu0 0
    %5231 = vmatprep.subr.bf16.mxu0 0
    %5232 = vmatpush1.bf16.msra.mxu0 0
    %5233 = vmatprep.subr.bf16.mxu0 0
    %5234 = vmatpush1.bf16.msra.mxu0 0
    %5235 = vmatprep.subr.bf16.mxu0 0
    %5236 = vmatpush1.bf16.msra.mxu0 0
    %5237 = vmatprep.subr.bf16.mxu0 0
    %5238 = vmatpush1.bf16.msra.mxu0 0
    %5239 = vmatprep.subr.bf16.mxu0 0
    %5240 = vmatpush1.bf16.msra.mxu0 0
    %5241 = vmatprep.subr.bf16.mxu0 0
    %5242 = vmatpush1.bf16.msra.mxu0 0
    %5243 = vmatprep.subr.bf16.mxu0 0
    %5244 = vmatpush1.bf16.msra.mxu0 0
    %5245 = vmatprep.mubr.bf16.mxu0 0
    %5246 = vmatmul.mubr.bf16.gmra.mrb[0].mxu0 %v5101
    %v5247 = vpop.f32.mrb[0].mxu0
    %v5248 = vadd.f32 0.0, %v5247
    %v5249 = vpop.f32.mrb[0].mxu0
    %v5250 = vadd.f32 0.0, %v5249
    %v5251 = vpop.f32.mrb[0].mxu0
    %v5252 = vpop.f32.mrb[0].mxu0
    %5253 = vdwg.mxu0
    %5254 = vmatprep.subr.bf16.mxu0 %v4143
    %5255 = vmatpush1.bf16.msra.mxu0 %v4142
    %5256 = vmatprep.subr.bf16.mxu0 %v4147
    %5257 = vmatpush1.bf16.msra.mxu0 %v4146
    %5258 = vmatprep.subr.bf16.mxu0 %v4151
    %5259 = vmatpush1.bf16.msra.mxu0 %v4150
    %5260 = vmatprep.subr.bf16.mxu0 %v4155
    %5261 = vmatpush1.bf16.msra.mxu0 %v4154
    %5262 = vmatprep.subr.bf16.mxu0 %v4159
    %5263 = vmatpush1.bf16.msra.mxu0 %v4158
    %5264 = vmatprep.subr.bf16.mxu0 %v4163
    %5265 = vmatpush1.bf16.msra.mxu0 %v4162
    %5266 = vmatprep.subr.bf16.mxu0 %v4167
    %5267 = vmatpush1.bf16.msra.mxu0 %v4166
    %5268 = vmatprep.subr.bf16.mxu0 %v4171
    %5269 = vmatpush1.bf16.msra.mxu0 %v4170
    %5270 = vmatprep.subr.bf16.mxu0 0
    %5271 = vmatpush1.bf16.msra.mxu0 0
    %5272 = vmatprep.subr.bf16.mxu0 0
    %5273 = vmatpush1.bf16.msra.mxu0 0
    %5274 = vmatprep.subr.bf16.mxu0 0
    %5275 = vmatpush1.bf16.msra.mxu0 0
    %5276 = vmatprep.subr.bf16.mxu0 0
    %5277 = vmatpush1.bf16.msra.mxu0 0
    %5278 = vmatprep.subr.bf16.mxu0 0
    %5279 = vmatpush1.bf16.msra.mxu0 0
    %5280 = vmatprep.subr.bf16.mxu0 0
    %5281 = vmatpush1.bf16.msra.mxu0 0
    %5282 = vmatprep.subr.bf16.mxu0 0
    %5283 = vmatpush1.bf16.msra.mxu0 0
    %5284 = vmatprep.subr.bf16.mxu0 0
    %5285 = vmatpush1.bf16.msra.mxu0 0
    %5286 = vmatprep.mubr.bf16.mxu0 0
    %5287 = vmatmul.mubr.bf16.gmra.mrb[0].mxu0 %v5101
    %v5288 = vpop.f32.mrb[0].mxu0
    %v5289 = vadd.f32 0.0, %v5288
    %v5290 = vpop.f32.mrb[0].mxu0
    %v5291 = vadd.f32 0.0, %v5290
    %v5292 = vpop.f32.mrb[0].mxu0
    %v5293 = vpop.f32.mrb[0].mxu0
    %5294 = vdwg.mxu0
    %v5299 = vrot.slane %v5248, 4
    %v5300 = vrot.slane %v5250, 4
    %v5301 = vrot.slane %v5289, 4
    %v5302 = vrot.slane %v5291, 4
    %v5307 = vadd.f32 %v3939, %v5299
    %v5308 = vadd.f32 %v3941, %v5300
    %v5309 = vadd.f32 %v3982, %v5301
    %v5310 = vadd.f32 %v3984, %v5302
    %v5311 = vxor.u32 %v5307, 2147483648
    %v5312 = vmul.f32 %v5311, 1.442695
    %v5313 = vpow.pop %v5312
    %v5314 = vadd.f32 %v5313, 1.0
    %v5315 = vrcp.pop %v5314
    %v5316 = vmul.f32 1.0, %v5315
    %v5317 = vxor.u32 %v5308, 2147483648
    %v5318 = vmul.f32 %v5317, 1.442695
    %v5319 = vpow.pop %v5318
    %v5320 = vadd.f32 %v5319, 1.0
    %v5321 = vrcp.pop %v5320
    %v5322 = vmul.f32 1.0, %v5321
    %v5323 = vtanh.pop %v5309
    %v5324 = vxor.u32 %v5310, 2147483648
    %v5325 = vmul.f32 %v5324, 1.442695
    %v5326 = vpow.pop %v5325
    %v5327 = vadd.f32 %v5326, 1.0
    %v5328 = vrcp.pop %v5327
    %v5329 = vmul.f32 1.0, %v5328
    %v5331 = vrot.slane %v5013, 6
    %v5333 = vmul.f32 %v5322, %v5331
    %v5334 = vmul.f32 %v5316, %v5323
    %v5335 = vadd.f32 %v5333, %v5334
    %v5336 = vtanh.pop %v5335
    %v5337 = vmul.f32 %v5329, %v5336
    %v5338 = vpack.c.bf16 %v5337, %v5337
    %v5339 = vpack.c.bf16 %v5212, %v5212
    %5340 = vmatprep.subr.bf16.mxu0 %v4476
    %5341 = vmatpush1.bf16.msra.mxu0 %v4475
    %5342 = vmatprep.subr.bf16.mxu0 %v4480
    %5343 = vmatpush1.bf16.msra.mxu0 %v4479
    %5344 = vmatprep.subr.bf16.mxu0 %v4484
    %5345 = vmatpush1.bf16.msra.mxu0 %v4483
    %5346 = vmatprep.subr.bf16.mxu0 %v4488
    %5347 = vmatpush1.bf16.msra.mxu0 %v4487
    %5348 = vmatprep.subr.bf16.mxu0 %v4492
    %5349 = vmatpush1.bf16.msra.mxu0 %v4491
    %5350 = vmatprep.subr.bf16.mxu0 %v4496
    %5351 = vmatpush1.bf16.msra.mxu0 %v4495
    %5352 = vmatprep.subr.bf16.mxu0 %v4500
    %5353 = vmatpush1.bf16.msra.mxu0 %v4499
    %5354 = vmatprep.subr.bf16.mxu0 %v4504
    %5355 = vmatpush1.bf16.msra.mxu0 %v4503
    %5356 = vmatprep.subr.bf16.mxu0 0
    %5357 = vmatpush1.bf16.msra.mxu0 0
    %5358 = vmatprep.subr.bf16.mxu0 0
    %5359 = vmatpush1.bf16.msra.mxu0 0
    %5360 = vmatprep.subr.bf16.mxu0 0
    %5361 = vmatpush1.bf16.msra.mxu0 0
    %5362 = vmatprep.subr.bf16.mxu0 0
    %5363 = vmatpush1.bf16.msra.mxu0 0
    %5364 = vmatprep.subr.bf16.mxu0 0
    %5365 = vmatpush1.bf16.msra.mxu0 0
    %5366 = vmatprep.subr.bf16.mxu0 0
    %5367 = vmatpush1.bf16.msra.mxu0 0
    %5368 = vmatprep.subr.bf16.mxu0 0
    %5369 = vmatpush1.bf16.msra.mxu0 0
    %5370 = vmatprep.subr.bf16.mxu0 0
    %5371 = vmatpush1.bf16.msra.mxu0 0
    %5372 = vmatprep.mubr.bf16.mxu0 0
    %5373 = vmatmul.mubr.bf16.gmra.mrb[0].mxu0 %v5339
    %v5374 = vpop.f32.mrb[0].mxu0
    %v5375 = vadd.f32 0.0, %v5374
    %v5376 = vpop.f32.mrb[0].mxu0
    %v5377 = vadd.f32 0.0, %v5376
    %v5378 = vpop.f32.mrb[0].mxu0
    %v5379 = vpop.f32.mrb[0].mxu0
    %5380 = vdwg.mxu0
    %5381 = vmatprep.subr.bf16.mxu0 %v4478
    %5382 = vmatpush1.bf16.msra.mxu0 %v4477
    %5383 = vmatprep.subr.bf16.mxu0 %v4482
    %5384 = vmatpush1.bf16.msra.mxu0 %v4481
    %5385 = vmatprep.subr.bf16.mxu0 %v4486
    %5386 = vmatpush1.bf16.msra.mxu0 %v4485
    %5387 = vmatprep.subr.bf16.mxu0 %v4490
    %5388 = vmatpush1.bf16.msra.mxu0 %v4489
    %5389 = vmatprep.subr.bf16.mxu0 %v4494
    %5390 = vmatpush1.bf16.msra.mxu0 %v4493
    %5391 = vmatprep.subr.bf16.mxu0 %v4498
    %5392 = vmatpush1.bf16.msra.mxu0 %v4497
    %5393 = vmatprep.subr.bf16.mxu0 %v4502
    %5394 = vmatpush1.bf16.msra.mxu0 %v4501
    %5395 = vmatprep.subr.bf16.mxu0 %v4506
    %5396 = vmatpush1.bf16.msra.mxu0 %v4505
    %5397 = vmatprep.subr.bf16.mxu0 0
    %5398 = vmatpush1.bf16.msra.mxu0 0
    %5399 = vmatprep.subr.bf16.mxu0 0
    %5400 = vmatpush1.bf16.msra.mxu0 0
    %5401 = vmatprep.subr.bf16.mxu0 0
    %5402 = vmatpush1.bf16.msra.mxu0 0
    %5403 = vmatprep.subr.bf16.mxu0 0
    %5404 = vmatpush1.bf16.msra.mxu0 0
    %5405 = vmatprep.subr.bf16.mxu0 0
    %5406 = vmatpush1.bf16.msra.mxu0 0
    %5407 = vmatprep.subr.bf16.mxu0 0
    %5408 = vmatpush1.bf16.msra.mxu0 0
    %5409 = vmatprep.subr.bf16.mxu0 0
    %5410 = vmatpush1.bf16.msra.mxu0 0
    %5411 = vmatprep.subr.bf16.mxu0 0
    %5412 = vmatpush1.bf16.msra.mxu0 0
    %5413 = vmatprep.mubr.bf16.mxu0 0
    %5414 = vmatmul.mubr.bf16.gmra.mrb[0].mxu0 %v5339
    %v5415 = vpop.f32.mrb[0].mxu0
    %v5416 = vadd.f32 0.0, %v5415
    %v5417 = vpop.f32.mrb[0].mxu0
    %v5418 = vadd.f32 0.0, %v5417
    %v5419 = vpop.f32.mrb[0].mxu0
    %v5420 = vpop.f32.mrb[0].mxu0
    %5421 = vdwg.mxu0
    %v5423 = vrot.slane %v5338, 2
    %5425 = vmatprep.subr.bf16.mxu0 %v4718
    %5426 = vmatpush1.bf16.msra.mxu0 %v4717
    %5427 = vmatprep.subr.bf16.mxu0 %v4722
    %5428 = vmatpush1.bf16.msra.mxu0 %v4721
    %5429 = vmatprep.subr.bf16.mxu0 %v4726
    %5430 = vmatpush1.bf16.msra.mxu0 %v4725
    %5431 = vmatprep.subr.bf16.mxu0 %v4730
    %5432 = vmatpush1.bf16.msra.mxu0 %v4729
    %5433 = vmatprep.subr.bf16.mxu0 %v4734
    %5434 = vmatpush1.bf16.msra.mxu0 %v4733
    %5435 = vmatprep.subr.bf16.mxu0 %v4738
    %5436 = vmatpush1.bf16.msra.mxu0 %v4737
    %5437 = vmatprep.subr.bf16.mxu0 %v4742
    %5438 = vmatpush1.bf16.msra.mxu0 %v4741
    %5439 = vmatprep.subr.bf16.mxu0 %v4746
    %5440 = vmatpush1.bf16.msra.mxu0 %v4745
    %5441 = vmatprep.subr.bf16.mxu0 0
    %5442 = vmatpush1.bf16.msra.mxu0 0
    %5443 = vmatprep.subr.bf16.mxu0 0
    %5444 = vmatpush1.bf16.msra.mxu0 0
    %5445 = vmatprep.subr.bf16.mxu0 0
    %5446 = vmatpush1.bf16.msra.mxu0 0
    %5447 = vmatprep.subr.bf16.mxu0 0
    %5448 = vmatpush1.bf16.msra.mxu0 0
    %5449 = vmatprep.subr.bf16.mxu0 0
    %5450 = vmatpush1.bf16.msra.mxu0 0
    %5451 = vmatprep.subr.bf16.mxu0 0
    %5452 = vmatpush1.bf16.msra.mxu0 0
    %5453 = vmatprep.subr.bf16.mxu0 0
    %5454 = vmatpush1.bf16.msra.mxu0 0
    %5455 = vmatprep.subr.bf16.mxu0 0
    %5456 = vmatpush1.bf16.msra.mxu0 0
    %5457 = vmatprep.mubr.bf16.mxu0 0
    %5458 = vmatmul.mubr.bf16.gmra.mrb[0].mxu0 %v5423
    %v5459 = vpop.f32.mrb[0].mxu0
    %v5460 = vadd.f32 %v5375, %v5459
    %v5461 = vpop.f32.mrb[0].mxu0
    %v5462 = vadd.f32 %v5377, %v5461
    %v5463 = vpop.f32.mrb[0].mxu0
    %v5464 = vpop.f32.mrb[0].mxu0
    %5465 = vdwg.mxu0
    %5466 = vmatprep.subr.bf16.mxu0 %v4720
    %5467 = vmatpush1.bf16.msra.mxu0 %v4719
    %5468 = vmatprep.subr.bf16.mxu0 %v4724
    %5469 = vmatpush1.bf16.msra.mxu0 %v4723
    %5470 = vmatprep.subr.bf16.mxu0 %v4728
    %5471 = vmatpush1.bf16.msra.mxu0 %v4727
    %5472 = vmatprep.subr.bf16.mxu0 %v4732
    %5473 = vmatpush1.bf16.msra.mxu0 %v4731
    %5474 = vmatprep.subr.bf16.mxu0 %v4736
    %5475 = vmatpush1.bf16.msra.mxu0 %v4735
    %5476 = vmatprep.subr.bf16.mxu0 %v4740
    %5477 = vmatpush1.bf16.msra.mxu0 %v4739
    %5478 = vmatprep.subr.bf16.mxu0 %v4744
    %5479 = vmatpush1.bf16.msra.mxu0 %v4743
    %5480 = vmatprep.subr.bf16.mxu0 %v4748
    %5481 = vmatpush1.bf16.msra.mxu0 %v4747
    %5482 = vmatprep.subr.bf16.mxu0 0
    %5483 = vmatpush1.bf16.msra.mxu0 0
    %5484 = vmatprep.subr.bf16.mxu0 0
    %5485 = vmatpush1.bf16.msra.mxu0 0
    %5486 = vmatprep.subr.bf16.mxu0 0
    %5487 = vmatpush1.bf16.msra.mxu0 0
    %5488 = vmatprep.subr.bf16.mxu0 0
    %5489 = vmatpush1.bf16.msra.mxu0 0
    %5490 = vmatprep.subr.bf16.mxu0 0
    %5491 = vmatpush1.bf16.msra.mxu0 0
    %5492 = vmatprep.subr.bf16.mxu0 0
    %5493 = vmatpush1.bf16.msra.mxu0 0
    %5494 = vmatprep.subr.bf16.mxu0 0
    %5495 = vmatpush1.bf16.msra.mxu0 0
    %5496 = vmatprep.subr.bf16.mxu0 0
    %5497 = vmatpush1.bf16.msra.mxu0 0
    %5498 = vmatprep.mubr.bf16.mxu0 0
    %5499 = vmatmul.mubr.bf16.gmra.mrb[0].mxu0 %v5423
    %v5500 = vpop.f32.mrb[0].mxu0
    %v5501 = vadd.f32 %v5416, %v5500
    %v5502 = vpop.f32.mrb[0].mxu0
    %v5503 = vadd.f32 %v5418, %v5502
    %v5504 = vpop.f32.mrb[0].mxu0
    %v5505 = vpop.f32.mrb[0].mxu0
    %5506 = vdwg.mxu0
    %v5507 = vadd.f32 %v5460, %v3995
    %v5508 = vadd.f32 %v5462, %v3999
    %v5509 = vadd.f32 %v5501, %v4003
    %v5510 = vadd.f32 %v5503, %v4007
    %v5511 = vxor.u32 %v5507, 2147483648
    %v5512 = vmul.f32 %v5511, 1.442695
    %v5513 = vpow.pop %v5512
    %v5514 = vadd.f32 %v5513, 1.0
    %v5515 = vrcp.pop %v5514
    %v5516 = vmul.f32 1.0, %v5515
    %v5517 = vxor.u32 %v5508, 2147483648
    %v5518 = vmul.f32 %v5517, 1.442695
    %v5519 = vpow.pop %v5518
    %v5520 = vadd.f32 %v5519, 1.0
    %v5521 = vrcp.pop %v5520
    %v5522 = vmul.f32 1.0, %v5521
    %v5523 = vtanh.pop %v5509
    %v5524 = vxor.u32 %v5510, 2147483648
    %v5525 = vmul.f32 %v5524, 1.442695
    %v5526 = vpow.pop %v5525
    %v5527 = vadd.f32 %v5526, 1.0
    %v5528 = vrcp.pop %v5527
    %v5529 = vmul.f32 1.0, %v5528
    %v5530 = vmul.f32 %v5522, %v5210
    %v5531 = vmul.f32 %v5516, %v5523
    %v5532 = vadd.f32 %v5530, %v5531
    %v5533 = vtanh.pop %v5532
    %v5534 = vmul.f32 %v5529, %v5533
    %5535 = vmatprep.subr.bf16.mxu0 %v4141
    %5536 = vmatpush1.bf16.msra.mxu0 %v4140
    %5537 = vmatprep.subr.bf16.mxu0 %v4145
    %5538 = vmatpush1.bf16.msra.mxu0 %v4144
    %5539 = vmatprep.subr.bf16.mxu0 %v4149
    %5540 = vmatpush1.bf16.msra.mxu0 %v4148
    %5541 = vmatprep.subr.bf16.mxu0 %v4153
    %5542 = vmatpush1.bf16.msra.mxu0 %v4152
    %5543 = vmatprep.subr.bf16.mxu0 %v4157
    %5544 = vmatpush1.bf16.msra.mxu0 %v4156
    %5545 = vmatprep.subr.bf16.mxu0 %v4161
    %5546 = vmatpush1.bf16.msra.mxu0 %v4160
    %5547 = vmatprep.subr.bf16.mxu0 %v4165
    %5548 = vmatpush1.bf16.msra.mxu0 %v4164
    %5549 = vmatprep.subr.bf16.mxu0 %v4169
    %5550 = vmatpush1.bf16.msra.mxu0 %v4168
    %5551 = vmatprep.subr.bf16.mxu0 0
    %5552 = vmatpush1.bf16.msra.mxu0 0
    %5553 = vmatprep.subr.bf16.mxu0 0
    %5554 = vmatpush1.bf16.msra.mxu0 0
    %5555 = vmatprep.subr.bf16.mxu0 0
    %5556 = vmatpush1.bf16.msra.mxu0 0
    %5557 = vmatprep.subr.bf16.mxu0 0
    %5558 = vmatpush1.bf16.msra.mxu0 0
    %5559 = vmatprep.subr.bf16.mxu0 0
    %5560 = vmatpush1.bf16.msra.mxu0 0
    %5561 = vmatprep.subr.bf16.mxu0 0
    %5562 = vmatpush1.bf16.msra.mxu0 0
    %5563 = vmatprep.subr.bf16.mxu0 0
    %5564 = vmatpush1.bf16.msra.mxu0 0
    %5565 = vmatprep.subr.bf16.mxu0 0
    %5566 = vmatpush1.bf16.msra.mxu0 0
    %5567 = vmatprep.mubr.bf16.mxu0 0
    %5568 = vmatmul.mubr.bf16.gmra.mrb[0].mxu0 %v5423
    %v5569 = vpop.f32.mrb[0].mxu0
    %v5570 = vadd.f32 0.0, %v5569
    %v5571 = vpop.f32.mrb[0].mxu0
    %v5572 = vadd.f32 0.0, %v5571
    %v5573 = vpop.f32.mrb[0].mxu0
    %v5574 = vpop.f32.mrb[0].mxu0
    %5575 = vdwg.mxu0
    %5576 = vmatprep.subr.bf16.mxu0 %v4143
    %5577 = vmatpush1.bf16.msra.mxu0 %v4142
    %5578 = vmatprep.subr.bf16.mxu0 %v4147
    %5579 = vmatpush1.bf16.msra.mxu0 %v4146
    %5580 = vmatprep.subr.bf16.mxu0 %v4151
    %5581 = vmatpush1.bf16.msra.mxu0 %v4150
    %5582 = vmatprep.subr.bf16.mxu0 %v4155
    %5583 = vmatpush1.bf16.msra.mxu0 %v4154
    %5584 = vmatprep.subr.bf16.mxu0 %v4159
    %5585 = vmatpush1.bf16.msra.mxu0 %v4158
    %5586 = vmatprep.subr.bf16.mxu0 %v4163
    %5587 = vmatpush1.bf16.msra.mxu0 %v4162
    %5588 = vmatprep.subr.bf16.mxu0 %v4167
    %5589 = vmatpush1.bf16.msra.mxu0 %v4166
    %5590 = vmatprep.subr.bf16.mxu0 %v4171
    %5591 = vmatpush1.bf16.msra.mxu0 %v4170
    %5592 = vmatprep.subr.bf16.mxu0 0
    %5593 = vmatpush1.bf16.msra.mxu0 0
    %5594 = vmatprep.subr.bf16.mxu0 0
    %5595 = vmatpush1.bf16.msra.mxu0 0
    %5596 = vmatprep.subr.bf16.mxu0 0
    %5597 = vmatpush1.bf16.msra.mxu0 0
    %5598 = vmatprep.subr.bf16.mxu0 0
    %5599 = vmatpush1.bf16.msra.mxu0 0
    %5600 = vmatprep.subr.bf16.mxu0 0
    %5601 = vmatpush1.bf16.msra.mxu0 0
    %5602 = vmatprep.subr.bf16.mxu0 0
    %5603 = vmatpush1.bf16.msra.mxu0 0
    %5604 = vmatprep.subr.bf16.mxu0 0
    %5605 = vmatpush1.bf16.msra.mxu0 0
    %5606 = vmatprep.subr.bf16.mxu0 0
    %5607 = vmatpush1.bf16.msra.mxu0 0
    %5608 = vmatprep.mubr.bf16.mxu0 0
    %5609 = vmatmul.mubr.bf16.gmra.mrb[0].mxu0 %v5423
    %v5610 = vpop.f32.mrb[0].mxu0
    %v5611 = vadd.f32 0.0, %v5610
    %v5612 = vpop.f32.mrb[0].mxu0
    %v5613 = vadd.f32 0.0, %v5612
    %v5614 = vpop.f32.mrb[0].mxu0
    %v5615 = vpop.f32.mrb[0].mxu0
    %5616 = vdwg.mxu0
    %v5621 = vrot.slane %v5570, 2
    %v5622 = vrot.slane %v5572, 2
    %v5623 = vrot.slane %v5611, 2
    %v5624 = vrot.slane %v5613, 2
    %v5629 = vadd.f32 %v3939, %v5621
    %v5630 = vadd.f32 %v3941, %v5622
    %v5631 = vadd.f32 %v3982, %v5623
    %v5632 = vadd.f32 %v3984, %v5624
    %v5633 = vxor.u32 %v5629, 2147483648
    %v5634 = vmul.f32 %v5633, 1.442695
    %v5635 = vpow.pop %v5634
    %v5636 = vadd.f32 %v5635, 1.0
    %v5637 = vrcp.pop %v5636
    %v5638 = vmul.f32 1.0, %v5637
    %v5639 = vxor.u32 %v5630, 2147483648
    %v5640 = vmul.f32 %v5639, 1.442695
    %v5641 = vpow.pop %v5640
    %v5642 = vadd.f32 %v5641, 1.0
    %v5643 = vrcp.pop %v5642
    %v5644 = vmul.f32 1.0, %v5643
    %v5645 = vtanh.pop %v5631
    %v5646 = vxor.u32 %v5632, 2147483648
    %v5647 = vmul.f32 %v5646, 1.442695
    %v5648 = vpow.pop %v5647
    %v5649 = vadd.f32 %v5648, 1.0
    %v5650 = vrcp.pop %v5649
    %v5651 = vmul.f32 1.0, %v5650
    %v5653 = vrot.slane %v5335, 6
    %v5655 = vmul.f32 %v5644, %v5653
    %v5656 = vmul.f32 %v5638, %v5645
    %v5657 = vadd.f32 %v5655, %v5656
    %v5658 = vtanh.pop %v5657
    %v5659 = vmul.f32 %v5651, %v5658
    %v5660 = vpack.c.bf16 %v5659, %v5659
    %v5661 = vpack.c.bf16 %v5534, %v5534
    %5662 = vmatprep.subr.bf16.mxu0 %v4476
    %5663 = vmatpush1.bf16.msra.mxu0 %v4475
    %5664 = vmatprep.subr.bf16.mxu0 %v4480
    %5665 = vmatpush1.bf16.msra.mxu0 %v4479
    %5666 = vmatprep.subr.bf16.mxu0 %v4484
    %5667 = vmatpush1.bf16.msra.mxu0 %v4483
    %5668 = vmatprep.subr.bf16.mxu0 %v4488
    %5669 = vmatpush1.bf16.msra.mxu0 %v4487
    %5670 = vmatprep.subr.bf16.mxu0 %v4492
    %5671 = vmatpush1.bf16.msra.mxu0 %v4491
    %5672 = vmatprep.subr.bf16.mxu0 %v4496
    %5673 = vmatpush1.bf16.msra.mxu0 %v4495
    %5674 = vmatprep.subr.bf16.mxu0 %v4500
    %5675 = vmatpush1.bf16.msra.mxu0 %v4499
    %5676 = vmatprep.subr.bf16.mxu0 %v4504
    %5677 = vmatpush1.bf16.msra.mxu0 %v4503
    %5678 = vmatprep.subr.bf16.mxu0 0
    %5679 = vmatpush1.bf16.msra.mxu0 0
    %5680 = vmatprep.subr.bf16.mxu0 0
    %5681 = vmatpush1.bf16.msra.mxu0 0
    %5682 = vmatprep.subr.bf16.mxu0 0
    %5683 = vmatpush1.bf16.msra.mxu0 0
    %5684 = vmatprep.subr.bf16.mxu0 0
    %5685 = vmatpush1.bf16.msra.mxu0 0
    %5686 = vmatprep.subr.bf16.mxu0 0
    %5687 = vmatpush1.bf16.msra.mxu0 0
    %5688 = vmatprep.subr.bf16.mxu0 0
    %5689 = vmatpush1.bf16.msra.mxu0 0
    %5690 = vmatprep.subr.bf16.mxu0 0
    %5691 = vmatpush1.bf16.msra.mxu0 0
    %5692 = vmatprep.subr.bf16.mxu0 0
    %5693 = vmatpush1.bf16.msra.mxu0 0
    %5694 = vmatprep.mubr.bf16.mxu0 0
    %5695 = vmatmul.mubr.bf16.gmra.mrb[0].mxu0 %v5661
    %v5696 = vpop.f32.mrb[0].mxu0
    %v5697 = vadd.f32 0.0, %v5696
    %v5698 = vpop.f32.mrb[0].mxu0
    %v5699 = vadd.f32 0.0, %v5698
    %v5700 = vpop.f32.mrb[0].mxu0
    %v5701 = vpop.f32.mrb[0].mxu0
    %5702 = vdwg.mxu0
    %5703 = vmatprep.subr.bf16.mxu0 %v4478
    %5704 = vmatpush1.bf16.msra.mxu0 %v4477
    %5705 = vmatprep.subr.bf16.mxu0 %v4482
    %5706 = vmatpush1.bf16.msra.mxu0 %v4481
    %5707 = vmatprep.subr.bf16.mxu0 %v4486
    %5708 = vmatpush1.bf16.msra.mxu0 %v4485
    %5709 = vmatprep.subr.bf16.mxu0 %v4490
    %5710 = vmatpush1.bf16.msra.mxu0 %v4489
    %5711 = vmatprep.subr.bf16.mxu0 %v4494
    %5712 = vmatpush1.bf16.msra.mxu0 %v4493
    %5713 = vmatprep.subr.bf16.mxu0 %v4498
    %5714 = vmatpush1.bf16.msra.mxu0 %v4497
    %5715 = vmatprep.subr.bf16.mxu0 %v4502
    %5716 = vmatpush1.bf16.msra.mxu0 %v4501
    %5717 = vmatprep.subr.bf16.mxu0 %v4506
    %5718 = vmatpush1.bf16.msra.mxu0 %v4505
    %5719 = vmatprep.subr.bf16.mxu0 0
    %5720 = vmatpush1.bf16.msra.mxu0 0
    %5721 = vmatprep.subr.bf16.mxu0 0
    %5722 = vmatpush1.bf16.msra.mxu0 0
    %5723 = vmatprep.subr.bf16.mxu0 0
    %5724 = vmatpush1.bf16.msra.mxu0 0
    %5725 = vmatprep.subr.bf16.mxu0 0
    %5726 = vmatpush1.bf16.msra.mxu0 0
    %5727 = vmatprep.subr.bf16.mxu0 0
    %5728 = vmatpush1.bf16.msra.mxu0 0
    %5729 = vmatprep.subr.bf16.mxu0 0
    %5730 = vmatpush1.bf16.msra.mxu0 0
    %5731 = vmatprep.subr.bf16.mxu0 0
    %5732 = vmatpush1.bf16.msra.mxu0 0
    %5733 = vmatprep.subr.bf16.mxu0 0
    %5734 = vmatpush1.bf16.msra.mxu0 0
    %5735 = vmatprep.mubr.bf16.mxu0 0
    %5736 = vmatmul.mubr.bf16.gmra.mrb[0].mxu0 %v5661
    %v5737 = vpop.f32.mrb[0].mxu0
    %v5738 = vadd.f32 0.0, %v5737
    %v5739 = vpop.f32.mrb[0].mxu0
    %v5740 = vadd.f32 0.0, %v5739
    %v5741 = vpop.f32.mrb[0].mxu0
    %v5742 = vpop.f32.mrb[0].mxu0
    %5743 = vdwg.mxu0
    %v5745 = vrot.slane %v5660, 3
    %5747 = vmatprep.subr.bf16.mxu0 %v4718
    %5748 = vmatpush1.bf16.msra.mxu0 %v4717
    %5749 = vmatprep.subr.bf16.mxu0 %v4722
    %5750 = vmatpush1.bf16.msra.mxu0 %v4721
    %5751 = vmatprep.subr.bf16.mxu0 %v4726
    %5752 = vmatpush1.bf16.msra.mxu0 %v4725
    %5753 = vmatprep.subr.bf16.mxu0 %v4730
    %5754 = vmatpush1.bf16.msra.mxu0 %v4729
    %5755 = vmatprep.subr.bf16.mxu0 %v4734
    %5756 = vmatpush1.bf16.msra.mxu0 %v4733
    %5757 = vmatprep.subr.bf16.mxu0 %v4738
    %5758 = vmatpush1.bf16.msra.mxu0 %v4737
    %5759 = vmatprep.subr.bf16.mxu0 %v4742
    %5760 = vmatpush1.bf16.msra.mxu0 %v4741
    %5761 = vmatprep.subr.bf16.mxu0 %v4746
    %5762 = vmatpush1.bf16.msra.mxu0 %v4745
    %5763 = vmatprep.subr.bf16.mxu0 0
    %5764 = vmatpush1.bf16.msra.mxu0 0
    %5765 = vmatprep.subr.bf16.mxu0 0
    %5766 = vmatpush1.bf16.msra.mxu0 0
    %5767 = vmatprep.subr.bf16.mxu0 0
    %5768 = vmatpush1.bf16.msra.mxu0 0
    %5769 = vmatprep.subr.bf16.mxu0 0
    %5770 = vmatpush1.bf16.msra.mxu0 0
    %5771 = vmatprep.subr.bf16.mxu0 0
    %5772 = vmatpush1.bf16.msra.mxu0 0
    %5773 = vmatprep.subr.bf16.mxu0 0
    %5774 = vmatpush1.bf16.msra.mxu0 0
    %5775 = vmatprep.subr.bf16.mxu0 0
    %5776 = vmatpush1.bf16.msra.mxu0 0
    %5777 = vmatprep.subr.bf16.mxu0 0
    %5778 = vmatpush1.bf16.msra.mxu0 0
    %5779 = vmatprep.mubr.bf16.mxu0 0
    %5780 = vmatmul.mubr.bf16.gmra.mrb[0].mxu0 %v5745
    %v5781 = vpop.f32.mrb[0].mxu0
    %v5782 = vadd.f32 %v5697, %v5781
    %v5783 = vpop.f32.mrb[0].mxu0
    %v5784 = vadd.f32 %v5699, %v5783
    %v5785 = vpop.f32.mrb[0].mxu0
    %v5786 = vpop.f32.mrb[0].mxu0
    %5787 = vdwg.mxu0
    %5788 = vmatprep.subr.bf16.mxu0 %v4720
    %5789 = vmatpush1.bf16.msra.mxu0 %v4719
    %5790 = vmatprep.subr.bf16.mxu0 %v4724
    %5791 = vmatpush1.bf16.msra.mxu0 %v4723
    %5792 = vmatprep.subr.bf16.mxu0 %v4728
    %5793 = vmatpush1.bf16.msra.mxu0 %v4727
    %5794 = vmatprep.subr.bf16.mxu0 %v4732
    %5795 = vmatpush1.bf16.msra.mxu0 %v4731
    %5796 = vmatprep.subr.bf16.mxu0 %v4736
    %5797 = vmatpush1.bf16.msra.mxu0 %v4735
    %5798 = vmatprep.subr.bf16.mxu0 %v4740
    %5799 = vmatpush1.bf16.msra.mxu0 %v4739
    %5800 = vmatprep.subr.bf16.mxu0 %v4744
    %5801 = vmatpush1.bf16.msra.mxu0 %v4743
    %5802 = vmatprep.subr.bf16.mxu0 %v4748
    %5803 = vmatpush1.bf16.msra.mxu0 %v4747
    %5804 = vmatprep.subr.bf16.mxu0 0
    %5805 = vmatpush1.bf16.msra.mxu0 0
    %5806 = vmatprep.subr.bf16.mxu0 0
    %5807 = vmatpush1.bf16.msra.mxu0 0
    %5808 = vmatprep.subr.bf16.mxu0 0
    %5809 = vmatpush1.bf16.msra.mxu0 0
    %5810 = vmatprep.subr.bf16.mxu0 0
    %5811 = vmatpush1.bf16.msra.mxu0 0
    %5812 = vmatprep.subr.bf16.mxu0 0
    %5813 = vmatpush1.bf16.msra.mxu0 0
    %5814 = vmatprep.subr.bf16.mxu0 0
    %5815 = vmatpush1.bf16.msra.mxu0 0
    %5816 = vmatprep.subr.bf16.mxu0 0
    %5817 = vmatpush1.bf16.msra.mxu0 0
    %5818 = vmatprep.subr.bf16.mxu0 0
    %5819 = vmatpush1.bf16.msra.mxu0 0
    %5820 = vmatprep.mubr.bf16.mxu0 0
    %5821 = vmatmul.mubr.bf16.gmra.mrb[0].mxu0 %v5745
    %v5822 = vpop.f32.mrb[0].mxu0
    %v5823 = vadd.f32 %v5738, %v5822
    %v5824 = vpop.f32.mrb[0].mxu0
    %v5825 = vadd.f32 %v5740, %v5824
    %v5826 = vpop.f32.mrb[0].mxu0
    %v5827 = vpop.f32.mrb[0].mxu0
    %5828 = vdwg.mxu0
    %v5829 = vadd.f32 %v5782, %v3995
    %v5830 = vadd.f32 %v5784, %v3999
    %v5831 = vadd.f32 %v5823, %v4003
    %v5832 = vadd.f32 %v5825, %v4007
    %v5833 = vxor.u32 %v5829, 2147483648
    %v5834 = vmul.f32 %v5833, 1.442695
    %v5835 = vpow.pop %v5834
    %v5836 = vadd.f32 %v5835, 1.0
    %v5837 = vrcp.pop %v5836
    %v5838 = vmul.f32 1.0, %v5837
    %v5839 = vxor.u32 %v5830, 2147483648
    %v5840 = vmul.f32 %v5839, 1.442695
    %v5841 = vpow.pop %v5840
    %v5842 = vadd.f32 %v5841, 1.0
    %v5843 = vrcp.pop %v5842
    %v5844 = vmul.f32 1.0, %v5843
    %v5845 = vtanh.pop %v5831
    %v5846 = vxor.u32 %v5832, 2147483648
    %v5847 = vmul.f32 %v5846, 1.442695
    %v5848 = vpow.pop %v5847
    %v5849 = vadd.f32 %v5848, 1.0
    %v5850 = vrcp.pop %v5849
    %v5851 = vmul.f32 1.0, %v5850
    %v5852 = vmul.f32 %v5844, %v5532
    %v5853 = vmul.f32 %v5838, %v5845
    %v5854 = vadd.f32 %v5852, %v5853
    %v5855 = vtanh.pop %v5854
    %v5856 = vmul.f32 %v5851, %v5855
    %5857 = vmatprep.subr.bf16.mxu0 %v4141
    %5858 = vmatpush1.bf16.msra.mxu0 %v4140
    %5859 = vmatprep.subr.bf16.mxu0 %v4145
    %5860 = vmatpush1.bf16.msra.mxu0 %v4144
    %5861 = vmatprep.subr.bf16.mxu0 %v4149
    %5862 = vmatpush1.bf16.msra.mxu0 %v4148
    %5863 = vmatprep.subr.bf16.mxu0 %v4153
    %5864 = vmatpush1.bf16.msra.mxu0 %v4152
    %5865 = vmatprep.subr.bf16.mxu0 %v4157
    %5866 = vmatpush1.bf16.msra.mxu0 %v4156
    %5867 = vmatprep.subr.bf16.mxu0 %v4161
    %5868 = vmatpush1.bf16.msra.mxu0 %v4160
    %5869 = vmatprep.subr.bf16.mxu0 %v4165
    %5870 = vmatpush1.bf16.msra.mxu0 %v4164
    %5871 = vmatprep.subr.bf16.mxu0 %v4169
    %5872 = vmatpush1.bf16.msra.mxu0 %v4168
    %5873 = vmatprep.subr.bf16.mxu0 0
    %5874 = vmatpush1.bf16.msra.mxu0 0
    %5875 = vmatprep.subr.bf16.mxu0 0
    %5876 = vmatpush1.bf16.msra.mxu0 0
    %5877 = vmatprep.subr.bf16.mxu0 0
    %5878 = vmatpush1.bf16.msra.mxu0 0
    %5879 = vmatprep.subr.bf16.mxu0 0
    %5880 = vmatpush1.bf16.msra.mxu0 0
    %5881 = vmatprep.subr.bf16.mxu0 0
    %5882 = vmatpush1.bf16.msra.mxu0 0
    %5883 = vmatprep.subr.bf16.mxu0 0
    %5884 = vmatpush1.bf16.msra.mxu0 0
    %5885 = vmatprep.subr.bf16.mxu0 0
    %5886 = vmatpush1.bf16.msra.mxu0 0
    %5887 = vmatprep.subr.bf16.mxu0 0
    %5888 = vmatpush1.bf16.msra.mxu0 0
    %5889 = vmatprep.mubr.bf16.mxu0 0
    %5890 = vmatmul.mubr.bf16.gmra.mrb[0].mxu0 %v5745
    %v5891 = vpop.f32.mrb[0].mxu0
    %v5892 = vadd.f32 0.0, %v5891
    %v5893 = vpop.f32.mrb[0].mxu0
    %v5894 = vadd.f32 0.0, %v5893
    %v5895 = vpop.f32.mrb[0].mxu0
    %v5896 = vpop.f32.mrb[0].mxu0
    %5897 = vdwg.mxu0
    %5898 = vmatprep.subr.bf16.mxu0 %v4143
    %5899 = vmatpush1.bf16.msra.mxu0 %v4142
    %5900 = vmatprep.subr.bf16.mxu0 %v4147
    %5901 = vmatpush1.bf16.msra.mxu0 %v4146
    %5902 = vmatprep.subr.bf16.mxu0 %v4151
    %5903 = vmatpush1.bf16.msra.mxu0 %v4150
    %5904 = vmatprep.subr.bf16.mxu0 %v4155
    %5905 = vmatpush1.bf16.msra.mxu0 %v4154
    %5906 = vmatprep.subr.bf16.mxu0 %v4159
    %5907 = vmatpush1.bf16.msra.mxu0 %v4158
    %5908 = vmatprep.subr.bf16.mxu0 %v4163
    %5909 = vmatpush1.bf16.msra.mxu0 %v4162
    %5910 = vmatprep.subr.bf16.mxu0 %v4167
    %5911 = vmatpush1.bf16.msra.mxu0 %v4166
    %5912 = vmatprep.subr.bf16.mxu0 %v4171
    %5913 = vmatpush1.bf16.msra.mxu0 %v4170
    %5914 = vmatprep.subr.bf16.mxu0 0
    %5915 = vmatpush1.bf16.msra.mxu0 0
    %5916 = vmatprep.subr.bf16.mxu0 0
    %5917 = vmatpush1.bf16.msra.mxu0 0
    %5918 = vmatprep.subr.bf16.mxu0 0
    %5919 = vmatpush1.bf16.msra.mxu0 0
    %5920 = vmatprep.subr.bf16.mxu0 0
    %5921 = vmatpush1.bf16.msra.mxu0 0
    %5922 = vmatprep.subr.bf16.mxu0 0
    %5923 = vmatpush1.bf16.msra.mxu0 0
    %5924 = vmatprep.subr.bf16.mxu0 0
    %5925 = vmatpush1.bf16.msra.mxu0 0
    %5926 = vmatprep.subr.bf16.mxu0 0
    %5927 = vmatpush1.bf16.msra.mxu0 0
    %5928 = vmatprep.subr.bf16.mxu0 0
    %5929 = vmatpush1.bf16.msra.mxu0 0
    %5930 = vmatprep.mubr.bf16.mxu0 0
    %5931 = vmatmul.mubr.bf16.gmra.mrb[0].mxu0 %v5745
    %v5932 = vpop.f32.mrb[0].mxu0
    %v5933 = vadd.f32 0.0, %v5932
    %v5934 = vpop.f32.mrb[0].mxu0
    %v5935 = vadd.f32 0.0, %v5934
    %v5936 = vpop.f32.mrb[0].mxu0
    %v5937 = vpop.f32.mrb[0].mxu0
    %5938 = vdwg.mxu0
    %v5939 = vadd.f32 %v3943, %v5892
    %v5940 = vadd.f32 %v3945, %v5894
    %v5941 = vadd.f32 %v3986, %v5933
    %v5942 = vadd.f32 %v3988, %v5935
    %v5943 = vxor.u32 %v5939, 2147483648
    %v5944 = vmul.f32 %v5943, 1.442695
    %v5945 = vpow.pop %v5944
    %v5946 = vadd.f32 %v5945, 1.0
    %v5947 = vrcp.pop %v5946
    %v5948 = vmul.f32 1.0, %v5947
    %v5949 = vxor.u32 %v5940, 2147483648
    %v5950 = vmul.f32 %v5949, 1.442695
    %v5951 = vpow.pop %v5950
    %v5952 = vadd.f32 %v5951, 1.0
    %v5953 = vrcp.pop %v5952
    %v5954 = vmul.f32 1.0, %v5953
    %v5955 = vtanh.pop %v5941
    %v5956 = vxor.u32 %v5942, 2147483648
    %v5957 = vmul.f32 %v5956, 1.442695
    %v5958 = vpow.pop %v5957
    %v5959 = vadd.f32 %v5958, 1.0
    %v5960 = vrcp.pop %v5959
    %v5961 = vmul.f32 1.0, %v5960
    %v5963 = vrot.slane %v5657, 6
    %v5965 = vmul.f32 %v5954, %v5963
    %v5966 = vmul.f32 %v5948, %v5955
    %v5967 = vadd.f32 %v5965, %v5966
    %v5968 = vtanh.pop %v5967
    %v5969 = vmul.f32 %v5961, %v5968
    %v5970 = vpack.c.bf16 %v5969, %v5969
    %v5971 = vpack.c.bf16 %v5856, %v5856
    %5972 = vmatprep.subr.bf16.mxu0 %v4476
    %5973 = vmatpush1.bf16.msra.mxu0 %v4475
    %5974 = vmatprep.subr.bf16.mxu0 %v4480
    %5975 = vmatpush1.bf16.msra.mxu0 %v4479
    %5976 = vmatprep.subr.bf16.mxu0 %v4484
    %5977 = vmatpush1.bf16.msra.mxu0 %v4483
    %5978 = vmatprep.subr.bf16.mxu0 %v4488
    %5979 = vmatpush1.bf16.msra.mxu0 %v4487
    %5980 = vmatprep.subr.bf16.mxu0 %v4492
    %5981 = vmatpush1.bf16.msra.mxu0 %v4491
    %5982 = vmatprep.subr.bf16.mxu0 %v4496
    %5983 = vmatpush1.bf16.msra.mxu0 %v4495
    %5984 = vmatprep.subr.bf16.mxu0 %v4500
    %5985 = vmatpush1.bf16.msra.mxu0 %v4499
    %5986 = vmatprep.subr.bf16.mxu0 %v4504
    %5987 = vmatpush1.bf16.msra.mxu0 %v4503
    %5988 = vmatprep.subr.bf16.mxu0 0
    %5989 = vmatpush1.bf16.msra.mxu0 0
    %5990 = vmatprep.subr.bf16.mxu0 0
    %5991 = vmatpush1.bf16.msra.mxu0 0
    %5992 = vmatprep.subr.bf16.mxu0 0
    %5993 = vmatpush1.bf16.msra.mxu0 0
    %5994 = vmatprep.subr.bf16.mxu0 0
    %5995 = vmatpush1.bf16.msra.mxu0 0
    %5996 = vmatprep.subr.bf16.mxu0 0
    %5997 = vmatpush1.bf16.msra.mxu0 0
    %5998 = vmatprep.subr.bf16.mxu0 0
    %5999 = vmatpush1.bf16.msra.mxu0 0
    %6000 = vmatprep.subr.bf16.mxu0 0
    %6001 = vmatpush1.bf16.msra.mxu0 0
    %6002 = vmatprep.subr.bf16.mxu0 0
    %6003 = vmatpush1.bf16.msra.mxu0 0
    %6004 = vmatprep.mubr.bf16.mxu0 0
    %6005 = vmatmul.mubr.bf16.gmra.mrb[0].mxu0 %v5971
    %v6006 = vpop.f32.mrb[0].mxu0
    %v6007 = vadd.f32 0.0, %v6006
    %v6008 = vpop.f32.mrb[0].mxu0
    %v6009 = vadd.f32 0.0, %v6008
    %v6010 = vpop.f32.mrb[0].mxu0
    %v6011 = vpop.f32.mrb[0].mxu0
    %6012 = vdwg.mxu0
    %6013 = vmatprep.subr.bf16.mxu0 %v4478
    %6014 = vmatpush1.bf16.msra.mxu0 %v4477
    %6015 = vmatprep.subr.bf16.mxu0 %v4482
    %6016 = vmatpush1.bf16.msra.mxu0 %v4481
    %6017 = vmatprep.subr.bf16.mxu0 %v4486
    %6018 = vmatpush1.bf16.msra.mxu0 %v4485
    %6019 = vmatprep.subr.bf16.mxu0 %v4490
    %6020 = vmatpush1.bf16.msra.mxu0 %v4489
    %6021 = vmatprep.subr.bf16.mxu0 %v4494
    %6022 = vmatpush1.bf16.msra.mxu0 %v4493
    %6023 = vmatprep.subr.bf16.mxu0 %v4498
    %6024 = vmatpush1.bf16.msra.mxu0 %v4497
    %6025 = vmatprep.subr.bf16.mxu0 %v4502
    %6026 = vmatpush1.bf16.msra.mxu0 %v4501
    %6027 = vmatprep.subr.bf16.mxu0 %v4506
    %6028 = vmatpush1.bf16.msra.mxu0 %v4505
    %6029 = vmatprep.subr.bf16.mxu0 0
    %6030 = vmatpush1.bf16.msra.mxu0 0
    %6031 = vmatprep.subr.bf16.mxu0 0
    %6032 = vmatpush1.bf16.msra.mxu0 0
    %6033 = vmatprep.subr.bf16.mxu0 0
    %6034 = vmatpush1.bf16.msra.mxu0 0
    %6035 = vmatprep.subr.bf16.mxu0 0
    %6036 = vmatpush1.bf16.msra.mxu0 0
    %6037 = vmatprep.subr.bf16.mxu0 0
    %6038 = vmatpush1.bf16.msra.mxu0 0
    %6039 = vmatprep.subr.bf16.mxu0 0
    %6040 = vmatpush1.bf16.msra.mxu0 0
    %6041 = vmatprep.subr.bf16.mxu0 0
    %6042 = vmatpush1.bf16.msra.mxu0 0
    %6043 = vmatprep.subr.bf16.mxu0 0
    %6044 = vmatpush1.bf16.msra.mxu0 0
    %6045 = vmatprep.mubr.bf16.mxu0 0
    %6046 = vmatmul.mubr.bf16.gmra.mrb[0].mxu0 %v5971
    %v6047 = vpop.f32.mrb[0].mxu0
    %v6048 = vadd.f32 0.0, %v6047
    %v6049 = vpop.f32.mrb[0].mxu0
    %v6050 = vadd.f32 0.0, %v6049
    %v6051 = vpop.f32.mrb[0].mxu0
    %v6052 = vpop.f32.mrb[0].mxu0
    %6053 = vdwg.mxu0
    %6054 = vmatprep.subr.bf16.mxu0 %v4718
    %6055 = vmatpush1.bf16.msra.mxu0 %v4717
    %6056 = vmatprep.subr.bf16.mxu0 %v4722
    %6057 = vmatpush1.bf16.msra.mxu0 %v4721
    %6058 = vmatprep.subr.bf16.mxu0 %v4726
    %6059 = vmatpush1.bf16.msra.mxu0 %v4725
    %6060 = vmatprep.subr.bf16.mxu0 %v4730
    %6061 = vmatpush1.bf16.msra.mxu0 %v4729
    %6062 = vmatprep.subr.bf16.mxu0 %v4734
    %6063 = vmatpush1.bf16.msra.mxu0 %v4733
    %6064 = vmatprep.subr.bf16.mxu0 %v4738
    %6065 = vmatpush1.bf16.msra.mxu0 %v4737
    %6066 = vmatprep.subr.bf16.mxu0 %v4742
    %6067 = vmatpush1.bf16.msra.mxu0 %v4741
    %6068 = vmatprep.subr.bf16.mxu0 %v4746
    %6069 = vmatpush1.bf16.msra.mxu0 %v4745
    %6070 = vmatprep.subr.bf16.mxu0 0
    %6071 = vmatpush1.bf16.msra.mxu0 0
    %6072 = vmatprep.subr.bf16.mxu0 0
    %6073 = vmatpush1.bf16.msra.mxu0 0
    %6074 = vmatprep.subr.bf16.mxu0 0
    %6075 = vmatpush1.bf16.msra.mxu0 0
    %6076 = vmatprep.subr.bf16.mxu0 0
    %6077 = vmatpush1.bf16.msra.mxu0 0
    %6078 = vmatprep.subr.bf16.mxu0 0
    %6079 = vmatpush1.bf16.msra.mxu0 0
    %6080 = vmatprep.subr.bf16.mxu0 0
    %6081 = vmatpush1.bf16.msra.mxu0 0
    %6082 = vmatprep.subr.bf16.mxu0 0
    %6083 = vmatpush1.bf16.msra.mxu0 0
    %6084 = vmatprep.subr.bf16.mxu0 0
    %6085 = vmatpush1.bf16.msra.mxu0 0
    %6086 = vmatprep.mubr.bf16.mxu0 0
    %6087 = vmatmul.mubr.bf16.gmra.mrb[0].mxu0 %v5970
    %v6088 = vpop.f32.mrb[0].mxu0
    %v6089 = vadd.f32 %v6007, %v6088
    %v6090 = vpop.f32.mrb[0].mxu0
    %v6091 = vadd.f32 %v6009, %v6090
    %v6092 = vpop.f32.mrb[0].mxu0
    %v6093 = vpop.f32.mrb[0].mxu0
    %6094 = vdwg.mxu0
    %6095 = vmatprep.subr.bf16.mxu0 %v4720
    %6096 = vmatpush1.bf16.msra.mxu0 %v4719
    %6097 = vmatprep.subr.bf16.mxu0 %v4724
    %6098 = vmatpush1.bf16.msra.mxu0 %v4723
    %6099 = vmatprep.subr.bf16.mxu0 %v4728
    %6100 = vmatpush1.bf16.msra.mxu0 %v4727
    %6101 = vmatprep.subr.bf16.mxu0 %v4732
    %6102 = vmatpush1.bf16.msra.mxu0 %v4731
    %6103 = vmatprep.subr.bf16.mxu0 %v4736
    %6104 = vmatpush1.bf16.msra.mxu0 %v4735
    %6105 = vmatprep.subr.bf16.mxu0 %v4740
    %6106 = vmatpush1.bf16.msra.mxu0 %v4739
    %6107 = vmatprep.subr.bf16.mxu0 %v4744
    %6108 = vmatpush1.bf16.msra.mxu0 %v4743
    %6109 = vmatprep.subr.bf16.mxu0 %v4748
    %6110 = vmatpush1.bf16.msra.mxu0 %v4747
    %6111 = vmatprep.subr.bf16.mxu0 0
    %6112 = vmatpush1.bf16.msra.mxu0 0
    %6113 = vmatprep.subr.bf16.mxu0 0
    %6114 = vmatpush1.bf16.msra.mxu0 0
    %6115 = vmatprep.subr.bf16.mxu0 0
    %6116 = vmatpush1.bf16.msra.mxu0 0
    %6117 = vmatprep.subr.bf16.mxu0 0
    %6118 = vmatpush1.bf16.msra.mxu0 0
    %6119 = vmatprep.subr.bf16.mxu0 0
    %6120 = vmatpush1.bf16.msra.mxu0 0
    %6121 = vmatprep.subr.bf16.mxu0 0
    %6122 = vmatpush1.bf16.msra.mxu0 0
    %6123 = vmatprep.subr.bf16.mxu0 0
    %6124 = vmatpush1.bf16.msra.mxu0 0
    %6125 = vmatprep.subr.bf16.mxu0 0
    %6126 = vmatpush1.bf16.msra.mxu0 0
    %6127 = vmatprep.mubr.bf16.mxu0 0
    %6128 = vmatmul.mubr.bf16.gmra.mrb[0].mxu0 %v5970
    %v6129 = vpop.f32.mrb[0].mxu0
    %v6130 = vadd.f32 %v6048, %v6129
    %v6131 = vpop.f32.mrb[0].mxu0
    %v6132 = vadd.f32 %v6050, %v6131
    %v6133 = vpop.f32.mrb[0].mxu0
    %v6134 = vpop.f32.mrb[0].mxu0
    %6135 = vdwg.mxu0
    %v6136 = vadd.f32 %v6089, %v3995
    %v6137 = vadd.f32 %v6091, %v3999
    %v6138 = vadd.f32 %v6130, %v4003
    %v6139 = vadd.f32 %v6132, %v4007
    %v6140 = vxor.u32 %v6136, 2147483648
    %v6141 = vmul.f32 %v6140, 1.442695
    %v6142 = vpow.pop %v6141
    %v6143 = vadd.f32 %v6142, 1.0
    %v6144 = vrcp.pop %v6143
    %v6145 = vmul.f32 1.0, %v6144
    %v6146 = vxor.u32 %v6137, 2147483648
    %v6147 = vmul.f32 %v6146, 1.442695
    %v6148 = vpow.pop %v6147
    %v6149 = vadd.f32 %v6148, 1.0
    %v6150 = vrcp.pop %v6149
    %v6151 = vmul.f32 1.0, %v6150
    %v6152 = vtanh.pop %v6138
    %v6153 = vxor.u32 %v6139, 2147483648
    %v6154 = vmul.f32 %v6153, 1.442695
    %v6155 = vpow.pop %v6154
    %v6156 = vadd.f32 %v6155, 1.0
    %v6157 = vrcp.pop %v6156
    %v6158 = vmul.f32 1.0, %v6157
    %v6159 = vmul.f32 %v6151, %v5854
    %v6160 = vmul.f32 %v6145, %v6152
    %v6161 = vadd.f32 %v6159, %v6160
    %v6162 = vtanh.pop %v6161
    %v6163 = vmul.f32 %v6158, %v6162
    %6164 = vmatprep.subr.bf16.mxu0 %v4141
    %6165 = vmatpush1.bf16.msra.mxu0 %v4140
    %6166 = vmatprep.subr.bf16.mxu0 %v4145
    %6167 = vmatpush1.bf16.msra.mxu0 %v4144
    %6168 = vmatprep.subr.bf16.mxu0 %v4149
    %6169 = vmatpush1.bf16.msra.mxu0 %v4148
    %6170 = vmatprep.subr.bf16.mxu0 %v4153
    %6171 = vmatpush1.bf16.msra.mxu0 %v4152
    %6172 = vmatprep.subr.bf16.mxu0 %v4157
    %6173 = vmatpush1.bf16.msra.mxu0 %v4156
    %6174 = vmatprep.subr.bf16.mxu0 %v4161
    %6175 = vmatpush1.bf16.msra.mxu0 %v4160
    %6176 = vmatprep.subr.bf16.mxu0 %v4165
    %6177 = vmatpush1.bf16.msra.mxu0 %v4164
    %6178 = vmatprep.subr.bf16.mxu0 %v4169
    %6179 = vmatpush1.bf16.msra.mxu0 %v4168
    %6180 = vmatprep.subr.bf16.mxu0 0
    %6181 = vmatpush1.bf16.msra.mxu0 0
    %6182 = vmatprep.subr.bf16.mxu0 0
    %6183 = vmatpush1.bf16.msra.mxu0 0
    %6184 = vmatprep.subr.bf16.mxu0 0
    %6185 = vmatpush1.bf16.msra.mxu0 0
    %6186 = vmatprep.subr.bf16.mxu0 0
    %6187 = vmatpush1.bf16.msra.mxu0 0
    %6188 = vmatprep.subr.bf16.mxu0 0
    %6189 = vmatpush1.bf16.msra.mxu0 0
    %6190 = vmatprep.subr.bf16.mxu0 0
    %6191 = vmatpush1.bf16.msra.mxu0 0
    %6192 = vmatprep.subr.bf16.mxu0 0
    %6193 = vmatpush1.bf16.msra.mxu0 0
    %6194 = vmatprep.subr.bf16.mxu0 0
    %6195 = vmatpush1.bf16.msra.mxu0 0
    %6196 = vmatprep.mubr.bf16.mxu0 0
    %6197 = vmatmul.mubr.bf16.gmra.mrb[0].mxu0 %v5970
    %v6198 = vpop.f32.mrb[0].mxu0
    %v6199 = vadd.f32 0.0, %v6198
    %v6200 = vpop.f32.mrb[0].mxu0
    %v6201 = vadd.f32 0.0, %v6200
    %v6202 = vpop.f32.mrb[0].mxu0
    %v6203 = vpop.f32.mrb[0].mxu0
    %6204 = vdwg.mxu0
    %6205 = vmatprep.subr.bf16.mxu0 %v4143
    %6206 = vmatpush1.bf16.msra.mxu0 %v4142
    %6207 = vmatprep.subr.bf16.mxu0 %v4147
    %6208 = vmatpush1.bf16.msra.mxu0 %v4146
    %6209 = vmatprep.subr.bf16.mxu0 %v4151
    %6210 = vmatpush1.bf16.msra.mxu0 %v4150
    %6211 = vmatprep.subr.bf16.mxu0 %v4155
    %6212 = vmatpush1.bf16.msra.mxu0 %v4154
    %6213 = vmatprep.subr.bf16.mxu0 %v4159
    %6214 = vmatpush1.bf16.msra.mxu0 %v4158
    %6215 = vmatprep.subr.bf16.mxu0 %v4163
    %6216 = vmatpush1.bf16.msra.mxu0 %v4162
    %6217 = vmatprep.subr.bf16.mxu0 %v4167
    %6218 = vmatpush1.bf16.msra.mxu0 %v4166
    %6219 = vmatprep.subr.bf16.mxu0 %v4171
    %6220 = vmatpush1.bf16.msra.mxu0 %v4170
    %6221 = vmatprep.subr.bf16.mxu0 0
    %6222 = vmatpush1.bf16.msra.mxu0 0
    %6223 = vmatprep.subr.bf16.mxu0 0
    %6224 = vmatpush1.bf16.msra.mxu0 0
    %6225 = vmatprep.subr.bf16.mxu0 0
    %6226 = vmatpush1.bf16.msra.mxu0 0
    %6227 = vmatprep.subr.bf16.mxu0 0
    %6228 = vmatpush1.bf16.msra.mxu0 0
    %6229 = vmatprep.subr.bf16.mxu0 0
    %6230 = vmatpush1.bf16.msra.mxu0 0
    %6231 = vmatprep.subr.bf16.mxu0 0
    %6232 = vmatpush1.bf16.msra.mxu0 0
    %6233 = vmatprep.subr.bf16.mxu0 0
    %6234 = vmatpush1.bf16.msra.mxu0 0
    %6235 = vmatprep.subr.bf16.mxu0 0
    %6236 = vmatpush1.bf16.msra.mxu0 0
    %6237 = vmatprep.mubr.bf16.mxu0 0
    %6238 = vmatmul.mubr.bf16.gmra.mrb[0].mxu0 %v5970
    %v6239 = vpop.f32.mrb[0].mxu0
    %v6240 = vadd.f32 0.0, %v6239
    %v6241 = vpop.f32.mrb[0].mxu0
    %v6242 = vadd.f32 0.0, %v6241
    %v6243 = vpop.f32.mrb[0].mxu0
    %v6244 = vpop.f32.mrb[0].mxu0
    %6245 = vdwg.mxu0
    %v6250 = vrot.slane %v6199, 6
    %v6251 = vrot.slane %v6201, 6
    %v6252 = vrot.slane %v6240, 6
    %v6253 = vrot.slane %v6242, 6
    %v6258 = vadd.f32 %v3943, %v6250
    %v6259 = vadd.f32 %v3945, %v6251
    %v6260 = vadd.f32 %v3986, %v6252
    %v6261 = vadd.f32 %v3988, %v6253
    %v6262 = vxor.u32 %v6258, 2147483648
    %v6263 = vmul.f32 %v6262, 1.442695
    %v6264 = vpow.pop %v6263
    %v6265 = vadd.f32 %v6264, 1.0
    %v6266 = vrcp.pop %v6265
    %v6267 = vmul.f32 1.0, %v6266
    %v6268 = vxor.u32 %v6259, 2147483648
    %v6269 = vmul.f32 %v6268, 1.442695
    %v6270 = vpow.pop %v6269
    %v6271 = vadd.f32 %v6270, 1.0
    %v6272 = vrcp.pop %v6271
    %v6273 = vmul.f32 1.0, %v6272
    %v6274 = vtanh.pop %v6260
    %v6275 = vxor.u32 %v6261, 2147483648
    %v6276 = vmul.f32 %v6275, 1.442695
    %v6277 = vpow.pop %v6276
    %v6278 = vadd.f32 %v6277, 1.0
    %v6279 = vrcp.pop %v6278
    %v6280 = vmul.f32 1.0, %v6279
    %v6282 = vrot.slane %v5967, 6
    %v6284 = vmul.f32 %v6273, %v6282
    %v6285 = vmul.f32 %v6267, %v6274
    %v6286 = vadd.f32 %v6284, %v6285
    %v6287 = vtanh.pop %v6286
    %v6288 = vmul.f32 %v6280, %v6287
    %v6289 = vpack.c.bf16 %v6288, %v6288
    %v6290 = vpack.c.bf16 %v6163, %v6163
    %6291 = vmatprep.subr.bf16.mxu0 %v4476
    %6292 = vmatpush1.bf16.msra.mxu0 %v4475
    %6293 = vmatprep.subr.bf16.mxu0 %v4480
    %6294 = vmatpush1.bf16.msra.mxu0 %v4479
    %6295 = vmatprep.subr.bf16.mxu0 %v4484
    %6296 = vmatpush1.bf16.msra.mxu0 %v4483
    %6297 = vmatprep.subr.bf16.mxu0 %v4488
    %6298 = vmatpush1.bf16.msra.mxu0 %v4487
    %6299 = vmatprep.subr.bf16.mxu0 %v4492
    %6300 = vmatpush1.bf16.msra.mxu0 %v4491
    %6301 = vmatprep.subr.bf16.mxu0 %v4496
    %6302 = vmatpush1.bf16.msra.mxu0 %v4495
    %6303 = vmatprep.subr.bf16.mxu0 %v4500
    %6304 = vmatpush1.bf16.msra.mxu0 %v4499
    %6305 = vmatprep.subr.bf16.mxu0 %v4504
    %6306 = vmatpush1.bf16.msra.mxu0 %v4503
    %6307 = vmatprep.subr.bf16.mxu0 0
    %6308 = vmatpush1.bf16.msra.mxu0 0
    %6309 = vmatprep.subr.bf16.mxu0 0
    %6310 = vmatpush1.bf16.msra.mxu0 0
    %6311 = vmatprep.subr.bf16.mxu0 0
    %6312 = vmatpush1.bf16.msra.mxu0 0
    %6313 = vmatprep.subr.bf16.mxu0 0
    %6314 = vmatpush1.bf16.msra.mxu0 0
    %6315 = vmatprep.subr.bf16.mxu0 0
    %6316 = vmatpush1.bf16.msra.mxu0 0
    %6317 = vmatprep.subr.bf16.mxu0 0
    %6318 = vmatpush1.bf16.msra.mxu0 0
    %6319 = vmatprep.subr.bf16.mxu0 0
    %6320 = vmatpush1.bf16.msra.mxu0 0
    %6321 = vmatprep.subr.bf16.mxu0 0
    %6322 = vmatpush1.bf16.msra.mxu0 0
    %6323 = vmatprep.mubr.bf16.mxu0 0
    %6324 = vmatmul.mubr.bf16.gmra.mrb[0].mxu0 %v6290
    %v6325 = vpop.f32.mrb[0].mxu0
    %v6326 = vadd.f32 0.0, %v6325
    %v6327 = vpop.f32.mrb[0].mxu0
    %v6328 = vadd.f32 0.0, %v6327
    %v6329 = vpop.f32.mrb[0].mxu0
    %v6330 = vpop.f32.mrb[0].mxu0
    %6331 = vdwg.mxu0
    %6332 = vmatprep.subr.bf16.mxu0 %v4478
    %6333 = vmatpush1.bf16.msra.mxu0 %v4477
    %6334 = vmatprep.subr.bf16.mxu0 %v4482
    %6335 = vmatpush1.bf16.msra.mxu0 %v4481
    %6336 = vmatprep.subr.bf16.mxu0 %v4486
    %6337 = vmatpush1.bf16.msra.mxu0 %v4485
    %6338 = vmatprep.subr.bf16.mxu0 %v4490
    %6339 = vmatpush1.bf16.msra.mxu0 %v4489
    %6340 = vmatprep.subr.bf16.mxu0 %v4494
    %6341 = vmatpush1.bf16.msra.mxu0 %v4493
    %6342 = vmatprep.subr.bf16.mxu0 %v4498
    %6343 = vmatpush1.bf16.msra.mxu0 %v4497
    %6344 = vmatprep.subr.bf16.mxu0 %v4502
    %6345 = vmatpush1.bf16.msra.mxu0 %v4501
    %6346 = vmatprep.subr.bf16.mxu0 %v4506
    %6347 = vmatpush1.bf16.msra.mxu0 %v4505
    %6348 = vmatprep.subr.bf16.mxu0 0
    %6349 = vmatpush1.bf16.msra.mxu0 0
    %6350 = vmatprep.subr.bf16.mxu0 0
    %6351 = vmatpush1.bf16.msra.mxu0 0
    %6352 = vmatprep.subr.bf16.mxu0 0
    %6353 = vmatpush1.bf16.msra.mxu0 0
    %6354 = vmatprep.subr.bf16.mxu0 0
    %6355 = vmatpush1.bf16.msra.mxu0 0
    %6356 = vmatprep.subr.bf16.mxu0 0
    %6357 = vmatpush1.bf16.msra.mxu0 0
    %6358 = vmatprep.subr.bf16.mxu0 0
    %6359 = vmatpush1.bf16.msra.mxu0 0
    %6360 = vmatprep.subr.bf16.mxu0 0
    %6361 = vmatpush1.bf16.msra.mxu0 0
    %6362 = vmatprep.subr.bf16.mxu0 0
    %6363 = vmatpush1.bf16.msra.mxu0 0
    %6364 = vmatprep.mubr.bf16.mxu0 0
    %6365 = vmatmul.mubr.bf16.gmra.mrb[0].mxu0 %v6290
    %v6366 = vpop.f32.mrb[0].mxu0
    %v6367 = vadd.f32 0.0, %v6366
    %v6368 = vpop.f32.mrb[0].mxu0
    %v6369 = vadd.f32 0.0, %v6368
    %v6370 = vpop.f32.mrb[0].mxu0
    %v6371 = vpop.f32.mrb[0].mxu0
    %6372 = vdwg.mxu0
    %v6374 = vrot.slane %v6289, 1
    %6376 = vmatprep.subr.bf16.mxu0 %v4718
    %6377 = vmatpush1.bf16.msra.mxu0 %v4717
    %6378 = vmatprep.subr.bf16.mxu0 %v4722
    %6379 = vmatpush1.bf16.msra.mxu0 %v4721
    %6380 = vmatprep.subr.bf16.mxu0 %v4726
    %6381 = vmatpush1.bf16.msra.mxu0 %v4725
    %6382 = vmatprep.subr.bf16.mxu0 %v4730
    %6383 = vmatpush1.bf16.msra.mxu0 %v4729
    %6384 = vmatprep.subr.bf16.mxu0 %v4734
    %6385 = vmatpush1.bf16.msra.mxu0 %v4733
    %6386 = vmatprep.subr.bf16.mxu0 %v4738
    %6387 = vmatpush1.bf16.msra.mxu0 %v4737
    %6388 = vmatprep.subr.bf16.mxu0 %v4742
    %6389 = vmatpush1.bf16.msra.mxu0 %v4741
    %6390 = vmatprep.subr.bf16.mxu0 %v4746
    %6391 = vmatpush1.bf16.msra.mxu0 %v4745
    %6392 = vmatprep.subr.bf16.mxu0 0
    %6393 = vmatpush1.bf16.msra.mxu0 0
    %6394 = vmatprep.subr.bf16.mxu0 0
    %6395 = vmatpush1.bf16.msra.mxu0 0
    %6396 = vmatprep.subr.bf16.mxu0 0
    %6397 = vmatpush1.bf16.msra.mxu0 0
    %6398 = vmatprep.subr.bf16.mxu0 0
    %6399 = vmatpush1.bf16.msra.mxu0 0
    %6400 = vmatprep.subr.bf16.mxu0 0
    %6401 = vmatpush1.bf16.msra.mxu0 0
    %6402 = vmatprep.subr.bf16.mxu0 0
    %6403 = vmatpush1.bf16.msra.mxu0 0
    %6404 = vmatprep.subr.bf16.mxu0 0
    %6405 = vmatpush1.bf16.msra.mxu0 0
    %6406 = vmatprep.subr.bf16.mxu0 0
    %6407 = vmatpush1.bf16.msra.mxu0 0
    %6408 = vmatprep.mubr.bf16.mxu0 0
    %6409 = vmatmul.mubr.bf16.gmra.mrb[0].mxu0 %v6374
    %v6410 = vpop.f32.mrb[0].mxu0
    %v6411 = vadd.f32 %v6326, %v6410
    %v6412 = vpop.f32.mrb[0].mxu0
    %v6413 = vadd.f32 %v6328, %v6412
    %v6414 = vpop.f32.mrb[0].mxu0
    %v6415 = vpop.f32.mrb[0].mxu0
    %6416 = vdwg.mxu0
    %6417 = vmatprep.subr.bf16.mxu0 %v4720
    %6418 = vmatpush1.bf16.msra.mxu0 %v4719
    %6419 = vmatprep.subr.bf16.mxu0 %v4724
    %6420 = vmatpush1.bf16.msra.mxu0 %v4723
    %6421 = vmatprep.subr.bf16.mxu0 %v4728
    %6422 = vmatpush1.bf16.msra.mxu0 %v4727
    %6423 = vmatprep.subr.bf16.mxu0 %v4732
    %6424 = vmatpush1.bf16.msra.mxu0 %v4731
    %6425 = vmatprep.subr.bf16.mxu0 %v4736
    %6426 = vmatpush1.bf16.msra.mxu0 %v4735
    %6427 = vmatprep.subr.bf16.mxu0 %v4740
    %6428 = vmatpush1.bf16.msra.mxu0 %v4739
    %6429 = vmatprep.subr.bf16.mxu0 %v4744
    %6430 = vmatpush1.bf16.msra.mxu0 %v4743
    %6431 = vmatprep.subr.bf16.mxu0 %v4748
    %6432 = vmatpush1.bf16.msra.mxu0 %v4747
    %6433 = vmatprep.subr.bf16.mxu0 0
    %6434 = vmatpush1.bf16.msra.mxu0 0
    %6435 = vmatprep.subr.bf16.mxu0 0
    %6436 = vmatpush1.bf16.msra.mxu0 0
    %6437 = vmatprep.subr.bf16.mxu0 0
    %6438 = vmatpush1.bf16.msra.mxu0 0
    %6439 = vmatprep.subr.bf16.mxu0 0
    %6440 = vmatpush1.bf16.msra.mxu0 0
    %6441 = vmatprep.subr.bf16.mxu0 0
    %6442 = vmatpush1.bf16.msra.mxu0 0
    %6443 = vmatprep.subr.bf16.mxu0 0
    %6444 = vmatpush1.bf16.msra.mxu0 0
    %6445 = vmatprep.subr.bf16.mxu0 0
    %6446 = vmatpush1.bf16.msra.mxu0 0
    %6447 = vmatprep.subr.bf16.mxu0 0
    %6448 = vmatpush1.bf16.msra.mxu0 0
    %6449 = vmatprep.mubr.bf16.mxu0 0
    %6450 = vmatmul.mubr.bf16.gmra.mrb[0].mxu0 %v6374
    %v6451 = vpop.f32.mrb[0].mxu0
    %v6452 = vadd.f32 %v6367, %v6451
    %v6453 = vpop.f32.mrb[0].mxu0
    %v6454 = vadd.f32 %v6369, %v6453
    %v6455 = vpop.f32.mrb[0].mxu0
    %v6456 = vpop.f32.mrb[0].mxu0
    %6457 = vdwg.mxu0
    %v6458 = vadd.f32 %v6411, %v3995
    %v6459 = vadd.f32 %v6413, %v3999
    %v6460 = vadd.f32 %v6452, %v4003
    %v6461 = vadd.f32 %v6454, %v4007
    %v6462 = vxor.u32 %v6458, 2147483648
    %v6463 = vmul.f32 %v6462, 1.442695
    %v6464 = vpow.pop %v6463
    %v6465 = vadd.f32 %v6464, 1.0
    %v6466 = vrcp.pop %v6465
    %v6467 = vmul.f32 1.0, %v6466
    %v6468 = vxor.u32 %v6459, 2147483648
    %v6469 = vmul.f32 %v6468, 1.442695
    %v6470 = vpow.pop %v6469
    %v6471 = vadd.f32 %v6470, 1.0
    %v6472 = vrcp.pop %v6471
    %v6473 = vmul.f32 1.0, %v6472
    %v6474 = vtanh.pop %v6460
    %v6475 = vxor.u32 %v6461, 2147483648
    %v6476 = vmul.f32 %v6475, 1.442695
    %v6477 = vpow.pop %v6476
    %v6478 = vadd.f32 %v6477, 1.0
    %v6479 = vrcp.pop %v6478
    %v6480 = vmul.f32 1.0, %v6479
    %v6481 = vmul.f32 %v6473, %v6161
    %v6482 = vmul.f32 %v6467, %v6474
    %v6483 = vadd.f32 %v6481, %v6482
    %v6484 = vtanh.pop %v6483
    %v6485 = vmul.f32 %v6480, %v6484
    %s6486 = smul.u32 4, 45
    %s6487 = smul.u32 %s6486, 4
    %s6488 = sshll.u32 %s6487, 4
    %6489 = dma.done [#allocation8], %s6488
    %s6490 = smul.u32 4, 16
    %s6491 = smul.u32 %s6490, 4
    %s6492 = sshll.u32 %s6491, 4
    %6493 = dma.done %s233, %s6492
    %s6494 = sshll.u32 %s6491, 4
    %6495 = dma.done %s269, %s6494
    %s6496 = smul.u32 4, 64
    %s6497 = smul.u32 %s6496, 4
    %s6498 = sshll.u32 %s6497, 4
    %6499 = dma.done %s304, %s6498
    %s6500 = sshll.u32 %s6497, 4
    %6501 = dma.done %s339, %s6500
    %s6502 = sshll.u32 %s6497, 4
    %6503 = dma.done %s374, %s6502
    %v6504 = vld [vmem:[%s1] sm:$0x3f]
    %v6506 = vcombine.high %v6504, %v6504
    %v6508 = vunpack.c.l.s4 1983009808
    %v6509 = vunpack.c.0.s8 %v6508
    %v6510 = vlaneseq
    %v6511 = vshrl.u32 %v6510, 7
    %v6512 = vsub.s32 %v6509, %v6511
    %v6513 = vrot.slane %v6504, %v6512
    %v6515 = vunpack.c.l.s4 1983009808
    %v6516 = vunpack.c.0.s8 %v6515
    %v6517 = vlaneseq
    %v6518 = vshrl.u32 %v6517, 7
    %v6519 = vsub.s32 %v6516, %v6518
    %v6520 = vrot.slane %v6506, %v6519
    %v6521 = vcombine.high %v6513, %v6513
    %v6525 = vpack.c.bf16 %v6513, %v6513
    %v6526 = vpack.c.bf16 %v6521, %v6521
    %v6527 = vpack.c.bf16 %v6520, %v6520
    %v6528 = vld [vmem:[#allocation2] sm:$0xff]
    %v6529 = vld [vmem:[#allocation2 + $0x8] sm:$0xff]
    %v6530 = vld [vmem:[#allocation2 + $0x10] sm:$0xff]
    %v6531 = vld [vmem:[#allocation2 + $0x18] sm:$0xff]
    %v6532 = vld [vmem:[#allocation2 + $0x20] sm:$0xff]
    %v6533 = vld [vmem:[#allocation2 + $0x28] sm:$0xff]
    %v6534 = vld [vmem:[#allocation2 + $0x30] sm:$0xff]
    %v6535 = vld [vmem:[#allocation2 + $0x38] sm:$0xff]
    %v6536 = vld [vmem:[#allocation2 + $0x40] sm:$0xff]
    %v6537 = vld [vmem:[#allocation2 + $0x48] sm:$0xff]
    %v6538 = vld [vmem:[#allocation2 + $0x50] sm:$0xff]
    %v6539 = vld [vmem:[#allocation2 + $0x58] sm:$0xff]
    %v6540 = vld [vmem:[#allocation2 + $0x60] sm:$0xff]
    %v6541 = vld [vmem:[#allocation2 + $0x68] sm:$0xff]
    %v6542 = vld [vmem:[#allocation2 + $0x70] sm:$0xff]
    %v6543 = vld [vmem:[#allocation2 + $0x78] sm:$0xff]
    %v6544 = vld [vmem:[#allocation2 + $0x80] sm:$0xff]
    %v6545 = vld [vmem:[#allocation2 + $0x88] sm:$0xff]
    %v6546 = vld [vmem:[#allocation2 + $0x90] sm:$0xff]
    %v6547 = vld [vmem:[#allocation2 + $0x98] sm:$0xff]
    %v6548 = vld [vmem:[#allocation2 + $0xa0] sm:$0xff]
    %v6549 = vld [vmem:[#allocation2 + $0xa8] sm:$0xff]
    %v6550 = vld [vmem:[#allocation2 + $0xb0] sm:$0xff]
    %v6551 = vld [vmem:[#allocation2 + $0xb8] sm:$0xff]
    %v6552 = vld [vmem:[#allocation2 + $0xc0] sm:$0xff]
    %v6553 = vld [vmem:[#allocation2 + $0xc8] sm:$0xff]
    %v6554 = vld [vmem:[#allocation2 + $0xd0] sm:$0xff]
    %v6555 = vld [vmem:[#allocation2 + $0xd8] sm:$0xff]
    %v6556 = vld [vmem:[#allocation2 + $0xe0] sm:$0xff]
    %v6557 = vld [vmem:[#allocation2 + $0xe8] sm:$0xff]
    %v6558 = vld [vmem:[#allocation2 + $0xf0] sm:$0xff]
    %v6559 = vld [vmem:[#allocation2 + $0xf8] sm:$0xff]
    %v6560 = vld [vmem:[#allocation2 + $0x100] sm:$0xff]
    %v6561 = vld [vmem:[#allocation2 + $0x108] sm:$0xff]
    %v6562 = vld [vmem:[#allocation2 + $0x110] sm:$0xff]
    %v6563 = vld [vmem:[#allocation2 + $0x118] sm:$0xff]
    %v6564 = vld [vmem:[#allocation2 + $0x120] sm:$0xff]
    %v6565 = vld [vmem:[#allocation2 + $0x128] sm:$0xff]
    %v6566 = vld [vmem:[#allocation2 + $0x130] sm:$0xff]
    %v6567 = vld [vmem:[#allocation2 + $0x138] sm:$0xff]
    %v6568 = vld [vmem:[#allocation2 + $0x140] sm:$0xff]
    %v6569 = vld [vmem:[#allocation2 + $0x148] sm:$0xff]
    %v6570 = vld [vmem:[#allocation2 + $0x150] sm:$0xff]
    %v6571 = vld [vmem:[#allocation2 + $0x158] sm:$0xff]
    %v6572 = vld [vmem:[#allocation2 + $0x160] sm:$0xff]
    %v6573 = vld [vmem:[#allocation2 + $0x168] sm:$0xff]
    %v6574 = vld [vmem:[#allocation2 + $0x170] sm:$0xff]
    %v6575 = vld [vmem:[#allocation2 + $0x178] sm:$0xff]
    %v6576 = vld [vmem:[#allocation2 + $0x180] sm:$0xff]
    %v6577 = vld [vmem:[#allocation2 + $0x188] sm:$0xff]
    %v6578 = vld [vmem:[#allocation2 + $0x190] sm:$0xff]
    %v6579 = vld [vmem:[#allocation2 + $0x198] sm:$0xff]
    %v6580 = vld [vmem:[#allocation2 + $0x1a0] sm:$0xff]
    %v6581 = vld [vmem:[#allocation2 + $0x1a8] sm:$0xff]
    %v6582 = vld [vmem:[#allocation2 + $0x1b0] sm:$0xff]
    %v6583 = vld [vmem:[#allocation2 + $0x1b8] sm:$0xff]
    %v6584 = vld [vmem:[#allocation2 + $0x1c0] sm:$0xff]
    %v6585 = vld [vmem:[#allocation2 + $0x1c8] sm:$0xff]
    %v6586 = vld [vmem:[#allocation2 + $0x1d0] sm:$0xff]
    %v6587 = vld [vmem:[#allocation2 + $0x1d8] sm:$0xff]
    %v6588 = vld [vmem:[#allocation2 + $0x1e0] sm:$0xff]
    %v6589 = vld [vmem:[#allocation2 + $0x1e8] sm:$0xff]
    %v6590 = vld [vmem:[#allocation2 + $0x1f0] sm:$0xff]
    %v6591 = vld [vmem:[#allocation2 + $0x1f8] sm:$0xff]
    %v6592 = vld [vmem:[#allocation2 + $0x200] sm:$0xff]
    %v6593 = vld [vmem:[#allocation2 + $0x208] sm:$0xff]
    %v6594 = vld [vmem:[#allocation2 + $0x210] sm:$0xff]
    %v6595 = vld [vmem:[#allocation2 + $0x218] sm:$0xff]
    %v6596 = vld [vmem:[#allocation2 + $0x220] sm:$0xff]
    %v6597 = vld [vmem:[#allocation2 + $0x228] sm:$0xff]
    %v6598 = vld [vmem:[#allocation2 + $0x230] sm:$0xff]
    %v6599 = vld [vmem:[#allocation2 + $0x238] sm:$0xff]
    %v6600 = vld [vmem:[#allocation2 + $0x240] sm:$0xff]
    %v6601 = vld [vmem:[#allocation2 + $0x248] sm:$0xff]
    %v6602 = vld [vmem:[#allocation2 + $0x250] sm:$0xff]
    %v6603 = vld [vmem:[#allocation2 + $0x258] sm:$0xff]
    %v6604 = vld [vmem:[#allocation2 + $0x260] sm:$0xff]
    %v6605 = vld [vmem:[#allocation2 + $0x268] sm:$0xff]
    %v6606 = vld [vmem:[#allocation2 + $0x270] sm:$0xff]
    %v6607 = vld [vmem:[#allocation2 + $0x278] sm:$0xff]
    %v6608 = vld [vmem:[#allocation2 + $0x280] sm:$0xff]
    %v6609 = vld [vmem:[#allocation2 + $0x288] sm:$0xff]
    %v6610 = vld [vmem:[#allocation2 + $0x290] sm:$0xff]
    %v6611 = vld [vmem:[#allocation2 + $0x298] sm:$0xff]
    %v6612 = vld [vmem:[#allocation2 + $0x2a0] sm:$0xff]
    %v6613 = vld [vmem:[#allocation2 + $0x2a8] sm:$0xff]
    %v6614 = vld [vmem:[#allocation2 + $0x2b0] sm:$0xff]
    %v6615 = vld [vmem:[#allocation2 + $0x2b8] sm:$0xff]
    %v6616 = vld [vmem:[#allocation2 + $0x2c0] sm:$0x77]
    %v6617 = vld [vmem:[#allocation2 + $0x2c8] sm:$0x77]
    %v6618 = vpack.c.bf16 %v3771, %v3771
    %v6619 = vld [vmem:[#allocation3] sm:$0xff]
    %v6620 = vld [vmem:[#allocation3 + $0x8] sm:$0xff]
    %v6621 = vld [vmem:[#allocation3 + $0x10] sm:$0xff]
    %v6622 = vld [vmem:[#allocation3 + $0x18] sm:$0xff]
    %v6623 = vld [vmem:[#allocation3 + $0x20] sm:$0xff]
    %v6624 = vld [vmem:[#allocation3 + $0x28] sm:$0xff]
    %v6625 = vld [vmem:[#allocation3 + $0x30] sm:$0xff]
    %v6626 = vld [vmem:[#allocation3 + $0x38] sm:$0xff]
    %v6627 = vld [vmem:[#allocation3 + $0x40] sm:$0xff]
    %v6628 = vld [vmem:[#allocation3 + $0x48] sm:$0xff]
    %v6629 = vld [vmem:[#allocation3 + $0x50] sm:$0xff]
    %v6630 = vld [vmem:[#allocation3 + $0x58] sm:$0xff]
    %v6631 = vld [vmem:[#allocation3 + $0x60] sm:$0xff]
    %v6632 = vld [vmem:[#allocation3 + $0x68] sm:$0xff]
    %v6633 = vld [vmem:[#allocation3 + $0x70] sm:$0xff]
    %v6634 = vld [vmem:[#allocation3 + $0x78] sm:$0xff]
    %v6635 = vld [vmem:[#allocation3 + $0x80] sm:$0xff]
    %v6636 = vld [vmem:[#allocation3 + $0x88] sm:$0xff]
    %v6637 = vld [vmem:[#allocation3 + $0x90] sm:$0xff]
    %v6638 = vld [vmem:[#allocation3 + $0x98] sm:$0xff]
    %v6639 = vld [vmem:[#allocation3 + $0xa0] sm:$0xff]
    %v6640 = vld [vmem:[#allocation3 + $0xa8] sm:$0xff]
    %v6641 = vld [vmem:[#allocation3 + $0xb0] sm:$0xff]
    %v6642 = vld [vmem:[#allocation3 + $0xb8] sm:$0xff]
    %v6643 = vld [vmem:[#allocation3 + $0xc0] sm:$0xff]
    %v6644 = vld [vmem:[#allocation3 + $0xc8] sm:$0xff]
    %v6645 = vld [vmem:[#allocation3 + $0xd0] sm:$0xff]
    %v6646 = vld [vmem:[#allocation3 + $0xd8] sm:$0xff]
    %v6647 = vld [vmem:[#allocation3 + $0xe0] sm:$0xff]
    %v6648 = vld [vmem:[#allocation3 + $0xe8] sm:$0xff]
    %v6649 = vld [vmem:[#allocation3 + $0xf0] sm:$0xff]
    %v6650 = vld [vmem:[#allocation3 + $0xf8] sm:$0xff]
    %6651 = vmatprep.subr.bf16.mxu0 %v6620
    %6652 = vmatpush1.bf16.msra.mxu0 %v6619
    %6653 = vmatprep.subr.bf16.mxu0 %v6624
    %6654 = vmatpush1.bf16.msra.mxu0 %v6623
    %6655 = vmatprep.subr.bf16.mxu0 %v6628
    %6656 = vmatpush1.bf16.msra.mxu0 %v6627
    %6657 = vmatprep.subr.bf16.mxu0 %v6632
    %6658 = vmatpush1.bf16.msra.mxu0 %v6631
    %6659 = vmatprep.subr.bf16.mxu0 %v6636
    %6660 = vmatpush1.bf16.msra.mxu0 %v6635
    %6661 = vmatprep.subr.bf16.mxu0 %v6640
    %6662 = vmatpush1.bf16.msra.mxu0 %v6639
    %6663 = vmatprep.subr.bf16.mxu0 %v6644
    %6664 = vmatpush1.bf16.msra.mxu0 %v6643
    %6665 = vmatprep.subr.bf16.mxu0 %v6648
    %6666 = vmatpush1.bf16.msra.mxu0 %v6647
    %6667 = vmatprep.subr.bf16.mxu0 0
    %6668 = vmatpush1.bf16.msra.mxu0 0
    %6669 = vmatprep.subr.bf16.mxu0 0
    %6670 = vmatpush1.bf16.msra.mxu0 0
    %6671 = vmatprep.subr.bf16.mxu0 0
    %6672 = vmatpush1.bf16.msra.mxu0 0
    %6673 = vmatprep.subr.bf16.mxu0 0
    %6674 = vmatpush1.bf16.msra.mxu0 0
    %6675 = vmatprep.subr.bf16.mxu0 0
    %6676 = vmatpush1.bf16.msra.mxu0 0
    %6677 = vmatprep.subr.bf16.mxu0 0
    %6678 = vmatpush1.bf16.msra.mxu0 0
    %6679 = vmatprep.subr.bf16.mxu0 0
    %6680 = vmatpush1.bf16.msra.mxu0 0
    %6681 = vmatprep.subr.bf16.mxu0 0
    %6682 = vmatpush1.bf16.msra.mxu0 0
    %6683 = vmatprep.mubr.bf16.mxu0 0
    %6684 = vmatmul.mubr.bf16.gmra.mrb[0].mxu0 %v6618
    %v6685 = vpop.f32.mrb[0].mxu0
    %v6686 = vadd.f32 0.0, %v6685
    %v6687 = vpop.f32.mrb[0].mxu0
    %v6688 = vadd.f32 0.0, %v6687
    %v6689 = vpop.f32.mrb[0].mxu0
    %v6690 = vpop.f32.mrb[0].mxu0
    %6691 = vdwg.mxu0
    %6692 = vmatprep.subr.bf16.mxu0 %v6622
    %6693 = vmatpush1.bf16.msra.mxu0 %v6621
    %6694 = vmatprep.subr.bf16.mxu0 %v6626
    %6695 = vmatpush1.bf16.msra.mxu0 %v6625
    %6696 = vmatprep.subr.bf16.mxu0 %v6630
    %6697 = vmatpush1.bf16.msra.mxu0 %v6629
    %6698 = vmatprep.subr.bf16.mxu0 %v6634
    %6699 = vmatpush1.bf16.msra.mxu0 %v6633
    %6700 = vmatprep.subr.bf16.mxu0 %v6638
    %6701 = vmatpush1.bf16.msra.mxu0 %v6637
    %6702 = vmatprep.subr.bf16.mxu0 %v6642
    %6703 = vmatpush1.bf16.msra.mxu0 %v6641
    %6704 = vmatprep.subr.bf16.mxu0 %v6646
    %6705 = vmatpush1.bf16.msra.mxu0 %v6645
    %6706 = vmatprep.subr.bf16.mxu0 %v6650
    %6707 = vmatpush1.bf16.msra.mxu0 %v6649
    %6708 = vmatprep.subr.bf16.mxu0 0
    %6709 = vmatpush1.bf16.msra.mxu0 0
    %6710 = vmatprep.subr.bf16.mxu0 0
    %6711 = vmatpush1.bf16.msra.mxu0 0
    %6712 = vmatprep.subr.bf16.mxu0 0
    %6713 = vmatpush1.bf16.msra.mxu0 0
    %6714 = vmatprep.subr.bf16.mxu0 0
    %6715 = vmatpush1.bf16.msra.mxu0 0
    %6716 = vmatprep.subr.bf16.mxu0 0
    %6717 = vmatpush1.bf16.msra.mxu0 0
    %6718 = vmatprep.subr.bf16.mxu0 0
    %6719 = vmatpush1.bf16.msra.mxu0 0
    %6720 = vmatprep.subr.bf16.mxu0 0
    %6721 = vmatpush1.bf16.msra.mxu0 0
    %6722 = vmatprep.subr.bf16.mxu0 0
    %6723 = vmatpush1.bf16.msra.mxu0 0
    %6724 = vmatprep.mubr.bf16.mxu0 0
    %6725 = vmatmul.mubr.bf16.gmra.mrb[0].mxu0 %v6618
    %v6726 = vpop.f32.mrb[0].mxu0
    %v6727 = vadd.f32 0.0, %v6726
    %v6728 = vpop.f32.mrb[0].mxu0
    %v6729 = vadd.f32 0.0, %v6728
    %v6730 = vpop.f32.mrb[0].mxu0
    %v6731 = vpop.f32.mrb[0].mxu0
    %6732 = vdwg.mxu0
    %v6823 = vunpack.c.l.b16 %v6528
    %v6824 = vunpack.c.h.b16 %v6528
    %v6825 = vunpack.c.l.b16 %v6529
    %v6826 = vunpack.c.h.b16 %v6529
    %v6827 = vunpack.c.l.b16 %v6530
    %v6828 = vunpack.c.h.b16 %v6530
    %v6829 = vunpack.c.l.b16 %v6531
    %v6830 = vunpack.c.h.b16 %v6531
    %v6831 = vunpack.c.l.b16 %v6532
    %v6832 = vunpack.c.h.b16 %v6532
    %v6833 = vunpack.c.l.b16 %v6533
    %v6834 = vunpack.c.h.b16 %v6533
    %v6835 = vunpack.c.l.b16 %v6534
    %v6836 = vunpack.c.h.b16 %v6534
    %v6837 = vunpack.c.l.b16 %v6535
    %v6838 = vunpack.c.h.b16 %v6535
    %v6839 = vunpack.c.l.b16 %v6536
    %v6840 = vunpack.c.h.b16 %v6536
    %v6841 = vunpack.c.l.b16 %v6537
    %v6842 = vunpack.c.h.b16 %v6537
    %v6843 = vunpack.c.l.b16 %v6538
    %v6844 = vunpack.c.h.b16 %v6538
    %v6845 = vunpack.c.l.b16 %v6539
    %v6846 = vunpack.c.h.b16 %v6539
    %v6847 = vunpack.c.l.b16 %v6540
    %v6848 = vunpack.c.h.b16 %v6540
    %v6849 = vunpack.c.l.b16 %v6541
    %v6850 = vunpack.c.h.b16 %v6541
    %v6851 = vunpack.c.l.b16 %v6542
    %v6852 = vunpack.c.h.b16 %v6542
    %v6853 = vunpack.c.l.b16 %v6543
    %v6854 = vunpack.c.h.b16 %v6543
    %v6855 = vunpack.c.l.b16 %v6544
    %v6856 = vunpack.c.h.b16 %v6544
    %v6857 = vunpack.c.l.b16 %v6545
    %v6858 = vunpack.c.h.b16 %v6545
    %v6859 = vunpack.c.l.b16 %v6546
    %v6860 = vunpack.c.h.b16 %v6546
    %v6861 = vunpack.c.l.b16 %v6547
    %v6862 = vunpack.c.h.b16 %v6547
    %v6863 = vunpack.c.l.b16 %v6548
    %v6864 = vunpack.c.h.b16 %v6548
    %v6865 = vunpack.c.l.b16 %v6549
    %v6866 = vunpack.c.h.b16 %v6549
    %v6867 = vunpack.c.l.b16 %v6550
    %v6868 = vunpack.c.h.b16 %v6550
    %v6869 = vunpack.c.l.b16 %v6551
    %v6870 = vunpack.c.h.b16 %v6551
    %v6871 = vunpack.c.l.b16 %v6552
    %v6872 = vunpack.c.h.b16 %v6552
    %v6873 = vunpack.c.l.b16 %v6553
    %v6874 = vunpack.c.h.b16 %v6553
    %v6875 = vunpack.c.l.b16 %v6554
    %v6876 = vunpack.c.h.b16 %v6554
    %v6877 = vunpack.c.l.b16 %v6555
    %v6878 = vunpack.c.h.b16 %v6555
    %v6879 = vunpack.c.l.b16 %v6556
    %v6880 = vunpack.c.h.b16 %v6556
    %v6881 = vunpack.c.l.b16 %v6557
    %v6882 = vunpack.c.h.b16 %v6557
    %v6883 = vunpack.c.l.b16 %v6558
    %v6884 = vunpack.c.h.b16 %v6558
    %v6885 = vunpack.c.l.b16 %v6559
    %v6886 = vunpack.c.h.b16 %v6559
    %v6887 = vunpack.c.l.b16 %v6560
    %v6888 = vunpack.c.h.b16 %v6560
    %v6889 = vunpack.c.l.b16 %v6561
    %v6890 = vunpack.c.h.b16 %v6561
    %v6891 = vunpack.c.l.b16 %v6562
    %v6892 = vunpack.c.h.b16 %v6562
    %v6893 = vunpack.c.l.b16 %v6563
    %v6894 = vunpack.c.h.b16 %v6563
    %v6895 = vunpack.c.l.b16 %v6564
    %v6896 = vunpack.c.h.b16 %v6564
    %v6897 = vunpack.c.l.b16 %v6565
    %v6898 = vunpack.c.h.b16 %v6565
    %v6899 = vunpack.c.l.b16 %v6566
    %v6900 = vunpack.c.h.b16 %v6566
    %v6901 = vunpack.c.l.b16 %v6567
    %v6902 = vunpack.c.h.b16 %v6567
    %v6903 = vunpack.c.l.b16 %v6568
    %v6904 = vunpack.c.h.b16 %v6568
    %v6905 = vunpack.c.l.b16 %v6569
    %v6906 = vunpack.c.h.b16 %v6569
    %v6907 = vunpack.c.l.b16 %v6570
    %v6908 = vunpack.c.h.b16 %v6570
    %v6909 = vunpack.c.l.b16 %v6571
    %v6910 = vunpack.c.h.b16 %v6571
    %v6911 = vunpack.c.l.b16 %v6572
    %v6912 = vunpack.c.h.b16 %v6572
    %v6913 = vunpack.c.l.b16 %v6573
    %v6914 = vunpack.c.h.b16 %v6573
    %v6915 = vunpack.c.l.b16 %v6574
    %v6916 = vunpack.c.h.b16 %v6574
    %v6917 = vunpack.c.l.b16 %v6575
    %v6918 = vunpack.c.h.b16 %v6575
    %v6919 = vunpack.c.l.b16 %v6576
    %v6920 = vunpack.c.h.b16 %v6576
    %v6921 = vunpack.c.l.b16 %v6577
    %v6922 = vunpack.c.h.b16 %v6577
    %v6923 = vunpack.c.l.b16 %v6578
    %v6924 = vunpack.c.h.b16 %v6578
    %v6925 = vunpack.c.l.b16 %v6579
    %v6926 = vunpack.c.h.b16 %v6579
    %v6927 = vunpack.c.l.b16 %v6580
    %v6928 = vunpack.c.h.b16 %v6580
    %v6929 = vunpack.c.l.b16 %v6581
    %v6930 = vunpack.c.h.b16 %v6581
    %v6931 = vunpack.c.l.b16 %v6582
    %v6932 = vunpack.c.h.b16 %v6582
    %v6933 = vunpack.c.l.b16 %v6583
    %v6934 = vunpack.c.h.b16 %v6583
    %v6935 = vunpack.c.l.b16 %v6584
    %v6936 = vunpack.c.h.b16 %v6584
    %v6937 = vunpack.c.l.b16 %v6585
    %v6938 = vunpack.c.h.b16 %v6585
    %v6939 = vunpack.c.l.b16 %v6586
    %v6940 = vunpack.c.h.b16 %v6586
    %v6941 = vunpack.c.l.b16 %v6587
    %v6942 = vunpack.c.h.b16 %v6587
    %v6943 = vunpack.c.l.b16 %v6588
    %v6944 = vunpack.c.h.b16 %v6588
    %v6945 = vunpack.c.l.b16 %v6589
    %v6946 = vunpack.c.h.b16 %v6589
    %v6947 = vunpack.c.l.b16 %v6590
    %v6948 = vunpack.c.h.b16 %v6590
    %v6949 = vunpack.c.l.b16 %v6591
    %v6950 = vunpack.c.h.b16 %v6591
    %v6951 = vunpack.c.l.b16 %v6592
    %v6952 = vunpack.c.h.b16 %v6592
    %v6953 = vunpack.c.l.b16 %v6593
    %v6954 = vunpack.c.h.b16 %v6593
    %v6955 = vunpack.c.l.b16 %v6594
    %v6956 = vunpack.c.h.b16 %v6594
    %v6957 = vunpack.c.l.b16 %v6595
    %v6958 = vunpack.c.h.b16 %v6595
    %v6959 = vunpack.c.l.b16 %v6596
    %v6960 = vunpack.c.h.b16 %v6596
    %v6961 = vunpack.c.l.b16 %v6597
    %v6962 = vunpack.c.h.b16 %v6597
    %v6963 = vunpack.c.l.b16 %v6598
    %v6964 = vunpack.c.h.b16 %v6598
    %v6965 = vunpack.c.l.b16 %v6599
    %v6966 = vunpack.c.h.b16 %v6599
    %v6967 = vunpack.c.l.b16 %v6600
    %v6968 = vunpack.c.h.b16 %v6600
    %v6969 = vunpack.c.l.b16 %v6601
    %v6970 = vunpack.c.h.b16 %v6601
    %v6971 = vunpack.c.l.b16 %v6602
    %v6972 = vunpack.c.h.b16 %v6602
    %v6973 = vunpack.c.l.b16 %v6603
    %v6974 = vunpack.c.h.b16 %v6603
    %v6975 = vunpack.c.l.b16 %v6604
    %v6976 = vunpack.c.h.b16 %v6604
    %v6977 = vunpack.c.l.b16 %v6605
    %v6978 = vunpack.c.h.b16 %v6605
    %v6979 = vunpack.c.l.b16 %v6606
    %v6980 = vunpack.c.h.b16 %v6606
    %v6981 = vunpack.c.l.b16 %v6607
    %v6982 = vunpack.c.h.b16 %v6607
    %v6983 = vunpack.c.l.b16 %v6608
    %v6984 = vunpack.c.h.b16 %v6608
    %v6985 = vunpack.c.l.b16 %v6609
    %v6986 = vunpack.c.h.b16 %v6609
    %v6987 = vunpack.c.l.b16 %v6610
    %v6988 = vunpack.c.h.b16 %v6610
    %v6989 = vunpack.c.l.b16 %v6611
    %v6990 = vunpack.c.h.b16 %v6611
    %v6991 = vunpack.c.l.b16 %v6612
    %v6992 = vunpack.c.h.b16 %v6612
    %v6993 = vunpack.c.l.b16 %v6613
    %v6994 = vunpack.c.h.b16 %v6613
    %v6995 = vunpack.c.l.b16 %v6614
    %v6996 = vunpack.c.h.b16 %v6614
    %v6997 = vunpack.c.l.b16 %v6615
    %v6998 = vunpack.c.h.b16 %v6615
    %v6999 = vunpack.c.l.b16 %v6616
    %v7000 = vunpack.c.h.b16 %v6616
    %v7001 = vunpack.c.l.b16 %v6617
    %v7002 = vunpack.c.h.b16 %v6617
    %v7003 = vpack.c.b16 %v6827, %v6823
    %v7004 = vpack.c.b16 %v6828, %v6824
    %v7005 = vpack.c.b16 %v6829, %v6825
    %v7006 = vpack.c.b16 %v6830, %v6826
    %v7007 = vpack.c.b16 %v6835, %v6831
    %v7008 = vpack.c.b16 %v6836, %v6832
    %v7009 = vpack.c.b16 %v6837, %v6833
    %v7010 = vpack.c.b16 %v6838, %v6834
    %v7011 = vpack.c.b16 %v6843, %v6839
    %v7012 = vpack.c.b16 %v6844, %v6840
    %v7013 = vpack.c.b16 %v6845, %v6841
    %v7014 = vpack.c.b16 %v6846, %v6842
    %v7015 = vpack.c.b16 %v6851, %v6847
    %v7016 = vpack.c.b16 %v6852, %v6848
    %v7017 = vpack.c.b16 %v6853, %v6849
    %v7018 = vpack.c.b16 %v6854, %v6850
    %v7019 = vpack.c.b16 %v6859, %v6855
    %v7020 = vpack.c.b16 %v6860, %v6856
    %v7021 = vpack.c.b16 %v6861, %v6857
    %v7022 = vpack.c.b16 %v6862, %v6858
    %v7023 = vpack.c.b16 %v6867, %v6863
    %v7024 = vpack.c.b16 %v6868, %v6864
    %v7025 = vpack.c.b16 %v6869, %v6865
    %v7026 = vpack.c.b16 %v6870, %v6866
    %v7027 = vpack.c.b16 %v6875, %v6871
    %v7028 = vpack.c.b16 %v6876, %v6872
    %v7029 = vpack.c.b16 %v6877, %v6873
    %v7030 = vpack.c.b16 %v6878, %v6874
    %v7031 = vpack.c.b16 %v6883, %v6879
    %v7032 = vpack.c.b16 %v6884, %v6880
    %v7033 = vpack.c.b16 %v6885, %v6881
    %v7034 = vpack.c.b16 %v6886, %v6882
    %v7035 = vpack.c.b16 %v6891, %v6887
    %v7036 = vpack.c.b16 %v6892, %v6888
    %v7037 = vpack.c.b16 %v6893, %v6889
    %v7038 = vpack.c.b16 %v6894, %v6890
    %v7039 = vpack.c.b16 %v6899, %v6895
    %v7040 = vpack.c.b16 %v6900, %v6896
    %v7041 = vpack.c.b16 %v6901, %v6897
    %v7042 = vpack.c.b16 %v6902, %v6898
    %v7043 = vpack.c.b16 %v6907, %v6903
    %v7044 = vpack.c.b16 %v6908, %v6904
    %v7045 = vpack.c.b16 %v6909, %v6905
    %v7046 = vpack.c.b16 %v6910, %v6906
    %v7047 = vpack.c.b16 %v6915, %v6911
    %v7048 = vpack.c.b16 %v6916, %v6912
    %v7049 = vpack.c.b16 %v6917, %v6913
    %v7050 = vpack.c.b16 %v6918, %v6914
    %v7051 = vpack.c.b16 %v6923, %v6919
    %v7052 = vpack.c.b16 %v6924, %v6920
    %v7053 = vpack.c.b16 %v6925, %v6921
    %v7054 = vpack.c.b16 %v6926, %v6922
    %v7055 = vpack.c.b16 %v6931, %v6927
    %v7056 = vpack.c.b16 %v6932, %v6928
    %v7057 = vpack.c.b16 %v6933, %v6929
    %v7058 = vpack.c.b16 %v6934, %v6930
    %v7059 = vpack.c.b16 %v6939, %v6935
    %v7060 = vpack.c.b16 %v6940, %v6936
    %v7061 = vpack.c.b16 %v6941, %v6937
    %v7062 = vpack.c.b16 %v6942, %v6938
    %v7063 = vpack.c.b16 %v6947, %v6943
    %v7064 = vpack.c.b16 %v6948, %v6944
    %v7065 = vpack.c.b16 %v6949, %v6945
    %v7066 = vpack.c.b16 %v6950, %v6946
    %v7067 = vpack.c.b16 %v6955, %v6951
    %v7068 = vpack.c.b16 %v6956, %v6952
    %v7069 = vpack.c.b16 %v6957, %v6953
    %v7070 = vpack.c.b16 %v6958, %v6954
    %v7071 = vpack.c.b16 %v6963, %v6959
    %v7072 = vpack.c.b16 %v6964, %v6960
    %v7073 = vpack.c.b16 %v6965, %v6961
    %v7074 = vpack.c.b16 %v6966, %v6962
    %v7075 = vpack.c.b16 %v6971, %v6967
    %v7076 = vpack.c.b16 %v6972, %v6968
    %v7077 = vpack.c.b16 %v6973, %v6969
    %v7078 = vpack.c.b16 %v6974, %v6970
    %v7079 = vpack.c.b16 %v6979, %v6975
    %v7080 = vpack.c.b16 %v6980, %v6976
    %v7081 = vpack.c.b16 %v6981, %v6977
    %v7082 = vpack.c.b16 %v6982, %v6978
    %v7083 = vpack.c.b16 %v6987, %v6983
    %v7084 = vpack.c.b16 %v6988, %v6984
    %v7085 = vpack.c.b16 %v6989, %v6985
    %v7086 = vpack.c.b16 %v6990, %v6986
    %v7087 = vpack.c.b16 %v6995, %v6991
    %v7088 = vpack.c.b16 %v6996, %v6992
    %v7089 = vpack.c.b16 %v6997, %v6993
    %v7090 = vpack.c.b16 %v6998, %v6994
    %v7091 = vpack.c.b16 %v6999, %v6999
    %v7092 = vpack.c.b16 %v7000, %v7000
    %v7093 = vpack.c.b16 %v7001, %v7001
    %v7094 = vpack.c.b16 %v7002, %v7002
    %vm7183 = vcmask 826368
    %v7185 = vsel %vm7183, %v6527, 0
    %vm7187 = vcmask 1041408
    %vm7188 = vcmask 1042432
    %v7189 = vsel %vm7187, 4294967295, 65535
    %v7190 = vsel %vm7188, %v7189, 0
    %v7192 = vand.u32 %v7091, %v7190
    %v7195 = vand.u32 %v7092, %v7190
    %v7198 = vand.u32 %v7093, %v7190
    %v7201 = vand.u32 %v7094, %v7190
    %7203 = vmatprep.subr.bf16.mxu0 %v7004
    %7204 = vmatpush1.bf16.msra.mxu0 %v7003
    %7205 = vmatprep.subr.bf16.mxu0 %v7008
    %7206 = vmatpush1.bf16.msra.mxu0 %v7007
    %7207 = vmatprep.subr.bf16.mxu0 %v7012
    %7208 = vmatpush1.bf16.msra.mxu0 %v7011
    %7209 = vmatprep.subr.bf16.mxu0 %v7016
    %7210 = vmatpush1.bf16.msra.mxu0 %v7015
    %7211 = vmatprep.subr.bf16.mxu0 %v7020
    %7212 = vmatpush1.bf16.msra.mxu0 %v7019
    %7213 = vmatprep.subr.bf16.mxu0 %v7024
    %7214 = vmatpush1.bf16.msra.mxu0 %v7023
    %7215 = vmatprep.subr.bf16.mxu0 %v7028
    %7216 = vmatpush1.bf16.msra.mxu0 %v7027
    %7217 = vmatprep.subr.bf16.mxu0 %v7032
    %7218 = vmatpush1.bf16.msra.mxu0 %v7031
    %7219 = vmatprep.subr.bf16.mxu0 %v7036
    %7220 = vmatpush1.bf16.msra.mxu0 %v7035
    %7221 = vmatprep.subr.bf16.mxu0 %v7040
    %7222 = vmatpush1.bf16.msra.mxu0 %v7039
    %7223 = vmatprep.subr.bf16.mxu0 %v7044
    %7224 = vmatpush1.bf16.msra.mxu0 %v7043
    %7225 = vmatprep.subr.bf16.mxu0 %v7048
    %7226 = vmatpush1.bf16.msra.mxu0 %v7047
    %7227 = vmatprep.subr.bf16.mxu0 %v7052
    %7228 = vmatpush1.bf16.msra.mxu0 %v7051
    %7229 = vmatprep.subr.bf16.mxu0 %v7056
    %7230 = vmatpush1.bf16.msra.mxu0 %v7055
    %7231 = vmatprep.subr.bf16.mxu0 %v7060
    %7232 = vmatpush1.bf16.msra.mxu0 %v7059
    %7233 = vmatprep.subr.bf16.mxu0 %v7064
    %7234 = vmatpush1.bf16.msra.mxu0 %v7063
    %7235 = vmatprep.mubr.bf16.mxu0 %v6526
    %7236 = vmatmul.mubr.bf16.gmra.mrb[0].mxu0 %v6525
    %v7237 = vpop.f32.mrb[0].mxu0
    %v7238 = vadd.f32 %v6686, %v7237
    %v7239 = vpop.f32.mrb[0].mxu0
    %v7240 = vadd.f32 %v6688, %v7239
    %v7241 = vpop.f32.mrb[0].mxu0
    %v7242 = vpop.f32.mrb[0].mxu0
    %7243 = vdwg.mxu0
    %7244 = vmatprep.subr.bf16.mxu0 %v7068
    %7245 = vmatpush1.bf16.msra.mxu0 %v7067
    %7246 = vmatprep.subr.bf16.mxu0 %v7072
    %7247 = vmatpush1.bf16.msra.mxu0 %v7071
    %7248 = vmatprep.subr.bf16.mxu0 %v7076
    %7249 = vmatpush1.bf16.msra.mxu0 %v7075
    %7250 = vmatprep.subr.bf16.mxu0 %v7080
    %7251 = vmatpush1.bf16.msra.mxu0 %v7079
    %7252 = vmatprep.subr.bf16.mxu0 %v7084
    %7253 = vmatpush1.bf16.msra.mxu0 %v7083
    %7254 = vmatprep.subr.bf16.mxu0 %v7088
    %7255 = vmatpush1.bf16.msra.mxu0 %v7087
    %7256 = vmatprep.subr.bf16.mxu0 %v7195
    %7257 = vmatpush1.bf16.msra.mxu0 %v7192
    %7258 = vmatprep.subr.bf16.mxu0 0
    %7259 = vmatpush1.bf16.msra.mxu0 0
    %7260 = vmatprep.subr.bf16.mxu0 0
    %7261 = vmatpush1.bf16.msra.mxu0 0
    %7262 = vmatprep.subr.bf16.mxu0 0
    %7263 = vmatpush1.bf16.msra.mxu0 0
    %7264 = vmatprep.subr.bf16.mxu0 0
    %7265 = vmatpush1.bf16.msra.mxu0 0
    %7266 = vmatprep.subr.bf16.mxu0 0
    %7267 = vmatpush1.bf16.msra.mxu0 0
    %7268 = vmatprep.subr.bf16.mxu0 0
    %7269 = vmatpush1.bf16.msra.mxu0 0
    %7270 = vmatprep.subr.bf16.mxu0 0
    %7271 = vmatpush1.bf16.msra.mxu0 0
    %7272 = vmatprep.subr.bf16.mxu0 0
    %7273 = vmatpush1.bf16.msra.mxu0 0
    %7274 = vmatprep.subr.bf16.mxu0 0
    %7275 = vmatpush1.bf16.msra.mxu0 0
    %7276 = vmatprep.mubr.bf16.mxu0 0
    %7277 = vmatmul.mubr.bf16.gmra.mrb[0].mxu0 %v7185
    %v7278 = vpop.f32.mrb[0].mxu0
    %v7279 = vadd.f32 %v7238, %v7278
    %v7280 = vpop.f32.mrb[0].mxu0
    %v7281 = vadd.f32 %v7240, %v7280
    %v7282 = vpop.f32.mrb[0].mxu0
    %v7283 = vpop.f32.mrb[0].mxu0
    %7284 = vdwg.mxu0
    %7285 = vmatprep.subr.bf16.mxu0 %v7006
    %7286 = vmatpush1.bf16.msra.mxu0 %v7005
    %7287 = vmatprep.subr.bf16.mxu0 %v7010
    %7288 = vmatpush1.bf16.msra.mxu0 %v7009
    %7289 = vmatprep.subr.bf16.mxu0 %v7014
    %7290 = vmatpush1.bf16.msra.mxu0 %v7013
    %7291 = vmatprep.subr.bf16.mxu0 %v7018
    %7292 = vmatpush1.bf16.msra.mxu0 %v7017
    %7293 = vmatprep.subr.bf16.mxu0 %v7022
    %7294 = vmatpush1.bf16.msra.mxu0 %v7021
    %7295 = vmatprep.subr.bf16.mxu0 %v7026
    %7296 = vmatpush1.bf16.msra.mxu0 %v7025
    %7297 = vmatprep.subr.bf16.mxu0 %v7030
    %7298 = vmatpush1.bf16.msra.mxu0 %v7029
    %7299 = vmatprep.subr.bf16.mxu0 %v7034
    %7300 = vmatpush1.bf16.msra.mxu0 %v7033
    %7301 = vmatprep.subr.bf16.mxu0 %v7038
    %7302 = vmatpush1.bf16.msra.mxu0 %v7037
    %7303 = vmatprep.subr.bf16.mxu0 %v7042
    %7304 = vmatpush1.bf16.msra.mxu0 %v7041
    %7305 = vmatprep.subr.bf16.mxu0 %v7046
    %7306 = vmatpush1.bf16.msra.mxu0 %v7045
    %7307 = vmatprep.subr.bf16.mxu0 %v7050
    %7308 = vmatpush1.bf16.msra.mxu0 %v7049
    %7309 = vmatprep.subr.bf16.mxu0 %v7054
    %7310 = vmatpush1.bf16.msra.mxu0 %v7053
    %7311 = vmatprep.subr.bf16.mxu0 %v7058
    %7312 = vmatpush1.bf16.msra.mxu0 %v7057
    %7313 = vmatprep.subr.bf16.mxu0 %v7062
    %7314 = vmatpush1.bf16.msra.mxu0 %v7061
    %7315 = vmatprep.subr.bf16.mxu0 %v7066
    %7316 = vmatpush1.bf16.msra.mxu0 %v7065
    %7317 = vmatprep.mubr.bf16.mxu0 %v6526
    %7318 = vmatmul.mubr.bf16.gmra.mrb[0].mxu0 %v6525
    %v7319 = vpop.f32.mrb[0].mxu0
    %v7320 = vadd.f32 %v6727, %v7319
    %v7321 = vpop.f32.mrb[0].mxu0
    %v7322 = vadd.f32 %v6729, %v7321
    %v7323 = vpop.f32.mrb[0].mxu0
    %v7324 = vpop.f32.mrb[0].mxu0
    %7325 = vdwg.mxu0
    %7326 = vmatprep.subr.bf16.mxu0 %v7070
    %7327 = vmatpush1.bf16.msra.mxu0 %v7069
    %7328 = vmatprep.subr.bf16.mxu0 %v7074
    %7329 = vmatpush1.bf16.msra.mxu0 %v7073
    %7330 = vmatprep.subr.bf16.mxu0 %v7078
    %7331 = vmatpush1.bf16.msra.mxu0 %v7077
    %7332 = vmatprep.subr.bf16.mxu0 %v7082
    %7333 = vmatpush1.bf16.msra.mxu0 %v7081
    %7334 = vmatprep.subr.bf16.mxu0 %v7086
    %7335 = vmatpush1.bf16.msra.mxu0 %v7085
    %7336 = vmatprep.subr.bf16.mxu0 %v7090
    %7337 = vmatpush1.bf16.msra.mxu0 %v7089
    %7338 = vmatprep.subr.bf16.mxu0 %v7201
    %7339 = vmatpush1.bf16.msra.mxu0 %v7198
    %7340 = vmatprep.subr.bf16.mxu0 0
    %7341 = vmatpush1.bf16.msra.mxu0 0
    %7342 = vmatprep.subr.bf16.mxu0 0
    %7343 = vmatpush1.bf16.msra.mxu0 0
    %7344 = vmatprep.subr.bf16.mxu0 0
    %7345 = vmatpush1.bf16.msra.mxu0 0
    %7346 = vmatprep.subr.bf16.mxu0 0
    %7347 = vmatpush1.bf16.msra.mxu0 0
    %7348 = vmatprep.subr.bf16.mxu0 0
    %7349 = vmatpush1.bf16.msra.mxu0 0
    %7350 = vmatprep.subr.bf16.mxu0 0
    %7351 = vmatpush1.bf16.msra.mxu0 0
    %7352 = vmatprep.subr.bf16.mxu0 0
    %7353 = vmatpush1.bf16.msra.mxu0 0
    %7354 = vmatprep.subr.bf16.mxu0 0
    %7355 = vmatpush1.bf16.msra.mxu0 0
    %7356 = vmatprep.subr.bf16.mxu0 0
    %7357 = vmatpush1.bf16.msra.mxu0 0
    %7358 = vmatprep.mubr.bf16.mxu0 0
    %7359 = vmatmul.mubr.bf16.gmra.mrb[0].mxu0 %v7185
    %v7360 = vpop.f32.mrb[0].mxu0
    %v7361 = vadd.f32 %v7320, %v7360
    %v7362 = vpop.f32.mrb[0].mxu0
    %v7363 = vadd.f32 %v7322, %v7362
    %v7364 = vpop.f32.mrb[0].mxu0
    %v7365 = vpop.f32.mrb[0].mxu0
    %7366 = vdwg.mxu0
    %v7367 = vpack.c.bf16 %v6485, %v6485
    %v7368 = vld [vmem:[#allocation4] sm:$0xff]
    %v7369 = vld [vmem:[#allocation4 + $0x8] sm:$0xff]
    %v7370 = vld [vmem:[#allocation4 + $0x10] sm:$0xff]
    %v7371 = vld [vmem:[#allocation4 + $0x18] sm:$0xff]
    %v7372 = vld [vmem:[#allocation4 + $0x20] sm:$0xff]
    %v7373 = vld [vmem:[#allocation4 + $0x28] sm:$0xff]
    %v7374 = vld [vmem:[#allocation4 + $0x30] sm:$0xff]
    %v7375 = vld [vmem:[#allocation4 + $0x38] sm:$0xff]
    %v7376 = vld [vmem:[#allocation4 + $0x40] sm:$0xff]
    %v7377 = vld [vmem:[#allocation4 + $0x48] sm:$0xff]
    %v7378 = vld [vmem:[#allocation4 + $0x50] sm:$0xff]
    %v7379 = vld [vmem:[#allocation4 + $0x58] sm:$0xff]
    %v7380 = vld [vmem:[#allocation4 + $0x60] sm:$0xff]
    %v7381 = vld [vmem:[#allocation4 + $0x68] sm:$0xff]
    %v7382 = vld [vmem:[#allocation4 + $0x70] sm:$0xff]
    %v7383 = vld [vmem:[#allocation4 + $0x78] sm:$0xff]
    %v7384 = vld [vmem:[#allocation4 + $0x80] sm:$0xff]
    %v7385 = vld [vmem:[#allocation4 + $0x88] sm:$0xff]
    %v7386 = vld [vmem:[#allocation4 + $0x90] sm:$0xff]
    %v7387 = vld [vmem:[#allocation4 + $0x98] sm:$0xff]
    %v7388 = vld [vmem:[#allocation4 + $0xa0] sm:$0xff]
    %v7389 = vld [vmem:[#allocation4 + $0xa8] sm:$0xff]
    %v7390 = vld [vmem:[#allocation4 + $0xb0] sm:$0xff]
    %v7391 = vld [vmem:[#allocation4 + $0xb8] sm:$0xff]
    %v7392 = vld [vmem:[#allocation4 + $0xc0] sm:$0xff]
    %v7393 = vld [vmem:[#allocation4 + $0xc8] sm:$0xff]
    %v7394 = vld [vmem:[#allocation4 + $0xd0] sm:$0xff]
    %v7395 = vld [vmem:[#allocation4 + $0xd8] sm:$0xff]
    %v7396 = vld [vmem:[#allocation4 + $0xe0] sm:$0xff]
    %v7397 = vld [vmem:[#allocation4 + $0xe8] sm:$0xff]
    %v7398 = vld [vmem:[#allocation4 + $0xf0] sm:$0xff]
    %v7399 = vld [vmem:[#allocation4 + $0xf8] sm:$0xff]
    %7400 = vmatprep.subr.bf16.mxu0 %v7369
    %7401 = vmatpush1.bf16.msra.mxu0 %v7368
    %7402 = vmatprep.subr.bf16.mxu0 %v7373
    %7403 = vmatpush1.bf16.msra.mxu0 %v7372
    %7404 = vmatprep.subr.bf16.mxu0 %v7377
    %7405 = vmatpush1.bf16.msra.mxu0 %v7376
    %7406 = vmatprep.subr.bf16.mxu0 %v7381
    %7407 = vmatpush1.bf16.msra.mxu0 %v7380
    %7408 = vmatprep.subr.bf16.mxu0 %v7385
    %7409 = vmatpush1.bf16.msra.mxu0 %v7384
    %7410 = vmatprep.subr.bf16.mxu0 %v7389
    %7411 = vmatpush1.bf16.msra.mxu0 %v7388
    %7412 = vmatprep.subr.bf16.mxu0 %v7393
    %7413 = vmatpush1.bf16.msra.mxu0 %v7392
    %7414 = vmatprep.subr.bf16.mxu0 %v7397
    %7415 = vmatpush1.bf16.msra.mxu0 %v7396
    %7416 = vmatprep.subr.bf16.mxu0 0
    %7417 = vmatpush1.bf16.msra.mxu0 0
    %7418 = vmatprep.subr.bf16.mxu0 0
    %7419 = vmatpush1.bf16.msra.mxu0 0
    %7420 = vmatprep.subr.bf16.mxu0 0
    %7421 = vmatpush1.bf16.msra.mxu0 0
    %7422 = vmatprep.subr.bf16.mxu0 0
    %7423 = vmatpush1.bf16.msra.mxu0 0
    %7424 = vmatprep.subr.bf16.mxu0 0
    %7425 = vmatpush1.bf16.msra.mxu0 0
    %7426 = vmatprep.subr.bf16.mxu0 0
    %7427 = vmatpush1.bf16.msra.mxu0 0
    %7428 = vmatprep.subr.bf16.mxu0 0
    %7429 = vmatpush1.bf16.msra.mxu0 0
    %7430 = vmatprep.subr.bf16.mxu0 0
    %7431 = vmatpush1.bf16.msra.mxu0 0
    %7432 = vmatprep.mubr.bf16.mxu0 0
    %7433 = vmatmul.mubr.bf16.gmra.mrb[0].mxu0 %v7367
    %v7434 = vpop.f32.mrb[0].mxu0
    %v7435 = vadd.f32 0.0, %v7434
    %v7436 = vpop.f32.mrb[0].mxu0
    %v7437 = vadd.f32 0.0, %v7436
    %v7438 = vpop.f32.mrb[0].mxu0
    %v7439 = vpop.f32.mrb[0].mxu0
    %7440 = vdwg.mxu0
    %7441 = vmatprep.subr.bf16.mxu0 %v7371
    %7442 = vmatpush1.bf16.msra.mxu0 %v7370
    %7443 = vmatprep.subr.bf16.mxu0 %v7375
    %7444 = vmatpush1.bf16.msra.mxu0 %v7374
    %7445 = vmatprep.subr.bf16.mxu0 %v7379
    %7446 = vmatpush1.bf16.msra.mxu0 %v7378
    %7447 = vmatprep.subr.bf16.mxu0 %v7383
    %7448 = vmatpush1.bf16.msra.mxu0 %v7382
    %7449 = vmatprep.subr.bf16.mxu0 %v7387
    %7450 = vmatpush1.bf16.msra.mxu0 %v7386
    %7451 = vmatprep.subr.bf16.mxu0 %v7391
    %7452 = vmatpush1.bf16.msra.mxu0 %v7390
    %7453 = vmatprep.subr.bf16.mxu0 %v7395
    %7454 = vmatpush1.bf16.msra.mxu0 %v7394
    %7455 = vmatprep.subr.bf16.mxu0 %v7399
    %7456 = vmatpush1.bf16.msra.mxu0 %v7398
    %7457 = vmatprep.subr.bf16.mxu0 0
    %7458 = vmatpush1.bf16.msra.mxu0 0
    %7459 = vmatprep.subr.bf16.mxu0 0
    %7460 = vmatpush1.bf16.msra.mxu0 0
    %7461 = vmatprep.subr.bf16.mxu0 0
    %7462 = vmatpush1.bf16.msra.mxu0 0
    %7463 = vmatprep.subr.bf16.mxu0 0
    %7464 = vmatpush1.bf16.msra.mxu0 0
    %7465 = vmatprep.subr.bf16.mxu0 0
    %7466 = vmatpush1.bf16.msra.mxu0 0
    %7467 = vmatprep.subr.bf16.mxu0 0
    %7468 = vmatpush1.bf16.msra.mxu0 0
    %7469 = vmatprep.subr.bf16.mxu0 0
    %7470 = vmatpush1.bf16.msra.mxu0 0
    %7471 = vmatprep.subr.bf16.mxu0 0
    %7472 = vmatpush1.bf16.msra.mxu0 0
    %7473 = vmatprep.mubr.bf16.mxu0 0
    %7474 = vmatmul.mubr.bf16.gmra.mrb[0].mxu0 %v7367
    %v7475 = vpop.f32.mrb[0].mxu0
    %v7476 = vadd.f32 0.0, %v7475
    %v7477 = vpop.f32.mrb[0].mxu0
    %v7478 = vadd.f32 0.0, %v7477
    %v7479 = vpop.f32.mrb[0].mxu0
    %v7480 = vpop.f32.mrb[0].mxu0
    %7481 = vdwg.mxu0
    %v7482 = vadd.f32 %v7279, %v7435
    %v7483 = vadd.f32 %v7281, %v7437
    %v7484 = vadd.f32 %v7361, %v7476
    %v7485 = vadd.f32 %v7363, %v7478
    %v7486 = vld [vmem:[%s31] sm:$0xf]
    %v7488 = vlaneseq
    %v7489 = vshrl.u32 %v7488, 7
    %v7490 = vsub.s32 0, %v7489
    %v7491 = vrot.slane %v7486, %v7490
    %v7492 = vlaneseq
    %v7493 = vshrl.u32 %v7492, 7
    %v7494 = vsub.s32 1, %v7493
    %v7495 = vrot.slane %v7486, %v7494
    %v7496 = vlaneseq
    %v7497 = vshrl.u32 %v7496, 7
    %v7498 = vsub.s32 2, %v7497
    %v7499 = vrot.slane %v7486, %v7498
    %v7500 = vlaneseq
    %v7501 = vshrl.u32 %v7500, 7
    %v7502 = vsub.s32 3, %v7501
    %v7503 = vrot.slane %v7486, %v7502
    %v7508 = vadd.f32 %v7482, %v7491
    %v7509 = vadd.f32 %v7483, %v7495
    %v7510 = vadd.f32 %v7484, %v7499
    %v7511 = vadd.f32 %v7485, %v7503
    %v7512 = vtanh.pop %v7508
    %v7513 = vtanh.pop %v7509
    %v7514 = vtanh.pop %v7510
    %v7515 = vtanh.pop %v7511
    %v7516 = vpack.c.bf16 %v7512, %v7512
    %v7517 = vpack.c.bf16 %v7513, %v7513
    %v7518 = vpack.c.bf16 %v7514, %v7514
    %v7519 = vpack.c.bf16 %v7515, %v7515
    %v7520 = vld [vmem:[#allocation5] sm:$0xff]
    %v7521 = vld [vmem:[#allocation5 + $0x8] sm:$0xff]
    %v7522 = vld [vmem:[#allocation5 + $0x10] sm:$0xff]
    %v7523 = vld [vmem:[#allocation5 + $0x18] sm:$0xff]
    %v7524 = vld [vmem:[#allocation5 + $0x20] sm:$0xff]
    %v7525 = vld [vmem:[#allocation5 + $0x28] sm:$0xff]
    %v7526 = vld [vmem:[#allocation5 + $0x30] sm:$0xff]
    %v7527 = vld [vmem:[#allocation5 + $0x38] sm:$0xff]
    %v7528 = vld [vmem:[#allocation5 + $0x40] sm:$0xff]
    %v7529 = vld [vmem:[#allocation5 + $0x48] sm:$0xff]
    %v7530 = vld [vmem:[#allocation5 + $0x50] sm:$0xff]
    %v7531 = vld [vmem:[#allocation5 + $0x58] sm:$0xff]
    %v7532 = vld [vmem:[#allocation5 + $0x60] sm:$0xff]
    %v7533 = vld [vmem:[#allocation5 + $0x68] sm:$0xff]
    %v7534 = vld [vmem:[#allocation5 + $0x70] sm:$0xff]
    %v7535 = vld [vmem:[#allocation5 + $0x78] sm:$0xff]
    %v7536 = vld [vmem:[#allocation5 + $0x80] sm:$0xff]
    %v7537 = vld [vmem:[#allocation5 + $0x88] sm:$0xff]
    %v7538 = vld [vmem:[#allocation5 + $0x90] sm:$0xff]
    %v7539 = vld [vmem:[#allocation5 + $0x98] sm:$0xff]
    %v7540 = vld [vmem:[#allocation5 + $0xa0] sm:$0xff]
    %v7541 = vld [vmem:[#allocation5 + $0xa8] sm:$0xff]
    %v7542 = vld [vmem:[#allocation5 + $0xb0] sm:$0xff]
    %v7543 = vld [vmem:[#allocation5 + $0xb8] sm:$0xff]
    %v7544 = vld [vmem:[#allocation5 + $0xc0] sm:$0xff]
    %v7545 = vld [vmem:[#allocation5 + $0xc8] sm:$0xff]
    %v7546 = vld [vmem:[#allocation5 + $0xd0] sm:$0xff]
    %v7547 = vld [vmem:[#allocation5 + $0xd8] sm:$0xff]
    %v7548 = vld [vmem:[#allocation5 + $0xe0] sm:$0xff]
    %v7549 = vld [vmem:[#allocation5 + $0xe8] sm:$0xff]
    %v7550 = vld [vmem:[#allocation5 + $0xf0] sm:$0xff]
    %v7551 = vld [vmem:[#allocation5 + $0xf8] sm:$0xff]
    %v7552 = vld [vmem:[#allocation5 + $0x100] sm:$0xff]
    %v7553 = vld [vmem:[#allocation5 + $0x108] sm:$0xff]
    %v7554 = vld [vmem:[#allocation5 + $0x110] sm:$0xff]
    %v7555 = vld [vmem:[#allocation5 + $0x118] sm:$0xff]
    %v7556 = vld [vmem:[#allocation5 + $0x120] sm:$0xff]
    %v7557 = vld [vmem:[#allocation5 + $0x128] sm:$0xff]
    %v7558 = vld [vmem:[#allocation5 + $0x130] sm:$0xff]
    %v7559 = vld [vmem:[#allocation5 + $0x138] sm:$0xff]
    %v7560 = vld [vmem:[#allocation5 + $0x140] sm:$0xff]
    %v7561 = vld [vmem:[#allocation5 + $0x148] sm:$0xff]
    %v7562 = vld [vmem:[#allocation5 + $0x150] sm:$0xff]
    %v7563 = vld [vmem:[#allocation5 + $0x158] sm:$0xff]
    %v7564 = vld [vmem:[#allocation5 + $0x160] sm:$0xff]
    %v7565 = vld [vmem:[#allocation5 + $0x168] sm:$0xff]
    %v7566 = vld [vmem:[#allocation5 + $0x170] sm:$0xff]
    %v7567 = vld [vmem:[#allocation5 + $0x178] sm:$0xff]
    %v7568 = vld [vmem:[#allocation5 + $0x180] sm:$0xff]
    %v7569 = vld [vmem:[#allocation5 + $0x188] sm:$0xff]
    %v7570 = vld [vmem:[#allocation5 + $0x190] sm:$0xff]
    %v7571 = vld [vmem:[#allocation5 + $0x198] sm:$0xff]
    %v7572 = vld [vmem:[#allocation5 + $0x1a0] sm:$0xff]
    %v7573 = vld [vmem:[#allocation5 + $0x1a8] sm:$0xff]
    %v7574 = vld [vmem:[#allocation5 + $0x1b0] sm:$0xff]
    %v7575 = vld [vmem:[#allocation5 + $0x1b8] sm:$0xff]
    %v7576 = vld [vmem:[#allocation5 + $0x1c0] sm:$0xff]
    %v7577 = vld [vmem:[#allocation5 + $0x1c8] sm:$0xff]
    %v7578 = vld [vmem:[#allocation5 + $0x1d0] sm:$0xff]
    %v7579 = vld [vmem:[#allocation5 + $0x1d8] sm:$0xff]
    %v7580 = vld [vmem:[#allocation5 + $0x1e0] sm:$0xff]
    %v7581 = vld [vmem:[#allocation5 + $0x1e8] sm:$0xff]
    %v7582 = vld [vmem:[#allocation5 + $0x1f0] sm:$0xff]
    %v7583 = vld [vmem:[#allocation5 + $0x1f8] sm:$0xff]
    %v7584 = vld [vmem:[#allocation5 + $0x200] sm:$0xff]
    %v7585 = vld [vmem:[#allocation5 + $0x208] sm:$0xff]
    %v7586 = vld [vmem:[#allocation5 + $0x210] sm:$0xff]
    %v7587 = vld [vmem:[#allocation5 + $0x218] sm:$0xff]
    %v7588 = vld [vmem:[#allocation5 + $0x220] sm:$0xff]
    %v7589 = vld [vmem:[#allocation5 + $0x228] sm:$0xff]
    %v7590 = vld [vmem:[#allocation5 + $0x230] sm:$0xff]
    %v7591 = vld [vmem:[#allocation5 + $0x238] sm:$0xff]
    %v7592 = vld [vmem:[#allocation5 + $0x240] sm:$0xff]
    %v7593 = vld [vmem:[#allocation5 + $0x248] sm:$0xff]
    %v7594 = vld [vmem:[#allocation5 + $0x250] sm:$0xff]
    %v7595 = vld [vmem:[#allocation5 + $0x258] sm:$0xff]
    %v7596 = vld [vmem:[#allocation5 + $0x260] sm:$0xff]
    %v7597 = vld [vmem:[#allocation5 + $0x268] sm:$0xff]
    %v7598 = vld [vmem:[#allocation5 + $0x270] sm:$0xff]
    %v7599 = vld [vmem:[#allocation5 + $0x278] sm:$0xff]
    %v7600 = vld [vmem:[#allocation5 + $0x280] sm:$0xff]
    %v7601 = vld [vmem:[#allocation5 + $0x288] sm:$0xff]
    %v7602 = vld [vmem:[#allocation5 + $0x290] sm:$0xff]
    %v7603 = vld [vmem:[#allocation5 + $0x298] sm:$0xff]
    %v7604 = vld [vmem:[#allocation5 + $0x2a0] sm:$0xff]
    %v7605 = vld [vmem:[#allocation5 + $0x2a8] sm:$0xff]
    %v7606 = vld [vmem:[#allocation5 + $0x2b0] sm:$0xff]
    %v7607 = vld [vmem:[#allocation5 + $0x2b8] sm:$0xff]
    %v7608 = vld [vmem:[#allocation5 + $0x2c0] sm:$0xff]
    %v7609 = vld [vmem:[#allocation5 + $0x2c8] sm:$0xff]
    %v7610 = vld [vmem:[#allocation5 + $0x2d0] sm:$0xff]
    %v7611 = vld [vmem:[#allocation5 + $0x2d8] sm:$0xff]
    %v7612 = vld [vmem:[#allocation5 + $0x2e0] sm:$0xff]
    %v7613 = vld [vmem:[#allocation5 + $0x2e8] sm:$0xff]
    %v7614 = vld [vmem:[#allocation5 + $0x2f0] sm:$0xff]
    %v7615 = vld [vmem:[#allocation5 + $0x2f8] sm:$0xff]
    %v7616 = vld [vmem:[#allocation5 + $0x300] sm:$0xff]
    %v7617 = vld [vmem:[#allocation5 + $0x308] sm:$0xff]
    %v7618 = vld [vmem:[#allocation5 + $0x310] sm:$0xff]
    %v7619 = vld [vmem:[#allocation5 + $0x318] sm:$0xff]
    %v7620 = vld [vmem:[#allocation5 + $0x320] sm:$0xff]
    %v7621 = vld [vmem:[#allocation5 + $0x328] sm:$0xff]
    %v7622 = vld [vmem:[#allocation5 + $0x330] sm:$0xff]
    %v7623 = vld [vmem:[#allocation5 + $0x338] sm:$0xff]
    %v7624 = vld [vmem:[#allocation5 + $0x340] sm:$0xff]
    %v7625 = vld [vmem:[#allocation5 + $0x348] sm:$0xff]
    %v7626 = vld [vmem:[#allocation5 + $0x350] sm:$0xff]
    %v7627 = vld [vmem:[#allocation5 + $0x358] sm:$0xff]
    %v7628 = vld [vmem:[#allocation5 + $0x360] sm:$0xff]
    %v7629 = vld [vmem:[#allocation5 + $0x368] sm:$0xff]
    %v7630 = vld [vmem:[#allocation5 + $0x370] sm:$0xff]
    %v7631 = vld [vmem:[#allocation5 + $0x378] sm:$0xff]
    %v7632 = vld [vmem:[#allocation5 + $0x380] sm:$0xff]
    %v7633 = vld [vmem:[#allocation5 + $0x388] sm:$0xff]
    %v7634 = vld [vmem:[#allocation5 + $0x390] sm:$0xff]
    %v7635 = vld [vmem:[#allocation5 + $0x398] sm:$0xff]
    %v7636 = vld [vmem:[#allocation5 + $0x3a0] sm:$0xff]
    %v7637 = vld [vmem:[#allocation5 + $0x3a8] sm:$0xff]
    %v7638 = vld [vmem:[#allocation5 + $0x3b0] sm:$0xff]
    %v7639 = vld [vmem:[#allocation5 + $0x3b8] sm:$0xff]
    %v7640 = vld [vmem:[#allocation5 + $0x3c0] sm:$0xff]
    %v7641 = vld [vmem:[#allocation5 + $0x3c8] sm:$0xff]
    %v7642 = vld [vmem:[#allocation5 + $0x3d0] sm:$0xff]
    %v7643 = vld [vmem:[#allocation5 + $0x3d8] sm:$0xff]
    %v7644 = vld [vmem:[#allocation5 + $0x3e0] sm:$0xff]
    %v7645 = vld [vmem:[#allocation5 + $0x3e8] sm:$0xff]
    %v7646 = vld [vmem:[#allocation5 + $0x3f0] sm:$0xff]
    %v7647 = vld [vmem:[#allocation5 + $0x3f8] sm:$0xff]
    %v7648 = vld [vmem:[%s33] sm:$0xf]
    %v7650 = vlaneseq
    %v7651 = vshrl.u32 %v7650, 7
    %v7652 = vsub.s32 0, %v7651
    %v7653 = vrot.slane %v7648, %v7652
    %v7654 = vlaneseq
    %v7655 = vshrl.u32 %v7654, 7
    %v7656 = vsub.s32 1, %v7655
    %v7657 = vrot.slane %v7648, %v7656
    %v7658 = vlaneseq
    %v7659 = vshrl.u32 %v7658, 7
    %v7660 = vsub.s32 2, %v7659
    %v7661 = vrot.slane %v7648, %v7660
    %v7662 = vlaneseq
    %v7663 = vshrl.u32 %v7662, 7
    %v7664 = vsub.s32 3, %v7663
    %v7665 = vrot.slane %v7648, %v7664
    %7670 = vmatprep.subr.bf16.mxu0 %v7521
    %7671 = vmatpush1.bf16.msra.mxu0 %v7520
    %7672 = vmatprep.subr.bf16.mxu0 %v7525
    %7673 = vmatpush1.bf16.msra.mxu0 %v7524
    %7674 = vmatprep.subr.bf16.mxu0 %v7529
    %7675 = vmatpush1.bf16.msra.mxu0 %v7528
    %7676 = vmatprep.subr.bf16.mxu0 %v7533
    %7677 = vmatpush1.bf16.msra.mxu0 %v7532
    %7678 = vmatprep.subr.bf16.mxu0 %v7537
    %7679 = vmatpush1.bf16.msra.mxu0 %v7536
    %7680 = vmatprep.subr.bf16.mxu0 %v7541
    %7681 = vmatpush1.bf16.msra.mxu0 %v7540
    %7682 = vmatprep.subr.bf16.mxu0 %v7545
    %7683 = vmatpush1.bf16.msra.mxu0 %v7544
    %7684 = vmatprep.subr.bf16.mxu0 %v7549
    %7685 = vmatpush1.bf16.msra.mxu0 %v7548
    %7686 = vmatprep.subr.bf16.mxu0 %v7553
    %7687 = vmatpush1.bf16.msra.mxu0 %v7552
    %7688 = vmatprep.subr.bf16.mxu0 %v7557
    %7689 = vmatpush1.bf16.msra.mxu0 %v7556
    %7690 = vmatprep.subr.bf16.mxu0 %v7561
    %7691 = vmatpush1.bf16.msra.mxu0 %v7560
    %7692 = vmatprep.subr.bf16.mxu0 %v7565
    %7693 = vmatpush1.bf16.msra.mxu0 %v7564
    %7694 = vmatprep.subr.bf16.mxu0 %v7569
    %7695 = vmatpush1.bf16.msra.mxu0 %v7568
    %7696 = vmatprep.subr.bf16.mxu0 %v7573
    %7697 = vmatpush1.bf16.msra.mxu0 %v7572
    %7698 = vmatprep.subr.bf16.mxu0 %v7577
    %7699 = vmatpush1.bf16.msra.mxu0 %v7576
    %7700 = vmatprep.subr.bf16.mxu0 %v7581
    %7701 = vmatpush1.bf16.msra.mxu0 %v7580
    %7702 = vmatprep.mubr.bf16.mxu0 %v7517
    %7703 = vmatmul.mubr.bf16.gmra.mrb[0].mxu0 %v7516
    %v7704 = vpop.f32.mrb[0].mxu0
    %v7705 = vadd.f32 %v7653, %v7704
    %v7706 = vpop.f32.mrb[0].mxu0
    %v7707 = vadd.f32 %v7657, %v7706
    %v7708 = vpop.f32.mrb[0].mxu0
    %v7709 = vpop.f32.mrb[0].mxu0
    %7710 = vdwg.mxu0
    %7711 = vmatprep.subr.bf16.mxu0 %v7585
    %7712 = vmatpush1.bf16.msra.mxu0 %v7584
    %7713 = vmatprep.subr.bf16.mxu0 %v7589
    %7714 = vmatpush1.bf16.msra.mxu0 %v7588
    %7715 = vmatprep.subr.bf16.mxu0 %v7593
    %7716 = vmatpush1.bf16.msra.mxu0 %v7592
    %7717 = vmatprep.subr.bf16.mxu0 %v7597
    %7718 = vmatpush1.bf16.msra.mxu0 %v7596
    %7719 = vmatprep.subr.bf16.mxu0 %v7601
    %7720 = vmatpush1.bf16.msra.mxu0 %v7600
    %7721 = vmatprep.subr.bf16.mxu0 %v7605
    %7722 = vmatpush1.bf16.msra.mxu0 %v7604
    %7723 = vmatprep.subr.bf16.mxu0 %v7609
    %7724 = vmatpush1.bf16.msra.mxu0 %v7608
    %7725 = vmatprep.subr.bf16.mxu0 %v7613
    %7726 = vmatpush1.bf16.msra.mxu0 %v7612
    %7727 = vmatprep.subr.bf16.mxu0 %v7617
    %7728 = vmatpush1.bf16.msra.mxu0 %v7616
    %7729 = vmatprep.subr.bf16.mxu0 %v7621
    %7730 = vmatpush1.bf16.msra.mxu0 %v7620
    %7731 = vmatprep.subr.bf16.mxu0 %v7625
    %7732 = vmatpush1.bf16.msra.mxu0 %v7624
    %7733 = vmatprep.subr.bf16.mxu0 %v7629
    %7734 = vmatpush1.bf16.msra.mxu0 %v7628
    %7735 = vmatprep.subr.bf16.mxu0 %v7633
    %7736 = vmatpush1.bf16.msra.mxu0 %v7632
    %7737 = vmatprep.subr.bf16.mxu0 %v7637
    %7738 = vmatpush1.bf16.msra.mxu0 %v7636
    %7739 = vmatprep.subr.bf16.mxu0 %v7641
    %7740 = vmatpush1.bf16.msra.mxu0 %v7640
    %7741 = vmatprep.subr.bf16.mxu0 %v7645
    %7742 = vmatpush1.bf16.msra.mxu0 %v7644
    %7743 = vmatprep.mubr.bf16.mxu0 %v7519
    %7744 = vmatmul.mubr.bf16.gmra.mrb[0].mxu0 %v7518
    %v7745 = vpop.f32.mrb[0].mxu0
    %v7746 = vadd.f32 %v7705, %v7745
    %v7747 = vpop.f32.mrb[0].mxu0
    %v7748 = vadd.f32 %v7707, %v7747
    %v7749 = vpop.f32.mrb[0].mxu0
    %v7750 = vpop.f32.mrb[0].mxu0
    %7751 = vdwg.mxu0
    %7752 = vmatprep.subr.bf16.mxu0 %v7523
    %7753 = vmatpush1.bf16.msra.mxu0 %v7522
    %7754 = vmatprep.subr.bf16.mxu0 %v7527
    %7755 = vmatpush1.bf16.msra.mxu0 %v7526
    %7756 = vmatprep.subr.bf16.mxu0 %v7531
    %7757 = vmatpush1.bf16.msra.mxu0 %v7530
    %7758 = vmatprep.subr.bf16.mxu0 %v7535
    %7759 = vmatpush1.bf16.msra.mxu0 %v7534
    %7760 = vmatprep.subr.bf16.mxu0 %v7539
    %7761 = vmatpush1.bf16.msra.mxu0 %v7538
    %7762 = vmatprep.subr.bf16.mxu0 %v7543
    %7763 = vmatpush1.bf16.msra.mxu0 %v7542
    %7764 = vmatprep.subr.bf16.mxu0 %v7547
    %7765 = vmatpush1.bf16.msra.mxu0 %v7546
    %7766 = vmatprep.subr.bf16.mxu0 %v7551
    %7767 = vmatpush1.bf16.msra.mxu0 %v7550
    %7768 = vmatprep.subr.bf16.mxu0 %v7555
    %7769 = vmatpush1.bf16.msra.mxu0 %v7554
    %7770 = vmatprep.subr.bf16.mxu0 %v7559
    %7771 = vmatpush1.bf16.msra.mxu0 %v7558
    %7772 = vmatprep.subr.bf16.mxu0 %v7563
    %7773 = vmatpush1.bf16.msra.mxu0 %v7562
    %7774 = vmatprep.subr.bf16.mxu0 %v7567
    %7775 = vmatpush1.bf16.msra.mxu0 %v7566
    %7776 = vmatprep.subr.bf16.mxu0 %v7571
    %7777 = vmatpush1.bf16.msra.mxu0 %v7570
    %7778 = vmatprep.subr.bf16.mxu0 %v7575
    %7779 = vmatpush1.bf16.msra.mxu0 %v7574
    %7780 = vmatprep.subr.bf16.mxu0 %v7579
    %7781 = vmatpush1.bf16.msra.mxu0 %v7578
    %7782 = vmatprep.subr.bf16.mxu0 %v7583
    %7783 = vmatpush1.bf16.msra.mxu0 %v7582
    %7784 = vmatprep.mubr.bf16.mxu0 %v7517
    %7785 = vmatmul.mubr.bf16.gmra.mrb[0].mxu0 %v7516
    %v7786 = vpop.f32.mrb[0].mxu0
    %v7787 = vadd.f32 %v7661, %v7786
    %v7788 = vpop.f32.mrb[0].mxu0
    %v7789 = vadd.f32 %v7665, %v7788
    %v7790 = vpop.f32.mrb[0].mxu0
    %v7791 = vpop.f32.mrb[0].mxu0
    %7792 = vdwg.mxu0
    %7793 = vmatprep.subr.bf16.mxu0 %v7587
    %7794 = vmatpush1.bf16.msra.mxu0 %v7586
    %7795 = vmatprep.subr.bf16.mxu0 %v7591
    %7796 = vmatpush1.bf16.msra.mxu0 %v7590
    %7797 = vmatprep.subr.bf16.mxu0 %v7595
    %7798 = vmatpush1.bf16.msra.mxu0 %v7594
    %7799 = vmatprep.subr.bf16.mxu0 %v7599
    %7800 = vmatpush1.bf16.msra.mxu0 %v7598
    %7801 = vmatprep.subr.bf16.mxu0 %v7603
    %7802 = vmatpush1.bf16.msra.mxu0 %v7602
    %7803 = vmatprep.subr.bf16.mxu0 %v7607
    %7804 = vmatpush1.bf16.msra.mxu0 %v7606
    %7805 = vmatprep.subr.bf16.mxu0 %v7611
    %7806 = vmatpush1.bf16.msra.mxu0 %v7610
    %7807 = vmatprep.subr.bf16.mxu0 %v7615
    %7808 = vmatpush1.bf16.msra.mxu0 %v7614
    %7809 = vmatprep.subr.bf16.mxu0 %v7619
    %7810 = vmatpush1.bf16.msra.mxu0 %v7618
    %7811 = vmatprep.subr.bf16.mxu0 %v7623
    %7812 = vmatpush1.bf16.msra.mxu0 %v7622
    %7813 = vmatprep.subr.bf16.mxu0 %v7627
    %7814 = vmatpush1.bf16.msra.mxu0 %v7626
    %7815 = vmatprep.subr.bf16.mxu0 %v7631
    %7816 = vmatpush1.bf16.msra.mxu0 %v7630
    %7817 = vmatprep.subr.bf16.mxu0 %v7635
    %7818 = vmatpush1.bf16.msra.mxu0 %v7634
    %7819 = vmatprep.subr.bf16.mxu0 %v7639
    %7820 = vmatpush1.bf16.msra.mxu0 %v7638
    %7821 = vmatprep.subr.bf16.mxu0 %v7643
    %7822 = vmatpush1.bf16.msra.mxu0 %v7642
    %7823 = vmatprep.subr.bf16.mxu0 %v7647
    %7824 = vmatpush1.bf16.msra.mxu0 %v7646
    %7825 = vmatprep.mubr.bf16.mxu0 %v7519
    %7826 = vmatmul.mubr.bf16.gmra.mrb[0].mxu0 %v7518
    %v7827 = vpop.f32.mrb[0].mxu0
    %v7828 = vadd.f32 %v7787, %v7827
    %v7829 = vpop.f32.mrb[0].mxu0
    %v7830 = vadd.f32 %v7789, %v7829
    %v7831 = vpop.f32.mrb[0].mxu0
    %v7832 = vpop.f32.mrb[0].mxu0
    %7833 = vdwg.mxu0
    %v7834 = vsel %vm7187, %v7746, 0.0
    %v7835 = vsel %vm7187, %v7748, 0.0
    %v7836 = vadd.f32 %v7834, %v7835
    %v7837 = vsel %vm7187, %v7828, 0.0
    %v7838 = vadd.f32 %v7836, %v7837
    %v7839 = vsel %vm7187, %v7830, 0.0
    %v7840 = vadd.f32 %v7838, %v7839
    %7841 = vadd.xlane.f32.xlu0 %v7840
    %v7842 = vpop.xlane.xlu0 %7841
    %v7843 = vrcp.pop 512.0
    %v7844 = vmul.f32 %v7842, %v7843
    %v7845 = vsub.f32 %v7746, %v7844
    %v7846 = vsub.f32 %v7748, %v7844
    %v7847 = vsub.f32 %v7828, %v7844
    %v7848 = vsub.f32 %v7830, %v7844
    %v7849 = vmul.f32 %v7845, %v7845
    %v7850 = vmul.f32 %v7846, %v7846
    %v7851 = vmul.f32 %v7847, %v7847
    %v7852 = vmul.f32 %v7848, %v7848
    %v7853 = vsel %vm7187, %v7849, 0.0
    %v7854 = vsel %vm7187, %v7850, 0.0
    %v7855 = vadd.f32 %v7853, %v7854
    %v7856 = vsel %vm7187, %v7851, 0.0
    %v7857 = vadd.f32 %v7855, %v7856
    %v7858 = vsel %vm7187, %v7852, 0.0
    %v7859 = vadd.f32 %v7857, %v7858
    %7860 = vadd.xlane.f32.xlu0 %v7859
    %v7861 = vpop.xlane.xlu0 %7860
    %v7862 = vmul.f32 %v7861, %v7843
    %v7863 = vadd.f32 %v7862, 1e-05
    %v7864 = vrsqrt.pop %v7863
    %v7865 = vmul.f32 %v7845, %v7864
    %v7866 = vmul.f32 %v7846, %v7864
    %v7867 = vmul.f32 %v7847, %v7864
    %v7868 = vmul.f32 %v7848, %v7864
    %v7869 = vld [vmem:[%s35] sm:$0xf]
    %v7871 = vlaneseq
    %v7872 = vshrl.u32 %v7871, 7
    %v7873 = vsub.s32 0, %v7872
    %v7874 = vrot.slane %v7869, %v7873
    %v7875 = vlaneseq
    %v7876 = vshrl.u32 %v7875, 7
    %v7877 = vsub.s32 1, %v7876
    %v7878 = vrot.slane %v7869, %v7877
    %v7879 = vlaneseq
    %v7880 = vshrl.u32 %v7879, 7
    %v7881 = vsub.s32 2, %v7880
    %v7882 = vrot.slane %v7869, %v7881
    %v7883 = vlaneseq
    %v7884 = vshrl.u32 %v7883, 7
    %v7885 = vsub.s32 3, %v7884
    %v7886 = vrot.slane %v7869, %v7885
    %v7891 = vmul.f32 %v7865, %v7874
    %v7892 = vmul.f32 %v7866, %v7878
    %v7893 = vmul.f32 %v7867, %v7882
    %v7894 = vmul.f32 %v7868, %v7886
    %v7895 = vld [vmem:[%s37] sm:$0xf]
    %v7897 = vlaneseq
    %v7898 = vshrl.u32 %v7897, 7
    %v7899 = vsub.s32 0, %v7898
    %v7900 = vrot.slane %v7895, %v7899
    %v7901 = vlaneseq
    %v7902 = vshrl.u32 %v7901, 7
    %v7903 = vsub.s32 1, %v7902
    %v7904 = vrot.slane %v7895, %v7903
    %v7905 = vlaneseq
    %v7906 = vshrl.u32 %v7905, 7
    %v7907 = vsub.s32 2, %v7906
    %v7908 = vrot.slane %v7895, %v7907
    %v7909 = vlaneseq
    %v7910 = vshrl.u32 %v7909, 7
    %v7911 = vsub.s32 3, %v7910
    %v7912 = vrot.slane %v7895, %v7911
    %v7917 = vadd.f32 %v7891, %v7900
    %v7918 = vadd.f32 %v7892, %v7904
    %v7919 = vadd.f32 %v7893, %v7908
    %v7920 = vadd.f32 %v7894, %v7912
    %v7921 = vtanh.pop %v7917
    %v7922 = vtanh.pop %v7918
    %v7923 = vtanh.pop %v7919
    %v7924 = vtanh.pop %v7920
    %v7925 = vpack.c.bf16 %v7921, %v7921
    %v7926 = vpack.c.bf16 %v7922, %v7922
    %v7927 = vpack.c.bf16 %v7923, %v7923
    %v7928 = vpack.c.bf16 %v7924, %v7924
    %v7929 = vld [vmem:[#allocation6] sm:$0xff]
    %v7930 = vld [vmem:[#allocation6 + $0x8] sm:$0xff]
    %v7931 = vld [vmem:[#allocation6 + $0x10] sm:$0xff]
    %v7932 = vld [vmem:[#allocation6 + $0x18] sm:$0xff]
    %v7933 = vld [vmem:[#allocation6 + $0x20] sm:$0xff]
    %v7934 = vld [vmem:[#allocation6 + $0x28] sm:$0xff]
    %v7935 = vld [vmem:[#allocation6 + $0x30] sm:$0xff]
    %v7936 = vld [vmem:[#allocation6 + $0x38] sm:$0xff]
    %v7937 = vld [vmem:[#allocation6 + $0x40] sm:$0xff]
    %v7938 = vld [vmem:[#allocation6 + $0x48] sm:$0xff]
    %v7939 = vld [vmem:[#allocation6 + $0x50] sm:$0xff]
    %v7940 = vld [vmem:[#allocation6 + $0x58] sm:$0xff]
    %v7941 = vld [vmem:[#allocation6 + $0x60] sm:$0xff]
    %v7942 = vld [vmem:[#allocation6 + $0x68] sm:$0xff]
    %v7943 = vld [vmem:[#allocation6 + $0x70] sm:$0xff]
    %v7944 = vld [vmem:[#allocation6 + $0x78] sm:$0xff]
    %v7945 = vld [vmem:[#allocation6 + $0x80] sm:$0xff]
    %v7946 = vld [vmem:[#allocation6 + $0x88] sm:$0xff]
    %v7947 = vld [vmem:[#allocation6 + $0x90] sm:$0xff]
    %v7948 = vld [vmem:[#allocation6 + $0x98] sm:$0xff]
    %v7949 = vld [vmem:[#allocation6 + $0xa0] sm:$0xff]
    %v7950 = vld [vmem:[#allocation6 + $0xa8] sm:$0xff]
    %v7951 = vld [vmem:[#allocation6 + $0xb0] sm:$0xff]
    %v7952 = vld [vmem:[#allocation6 + $0xb8] sm:$0xff]
    %v7953 = vld [vmem:[#allocation6 + $0xc0] sm:$0xff]
    %v7954 = vld [vmem:[#allocation6 + $0xc8] sm:$0xff]
    %v7955 = vld [vmem:[#allocation6 + $0xd0] sm:$0xff]
    %v7956 = vld [vmem:[#allocation6 + $0xd8] sm:$0xff]
    %v7957 = vld [vmem:[#allocation6 + $0xe0] sm:$0xff]
    %v7958 = vld [vmem:[#allocation6 + $0xe8] sm:$0xff]
    %v7959 = vld [vmem:[#allocation6 + $0xf0] sm:$0xff]
    %v7960 = vld [vmem:[#allocation6 + $0xf8] sm:$0xff]
    %v7961 = vld [vmem:[#allocation6 + $0x100] sm:$0xff]
    %v7962 = vld [vmem:[#allocation6 + $0x108] sm:$0xff]
    %v7963 = vld [vmem:[#allocation6 + $0x110] sm:$0xff]
    %v7964 = vld [vmem:[#allocation6 + $0x118] sm:$0xff]
    %v7965 = vld [vmem:[#allocation6 + $0x120] sm:$0xff]
    %v7966 = vld [vmem:[#allocation6 + $0x128] sm:$0xff]
    %v7967 = vld [vmem:[#allocation6 + $0x130] sm:$0xff]
    %v7968 = vld [vmem:[#allocation6 + $0x138] sm:$0xff]
    %v7969 = vld [vmem:[#allocation6 + $0x140] sm:$0xff]
    %v7970 = vld [vmem:[#allocation6 + $0x148] sm:$0xff]
    %v7971 = vld [vmem:[#allocation6 + $0x150] sm:$0xff]
    %v7972 = vld [vmem:[#allocation6 + $0x158] sm:$0xff]
    %v7973 = vld [vmem:[#allocation6 + $0x160] sm:$0xff]
    %v7974 = vld [vmem:[#allocation6 + $0x168] sm:$0xff]
    %v7975 = vld [vmem:[#allocation6 + $0x170] sm:$0xff]
    %v7976 = vld [vmem:[#allocation6 + $0x178] sm:$0xff]
    %v7977 = vld [vmem:[#allocation6 + $0x180] sm:$0xff]
    %v7978 = vld [vmem:[#allocation6 + $0x188] sm:$0xff]
    %v7979 = vld [vmem:[#allocation6 + $0x190] sm:$0xff]
    %v7980 = vld [vmem:[#allocation6 + $0x198] sm:$0xff]
    %v7981 = vld [vmem:[#allocation6 + $0x1a0] sm:$0xff]
    %v7982 = vld [vmem:[#allocation6 + $0x1a8] sm:$0xff]
    %v7983 = vld [vmem:[#allocation6 + $0x1b0] sm:$0xff]
    %v7984 = vld [vmem:[#allocation6 + $0x1b8] sm:$0xff]
    %v7985 = vld [vmem:[#allocation6 + $0x1c0] sm:$0xff]
    %v7986 = vld [vmem:[#allocation6 + $0x1c8] sm:$0xff]
    %v7987 = vld [vmem:[#allocation6 + $0x1d0] sm:$0xff]
    %v7988 = vld [vmem:[#allocation6 + $0x1d8] sm:$0xff]
    %v7989 = vld [vmem:[#allocation6 + $0x1e0] sm:$0xff]
    %v7990 = vld [vmem:[#allocation6 + $0x1e8] sm:$0xff]
    %v7991 = vld [vmem:[#allocation6 + $0x1f0] sm:$0xff]
    %v7992 = vld [vmem:[#allocation6 + $0x1f8] sm:$0xff]
    %v7993 = vld [vmem:[#allocation6 + $0x200] sm:$0xff]
    %v7994 = vld [vmem:[#allocation6 + $0x208] sm:$0xff]
    %v7995 = vld [vmem:[#allocation6 + $0x210] sm:$0xff]
    %v7996 = vld [vmem:[#allocation6 + $0x218] sm:$0xff]
    %v7997 = vld [vmem:[#allocation6 + $0x220] sm:$0xff]
    %v7998 = vld [vmem:[#allocation6 + $0x228] sm:$0xff]
    %v7999 = vld [vmem:[#allocation6 + $0x230] sm:$0xff]
    %v8000 = vld [vmem:[#allocation6 + $0x238] sm:$0xff]
    %v8001 = vld [vmem:[#allocation6 + $0x240] sm:$0xff]
    %v8002 = vld [vmem:[#allocation6 + $0x248] sm:$0xff]
    %v8003 = vld [vmem:[#allocation6 + $0x250] sm:$0xff]
    %v8004 = vld [vmem:[#allocation6 + $0x258] sm:$0xff]
    %v8005 = vld [vmem:[#allocation6 + $0x260] sm:$0xff]
    %v8006 = vld [vmem:[#allocation6 + $0x268] sm:$0xff]
    %v8007 = vld [vmem:[#allocation6 + $0x270] sm:$0xff]
    %v8008 = vld [vmem:[#allocation6 + $0x278] sm:$0xff]
    %v8009 = vld [vmem:[#allocation6 + $0x280] sm:$0xff]
    %v8010 = vld [vmem:[#allocation6 + $0x288] sm:$0xff]
    %v8011 = vld [vmem:[#allocation6 + $0x290] sm:$0xff]
    %v8012 = vld [vmem:[#allocation6 + $0x298] sm:$0xff]
    %v8013 = vld [vmem:[#allocation6 + $0x2a0] sm:$0xff]
    %v8014 = vld [vmem:[#allocation6 + $0x2a8] sm:$0xff]
    %v8015 = vld [vmem:[#allocation6 + $0x2b0] sm:$0xff]
    %v8016 = vld [vmem:[#allocation6 + $0x2b8] sm:$0xff]
    %v8017 = vld [vmem:[#allocation6 + $0x2c0] sm:$0xff]
    %v8018 = vld [vmem:[#allocation6 + $0x2c8] sm:$0xff]
    %v8019 = vld [vmem:[#allocation6 + $0x2d0] sm:$0xff]
    %v8020 = vld [vmem:[#allocation6 + $0x2d8] sm:$0xff]
    %v8021 = vld [vmem:[#allocation6 + $0x2e0] sm:$0xff]
    %v8022 = vld [vmem:[#allocation6 + $0x2e8] sm:$0xff]
    %v8023 = vld [vmem:[#allocation6 + $0x2f0] sm:$0xff]
    %v8024 = vld [vmem:[#allocation6 + $0x2f8] sm:$0xff]
    %v8025 = vld [vmem:[#allocation6 + $0x300] sm:$0xff]
    %v8026 = vld [vmem:[#allocation6 + $0x308] sm:$0xff]
    %v8027 = vld [vmem:[#allocation6 + $0x310] sm:$0xff]
    %v8028 = vld [vmem:[#allocation6 + $0x318] sm:$0xff]
    %v8029 = vld [vmem:[#allocation6 + $0x320] sm:$0xff]
    %v8030 = vld [vmem:[#allocation6 + $0x328] sm:$0xff]
    %v8031 = vld [vmem:[#allocation6 + $0x330] sm:$0xff]
    %v8032 = vld [vmem:[#allocation6 + $0x338] sm:$0xff]
    %v8033 = vld [vmem:[#allocation6 + $0x340] sm:$0xff]
    %v8034 = vld [vmem:[#allocation6 + $0x348] sm:$0xff]
    %v8035 = vld [vmem:[#allocation6 + $0x350] sm:$0xff]
    %v8036 = vld [vmem:[#allocation6 + $0x358] sm:$0xff]
    %v8037 = vld [vmem:[#allocation6 + $0x360] sm:$0xff]
    %v8038 = vld [vmem:[#allocation6 + $0x368] sm:$0xff]
    %v8039 = vld [vmem:[#allocation6 + $0x370] sm:$0xff]
    %v8040 = vld [vmem:[#allocation6 + $0x378] sm:$0xff]
    %v8041 = vld [vmem:[#allocation6 + $0x380] sm:$0xff]
    %v8042 = vld [vmem:[#allocation6 + $0x388] sm:$0xff]
    %v8043 = vld [vmem:[#allocation6 + $0x390] sm:$0xff]
    %v8044 = vld [vmem:[#allocation6 + $0x398] sm:$0xff]
    %v8045 = vld [vmem:[#allocation6 + $0x3a0] sm:$0xff]
    %v8046 = vld [vmem:[#allocation6 + $0x3a8] sm:$0xff]
    %v8047 = vld [vmem:[#allocation6 + $0x3b0] sm:$0xff]
    %v8048 = vld [vmem:[#allocation6 + $0x3b8] sm:$0xff]
    %v8049 = vld [vmem:[#allocation6 + $0x3c0] sm:$0xff]
    %v8050 = vld [vmem:[#allocation6 + $0x3c8] sm:$0xff]
    %v8051 = vld [vmem:[#allocation6 + $0x3d0] sm:$0xff]
    %v8052 = vld [vmem:[#allocation6 + $0x3d8] sm:$0xff]
    %v8053 = vld [vmem:[#allocation6 + $0x3e0] sm:$0xff]
    %v8054 = vld [vmem:[#allocation6 + $0x3e8] sm:$0xff]
    %v8055 = vld [vmem:[#allocation6 + $0x3f0] sm:$0xff]
    %v8056 = vld [vmem:[#allocation6 + $0x3f8] sm:$0xff]
    %v8057 = vld [vmem:[%s39] sm:$0xf]
    %v8059 = vlaneseq
    %v8060 = vshrl.u32 %v8059, 7
    %v8061 = vsub.s32 0, %v8060
    %v8062 = vrot.slane %v8057, %v8061
    %v8063 = vlaneseq
    %v8064 = vshrl.u32 %v8063, 7
    %v8065 = vsub.s32 1, %v8064
    %v8066 = vrot.slane %v8057, %v8065
    %v8067 = vlaneseq
    %v8068 = vshrl.u32 %v8067, 7
    %v8069 = vsub.s32 2, %v8068
    %v8070 = vrot.slane %v8057, %v8069
    %v8071 = vlaneseq
    %v8072 = vshrl.u32 %v8071, 7
    %v8073 = vsub.s32 3, %v8072
    %v8074 = vrot.slane %v8057, %v8073
    %8079 = vmatprep.subr.bf16.mxu0 %v7930
    %8080 = vmatpush1.bf16.msra.mxu0 %v7929
    %8081 = vmatprep.subr.bf16.mxu0 %v7934
    %8082 = vmatpush1.bf16.msra.mxu0 %v7933
    %8083 = vmatprep.subr.bf16.mxu0 %v7938
    %8084 = vmatpush1.bf16.msra.mxu0 %v7937
    %8085 = vmatprep.subr.bf16.mxu0 %v7942
    %8086 = vmatpush1.bf16.msra.mxu0 %v7941
    %8087 = vmatprep.subr.bf16.mxu0 %v7946
    %8088 = vmatpush1.bf16.msra.mxu0 %v7945
    %8089 = vmatprep.subr.bf16.mxu0 %v7950
    %8090 = vmatpush1.bf16.msra.mxu0 %v7949
    %8091 = vmatprep.subr.bf16.mxu0 %v7954
    %8092 = vmatpush1.bf16.msra.mxu0 %v7953
    %8093 = vmatprep.subr.bf16.mxu0 %v7958
    %8094 = vmatpush1.bf16.msra.mxu0 %v7957
    %8095 = vmatprep.subr.bf16.mxu0 %v7962
    %8096 = vmatpush1.bf16.msra.mxu0 %v7961
    %8097 = vmatprep.subr.bf16.mxu0 %v7966
    %8098 = vmatpush1.bf16.msra.mxu0 %v7965
    %8099 = vmatprep.subr.bf16.mxu0 %v7970
    %8100 = vmatpush1.bf16.msra.mxu0 %v7969
    %8101 = vmatprep.subr.bf16.mxu0 %v7974
    %8102 = vmatpush1.bf16.msra.mxu0 %v7973
    %8103 = vmatprep.subr.bf16.mxu0 %v7978
    %8104 = vmatpush1.bf16.msra.mxu0 %v7977
    %8105 = vmatprep.subr.bf16.mxu0 %v7982
    %8106 = vmatpush1.bf16.msra.mxu0 %v7981
    %8107 = vmatprep.subr.bf16.mxu0 %v7986
    %8108 = vmatpush1.bf16.msra.mxu0 %v7985
    %8109 = vmatprep.subr.bf16.mxu0 %v7990
    %8110 = vmatpush1.bf16.msra.mxu0 %v7989
    %8111 = vmatprep.mubr.bf16.mxu0 %v7926
    %8112 = vmatmul.mubr.bf16.gmra.mrb[0].mxu0 %v7925
    %v8113 = vpop.f32.mrb[0].mxu0
    %v8114 = vadd.f32 %v8062, %v8113
    %v8115 = vpop.f32.mrb[0].mxu0
    %v8116 = vadd.f32 %v8066, %v8115
    %v8117 = vpop.f32.mrb[0].mxu0
    %v8118 = vpop.f32.mrb[0].mxu0
    %8119 = vdwg.mxu0
    %8120 = vmatprep.subr.bf16.mxu0 %v7994
    %8121 = vmatpush1.bf16.msra.mxu0 %v7993
    %8122 = vmatprep.subr.bf16.mxu0 %v7998
    %8123 = vmatpush1.bf16.msra.mxu0 %v7997
    %8124 = vmatprep.subr.bf16.mxu0 %v8002
    %8125 = vmatpush1.bf16.msra.mxu0 %v8001
    %8126 = vmatprep.subr.bf16.mxu0 %v8006
    %8127 = vmatpush1.bf16.msra.mxu0 %v8005
    %8128 = vmatprep.subr.bf16.mxu0 %v8010
    %8129 = vmatpush1.bf16.msra.mxu0 %v8009
    %8130 = vmatprep.subr.bf16.mxu0 %v8014
    %8131 = vmatpush1.bf16.msra.mxu0 %v8013
    %8132 = vmatprep.subr.bf16.mxu0 %v8018
    %8133 = vmatpush1.bf16.msra.mxu0 %v8017
    %8134 = vmatprep.subr.bf16.mxu0 %v8022
    %8135 = vmatpush1.bf16.msra.mxu0 %v8021
    %8136 = vmatprep.subr.bf16.mxu0 %v8026
    %8137 = vmatpush1.bf16.msra.mxu0 %v8025
    %8138 = vmatprep.subr.bf16.mxu0 %v8030
    %8139 = vmatpush1.bf16.msra.mxu0 %v8029
    %8140 = vmatprep.subr.bf16.mxu0 %v8034
    %8141 = vmatpush1.bf16.msra.mxu0 %v8033
    %8142 = vmatprep.subr.bf16.mxu0 %v8038
    %8143 = vmatpush1.bf16.msra.mxu0 %v8037
    %8144 = vmatprep.subr.bf16.mxu0 %v8042
    %8145 = vmatpush1.bf16.msra.mxu0 %v8041
    %8146 = vmatprep.subr.bf16.mxu0 %v8046
    %8147 = vmatpush1.bf16.msra.mxu0 %v8045
    %8148 = vmatprep.subr.bf16.mxu0 %v8050
    %8149 = vmatpush1.bf16.msra.mxu0 %v8049
    %8150 = vmatprep.subr.bf16.mxu0 %v8054
    %8151 = vmatpush1.bf16.msra.mxu0 %v8053
    %8152 = vmatprep.mubr.bf16.mxu0 %v7928
    %8153 = vmatmul.mubr.bf16.gmra.mrb[0].mxu0 %v7927
    %v8154 = vpop.f32.mrb[0].mxu0
    %v8155 = vadd.f32 %v8114, %v8154
    %v8156 = vpop.f32.mrb[0].mxu0
    %v8157 = vadd.f32 %v8116, %v8156
    %v8158 = vpop.f32.mrb[0].mxu0
    %v8159 = vpop.f32.mrb[0].mxu0
    %8160 = vdwg.mxu0
    %8161 = vmatprep.subr.bf16.mxu0 %v7932
    %8162 = vmatpush1.bf16.msra.mxu0 %v7931
    %8163 = vmatprep.subr.bf16.mxu0 %v7936
    %8164 = vmatpush1.bf16.msra.mxu0 %v7935
    %8165 = vmatprep.subr.bf16.mxu0 %v7940
    %8166 = vmatpush1.bf16.msra.mxu0 %v7939
    %8167 = vmatprep.subr.bf16.mxu0 %v7944
    %8168 = vmatpush1.bf16.msra.mxu0 %v7943
    %8169 = vmatprep.subr.bf16.mxu0 %v7948
    %8170 = vmatpush1.bf16.msra.mxu0 %v7947
    %8171 = vmatprep.subr.bf16.mxu0 %v7952
    %8172 = vmatpush1.bf16.msra.mxu0 %v7951
    %8173 = vmatprep.subr.bf16.mxu0 %v7956
    %8174 = vmatpush1.bf16.msra.mxu0 %v7955
    %8175 = vmatprep.subr.bf16.mxu0 %v7960
    %8176 = vmatpush1.bf16.msra.mxu0 %v7959
    %8177 = vmatprep.subr.bf16.mxu0 %v7964
    %8178 = vmatpush1.bf16.msra.mxu0 %v7963
    %8179 = vmatprep.subr.bf16.mxu0 %v7968
    %8180 = vmatpush1.bf16.msra.mxu0 %v7967
    %8181 = vmatprep.subr.bf16.mxu0 %v7972
    %8182 = vmatpush1.bf16.msra.mxu0 %v7971
    %8183 = vmatprep.subr.bf16.mxu0 %v7976
    %8184 = vmatpush1.bf16.msra.mxu0 %v7975
    %8185 = vmatprep.subr.bf16.mxu0 %v7980
    %8186 = vmatpush1.bf16.msra.mxu0 %v7979
    %8187 = vmatprep.subr.bf16.mxu0 %v7984
    %8188 = vmatpush1.bf16.msra.mxu0 %v7983
    %8189 = vmatprep.subr.bf16.mxu0 %v7988
    %8190 = vmatpush1.bf16.msra.mxu0 %v7987
    %8191 = vmatprep.subr.bf16.mxu0 %v7992
    %8192 = vmatpush1.bf16.msra.mxu0 %v7991
    %8193 = vmatprep.mubr.bf16.mxu0 %v7926
    %8194 = vmatmul.mubr.bf16.gmra.mrb[0].mxu0 %v7925
    %v8195 = vpop.f32.mrb[0].mxu0
    %v8196 = vadd.f32 %v8070, %v8195
    %v8197 = vpop.f32.mrb[0].mxu0
    %v8198 = vadd.f32 %v8074, %v8197
    %v8199 = vpop.f32.mrb[0].mxu0
    %v8200 = vpop.f32.mrb[0].mxu0
    %8201 = vdwg.mxu0
    %8202 = vmatprep.subr.bf16.mxu0 %v7996
    %8203 = vmatpush1.bf16.msra.mxu0 %v7995
    %8204 = vmatprep.subr.bf16.mxu0 %v8000
    %8205 = vmatpush1.bf16.msra.mxu0 %v7999
    %8206 = vmatprep.subr.bf16.mxu0 %v8004
    %8207 = vmatpush1.bf16.msra.mxu0 %v8003
    %8208 = vmatprep.subr.bf16.mxu0 %v8008
    %8209 = vmatpush1.bf16.msra.mxu0 %v8007
    %8210 = vmatprep.subr.bf16.mxu0 %v8012
    %8211 = vmatpush1.bf16.msra.mxu0 %v8011
    %8212 = vmatprep.subr.bf16.mxu0 %v8016
    %8213 = vmatpush1.bf16.msra.mxu0 %v8015
    %8214 = vmatprep.subr.bf16.mxu0 %v8020
    %8215 = vmatpush1.bf16.msra.mxu0 %v8019
    %8216 = vmatprep.subr.bf16.mxu0 %v8024
    %8217 = vmatpush1.bf16.msra.mxu0 %v8023
    %8218 = vmatprep.subr.bf16.mxu0 %v8028
    %8219 = vmatpush1.bf16.msra.mxu0 %v8027
    %8220 = vmatprep.subr.bf16.mxu0 %v8032
    %8221 = vmatpush1.bf16.msra.mxu0 %v8031
    %8222 = vmatprep.subr.bf16.mxu0 %v8036
    %8223 = vmatpush1.bf16.msra.mxu0 %v8035
    %8224 = vmatprep.subr.bf16.mxu0 %v8040
    %8225 = vmatpush1.bf16.msra.mxu0 %v8039
    %8226 = vmatprep.subr.bf16.mxu0 %v8044
    %8227 = vmatpush1.bf16.msra.mxu0 %v8043
    %8228 = vmatprep.subr.bf16.mxu0 %v8048
    %8229 = vmatpush1.bf16.msra.mxu0 %v8047
    %8230 = vmatprep.subr.bf16.mxu0 %v8052
    %8231 = vmatpush1.bf16.msra.mxu0 %v8051
    %8232 = vmatprep.subr.bf16.mxu0 %v8056
    %8233 = vmatpush1.bf16.msra.mxu0 %v8055
    %8234 = vmatprep.mubr.bf16.mxu0 %v7928
    %8235 = vmatmul.mubr.bf16.gmra.mrb[0].mxu0 %v7927
    %v8236 = vpop.f32.mrb[0].mxu0
    %v8237 = vadd.f32 %v8196, %v8236
    %v8238 = vpop.f32.mrb[0].mxu0
    %v8239 = vadd.f32 %v8198, %v8238
    %v8240 = vpop.f32.mrb[0].mxu0
    %v8241 = vpop.f32.mrb[0].mxu0
    %8242 = vdwg.mxu0
    %v8243 = vadd.f32 %v8155, %v7512
    %v8244 = vadd.f32 %v8157, %v7513
    %v8245 = vadd.f32 %v8237, %v7514
    %v8246 = vadd.f32 %v8239, %v7515
    %v8247 = vtanh.pop %v8243
    %v8248 = vtanh.pop %v8244
    %v8249 = vtanh.pop %v8245
    %v8250 = vtanh.pop %v8246
    %v8251 = vpack.c.bf16 %v8247, %v8247
    %v8252 = vpack.c.bf16 %v8248, %v8248
    %v8253 = vpack.c.bf16 %v8249, %v8249
    %v8254 = vpack.c.bf16 %v8250, %v8250
    %v8255 = vld [vmem:[#allocation7] sm:$0xff]
    %v8256 = vld [vmem:[#allocation7 + $0x8] sm:$0xff]
    %v8257 = vld [vmem:[#allocation7 + $0x10] sm:$0xff]
    %v8258 = vld [vmem:[#allocation7 + $0x18] sm:$0xff]
    %v8259 = vld [vmem:[#allocation7 + $0x20] sm:$0xff]
    %v8260 = vld [vmem:[#allocation7 + $0x28] sm:$0xff]
    %v8261 = vld [vmem:[#allocation7 + $0x30] sm:$0xff]
    %v8262 = vld [vmem:[#allocation7 + $0x38] sm:$0xff]
    %v8263 = vld [vmem:[#allocation7 + $0x40] sm:$0xff]
    %v8264 = vld [vmem:[#allocation7 + $0x48] sm:$0xff]
    %v8265 = vld [vmem:[#allocation7 + $0x50] sm:$0xff]
    %v8266 = vld [vmem:[#allocation7 + $0x58] sm:$0xff]
    %v8267 = vld [vmem:[#allocation7 + $0x60] sm:$0xff]
    %v8268 = vld [vmem:[#allocation7 + $0x68] sm:$0xff]
    %v8269 = vld [vmem:[#allocation7 + $0x70] sm:$0xff]
    %v8270 = vld [vmem:[#allocation7 + $0x78] sm:$0xff]
    %v8271 = vld [vmem:[#allocation7 + $0x80] sm:$0xff]
    %v8272 = vld [vmem:[#allocation7 + $0x88] sm:$0xff]
    %v8273 = vld [vmem:[#allocation7 + $0x90] sm:$0xff]
    %v8274 = vld [vmem:[#allocation7 + $0x98] sm:$0xff]
    %v8275 = vld [vmem:[#allocation7 + $0xa0] sm:$0xff]
    %v8276 = vld [vmem:[#allocation7 + $0xa8] sm:$0xff]
    %v8277 = vld [vmem:[#allocation7 + $0xb0] sm:$0xff]
    %v8278 = vld [vmem:[#allocation7 + $0xb8] sm:$0xff]
    %v8279 = vld [vmem:[#allocation7 + $0xc0] sm:$0xff]
    %v8280 = vld [vmem:[#allocation7 + $0xc8] sm:$0xff]
    %v8281 = vld [vmem:[#allocation7 + $0xd0] sm:$0xff]
    %v8282 = vld [vmem:[#allocation7 + $0xd8] sm:$0xff]
    %v8283 = vld [vmem:[#allocation7 + $0xe0] sm:$0xff]
    %v8284 = vld [vmem:[#allocation7 + $0xe8] sm:$0xff]
    %v8285 = vld [vmem:[#allocation7 + $0xf0] sm:$0xff]
    %v8286 = vld [vmem:[#allocation7 + $0xf8] sm:$0xff]
    %v8287 = vld [vmem:[#allocation7 + $0x100] sm:$0xff]
    %v8288 = vld [vmem:[#allocation7 + $0x108] sm:$0xff]
    %v8289 = vld [vmem:[#allocation7 + $0x110] sm:$0xff]
    %v8290 = vld [vmem:[#allocation7 + $0x118] sm:$0xff]
    %v8291 = vld [vmem:[#allocation7 + $0x120] sm:$0xff]
    %v8292 = vld [vmem:[#allocation7 + $0x128] sm:$0xff]
    %v8293 = vld [vmem:[#allocation7 + $0x130] sm:$0xff]
    %v8294 = vld [vmem:[#allocation7 + $0x138] sm:$0xff]
    %v8295 = vld [vmem:[#allocation7 + $0x140] sm:$0xff]
    %v8296 = vld [vmem:[#allocation7 + $0x148] sm:$0xff]
    %v8297 = vld [vmem:[#allocation7 + $0x150] sm:$0xff]
    %v8298 = vld [vmem:[#allocation7 + $0x158] sm:$0xff]
    %v8299 = vld [vmem:[#allocation7 + $0x160] sm:$0xff]
    %v8300 = vld [vmem:[#allocation7 + $0x168] sm:$0xff]
    %v8301 = vld [vmem:[#allocation7 + $0x170] sm:$0xff]
    %v8302 = vld [vmem:[#allocation7 + $0x178] sm:$0xff]
    %v8303 = vld [vmem:[#allocation7 + $0x180] sm:$0xff]
    %v8304 = vld [vmem:[#allocation7 + $0x188] sm:$0xff]
    %v8305 = vld [vmem:[#allocation7 + $0x190] sm:$0xff]
    %v8306 = vld [vmem:[#allocation7 + $0x198] sm:$0xff]
    %v8307 = vld [vmem:[#allocation7 + $0x1a0] sm:$0xff]
    %v8308 = vld [vmem:[#allocation7 + $0x1a8] sm:$0xff]
    %v8309 = vld [vmem:[#allocation7 + $0x1b0] sm:$0xff]
    %v8310 = vld [vmem:[#allocation7 + $0x1b8] sm:$0xff]
    %v8311 = vld [vmem:[#allocation7 + $0x1c0] sm:$0xff]
    %v8312 = vld [vmem:[#allocation7 + $0x1c8] sm:$0xff]
    %v8313 = vld [vmem:[#allocation7 + $0x1d0] sm:$0xff]
    %v8314 = vld [vmem:[#allocation7 + $0x1d8] sm:$0xff]
    %v8315 = vld [vmem:[#allocation7 + $0x1e0] sm:$0xff]
    %v8316 = vld [vmem:[#allocation7 + $0x1e8] sm:$0xff]
    %v8317 = vld [vmem:[#allocation7 + $0x1f0] sm:$0xff]
    %v8318 = vld [vmem:[#allocation7 + $0x1f8] sm:$0xff]
    %v8319 = vld [vmem:[#allocation7 + $0x200] sm:$0xff]
    %v8320 = vld [vmem:[#allocation7 + $0x208] sm:$0xff]
    %v8321 = vld [vmem:[#allocation7 + $0x210] sm:$0xff]
    %v8322 = vld [vmem:[#allocation7 + $0x218] sm:$0xff]
    %v8323 = vld [vmem:[#allocation7 + $0x220] sm:$0xff]
    %v8324 = vld [vmem:[#allocation7 + $0x228] sm:$0xff]
    %v8325 = vld [vmem:[#allocation7 + $0x230] sm:$0xff]
    %v8326 = vld [vmem:[#allocation7 + $0x238] sm:$0xff]
    %v8327 = vld [vmem:[#allocation7 + $0x240] sm:$0xff]
    %v8328 = vld [vmem:[#allocation7 + $0x248] sm:$0xff]
    %v8329 = vld [vmem:[#allocation7 + $0x250] sm:$0xff]
    %v8330 = vld [vmem:[#allocation7 + $0x258] sm:$0xff]
    %v8331 = vld [vmem:[#allocation7 + $0x260] sm:$0xff]
    %v8332 = vld [vmem:[#allocation7 + $0x268] sm:$0xff]
    %v8333 = vld [vmem:[#allocation7 + $0x270] sm:$0xff]
    %v8334 = vld [vmem:[#allocation7 + $0x278] sm:$0xff]
    %v8335 = vld [vmem:[#allocation7 + $0x280] sm:$0xff]
    %v8336 = vld [vmem:[#allocation7 + $0x288] sm:$0xff]
    %v8337 = vld [vmem:[#allocation7 + $0x290] sm:$0xff]
    %v8338 = vld [vmem:[#allocation7 + $0x298] sm:$0xff]
    %v8339 = vld [vmem:[#allocation7 + $0x2a0] sm:$0xff]
    %v8340 = vld [vmem:[#allocation7 + $0x2a8] sm:$0xff]
    %v8341 = vld [vmem:[#allocation7 + $0x2b0] sm:$0xff]
    %v8342 = vld [vmem:[#allocation7 + $0x2b8] sm:$0xff]
    %v8343 = vld [vmem:[#allocation7 + $0x2c0] sm:$0xff]
    %v8344 = vld [vmem:[#allocation7 + $0x2c8] sm:$0xff]
    %v8345 = vld [vmem:[#allocation7 + $0x2d0] sm:$0xff]
    %v8346 = vld [vmem:[#allocation7 + $0x2d8] sm:$0xff]
    %v8347 = vld [vmem:[#allocation7 + $0x2e0] sm:$0xff]
    %v8348 = vld [vmem:[#allocation7 + $0x2e8] sm:$0xff]
    %v8349 = vld [vmem:[#allocation7 + $0x2f0] sm:$0xff]
    %v8350 = vld [vmem:[#allocation7 + $0x2f8] sm:$0xff]
    %v8351 = vld [vmem:[#allocation7 + $0x300] sm:$0xff]
    %v8352 = vld [vmem:[#allocation7 + $0x308] sm:$0xff]
    %v8353 = vld [vmem:[#allocation7 + $0x310] sm:$0xff]
    %v8354 = vld [vmem:[#allocation7 + $0x318] sm:$0xff]
    %v8355 = vld [vmem:[#allocation7 + $0x320] sm:$0xff]
    %v8356 = vld [vmem:[#allocation7 + $0x328] sm:$0xff]
    %v8357 = vld [vmem:[#allocation7 + $0x330] sm:$0xff]
    %v8358 = vld [vmem:[#allocation7 + $0x338] sm:$0xff]
    %v8359 = vld [vmem:[#allocation7 + $0x340] sm:$0xff]
    %v8360 = vld [vmem:[#allocation7 + $0x348] sm:$0xff]
    %v8361 = vld [vmem:[#allocation7 + $0x350] sm:$0xff]
    %v8362 = vld [vmem:[#allocation7 + $0x358] sm:$0xff]
    %v8363 = vld [vmem:[#allocation7 + $0x360] sm:$0xff]
    %v8364 = vld [vmem:[#allocation7 + $0x368] sm:$0xff]
    %v8365 = vld [vmem:[#allocation7 + $0x370] sm:$0xff]
    %v8366 = vld [vmem:[#allocation7 + $0x378] sm:$0xff]
    %v8367 = vld [vmem:[#allocation7 + $0x380] sm:$0xff]
    %v8368 = vld [vmem:[#allocation7 + $0x388] sm:$0xff]
    %v8369 = vld [vmem:[#allocation7 + $0x390] sm:$0xff]
    %v8370 = vld [vmem:[#allocation7 + $0x398] sm:$0xff]
    %v8371 = vld [vmem:[#allocation7 + $0x3a0] sm:$0xff]
    %v8372 = vld [vmem:[#allocation7 + $0x3a8] sm:$0xff]
    %v8373 = vld [vmem:[#allocation7 + $0x3b0] sm:$0xff]
    %v8374 = vld [vmem:[#allocation7 + $0x3b8] sm:$0xff]
    %v8375 = vld [vmem:[#allocation7 + $0x3c0] sm:$0xff]
    %v8376 = vld [vmem:[#allocation7 + $0x3c8] sm:$0xff]
    %v8377 = vld [vmem:[#allocation7 + $0x3d0] sm:$0xff]
    %v8378 = vld [vmem:[#allocation7 + $0x3d8] sm:$0xff]
    %v8379 = vld [vmem:[#allocation7 + $0x3e0] sm:$0xff]
    %v8380 = vld [vmem:[#allocation7 + $0x3e8] sm:$0xff]
    %v8381 = vld [vmem:[#allocation7 + $0x3f0] sm:$0xff]
    %v8382 = vld [vmem:[#allocation7 + $0x3f8] sm:$0xff]
    %v8383 = vld [vmem:[%s41] sm:$0xf]
    %v8385 = vlaneseq
    %v8386 = vshrl.u32 %v8385, 7
    %v8387 = vsub.s32 0, %v8386
    %v8388 = vrot.slane %v8383, %v8387
    %v8389 = vlaneseq
    %v8390 = vshrl.u32 %v8389, 7
    %v8391 = vsub.s32 1, %v8390
    %v8392 = vrot.slane %v8383, %v8391
    %v8393 = vlaneseq
    %v8394 = vshrl.u32 %v8393, 7
    %v8395 = vsub.s32 2, %v8394
    %v8396 = vrot.slane %v8383, %v8395
    %v8397 = vlaneseq
    %v8398 = vshrl.u32 %v8397, 7
    %v8399 = vsub.s32 3, %v8398
    %v8400 = vrot.slane %v8383, %v8399
    %8405 = vmatprep.subr.bf16.mxu0 %v8256
    %8406 = vmatpush1.bf16.msra.mxu0 %v8255
    %8407 = vmatprep.subr.bf16.mxu0 %v8260
    %8408 = vmatpush1.bf16.msra.mxu0 %v8259
    %8409 = vmatprep.subr.bf16.mxu0 %v8264
    %8410 = vmatpush1.bf16.msra.mxu0 %v8263
    %8411 = vmatprep.subr.bf16.mxu0 %v8268
    %8412 = vmatpush1.bf16.msra.mxu0 %v8267
    %8413 = vmatprep.subr.bf16.mxu0 %v8272
    %8414 = vmatpush1.bf16.msra.mxu0 %v8271
    %8415 = vmatprep.subr.bf16.mxu0 %v8276
    %8416 = vmatpush1.bf16.msra.mxu0 %v8275
    %8417 = vmatprep.subr.bf16.mxu0 %v8280
    %8418 = vmatpush1.bf16.msra.mxu0 %v8279
    %8419 = vmatprep.subr.bf16.mxu0 %v8284
    %8420 = vmatpush1.bf16.msra.mxu0 %v8283
    %8421 = vmatprep.subr.bf16.mxu0 %v8288
    %8422 = vmatpush1.bf16.msra.mxu0 %v8287
    %8423 = vmatprep.subr.bf16.mxu0 %v8292
    %8424 = vmatpush1.bf16.msra.mxu0 %v8291
    %8425 = vmatprep.subr.bf16.mxu0 %v8296
    %8426 = vmatpush1.bf16.msra.mxu0 %v8295
    %8427 = vmatprep.subr.bf16.mxu0 %v8300
    %8428 = vmatpush1.bf16.msra.mxu0 %v8299
    %8429 = vmatprep.subr.bf16.mxu0 %v8304
    %8430 = vmatpush1.bf16.msra.mxu0 %v8303
    %8431 = vmatprep.subr.bf16.mxu0 %v8308
    %8432 = vmatpush1.bf16.msra.mxu0 %v8307
    %8433 = vmatprep.subr.bf16.mxu0 %v8312
    %8434 = vmatpush1.bf16.msra.mxu0 %v8311
    %8435 = vmatprep.subr.bf16.mxu0 %v8316
    %8436 = vmatpush1.bf16.msra.mxu0 %v8315
    %8437 = vmatprep.mubr.bf16.mxu0 %v8252
    %8438 = vmatmul.mubr.bf16.gmra.mrb[0].mxu0 %v8251
    %v8439 = vpop.f32.mrb[0].mxu0
    %v8440 = vadd.f32 %v8388, %v8439
    %v8441 = vpop.f32.mrb[0].mxu0
    %v8442 = vadd.f32 %v8392, %v8441
    %v8443 = vpop.f32.mrb[0].mxu0
    %v8444 = vpop.f32.mrb[0].mxu0
    %8445 = vdwg.mxu0
    %8446 = vmatprep.subr.bf16.mxu0 %v8320
    %8447 = vmatpush1.bf16.msra.mxu0 %v8319
    %8448 = vmatprep.subr.bf16.mxu0 %v8324
    %8449 = vmatpush1.bf16.msra.mxu0 %v8323
    %8450 = vmatprep.subr.bf16.mxu0 %v8328
    %8451 = vmatpush1.bf16.msra.mxu0 %v8327
    %8452 = vmatprep.subr.bf16.mxu0 %v8332
    %8453 = vmatpush1.bf16.msra.mxu0 %v8331
    %8454 = vmatprep.subr.bf16.mxu0 %v8336
    %8455 = vmatpush1.bf16.msra.mxu0 %v8335
    %8456 = vmatprep.subr.bf16.mxu0 %v8340
    %8457 = vmatpush1.bf16.msra.mxu0 %v8339
    %8458 = vmatprep.subr.bf16.mxu0 %v8344
    %8459 = vmatpush1.bf16.msra.mxu0 %v8343
    %8460 = vmatprep.subr.bf16.mxu0 %v8348
    %8461 = vmatpush1.bf16.msra.mxu0 %v8347
    %8462 = vmatprep.subr.bf16.mxu0 %v8352
    %8463 = vmatpush1.bf16.msra.mxu0 %v8351
    %8464 = vmatprep.subr.bf16.mxu0 %v8356
    %8465 = vmatpush1.bf16.msra.mxu0 %v8355
    %8466 = vmatprep.subr.bf16.mxu0 %v8360
    %8467 = vmatpush1.bf16.msra.mxu0 %v8359
    %8468 = vmatprep.subr.bf16.mxu0 %v8364
    %8469 = vmatpush1.bf16.msra.mxu0 %v8363
    %8470 = vmatprep.subr.bf16.mxu0 %v8368
    %8471 = vmatpush1.bf16.msra.mxu0 %v8367
    %8472 = vmatprep.subr.bf16.mxu0 %v8372
    %8473 = vmatpush1.bf16.msra.mxu0 %v8371
    %8474 = vmatprep.subr.bf16.mxu0 %v8376
    %8475 = vmatpush1.bf16.msra.mxu0 %v8375
    %8476 = vmatprep.subr.bf16.mxu0 %v8380
    %8477 = vmatpush1.bf16.msra.mxu0 %v8379
    %8478 = vmatprep.mubr.bf16.mxu0 %v8254
    %8479 = vmatmul.mubr.bf16.gmra.mrb[0].mxu0 %v8253
    %v8480 = vpop.f32.mrb[0].mxu0
    %v8481 = vadd.f32 %v8440, %v8480
    %v8482 = vpop.f32.mrb[0].mxu0
    %v8483 = vadd.f32 %v8442, %v8482
    %v8484 = vpop.f32.mrb[0].mxu0
    %v8485 = vpop.f32.mrb[0].mxu0
    %8486 = vdwg.mxu0
    %8487 = vmatprep.subr.bf16.mxu0 %v8258
    %8488 = vmatpush1.bf16.msra.mxu0 %v8257
    %8489 = vmatprep.subr.bf16.mxu0 %v8262
    %8490 = vmatpush1.bf16.msra.mxu0 %v8261
    %8491 = vmatprep.subr.bf16.mxu0 %v8266
    %8492 = vmatpush1.bf16.msra.mxu0 %v8265
    %8493 = vmatprep.subr.bf16.mxu0 %v8270
    %8494 = vmatpush1.bf16.msra.mxu0 %v8269
    %8495 = vmatprep.subr.bf16.mxu0 %v8274
    %8496 = vmatpush1.bf16.msra.mxu0 %v8273
    %8497 = vmatprep.subr.bf16.mxu0 %v8278
    %8498 = vmatpush1.bf16.msra.mxu0 %v8277
    %8499 = vmatprep.subr.bf16.mxu0 %v8282
    %8500 = vmatpush1.bf16.msra.mxu0 %v8281
    %8501 = vmatprep.subr.bf16.mxu0 %v8286
    %8502 = vmatpush1.bf16.msra.mxu0 %v8285
    %8503 = vmatprep.subr.bf16.mxu0 %v8290
    %8504 = vmatpush1.bf16.msra.mxu0 %v8289
    %8505 = vmatprep.subr.bf16.mxu0 %v8294
    %8506 = vmatpush1.bf16.msra.mxu0 %v8293
    %8507 = vmatprep.subr.bf16.mxu0 %v8298
    %8508 = vmatpush1.bf16.msra.mxu0 %v8297
    %8509 = vmatprep.subr.bf16.mxu0 %v8302
    %8510 = vmatpush1.bf16.msra.mxu0 %v8301
    %8511 = vmatprep.subr.bf16.mxu0 %v8306
    %8512 = vmatpush1.bf16.msra.mxu0 %v8305
    %8513 = vmatprep.subr.bf16.mxu0 %v8310
    %8514 = vmatpush1.bf16.msra.mxu0 %v8309
    %8515 = vmatprep.subr.bf16.mxu0 %v8314
    %8516 = vmatpush1.bf16.msra.mxu0 %v8313
    %8517 = vmatprep.subr.bf16.mxu0 %v8318
    %8518 = vmatpush1.bf16.msra.mxu0 %v8317
    %8519 = vmatprep.mubr.bf16.mxu0 %v8252
    %8520 = vmatmul.mubr.bf16.gmra.mrb[0].mxu0 %v8251
    %v8521 = vpop.f32.mrb[0].mxu0
    %v8522 = vadd.f32 %v8396, %v8521
    %v8523 = vpop.f32.mrb[0].mxu0
    %v8524 = vadd.f32 %v8400, %v8523
    %v8525 = vpop.f32.mrb[0].mxu0
    %v8526 = vpop.f32.mrb[0].mxu0
    %8527 = vdwg.mxu0
    %8528 = vmatprep.subr.bf16.mxu0 %v8322
    %8529 = vmatpush1.bf16.msra.mxu0 %v8321
    %8530 = vmatprep.subr.bf16.mxu0 %v8326
    %8531 = vmatpush1.bf16.msra.mxu0 %v8325
    %8532 = vmatprep.subr.bf16.mxu0 %v8330
    %8533 = vmatpush1.bf16.msra.mxu0 %v8329
    %8534 = vmatprep.subr.bf16.mxu0 %v8334
    %8535 = vmatpush1.bf16.msra.mxu0 %v8333
    %8536 = vmatprep.subr.bf16.mxu0 %v8338
    %8537 = vmatpush1.bf16.msra.mxu0 %v8337
    %8538 = vmatprep.subr.bf16.mxu0 %v8342
    %8539 = vmatpush1.bf16.msra.mxu0 %v8341
    %8540 = vmatprep.subr.bf16.mxu0 %v8346
    %8541 = vmatpush1.bf16.msra.mxu0 %v8345
    %8542 = vmatprep.subr.bf16.mxu0 %v8350
    %8543 = vmatpush1.bf16.msra.mxu0 %v8349
    %8544 = vmatprep.subr.bf16.mxu0 %v8354
    %8545 = vmatpush1.bf16.msra.mxu0 %v8353
    %8546 = vmatprep.subr.bf16.mxu0 %v8358
    %8547 = vmatpush1.bf16.msra.mxu0 %v8357
    %8548 = vmatprep.subr.bf16.mxu0 %v8362
    %8549 = vmatpush1.bf16.msra.mxu0 %v8361
    %8550 = vmatprep.subr.bf16.mxu0 %v8366
    %8551 = vmatpush1.bf16.msra.mxu0 %v8365
    %8552 = vmatprep.subr.bf16.mxu0 %v8370
    %8553 = vmatpush1.bf16.msra.mxu0 %v8369
    %8554 = vmatprep.subr.bf16.mxu0 %v8374
    %8555 = vmatpush1.bf16.msra.mxu0 %v8373
    %8556 = vmatprep.subr.bf16.mxu0 %v8378
    %8557 = vmatpush1.bf16.msra.mxu0 %v8377
    %8558 = vmatprep.subr.bf16.mxu0 %v8382
    %8559 = vmatpush1.bf16.msra.mxu0 %v8381
    %8560 = vmatprep.mubr.bf16.mxu0 %v8254
    %8561 = vmatmul.mubr.bf16.gmra.mrb[0].mxu0 %v8253
    %v8562 = vpop.f32.mrb[0].mxu0
    %v8563 = vadd.f32 %v8522, %v8562
    %v8564 = vpop.f32.mrb[0].mxu0
    %v8565 = vadd.f32 %v8524, %v8564
    %v8566 = vpop.f32.mrb[0].mxu0
    %v8567 = vpop.f32.mrb[0].mxu0
    %8568 = vdwg.mxu0
    %v8569 = vadd.f32 %v8481, %v7512
    %v8570 = vadd.f32 %v8483, %v7513
    %v8571 = vadd.f32 %v8563, %v7514
    %v8572 = vadd.f32 %v8565, %v7515
    %v8573 = vadd.f32 %v8569, %v8247
    %v8574 = vadd.f32 %v8570, %v8248
    %v8575 = vadd.f32 %v8571, %v8249
    %v8576 = vadd.f32 %v8572, %v8250
    %v8577 = vtanh.pop %v8573
    %v8578 = vtanh.pop %v8574
    %v8579 = vtanh.pop %v8575
    %v8580 = vtanh.pop %v8576
    %v8581 = vld [vmem:[%s43] sm:$0xf]
    %v8583 = vlaneseq
    %v8584 = vshrl.u32 %v8583, 7
    %v8585 = vsub.s32 0, %v8584
    %v8586 = vrot.slane %v8581, %v8585
    %v8587 = vlaneseq
    %v8588 = vshrl.u32 %v8587, 7
    %v8589 = vsub.s32 1, %v8588
    %v8590 = vrot.slane %v8581, %v8589
    %v8591 = vlaneseq
    %v8592 = vshrl.u32 %v8591, 7
    %v8593 = vsub.s32 2, %v8592
    %v8594 = vrot.slane %v8581, %v8593
    %v8595 = vlaneseq
    %v8596 = vshrl.u32 %v8595, 7
    %v8597 = vsub.s32 3, %v8596
    %v8598 = vrot.slane %v8581, %v8597
    %v8603 = vmul.f32 %v8577, %v8586
    %v8604 = vmul.f32 %v8578, %v8590
    %v8605 = vmul.f32 %v8579, %v8594
    %v8606 = vmul.f32 %v8580, %v8598
    %v8607 = vsel %vm7187, %v8603, 0.0
    %v8608 = vsel %vm7187, %v8604, 0.0
    %v8609 = vadd.f32 %v8607, %v8608
    %v8610 = vsel %vm7187, %v8605, 0.0
    %v8611 = vadd.f32 %v8609, %v8610
    %v8612 = vsel %vm7187, %v8606, 0.0
    %v8613 = vadd.f32 %v8611, %v8612
    %8614 = vadd.xlane.f32.xlu0 %v8613
    %v8615 = vpop.xlane.xlu0 %8614
    %v8616 = vld [vmem:[#allocation9] sm:$0x1]
    %v8618 = vlaneseq
    %v8619 = vshrl.u32 %v8618, 7
    %v8620 = vsub.s32 0, %v8619
    %v8621 = vrot.slane %v8616, %v8620
    %v8623 = vadd.f32 %v8615, %v8621
    %vm8624 = vcmask 1024
    %8625 = vst.msk [vmem:[%s59] sm:$0x3] %vm8624, %v8623
    // Predicated region
    $region130: #{agent_cri_net_forward.1} parent=1 // pred_check
      _
    $region131: #{agent_cri_net_forward.1} parent=1 // pred_check_branch
      %8627 = sbr.rel (0) target = $region133
    $region132: #{agent_cri_net_forward.1} parent=1 // pred_region
      _
    $region133: #{agent_cri_net_forward.1} parent=1 // pred_fallthru
      _
    // Predicated region
    $region134: #{agent_cri_net_forward.1} parent=1 // pred_check
      _
    $region135: #{agent_cri_net_forward.1} parent=1 // pred_check_branch
      %8629 = sbr.rel (0) target = $region137
    $region136: #{agent_cri_net_forward.1} parent=1 // pred_region
      _
    $region137: #{agent_cri_net_forward.1} parent=1 // pred_fallthru
      _
    %8630 = vsyncpa [#allocation11], 1
    %8631 = vsyncpa [#allocation13], 1
    %8632 = vsyncpa [#allocation16], 1
    %8633 = vsyncpa [#allocation19], 1
    %8634 = vsyncpa [#allocation22], 1
  %8635 = vsyncmov [#allocation8]
  %s8636 = vpop.sfrf %8635
  %p8637 = scmp.eq.s32.totalorder %s8636, 0
  %p8638 = pneg %p8637
  %8640 = shalt.err (%p8638)
  %s8641 = scalar_lea.sflag [#allocation8], 1
  %8642 = vsyncmov %s8641
  %s8643 = vpop.sfrf %8642
  %p8644 = scmp.eq.s32.totalorder %s8643, 0
  %p8645 = pneg %p8644
  %8647 = shalt.err (%p8645)
  %s8648 = scalar_lea.sflag [#allocation8], 2
  %8649 = vsyncmov %s8648
  %s8650 = vpop.sfrf %8649
  %p8651 = scmp.eq.s32.totalorder %s8650, 0
  %p8652 = pneg %p8651
  %8654 = shalt.err (%p8652)
  %s8655 = scalar_lea.sflag [#allocation8], 3
  %8656 = vsyncmov %s8655
  %s8657 = vpop.sfrf %8656
  %p8658 = scmp.eq.s32.totalorder %s8657, 0
  %p8659 = pneg %p8658
  %8661 = shalt.err (%p8659)
  %s8662 = scalar_lea.sflag [#allocation8], 4
  %8663 = vsyncmov %s8662
  %s8664 = vpop.sfrf %8663
  %p8665 = scmp.eq.s32.totalorder %s8664, 0
  %p8666 = pneg %p8665
  %8668 = shalt.err (%p8666)
  %s8669 = scalar_lea.sflag [#allocation8], 5
  %8670 = vsyncmov %s8669
  %s8671 = vpop.sfrf %8670
  %p8672 = scmp.eq.s32.totalorder %s8671, 0
  %p8673 = pneg %p8672
  %8675 = shalt.err (%p8673)

</llo_original>
